<compile_context>
chip_gen: v7x
topology: tpu7x:2x2x1
jax: 0.10.0
libtpu: 0.0.40
codegen_flags: <defaults>
</compile_context>

<pallas_src>
import functools
import math

import jax
import jax.numpy as jnp
from jax.experimental import pallas as pl
from jax.experimental.pallas import tpu as pltpu

ROW_TILE = 512            # node-row tile for the aggregate (multiple of 128)
COL_TILE = 512            # adjacency reduction (column) tile (multiple of 128)
PROJ_ROW_TILE = 1024      # row tile for the dense projection x @ W1
PAD_MULTIPLE = math.lcm(ROW_TILE, COL_TILE, PROJ_ROW_TILE)


def _vmem_limit_bytes():
    """Generation-aware VMEM budget (~75% of physical, capped, safe fallback)."""
    try:
        cap = int(pltpu.get_tpu_info().vmem_capacity_bytes)
    except Exception:
        cap = 64 * 1024 * 1024          # conservative (v7x physical per-TC)
    return int(min((cap * 3) // 4, 100 * 1024 * 1024))


# ----------------------------------------------------------------------------
# Kernels
# ----------------------------------------------------------------------------
def _project_kernel(x_ref, w_ref, out_ref):
    # out = x @ W   (bf16 inputs, f32 MXU accumulate, bf16 store)
    out_ref[...] = jnp.dot(
        x_ref[...], w_ref[...], preferred_element_type=jnp.float32
    ).astype(out_ref.dtype)


def _aggregate_kernel(cols_ref, cnts_ref, adj_ref, z_ref, b_ref, *rest,
                      col_tile, max_k, apply_relu, fuse_w2):
    # acc[i-tile] = sum_k adj[i-tile, col_k] @ z[col_k]           (f32 accumulate)
    # finalize:   r = acc + b ; relu(r) ; optionally r = r @ W2 ; store
    if fuse_w2:
        w2_ref, out_ref, acc_ref = rest
    else:
        out_ref, acc_ref = rest

    i = pl.program_id(0)
    k = pl.program_id(1)

    @pl.when(k == 0)
    def _init():
        acc_ref[...] = jnp.zeros_like(acc_ref)

    # Only real (nonzero) adjacency tiles contribute; padded k steps are skipped.
    @pl.when(k < cnts_ref[i])
    def _accumulate():
        col = cols_ref[i * max_k + k]
        start = pl.multiple_of(col * col_tile, col_tile)
        z_blk = z_ref[pl.ds(start, col_tile), :]          # slice the resident z
        acc_ref[...] += jnp.dot(
            adj_ref[...], z_blk, preferred_element_type=jnp.float32
        )

    @pl.when(k == pl.num_programs(1) - 1)
    def _finalize():
        r = acc_ref[...] + b_ref[...]                     # f32 bias add
        if apply_relu:
            r = jnp.maximum(r, 0.0)                       # f32 ReLU (no bf16 VPU on v5e)
        if fuse_w2:
            # fused layer-2 projection: (row_tile, H) @ (H, C), resident bf16 W2
            r = jnp.dot(r.astype(jnp.bfloat16), w2_ref[...],
                        preferred_element_type=jnp.float32)
        out_ref[...] = r.astype(out_ref.dtype)


# ----------------------------------------------------------------------------
# pallas_call wrappers
# ----------------------------------------------------------------------------
def _project(x, w, *, row_tile, vmem_limit):
    n_pad, f_in = x.shape
    f_out = w.shape[1]
    return pl.pallas_call(
        _project_kernel,
        out_shape=jax.ShapeDtypeStruct((n_pad, f_out), jnp.bfloat16),
        grid_spec=pltpu.PrefetchScalarGridSpec(
            num_scalar_prefetch=0,
            grid=(n_pad // row_tile,),
            in_specs=[
                pl.BlockSpec((row_tile, f_in), lambda i: (i, 0)),
                pl.BlockSpec((f_in, f_out), lambda i: (0, 0)),   # W resident
            ],
            out_specs=pl.BlockSpec((row_tile, f_out), lambda i: (i, 0)),
        ),
        compiler_params=pltpu.CompilerParams(
            dimension_semantics=("parallel",),
            vmem_limit_bytes=vmem_limit,
        ),
        cost_estimate=pl.CostEstimate(
            flops=2 * n_pad * f_in * f_out,
            transcendentals=0,
            bytes_accessed=2 * (n_pad * f_in + f_in * f_out + n_pad * f_out),
        ),
    )(x, w)


def _aggregate(adj, z, b, col_ids_flat, counts, *, max_k, nnz_tiles, w2,
               apply_relu, out_dtype, row_tile, col_tile, vmem_limit):
    n_pad = adj.shape[0]
    f_z = z.shape[1]                       # width of the accumulated features
    fuse_w2 = w2 is not None
    f_out = w2.shape[1] if fuse_w2 else f_z
    n_row_tiles = n_pad // row_tile

    # Data-dependent index map: fetch only nonzero adjacency column tiles.
    def adj_index(i, k, cols, cnts):
        return (i, cols[i * max_k + k])

    in_specs = [
        pl.BlockSpec((row_tile, col_tile), adj_index),
        pl.BlockSpec((n_pad, f_z), lambda i, k, cols, cnts: (0, 0)),  # z resident
        pl.BlockSpec((1, f_z), lambda i, k, cols, cnts: (0, 0)),      # bias resident
    ]
    operands = [col_ids_flat, counts, adj, z, b]
    if fuse_w2:
        in_specs.append(pl.BlockSpec((f_z, f_out),
                                     lambda i, k, cols, cnts: (0, 0)))  # W2 resident
        operands.append(w2)

    kernel = functools.partial(_aggregate_kernel, col_tile=col_tile, max_k=max_k,
                               apply_relu=apply_relu, fuse_w2=fuse_w2)

    out_itemsize = jnp.dtype(out_dtype).itemsize
    flops = 2 * nnz_tiles * row_tile * col_tile * f_z
    bytes_accessed = (nnz_tiles * row_tile * col_tile * adj.dtype.itemsize
                      + n_pad * f_z * z.dtype.itemsize          # resident z: one pass
                      + n_pad * f_out * out_itemsize)
    if fuse_w2:
        flops += 2 * n_pad * f_z * f_out
        bytes_accessed += f_z * f_out * w2.dtype.itemsize

    return pl.pallas_call(
        kernel,
        out_shape=jax.ShapeDtypeStruct((n_pad, f_out), out_dtype),
        grid_spec=pltpu.PrefetchScalarGridSpec(
            num_scalar_prefetch=2,                       # col_ids, counts -> SMEM
            grid=(n_row_tiles, max_k),                   # reduction axis last
            in_specs=in_specs,
            out_specs=pl.BlockSpec((row_tile, f_out),
                                   lambda i, k, cols, cnts: (i, 0)),
            scratch_shapes=[pltpu.VMEM((row_tile, f_z), jnp.float32)],
        ),
        compiler_params=pltpu.CompilerParams(
            dimension_semantics=("parallel", "arbitrary"),   # rows across v7x TCs
            vmem_limit_bytes=vmem_limit,
        ),
        cost_estimate=pl.CostEstimate(
            flops=flops, transcendentals=0, bytes_accessed=bytes_accessed
        ),
    )(*operands)


# ----------------------------------------------------------------------------
# Padded (jit-able) forward: project -> fused aggregate+W2 -> aggregate
# ----------------------------------------------------------------------------
@functools.partial(jax.jit, static_argnames=(
    "max_k", "nnz_tiles", "n", "c", "row_tile", "col_tile", "proj_tile",
    "vmem_limit"))
def _gcn_forward_padded(col_ids, counts, adj_p, x_p, w1_p, b1_p, w2_p, b2_p, *,
                        max_k, nnz_tiles, n, c, row_tile, col_tile, proj_tile,
                        vmem_limit):
    # conv1 projection: x @ W1          (project first: N*F_in*H, not N*N*F_in)
    xw1 = _project(x_p, w1_p, row_tile=proj_tile, vmem_limit=vmem_limit)
    # conv1 aggregate + bias + ReLU, fused with conv2 projection (h @ W2):
    #   hw2 = relu(adj_hat @ xw1 + b1) @ W2
    hw2 = _aggregate(adj_p, xw1, b1_p, col_ids, counts,
                     max_k=max_k, nnz_tiles=nnz_tiles, w2=w2_p,
                     apply_relu=True, out_dtype=jnp.bfloat16,
                     row_tile=row_tile, col_tile=col_tile,
                     vmem_limit=vmem_limit)
    # TODO(synk): F.dropout(p=0.5, training=self.training) — identity in eval mode;
    #             a training-mode kernel would mask h in the fused finalize with
    #             pltpu.prng_seed + pltpu.prng_random_bits.
    # conv2 aggregate: adj_hat @ hw2 + b2
    out_p = _aggregate(adj_p, hw2, b2_p, col_ids, counts,
                       max_k=max_k, nnz_tiles=nnz_tiles, w2=None,
                       apply_relu=False, out_dtype=jnp.float32,
                       row_tile=row_tile, col_tile=col_tile,
                       vmem_limit=vmem_limit)
    return out_p[:n, :c]


# ----------------------------------------------------------------------------
# Host-side (one-time) preparation
# ----------------------------------------------------------------------------
def _round_up(x, m):
    return ((x + m - 1) // m) * m


def _pad2(a, shape):
    return jnp.pad(a, ((0, shape[0] - a.shape[0]), (0, shape[1] - a.shape[1])))


def _block_sparse_metadata(adj_f32, row_tile, col_tile):
    """Per row tile: column-tile ids of nonzero (row_tile x col_tile) blocks.

    One-time host prep (contains device->host syncs); not inside the jitted path.
    """
    n = adj_f32.shape[0]
    nr, nc = n // row_tile, n // col_tile
    occ = jnp.abs(adj_f32).reshape(nr, row_tile, nc, col_tile).sum(axis=(1, 3)) > 0.0
    counts = jnp.sum(occ, axis=1).astype(jnp.int32)                  # (nr,)
    max_k = max(int(jnp.max(counts)), 1)
    # Nonzero column-tile indices first (ascending, stable); pad with the last
    # valid id so consecutive padded steps keep the same block index (no re-DMA).
    order = jnp.argsort(jnp.logical_not(occ).astype(jnp.int32), axis=1, stable=True)
    last_valid = jnp.where(
        counts[:, None] > 0,
        jnp.take_along_axis(order, jnp.maximum(counts - 1, 0)[:, None], axis=1),
        0,
    )
    col_ids = jnp.where(jnp.arange(nc)[None, :] < counts[:, None], order, last_valid)
    col_ids = col_ids[:, :max_k].astype(jnp.int32)
    nnz_tiles = int(jnp.sum(counts))
    return col_ids.reshape(-1), counts, max_k, nnz_tiles


def gcn_forward(adj_hat, x, w1, b1, w2, b2, *, row_tile=ROW_TILE, col_tile=COL_TILE):
    n, f_in = x.shape
    hid = w1.shape[1]
    c = w2.shape[1]

    n_pad = _round_up(n, PAD_MULTIPLE)
    f_in_p = _round_up(f_in, 128)
    hid_p = _round_up(hid, 128)
    c_p = _round_up(c, 128)
    proj_tile = min(PROJ_ROW_TILE, n_pad)
    vmem_limit = _vmem_limit_bytes()

    # Zero padding keeps padded lanes/rows from contaminating the accumulation
    # (padded adjacency columns are exactly zero, so padded h rows never mix in).
    adj_pf32 = _pad2(adj_hat.astype(jnp.float32), (n_pad, n_pad))
    col_ids, counts, max_k, nnz = _block_sparse_metadata(adj_pf32, row_tile, col_tile)

    adj_p = adj_pf32.astype(jnp.bfloat16)                    # halves adj HBM traffic
    x_p = _pad2(x, (n_pad, f_in_p)).astype(jnp.bfloat16)
    w1_p = _pad2(w1, (f_in_p, hid_p)).astype(jnp.bfloat16)
    w2_p = _pad2(w2, (hid_p, c_p)).astype(jnp.bfloat16)
    b1_p = _pad2(b1.reshape(1, -1), (1, hid_p)).astype(jnp.float32)
    b2_p = _pad2(b2.reshape(1, -1), (1, c_p)).astype(jnp.float32)

    return _gcn_forward_padded(
        col_ids, counts, adj_p, x_p, w1_p, b1_p, w2_p, b2_p,
        max_k=max_k, nnz_tiles=nnz, n=n, c=c,
        row_tile=row_tile, col_tile=col_tile, proj_tile=proj_tile,
        vmem_limit=vmem_limit)


def normalized_adjacency(edge_index, num_nodes):
    """Dense equivalent of PyG gcn_norm: D^{-1/2} (A + I) D^{-1/2}."""
    src, dst = edge_index[0], edge_index[1]
    a = jnp.zeros((num_nodes, num_nodes), jnp.float32)
    a = a.at[dst, src].set(1.0)                       # message src -> dst (row = target)
    a_hat = jnp.maximum(a, jnp.eye(num_nodes, dtype=jnp.float32))
    deg = jnp.sum(a_hat, axis=1)
    d_inv_sqrt = jnp.where(deg > 0, 1.0 / jnp.sqrt(deg), 0.0)
    return d_inv_sqrt[:, None] * a_hat * d_inv_sqrt[None, :]


def glorot(key, shape):
    fan_in, fan_out = shape
    limit = jnp.sqrt(6.0 / (fan_in + fan_out))
    return jax.random.uniform(key, shape, jnp.float32, -limit, limit)


if __name__ == "__main__":
    # Small synthetic problem consistent with the module's shapes
    # (dataset.num_node_features -> F_IN, hidden_channels -> HID, num_classes -> C).
    N, F_IN, HID, C = 300, 32, 32, 8
    NUM_EDGES = 1200

    key = jax.random.PRNGKey(0)
    k_x, k_e1, k_e2, k_w1, k_w2 = jax.random.split(key, 5)

    # node features (row-normalized, mimicking NormalizeFeatures())
    x = jax.random.uniform(k_x, (N, F_IN), jnp.float32)
    x = x / jnp.maximum(jnp.sum(x, axis=1, keepdims=True), 1e-12)

    # synthetic edge_index (2, E)
    src = jax.random.randint(k_e1, (NUM_EDGES,), 0, N)
    dst = jax.random.randint(k_e2, (NUM_EDGES,), 0, N)
    edge_index = jnp.stack([src, dst], axis=0)

    # deterministic parameter init (glorot weights, zero biases, like GCNConv)
    w1 = glorot(k_w1, (F_IN, HID))
    b1 = jnp.zeros((1, HID), jnp.float32)
    w2 = glorot(k_w2, (HID, C))
    b2 = jnp.zeros((1, C), jnp.float32)

    adj_hat = normalized_adjacency(edge_index, N)

    out = jax.block_until_ready(gcn_forward(adj_hat, x, w1, b1, w2, b2))

    # Reference with the same bf16 cast points (f32 accumulate) as the kernels.
    bf16, f32 = jnp.bfloat16, jnp.float32
    xw1_r = jnp.dot(x.astype(bf16), w1.astype(bf16),
                    preferred_element_type=f32).astype(bf16)
    h_r = jnp.maximum(jnp.dot(adj_hat.astype(bf16), xw1_r,
                              preferred_element_type=f32) + b1, 0.0).astype(bf16)
    hw2_r = jnp.dot(h_r, w2.astype(bf16), preferred_element_type=f32).astype(bf16)
    ref = jnp.dot(adj_hat.astype(bf16), hw2_r, preferred_element_type=f32) + b2

    assert out.shape == (N, C)
    assert out.dtype == jnp.float32
    err = float(jnp.max(jnp.abs(out - ref)))
    assert jnp.allclose(out, ref, atol=3e-3, rtol=1e-2), f"max abs err {err}"

    print("KERNEL_OK")
</pallas_src>

<mosaic_0001>
module attributes {stable_mosaic.version = 11 : i64} {
  func.func @_aggregate_kernel(%arg0: i32, %arg1: i32, %arg2: memref<2xi32, #tpu.memory_space<smem>>, %arg3: memref<2xi32, #tpu.memory_space<smem>>, %arg4: memref<512x512xbf16, #tpu.memory_space<vmem>>, %arg5: memref<1024x128xbf16, #tpu.memory_space<vmem>>, %arg6: memref<1x128xf32, #tpu.memory_space<vmem>>, %arg7: memref<128x128xbf16, #tpu.memory_space<vmem>>, %arg8: memref<512x128xbf16, #tpu.memory_space<vmem>>, %arg9: memref<512x128xf32, #tpu.memory_space<vmem>>) attributes {dimension_semantics = [#tpu.dimension_semantics<parallel>, #tpu.dimension_semantics<arbitrary>], iteration_bounds = array<i64: 2, 1>, scalar_prefetch = 2 : i64, scratch_operands = 1 : i64, tpu.core_type = #tpu.core_type<tc>, window_params = [{transform_indices = @transform_0, window_bounds = array<i64: 512, 512>}, {pipeline_mode = #tpu.pipeline_mode<synchronous>, transform_indices = @transform_1, window_bounds = array<i64: 1024, 128>}, {pipeline_mode = #tpu.pipeline_mode<synchronous>, transform_indices = @transform_2, window_bounds = array<i64: 1, 128>}, {pipeline_mode = #tpu.pipeline_mode<synchronous>, transform_indices = @transform_3, window_bounds = array<i64: 128, 128>}, {transform_indices = @transform_4, window_bounds = array<i64: 512, 128>}]} {
    %c0_i32 = arith.constant 0 : i32
    %0 = arith.cmpi eq, %arg1, %c0_i32 : i32
    %1 = arith.extui %0 : i1 to i32
    %c0_i32_0 = arith.constant 0 : i32
    %2 = arith.cmpi ne, %1, %c0_i32_0 : i32
    scf.if %2 {
      %cst = arith.constant 0.000000e+00 : f32
      %11 = vector.broadcast %cst : f32 to vector<512x128xf32>
      %c0 = arith.constant 0 : index
      %c0_4 = arith.constant 0 : index
      %12 = vector.load %arg9[%c0, %c0_4] : memref<512x128xf32, #tpu.memory_space<vmem>>, vector<512x128xf32>
      tpu.vector_store %arg9[%c0, %c0_4], %11 {strides = array<i32>} : memref<512x128xf32, #tpu.memory_space<vmem>>, vector<512x128xf32>,
    } else {
    }
    %3 = arith.index_cast %arg0 : i32 to index
    %4 = memref.load %arg3[%3] : memref<2xi32, #tpu.memory_space<smem>>
    %5 = arith.cmpi slt, %arg1, %4 : i32
    %6 = arith.extui %5 : i1 to i32
    %c0_i32_1 = arith.constant 0 : i32
    %7 = arith.cmpi ne, %6, %c0_i32_1 : i32
    scf.if %7 {
      %c1_i32 = arith.constant 1 : i32
      %11 = arith.muli %arg0, %c1_i32 : i32
      %12 = arith.addi %11, %arg1 : i32
      %13 = arith.index_cast %12 : i32 to index
      %14 = memref.load %arg2[%13] : memref<2xi32, #tpu.memory_space<smem>>
      %c512_i32 = arith.constant 512 : i32
      %15 = arith.muli %14, %c512_i32 : i32
      %16 = tpu.assume_multiple %15, 512 : i32
      %17 = arith.index_cast %16 : i32 to index
      %c0 = arith.constant 0 : index
      %18 = vector.load %arg5[%17, %c0] : memref<1024x128xbf16, #tpu.memory_space<vmem>>, vector<512x128xbf16>
      %c0_4 = arith.constant 0 : index
      %c0_5 = arith.constant 0 : index
      %19 = vector.load %arg9[%c0_4, %c0_5] : memref<512x128xf32, #tpu.memory_space<vmem>>, vector<512x128xf32>
      %c0_6 = arith.constant 0 : index
      %c0_7 = arith.constant 0 : index
      %20 = vector.load %arg4[%c0_6, %c0_7] : memref<512x512xbf16, #tpu.memory_space<vmem>>, vector<512x512xbf16>
      %cst = arith.constant dense<0.000000e+00> : vector<512x128xf32>
      %21 = tpu.matmul %20, %18, %cst {dimension_numbers = #tpu.dot_dimension_numbers<[1], [0], [0], [1], [0, 0, 1, 1], [], []>} : vector<512x512xbf16>, vector<512x128xbf16>, vector<512x128xf32> -> vector<512x128xf32>
      %22 = arith.addf %19, %21 : vector<512x128xf32>
      %c0_8 = arith.constant 0 : index
      %c0_9 = arith.constant 0 : index
      %23 = vector.load %arg9[%c0_8, %c0_9] : memref<512x128xf32, #tpu.memory_space<vmem>>, vector<512x128xf32>
      tpu.vector_store %arg9[%c0_8, %c0_9], %22 {strides = array<i32>} : memref<512x128xf32, #tpu.memory_space<vmem>>, vector<512x128xf32>,
    } else {
    }
    %c0_i32_2 = arith.constant 0 : i32
    %8 = arith.cmpi eq, %arg1, %c0_i32_2 : i32
    %9 = arith.extui %8 : i1 to i32
    %c0_i32_3 = arith.constant 0 : i32
    %10 = arith.cmpi ne, %9, %c0_i32_3 : i32
    scf.if %10 {
      %c0 = arith.constant 0 : index
      %c0_4 = arith.constant 0 : index
      %11 = vector.load %arg9[%c0, %c0_4] : memref<512x128xf32, #tpu.memory_space<vmem>>, vector<512x128xf32>
      %c0_5 = arith.constant 0 : index
      %c0_6 = arith.constant 0 : index
      %12 = vector.load %arg6[%c0_5, %c0_6] : memref<1x128xf32, #tpu.memory_space<vmem>>, vector<1x128xf32>
      %13 = vector.broadcast %12 : vector<1x128xf32> to vector<512x128xf32>
      %14 = arith.addf %11, %13 : vector<512x128xf32>
      %cst = arith.constant 0.000000e+00 : f32
      %15 = vector.broadcast %cst : f32 to vector<512x128xf32>
      %16 = arith.maximumf %14, %15 : vector<512x128xf32>
      %17 = arith.truncf %16 : vector<512x128xf32> to vector<512x128xbf16>
      %c0_7 = arith.constant 0 : index
      %c0_8 = arith.constant 0 : index
      %18 = vector.load %arg7[%c0_7, %c0_8] : memref<128x128xbf16, #tpu.memory_space<vmem>>, vector<128x128xbf16>
      %cst_9 = arith.constant dense<0.000000e+00> : vector<512x128xf32>
      %19 = tpu.matmul %17, %18, %cst_9 {dimension_numbers = #tpu.dot_dimension_numbers<[1], [0], [0], [1], [0, 0, 1, 1], [], []>} : vector<512x128xbf16>, vector<128x128xbf16>, vector<512x128xf32> -> vector<512x128xf32>
      %20 = arith.truncf %19 : vector<512x128xf32> to vector<512x128xbf16>
      %c0_10 = arith.constant 0 : index
      %c0_11 = arith.constant 0 : index
      %21 = vector.load %arg8[%c0_10, %c0_11] : memref<512x128xbf16, #tpu.memory_space<vmem>>, vector<512x128xbf16>
      tpu.vector_store %arg8[%c0_10, %c0_11], %20 {strides = array<i32>} : memref<512x128xbf16, #tpu.memory_space<vmem>>, vector<512x128xbf16>,
    } else {
    }
    return
  }
  func.func @transform_0(%arg0: i32, %arg1: i32, %arg2: memref<2xi32, #tpu.memory_space<smem>>, %arg3: memref<2xi32, #tpu.memory_space<smem>>) -> (i32, i32) {
    %c1_i32 = arith.constant 1 : i32
    %0 = arith.muli %arg0, %c1_i32 : i32
    %1 = arith.addi %0, %arg1 : i32
    %2 = arith.index_cast %1 : i32 to index
    %3 = memref.load %arg2[%2] : memref<2xi32, #tpu.memory_space<smem>>
    %c0_i32 = arith.constant 0 : i32
    return %arg0, %3 : i32, i32
  }
  func.func @transform_1(%arg0: i32, %arg1: i32, %arg2: memref<2xi32, #tpu.memory_space<smem>>, %arg3: memref<2xi32, #tpu.memory_space<smem>>) -> (i32, i32) {
    %c0_i32 = arith.constant 0 : i32
    %c0_i32_0 = arith.constant 0 : i32
    %c0_i32_1 = arith.constant 0 : i32
    return %c0_i32, %c0_i32_0 : i32, i32
  }
  func.func @transform_2(%arg0: i32, %arg1: i32, %arg2: memref<2xi32, #tpu.memory_space<smem>>, %arg3: memref<2xi32, #tpu.memory_space<smem>>) -> (i32, i32) {
    %c0_i32 = arith.constant 0 : i32
    %c0_i32_0 = arith.constant 0 : i32
    %c0_i32_1 = arith.constant 0 : i32
    return %c0_i32, %c0_i32_0 : i32, i32
  }
  func.func @transform_3(%arg0: i32, %arg1: i32, %arg2: memref<2xi32, #tpu.memory_space<smem>>, %arg3: memref<2xi32, #tpu.memory_space<smem>>) -> (i32, i32) {
    %c0_i32 = arith.constant 0 : i32
    %c0_i32_0 = arith.constant 0 : i32
    %c0_i32_1 = arith.constant 0 : i32
    return %c0_i32, %c0_i32_0 : i32, i32
  }
  func.func @transform_4(%arg0: i32, %arg1: i32, %arg2: memref<2xi32, #tpu.memory_space<smem>>, %arg3: memref<2xi32, #tpu.memory_space<smem>>) -> (i32, i32) {
    %c0_i32 = arith.constant 0 : i32
    %c0_i32_0 = arith.constant 0 : i32
    return %arg0, %c0_i32 : i32, i32
  }
}

module attributes {stable_mosaic.version = 11 : i64} {
  func.func @_project_kernel(%arg0: i32, %arg1: memref<1024x128xbf16, #tpu.memory_space<vmem>>, %arg2: memref<128x128xbf16, #tpu.memory_space<vmem>>, %arg3: memref<1024x128xbf16, #tpu.memory_space<vmem>>) attributes {dimension_semantics = [#tpu.dimension_semantics<parallel>], iteration_bounds = array<i64: 1>, scalar_prefetch = 0 : i64, scratch_operands = 0 : i64, tpu.core_type = #tpu.core_type<tc>, window_params = [{transform_indices = @transform_0, window_bounds = array<i64: 1024, 128>}, {pipeline_mode = #tpu.pipeline_mode<synchronous>, transform_indices = @transform_1, window_bounds = array<i64: 128, 128>}, {transform_indices = @transform_2, window_bounds = array<i64: 1024, 128>}]} {
    %c0 = arith.constant 0 : index
    %c0_0 = arith.constant 0 : index
    %0 = vector.load %arg1[%c0, %c0_0] : memref<1024x128xbf16, #tpu.memory_space<vmem>>, vector<1024x128xbf16>
    %c0_1 = arith.constant 0 : index
    %c0_2 = arith.constant 0 : index
    %1 = vector.load %arg2[%c0_1, %c0_2] : memref<128x128xbf16, #tpu.memory_space<vmem>>, vector<128x128xbf16>
    %cst = arith.constant dense<0.000000e+00> : vector<1024x128xf32>
    %2 = tpu.matmul %0, %1, %cst {dimension_numbers = #tpu.dot_dimension_numbers<[1], [0], [0], [1], [0, 0, 1, 1], [], []>} : vector<1024x128xbf16>, vector<128x128xbf16>, vector<1024x128xf32> -> vector<1024x128xf32>
    %3 = arith.truncf %2 : vector<1024x128xf32> to vector<1024x128xbf16>
    %c0_3 = arith.constant 0 : index
    %c0_4 = arith.constant 0 : index
    %4 = vector.load %arg3[%c0_3, %c0_4] : memref<1024x128xbf16, #tpu.memory_space<vmem>>, vector<1024x128xbf16>
    tpu.vector_store %arg3[%c0_3, %c0_4], %3 {strides = array<i32>} : memref<1024x128xbf16, #tpu.memory_space<vmem>>, vector<1024x128xbf16>,
    return
  }
  func.func @transform_0(%arg0: i32) -> (i32, i32) {
    %c0_i32 = arith.constant 0 : i32
    %c0_i32_0 = arith.constant 0 : i32
    return %arg0, %c0_i32 : i32, i32
  }
  func.func @transform_1(%arg0: i32) -> (i32, i32) {
    %c0_i32 = arith.constant 0 : i32
    %c0_i32_0 = arith.constant 0 : i32
    %c0_i32_1 = arith.constant 0 : i32
    return %c0_i32, %c0_i32_0 : i32, i32
  }
  func.func @transform_2(%arg0: i32) -> (i32, i32) {
    %c0_i32 = arith.constant 0 : i32
    %c0_i32_0 = arith.constant 0 : i32
    return %arg0, %c0_i32 : i32, i32
  }
}

module attributes {stable_mosaic.version = 11 : i64} {
  func.func @_aggregate_kernel(%arg0: i32, %arg1: i32, %arg2: memref<2xi32, #tpu.memory_space<smem>>, %arg3: memref<2xi32, #tpu.memory_space<smem>>, %arg4: memref<512x512xbf16, #tpu.memory_space<vmem>>, %arg5: memref<1024x128xbf16, #tpu.memory_space<vmem>>, %arg6: memref<1x128xf32, #tpu.memory_space<vmem>>, %arg7: memref<512x128xf32, #tpu.memory_space<vmem>>, %arg8: memref<512x128xf32, #tpu.memory_space<vmem>>) attributes {dimension_semantics = [#tpu.dimension_semantics<parallel>, #tpu.dimension_semantics<arbitrary>], iteration_bounds = array<i64: 2, 1>, scalar_prefetch = 2 : i64, scratch_operands = 1 : i64, tpu.core_type = #tpu.core_type<tc>, window_params = [{transform_indices = @transform_0, window_bounds = array<i64: 512, 512>}, {pipeline_mode = #tpu.pipeline_mode<synchronous>, transform_indices = @transform_1, window_bounds = array<i64: 1024, 128>}, {pipeline_mode = #tpu.pipeline_mode<synchronous>, transform_indices = @transform_2, window_bounds = array<i64: 1, 128>}, {transform_indices = @transform_3, window_bounds = array<i64: 512, 128>}]} {
    %c0_i32 = arith.constant 0 : i32
    %0 = arith.cmpi eq, %arg1, %c0_i32 : i32
    %1 = arith.extui %0 : i1 to i32
    %c0_i32_0 = arith.constant 0 : i32
    %2 = arith.cmpi ne, %1, %c0_i32_0 : i32
    scf.if %2 {
      %cst = arith.constant 0.000000e+00 : f32
      %11 = vector.broadcast %cst : f32 to vector<512x128xf32>
      %c0 = arith.constant 0 : index
      %c0_4 = arith.constant 0 : index
      %12 = vector.load %arg8[%c0, %c0_4] : memref<512x128xf32, #tpu.memory_space<vmem>>, vector<512x128xf32>
      tpu.vector_store %arg8[%c0, %c0_4], %11 {strides = array<i32>} : memref<512x128xf32, #tpu.memory_space<vmem>>, vector<512x128xf32>,
    } else {
    }
    %3 = arith.index_cast %arg0 : i32 to index
    %4 = memref.load %arg3[%3] : memref<2xi32, #tpu.memory_space<smem>>
    %5 = arith.cmpi slt, %arg1, %4 : i32
    %6 = arith.extui %5 : i1 to i32
    %c0_i32_1 = arith.constant 0 : i32
    %7 = arith.cmpi ne, %6, %c0_i32_1 : i32
    scf.if %7 {
      %c1_i32 = arith.constant 1 : i32
      %11 = arith.muli %arg0, %c1_i32 : i32
      %12 = arith.addi %11, %arg1 : i32
      %13 = arith.index_cast %12 : i32 to index
      %14 = memref.load %arg2[%13] : memref<2xi32, #tpu.memory_space<smem>>
      %c512_i32 = arith.constant 512 : i32
      %15 = arith.muli %14, %c512_i32 : i32
      %16 = tpu.assume_multiple %15, 512 : i32
      %17 = arith.index_cast %16 : i32 to index
      %c0 = arith.constant 0 : index
      %18 = vector.load %arg5[%17, %c0] : memref<1024x128xbf16, #tpu.memory_space<vmem>>, vector<512x128xbf16>
      %c0_4 = arith.constant 0 : index
      %c0_5 = arith.constant 0 : index
      %19 = vector.load %arg8[%c0_4, %c0_5] : memref<512x128xf32, #tpu.memory_space<vmem>>, vector<512x128xf32>
      %c0_6 = arith.constant 0 : index
      %c0_7 = arith.constant 0 : index
      %20 = vector.load %arg4[%c0_6, %c0_7] : memref<512x512xbf16, #tpu.memory_space<vmem>>, vector<512x512xbf16>
      %cst = arith.constant dense<0.000000e+00> : vector<512x128xf32>
      %21 = tpu.matmul %20, %18, %cst {dimension_numbers = #tpu.dot_dimension_numbers<[1], [0], [0], [1], [0, 0, 1, 1], [], []>} : vector<512x512xbf16>, vector<512x128xbf16>, vector<512x128xf32> -> vector<512x128xf32>
      %22 = arith.addf %19, %21 : vector<512x128xf32>
      %c0_8 = arith.constant 0 : index
      %c0_9 = arith.constant 0 : index
      %23 = vector.load %arg8[%c0_8, %c0_9] : memref<512x128xf32, #tpu.memory_space<vmem>>, vector<512x128xf32>
      tpu.vector_store %arg8[%c0_8, %c0_9], %22 {strides = array<i32>} : memref<512x128xf32, #tpu.memory_space<vmem>>, vector<512x128xf32>,
    } else {
    }
    %c0_i32_2 = arith.constant 0 : i32
    %8 = arith.cmpi eq, %arg1, %c0_i32_2 : i32
    %9 = arith.extui %8 : i1 to i32
    %c0_i32_3 = arith.constant 0 : i32
    %10 = arith.cmpi ne, %9, %c0_i32_3 : i32
    scf.if %10 {
      %c0 = arith.constant 0 : index
      %c0_4 = arith.constant 0 : index
      %11 = vector.load %arg8[%c0, %c0_4] : memref<512x128xf32, #tpu.memory_space<vmem>>, vector<512x128xf32>
      %c0_5 = arith.constant 0 : index
      %c0_6 = arith.constant 0 : index
      %12 = vector.load %arg6[%c0_5, %c0_6] : memref<1x128xf32, #tpu.memory_space<vmem>>, vector<1x128xf32>
      %13 = vector.broadcast %12 : vector<1x128xf32> to vector<512x128xf32>
      %14 = arith.addf %11, %13 : vector<512x128xf32>
      %c0_7 = arith.constant 0 : index
      %c0_8 = arith.constant 0 : index
      %15 = vector.load %arg7[%c0_7, %c0_8] : memref<512x128xf32, #tpu.memory_space<vmem>>, vector<512x128xf32>
      tpu.vector_store %arg7[%c0_7, %c0_8], %14 {strides = array<i32>} : memref<512x128xf32, #tpu.memory_space<vmem>>, vector<512x128xf32>,
    } else {
    }
    return
  }
  func.func @transform_0(%arg0: i32, %arg1: i32, %arg2: memref<2xi32, #tpu.memory_space<smem>>, %arg3: memref<2xi32, #tpu.memory_space<smem>>) -> (i32, i32) {
    %c1_i32 = arith.constant 1 : i32
    %0 = arith.muli %arg0, %c1_i32 : i32
    %1 = arith.addi %0, %arg1 : i32
    %2 = arith.index_cast %1 : i32 to index
    %3 = memref.load %arg2[%2] : memref<2xi32, #tpu.memory_space<smem>>
    %c0_i32 = arith.constant 0 : i32
    return %arg0, %3 : i32, i32
  }
  func.func @transform_1(%arg0: i32, %arg1: i32, %arg2: memref<2xi32, #tpu.memory_space<smem>>, %arg3: memref<2xi32, #tpu.memory_space<smem>>) -> (i32, i32) {
    %c0_i32 = arith.constant 0 : i32
    %c0_i32_0 = arith.constant 0 : i32
    %c0_i32_1 = arith.constant 0 : i32
    return %c0_i32, %c0_i32_0 : i32, i32
  }
  func.func @transform_2(%arg0: i32, %arg1: i32, %arg2: memref<2xi32, #tpu.memory_space<smem>>, %arg3: memref<2xi32, #tpu.memory_space<smem>>) -> (i32, i32) {
    %c0_i32 = arith.constant 0 : i32
    %c0_i32_0 = arith.constant 0 : i32
    %c0_i32_1 = arith.constant 0 : i32
    return %c0_i32, %c0_i32_0 : i32, i32
  }
  func.func @transform_3(%arg0: i32, %arg1: i32, %arg2: memref<2xi32, #tpu.memory_space<smem>>, %arg3: memref<2xi32, #tpu.memory_space<smem>>) -> (i32, i32) {
    %c0_i32 = arith.constant 0 : i32
    %c0_i32_0 = arith.constant 0 : i32
    return %arg0, %c0_i32 : i32, i32
  }
}

</mosaic_0001>

<llo_original>
// kernel: _gcn_forward_padded.3
$region0: #{_gcn_forward_padded.3}
  #allocation0 [shape = 'u32[]', space=smem, size = 0x4, offset = 0x4, fixed_abs, tag = 'smem constant byte address 0x4 - core index']
  #allocation1 [shape = 'u32[144,128]{1,0:T(1,128)}', space=vmem, size = 0x12000, scoped, tag = 'internal scratch']
  %s0 = inlined_call_operand.hbm [shape: bf16[1024,128], index: 0, kind: input, shape index: {}]
  %s1 = inlined_call_operand.hbm [shape: bf16[128,128], index: 1, kind: input, shape index: {}]
  %s2 = inlined_call_operand.vmem [shape: bf16[1024,128], index: 2, kind: output, shape index: {}]
  %s3 = sld [smem:[#allocation0]]
  $region26: #{_gcn_forward_padded.3} parent=0
    _
  %s5 = ssub.s32 1, %s3
  %s6 = scalar_select 0, %s5, %s3
  $region1: #{_gcn_forward_padded.3} parent=0
    #allocation2 [shape = 'u8[262144]{0}', space=vmem, size = 0x40000, scoped, tag = 'input window, operand 0, single buffered']
    #allocation3 [shape = 's32[1]{0}', space=sflag, size = 0x4, scoped, tag = 'scoped memory for _gcn_forward_padded.3']
    #allocation4 [shape = 'u8[32768]{0}', space=vmem, size = 0x8000, scoped, tag = 'input window, operand 1, single buffered']
    #allocation5 [shape = 's32[1]{0}', space=sflag, size = 0x4, scoped, tag = 'scoped memory for _gcn_forward_padded.3']
    %7 = vsyncpa [#allocation3], 0
    %8 = vsyncpa [#allocation5], 0
    // Predicated region
    $region2: #{_gcn_forward_padded.3} parent=1 // pred_check
      _
    $region3: #{_gcn_forward_padded.3} parent=1 // pred_check_branch
      %10 = sbr.rel (0) target = $region5
    $region4: #{_gcn_forward_padded.3} parent=1 // pred_region
      %s12 = ssub.s32 8192, 8192
      %13 = vsyncadd [#allocation3], %s12
      %s14 = sshll.u32 [#allocation2], 4
      %s15 = int_to_ptr.vmem [resolvable:$true] %s14
      %20 = dma.hbm_to_vmem [thread:$0]  %s0, 8192, %s15, [#allocation3], 64, 64, 4
    $region5: #{_gcn_forward_padded.3} parent=1 // pred_fallthru
      _
    // Predicated region
    $region6: #{_gcn_forward_padded.3} parent=1 // pred_check
      _
    $region7: #{_gcn_forward_padded.3} parent=1 // pred_check_branch
      %22 = sbr.rel (0) target = $region9
    $region8: #{_gcn_forward_padded.3} parent=1 // pred_region
      %s24 = ssub.s32 1024, 1024
      %25 = vsyncadd [#allocation5], %s24
      %s26 = sshll.u32 [#allocation4], 4
      %s27 = int_to_ptr.vmem [resolvable:$true] %s26
      %32 = dma.hbm_to_vmem [thread:$0]  %s1, 1024, %s27, [#allocation5], 64, 64, 4
    $region9: #{_gcn_forward_padded.3} parent=1 // pred_fallthru
      _
    // Predicated region
    $region10: #{_gcn_forward_padded.3} parent=1 // pred_check
      _
    $region11: #{_gcn_forward_padded.3} parent=1 // pred_check_branch
      %34 = sbr.rel (0) target = $region13
    $region12: #{_gcn_forward_padded.3} parent=1 // pred_region
      %35 = dma.done [#allocation3], 8192
    $region13: #{_gcn_forward_padded.3} parent=1 // pred_fallthru
      _
    // Predicated region
    $region14: #{_gcn_forward_padded.3} parent=1 // pred_check
      _
    $region15: #{_gcn_forward_padded.3} parent=1 // pred_check_branch
      %37 = sbr.rel (0) target = $region17
    $region16: #{_gcn_forward_padded.3} parent=1 // pred_region
      %38 = dma.done [#allocation5], 1024
    $region17: #{_gcn_forward_padded.3} parent=1 // pred_fallthru
      _
    %v40 = vld [vmem:[#allocation2] sm:$0xf]
    %v41 = vld [vmem:[#allocation2 + $0x4] sm:$0xf]
    %v42 = vld [vmem:[#allocation2 + $0x8] sm:$0xf]
    %v43 = vld [vmem:[#allocation2 + $0xc] sm:$0xf]
    %v44 = vld [vmem:[#allocation2 + $0x10] sm:$0xf]
    %v45 = vld [vmem:[#allocation2 + $0x14] sm:$0xf]
    %v46 = vld [vmem:[#allocation2 + $0x18] sm:$0xf]
    %v47 = vld [vmem:[#allocation2 + $0x1c] sm:$0xf]
    %v48 = vld [vmem:[#allocation2 + $0x20] sm:$0xf]
    %v49 = vld [vmem:[#allocation2 + $0x24] sm:$0xf]
    %v50 = vld [vmem:[#allocation2 + $0x28] sm:$0xf]
    %v51 = vld [vmem:[#allocation2 + $0x2c] sm:$0xf]
    %v52 = vld [vmem:[#allocation2 + $0x30] sm:$0xf]
    %v53 = vld [vmem:[#allocation2 + $0x34] sm:$0xf]
    %v54 = vld [vmem:[#allocation2 + $0x38] sm:$0xf]
    %v55 = vld [vmem:[#allocation2 + $0x3c] sm:$0xf]
    %v56 = vld [vmem:[#allocation2 + $0x40] sm:$0xf]
    %v57 = vld [vmem:[#allocation2 + $0x44] sm:$0xf]
    %v58 = vld [vmem:[#allocation2 + $0x48] sm:$0xf]
    %v59 = vld [vmem:[#allocation2 + $0x4c] sm:$0xf]
    %v60 = vld [vmem:[#allocation2 + $0x50] sm:$0xf]
    %v61 = vld [vmem:[#allocation2 + $0x54] sm:$0xf]
    %v62 = vld [vmem:[#allocation2 + $0x58] sm:$0xf]
    %v63 = vld [vmem:[#allocation2 + $0x5c] sm:$0xf]
    %v64 = vld [vmem:[#allocation2 + $0x60] sm:$0xf]
    %v65 = vld [vmem:[#allocation2 + $0x64] sm:$0xf]
    %v66 = vld [vmem:[#allocation2 + $0x68] sm:$0xf]
    %v67 = vld [vmem:[#allocation2 + $0x6c] sm:$0xf]
    %v68 = vld [vmem:[#allocation2 + $0x70] sm:$0xf]
    %v69 = vld [vmem:[#allocation2 + $0x74] sm:$0xf]
    %v70 = vld [vmem:[#allocation2 + $0x78] sm:$0xf]
    %v71 = vld [vmem:[#allocation2 + $0x7c] sm:$0xf]
    %v72 = vld [vmem:[#allocation2 + $0x80] sm:$0xf]
    %v73 = vld [vmem:[#allocation2 + $0x84] sm:$0xf]
    %v74 = vld [vmem:[#allocation2 + $0x88] sm:$0xf]
    %v75 = vld [vmem:[#allocation2 + $0x8c] sm:$0xf]
    %v76 = vld [vmem:[#allocation2 + $0x90] sm:$0xf]
    %v77 = vld [vmem:[#allocation2 + $0x94] sm:$0xf]
    %v78 = vld [vmem:[#allocation2 + $0x98] sm:$0xf]
    %v79 = vld [vmem:[#allocation2 + $0x9c] sm:$0xf]
    %v80 = vld [vmem:[#allocation2 + $0xa0] sm:$0xf]
    %v81 = vld [vmem:[#allocation2 + $0xa4] sm:$0xf]
    %v82 = vld [vmem:[#allocation2 + $0xa8] sm:$0xf]
    %v83 = vld [vmem:[#allocation2 + $0xac] sm:$0xf]
    %v84 = vld [vmem:[#allocation2 + $0xb0] sm:$0xf]
    %v85 = vld [vmem:[#allocation2 + $0xb4] sm:$0xf]
    %v86 = vld [vmem:[#allocation2 + $0xb8] sm:$0xf]
    %v87 = vld [vmem:[#allocation2 + $0xbc] sm:$0xf]
    %v88 = vld [vmem:[#allocation2 + $0xc0] sm:$0xf]
    %v89 = vld [vmem:[#allocation2 + $0xc4] sm:$0xf]
    %v90 = vld [vmem:[#allocation2 + $0xc8] sm:$0xf]
    %v91 = vld [vmem:[#allocation2 + $0xcc] sm:$0xf]
    %v92 = vld [vmem:[#allocation2 + $0xd0] sm:$0xf]
    %v93 = vld [vmem:[#allocation2 + $0xd4] sm:$0xf]
    %v94 = vld [vmem:[#allocation2 + $0xd8] sm:$0xf]
    %v95 = vld [vmem:[#allocation2 + $0xdc] sm:$0xf]
    %v96 = vld [vmem:[#allocation2 + $0xe0] sm:$0xf]
    %v97 = vld [vmem:[#allocation2 + $0xe4] sm:$0xf]
    %v98 = vld [vmem:[#allocation2 + $0xe8] sm:$0xf]
    %v99 = vld [vmem:[#allocation2 + $0xec] sm:$0xf]
    %v100 = vld [vmem:[#allocation2 + $0xf0] sm:$0xf]
    %v101 = vld [vmem:[#allocation2 + $0xf4] sm:$0xf]
    %v102 = vld [vmem:[#allocation2 + $0xf8] sm:$0xf]
    %v103 = vld [vmem:[#allocation2 + $0xfc] sm:$0xf]
    %v104 = vld [vmem:[#allocation2 + $0x100] sm:$0xf]
    %v105 = vld [vmem:[#allocation2 + $0x104] sm:$0xf]
    %v106 = vld [vmem:[#allocation2 + $0x108] sm:$0xf]
    %v107 = vld [vmem:[#allocation2 + $0x10c] sm:$0xf]
    %v108 = vld [vmem:[#allocation2 + $0x110] sm:$0xf]
    %v109 = vld [vmem:[#allocation2 + $0x114] sm:$0xf]
    %v110 = vld [vmem:[#allocation2 + $0x118] sm:$0xf]
    %v111 = vld [vmem:[#allocation2 + $0x11c] sm:$0xf]
    %v112 = vld [vmem:[#allocation2 + $0x120] sm:$0xf]
    %v113 = vld [vmem:[#allocation2 + $0x124] sm:$0xf]
    %v114 = vld [vmem:[#allocation2 + $0x128] sm:$0xf]
    %v115 = vld [vmem:[#allocation2 + $0x12c] sm:$0xf]
    %v116 = vld [vmem:[#allocation2 + $0x130] sm:$0xf]
    %v117 = vld [vmem:[#allocation2 + $0x134] sm:$0xf]
    %v118 = vld [vmem:[#allocation2 + $0x138] sm:$0xf]
    %v119 = vld [vmem:[#allocation2 + $0x13c] sm:$0xf]
    %v120 = vld [vmem:[#allocation2 + $0x140] sm:$0xf]
    %v121 = vld [vmem:[#allocation2 + $0x144] sm:$0xf]
    %v122 = vld [vmem:[#allocation2 + $0x148] sm:$0xf]
    %v123 = vld [vmem:[#allocation2 + $0x14c] sm:$0xf]
    %v124 = vld [vmem:[#allocation2 + $0x150] sm:$0xf]
    %v125 = vld [vmem:[#allocation2 + $0x154] sm:$0xf]
    %v126 = vld [vmem:[#allocation2 + $0x158] sm:$0xf]
    %v127 = vld [vmem:[#allocation2 + $0x15c] sm:$0xf]
    %v128 = vld [vmem:[#allocation2 + $0x160] sm:$0xf]
    %v129 = vld [vmem:[#allocation2 + $0x164] sm:$0xf]
    %v130 = vld [vmem:[#allocation2 + $0x168] sm:$0xf]
    %v131 = vld [vmem:[#allocation2 + $0x16c] sm:$0xf]
    %v132 = vld [vmem:[#allocation2 + $0x170] sm:$0xf]
    %v133 = vld [vmem:[#allocation2 + $0x174] sm:$0xf]
    %v134 = vld [vmem:[#allocation2 + $0x178] sm:$0xf]
    %v135 = vld [vmem:[#allocation2 + $0x17c] sm:$0xf]
    %v136 = vld [vmem:[#allocation2 + $0x180] sm:$0xf]
    %v137 = vld [vmem:[#allocation2 + $0x184] sm:$0xf]
    %v138 = vld [vmem:[#allocation2 + $0x188] sm:$0xf]
    %v139 = vld [vmem:[#allocation2 + $0x18c] sm:$0xf]
    %v140 = vld [vmem:[#allocation2 + $0x190] sm:$0xf]
    %v141 = vld [vmem:[#allocation2 + $0x194] sm:$0xf]
    %v142 = vld [vmem:[#allocation2 + $0x198] sm:$0xf]
    %v143 = vld [vmem:[#allocation2 + $0x19c] sm:$0xf]
    %v144 = vld [vmem:[#allocation2 + $0x1a0] sm:$0xf]
    %v145 = vld [vmem:[#allocation2 + $0x1a4] sm:$0xf]
    %v146 = vld [vmem:[#allocation2 + $0x1a8] sm:$0xf]
    %v147 = vld [vmem:[#allocation2 + $0x1ac] sm:$0xf]
    %v148 = vld [vmem:[#allocation2 + $0x1b0] sm:$0xf]
    %v149 = vld [vmem:[#allocation2 + $0x1b4] sm:$0xf]
    %v150 = vld [vmem:[#allocation2 + $0x1b8] sm:$0xf]
    %v151 = vld [vmem:[#allocation2 + $0x1bc] sm:$0xf]
    %v152 = vld [vmem:[#allocation2 + $0x1c0] sm:$0xf]
    %v153 = vld [vmem:[#allocation2 + $0x1c4] sm:$0xf]
    %v154 = vld [vmem:[#allocation2 + $0x1c8] sm:$0xf]
    %v155 = vld [vmem:[#allocation2 + $0x1cc] sm:$0xf]
    %v156 = vld [vmem:[#allocation2 + $0x1d0] sm:$0xf]
    %v157 = vld [vmem:[#allocation2 + $0x1d4] sm:$0xf]
    %v158 = vld [vmem:[#allocation2 + $0x1d8] sm:$0xf]
    %v159 = vld [vmem:[#allocation2 + $0x1dc] sm:$0xf]
    %v160 = vld [vmem:[#allocation2 + $0x1e0] sm:$0xf]
    %v161 = vld [vmem:[#allocation2 + $0x1e4] sm:$0xf]
    %v162 = vld [vmem:[#allocation2 + $0x1e8] sm:$0xf]
    %v163 = vld [vmem:[#allocation2 + $0x1ec] sm:$0xf]
    %v164 = vld [vmem:[#allocation2 + $0x1f0] sm:$0xf]
    %v165 = vld [vmem:[#allocation2 + $0x1f4] sm:$0xf]
    %v166 = vld [vmem:[#allocation2 + $0x1f8] sm:$0xf]
    %v167 = vld [vmem:[#allocation2 + $0x1fc] sm:$0xf]
    %v168 = vld [vmem:[#allocation4] sm:$0xf]
    %v169 = vld [vmem:[#allocation4 + $0x4] sm:$0xf]
    %v170 = vld [vmem:[#allocation4 + $0x8] sm:$0xf]
    %v171 = vld [vmem:[#allocation4 + $0xc] sm:$0xf]
    %v172 = vld [vmem:[#allocation4 + $0x10] sm:$0xf]
    %v173 = vld [vmem:[#allocation4 + $0x14] sm:$0xf]
    %v174 = vld [vmem:[#allocation4 + $0x18] sm:$0xf]
    %v175 = vld [vmem:[#allocation4 + $0x1c] sm:$0xf]
    %v176 = vld [vmem:[#allocation4 + $0x20] sm:$0xf]
    %v177 = vld [vmem:[#allocation4 + $0x24] sm:$0xf]
    %v178 = vld [vmem:[#allocation4 + $0x28] sm:$0xf]
    %v179 = vld [vmem:[#allocation4 + $0x2c] sm:$0xf]
    %v180 = vld [vmem:[#allocation4 + $0x30] sm:$0xf]
    %v181 = vld [vmem:[#allocation4 + $0x34] sm:$0xf]
    %v182 = vld [vmem:[#allocation4 + $0x38] sm:$0xf]
    %v183 = vld [vmem:[#allocation4 + $0x3c] sm:$0xf]
    %v312 = vunpack.c.l.b16 %v40
    %v313 = vunpack.c.l.b16 %v41
    %v314 = vunpack.c.l.b16 %v42
    %v315 = vunpack.c.l.b16 %v43
    %v316 = vunpack.c.l.b16 %v44
    %v317 = vunpack.c.l.b16 %v45
    %v318 = vunpack.c.l.b16 %v46
    %v319 = vunpack.c.l.b16 %v47
    %v320 = vunpack.c.l.b16 %v48
    %v321 = vunpack.c.l.b16 %v49
    %v322 = vunpack.c.l.b16 %v50
    %v323 = vunpack.c.l.b16 %v51
    %v324 = vunpack.c.l.b16 %v52
    %v325 = vunpack.c.l.b16 %v53
    %v326 = vunpack.c.l.b16 %v54
    %v327 = vunpack.c.l.b16 %v55
    %v328 = vunpack.c.l.b16 %v56
    %v329 = vunpack.c.l.b16 %v57
    %v330 = vunpack.c.l.b16 %v58
    %v331 = vunpack.c.l.b16 %v59
    %v332 = vunpack.c.l.b16 %v60
    %v333 = vunpack.c.l.b16 %v61
    %v334 = vunpack.c.l.b16 %v62
    %v335 = vunpack.c.l.b16 %v63
    %v336 = vunpack.c.l.b16 %v64
    %v337 = vunpack.c.l.b16 %v65
    %v338 = vunpack.c.l.b16 %v66
    %v339 = vunpack.c.l.b16 %v67
    %v340 = vunpack.c.l.b16 %v68
    %v341 = vunpack.c.l.b16 %v69
    %v342 = vunpack.c.l.b16 %v70
    %v343 = vunpack.c.l.b16 %v71
    %v344 = vunpack.c.l.b16 %v72
    %v345 = vunpack.c.l.b16 %v73
    %v346 = vunpack.c.l.b16 %v74
    %v347 = vunpack.c.l.b16 %v75
    %v348 = vunpack.c.l.b16 %v76
    %v349 = vunpack.c.l.b16 %v77
    %v350 = vunpack.c.l.b16 %v78
    %v351 = vunpack.c.l.b16 %v79
    %v352 = vunpack.c.l.b16 %v80
    %v353 = vunpack.c.l.b16 %v81
    %v354 = vunpack.c.l.b16 %v82
    %v355 = vunpack.c.l.b16 %v83
    %v356 = vunpack.c.l.b16 %v84
    %v357 = vunpack.c.l.b16 %v85
    %v358 = vunpack.c.l.b16 %v86
    %v359 = vunpack.c.l.b16 %v87
    %v360 = vunpack.c.l.b16 %v88
    %v361 = vunpack.c.l.b16 %v89
    %v362 = vunpack.c.l.b16 %v90
    %v363 = vunpack.c.l.b16 %v91
    %v364 = vunpack.c.l.b16 %v92
    %v365 = vunpack.c.l.b16 %v93
    %v366 = vunpack.c.l.b16 %v94
    %v367 = vunpack.c.l.b16 %v95
    %v368 = vunpack.c.l.b16 %v96
    %v369 = vunpack.c.l.b16 %v97
    %v370 = vunpack.c.l.b16 %v98
    %v371 = vunpack.c.l.b16 %v99
    %v372 = vunpack.c.l.b16 %v100
    %v373 = vunpack.c.l.b16 %v101
    %v374 = vunpack.c.l.b16 %v102
    %v375 = vunpack.c.l.b16 %v103
    %v376 = vunpack.c.l.b16 %v104
    %v377 = vunpack.c.l.b16 %v105
    %v378 = vunpack.c.l.b16 %v106
    %v379 = vunpack.c.l.b16 %v107
    %v380 = vunpack.c.l.b16 %v108
    %v381 = vunpack.c.l.b16 %v109
    %v382 = vunpack.c.l.b16 %v110
    %v383 = vunpack.c.l.b16 %v111
    %v384 = vunpack.c.l.b16 %v112
    %v385 = vunpack.c.l.b16 %v113
    %v386 = vunpack.c.l.b16 %v114
    %v387 = vunpack.c.l.b16 %v115
    %v388 = vunpack.c.l.b16 %v116
    %v389 = vunpack.c.l.b16 %v117
    %v390 = vunpack.c.l.b16 %v118
    %v391 = vunpack.c.l.b16 %v119
    %v392 = vunpack.c.l.b16 %v120
    %v393 = vunpack.c.l.b16 %v121
    %v394 = vunpack.c.l.b16 %v122
    %v395 = vunpack.c.l.b16 %v123
    %v396 = vunpack.c.l.b16 %v124
    %v397 = vunpack.c.l.b16 %v125
    %v398 = vunpack.c.l.b16 %v126
    %v399 = vunpack.c.l.b16 %v127
    %v400 = vunpack.c.l.b16 %v128
    %v401 = vunpack.c.l.b16 %v129
    %v402 = vunpack.c.l.b16 %v130
    %v403 = vunpack.c.l.b16 %v131
    %v404 = vunpack.c.l.b16 %v132
    %v405 = vunpack.c.l.b16 %v133
    %v406 = vunpack.c.l.b16 %v134
    %v407 = vunpack.c.l.b16 %v135
    %v408 = vunpack.c.l.b16 %v136
    %v409 = vunpack.c.l.b16 %v137
    %v410 = vunpack.c.l.b16 %v138
    %v411 = vunpack.c.l.b16 %v139
    %v412 = vunpack.c.l.b16 %v140
    %v413 = vunpack.c.l.b16 %v141
    %v414 = vunpack.c.l.b16 %v142
    %v415 = vunpack.c.l.b16 %v143
    %v416 = vunpack.c.l.b16 %v144
    %v417 = vunpack.c.l.b16 %v145
    %v418 = vunpack.c.l.b16 %v146
    %v419 = vunpack.c.l.b16 %v147
    %v420 = vunpack.c.l.b16 %v148
    %v421 = vunpack.c.l.b16 %v149
    %v422 = vunpack.c.l.b16 %v150
    %v423 = vunpack.c.l.b16 %v151
    %v424 = vunpack.c.l.b16 %v152
    %v425 = vunpack.c.l.b16 %v153
    %v426 = vunpack.c.l.b16 %v154
    %v427 = vunpack.c.l.b16 %v155
    %v428 = vunpack.c.l.b16 %v156
    %v429 = vunpack.c.l.b16 %v157
    %v430 = vunpack.c.l.b16 %v158
    %v431 = vunpack.c.l.b16 %v159
    %v432 = vunpack.c.l.b16 %v160
    %v433 = vunpack.c.l.b16 %v161
    %v434 = vunpack.c.l.b16 %v162
    %v435 = vunpack.c.l.b16 %v163
    %v436 = vunpack.c.l.b16 %v164
    %v437 = vunpack.c.l.b16 %v165
    %v438 = vunpack.c.l.b16 %v166
    %v439 = vunpack.c.l.b16 %v167
    %v440 = vpack.c.b16 %v313, %v312
    %v441 = vpack.c.b16 %v315, %v314
    %v442 = vpack.c.b16 %v317, %v316
    %v443 = vpack.c.b16 %v319, %v318
    %v444 = vpack.c.b16 %v321, %v320
    %v445 = vpack.c.b16 %v323, %v322
    %v446 = vpack.c.b16 %v325, %v324
    %v447 = vpack.c.b16 %v327, %v326
    %v448 = vpack.c.b16 %v329, %v328
    %v449 = vpack.c.b16 %v331, %v330
    %v450 = vpack.c.b16 %v333, %v332
    %v451 = vpack.c.b16 %v335, %v334
    %v452 = vpack.c.b16 %v337, %v336
    %v453 = vpack.c.b16 %v339, %v338
    %v454 = vpack.c.b16 %v341, %v340
    %v455 = vpack.c.b16 %v343, %v342
    %v456 = vpack.c.b16 %v345, %v344
    %v457 = vpack.c.b16 %v347, %v346
    %v458 = vpack.c.b16 %v349, %v348
    %v459 = vpack.c.b16 %v351, %v350
    %v460 = vpack.c.b16 %v353, %v352
    %v461 = vpack.c.b16 %v355, %v354
    %v462 = vpack.c.b16 %v357, %v356
    %v463 = vpack.c.b16 %v359, %v358
    %v464 = vpack.c.b16 %v361, %v360
    %v465 = vpack.c.b16 %v363, %v362
    %v466 = vpack.c.b16 %v365, %v364
    %v467 = vpack.c.b16 %v367, %v366
    %v468 = vpack.c.b16 %v369, %v368
    %v469 = vpack.c.b16 %v371, %v370
    %v470 = vpack.c.b16 %v373, %v372
    %v471 = vpack.c.b16 %v375, %v374
    %v472 = vpack.c.b16 %v377, %v376
    %v473 = vpack.c.b16 %v379, %v378
    %v474 = vpack.c.b16 %v381, %v380
    %v475 = vpack.c.b16 %v383, %v382
    %v476 = vpack.c.b16 %v385, %v384
    %v477 = vpack.c.b16 %v387, %v386
    %v478 = vpack.c.b16 %v389, %v388
    %v479 = vpack.c.b16 %v391, %v390
    %v480 = vpack.c.b16 %v393, %v392
    %v481 = vpack.c.b16 %v395, %v394
    %v482 = vpack.c.b16 %v397, %v396
    %v483 = vpack.c.b16 %v399, %v398
    %v484 = vpack.c.b16 %v401, %v400
    %v485 = vpack.c.b16 %v403, %v402
    %v486 = vpack.c.b16 %v405, %v404
    %v487 = vpack.c.b16 %v407, %v406
    %v488 = vpack.c.b16 %v409, %v408
    %v489 = vpack.c.b16 %v411, %v410
    %v490 = vpack.c.b16 %v413, %v412
    %v491 = vpack.c.b16 %v415, %v414
    %v492 = vpack.c.b16 %v417, %v416
    %v493 = vpack.c.b16 %v419, %v418
    %v494 = vpack.c.b16 %v421, %v420
    %v495 = vpack.c.b16 %v423, %v422
    %v496 = vpack.c.b16 %v425, %v424
    %v497 = vpack.c.b16 %v427, %v426
    %v498 = vpack.c.b16 %v429, %v428
    %v499 = vpack.c.b16 %v431, %v430
    %v500 = vpack.c.b16 %v433, %v432
    %v501 = vpack.c.b16 %v435, %v434
    %v502 = vpack.c.b16 %v437, %v436
    %v503 = vpack.c.b16 %v439, %v438
    %v584 = vunpack.c.l.b16 %v168
    %v585 = vunpack.c.l.b16 %v169
    %v586 = vunpack.c.l.b16 %v170
    %v587 = vunpack.c.l.b16 %v171
    %v588 = vunpack.c.l.b16 %v172
    %v589 = vunpack.c.l.b16 %v173
    %v590 = vunpack.c.l.b16 %v174
    %v591 = vunpack.c.l.b16 %v175
    %v592 = vunpack.c.l.b16 %v176
    %v593 = vunpack.c.l.b16 %v177
    %v594 = vunpack.c.l.b16 %v178
    %v595 = vunpack.c.l.b16 %v179
    %v596 = vunpack.c.l.b16 %v180
    %v597 = vunpack.c.l.b16 %v181
    %v598 = vunpack.c.l.b16 %v182
    %v599 = vunpack.c.l.b16 %v183
    %v600 = vpack.c.b16 %v585, %v584
    %v601 = vpack.c.b16 %v587, %v586
    %v602 = vpack.c.b16 %v589, %v588
    %v603 = vpack.c.b16 %v591, %v590
    %v604 = vpack.c.b16 %v593, %v592
    %v605 = vpack.c.b16 %v595, %v594
    %v606 = vpack.c.b16 %v597, %v596
    %v607 = vpack.c.b16 %v599, %v598
    %616 = vmatprep.subr.bf16.mxu0 0
    %617 = vmatpush1.bf16.msra.mxu0 %v600
    %618 = vmatprep.subr.bf16.mxu0 0
    %619 = vmatpush1.bf16.msra.mxu0 %v601
    %620 = vmatprep.subr.bf16.mxu0 0
    %621 = vmatpush1.bf16.msra.mxu0 %v602
    %622 = vmatprep.subr.bf16.mxu0 0
    %623 = vmatpush1.bf16.msra.mxu0 %v603
    %624 = vmatprep.subr.bf16.mxu0 0
    %625 = vmatpush1.bf16.msra.mxu0 %v604
    %626 = vmatprep.subr.bf16.mxu0 0
    %627 = vmatpush1.bf16.msra.mxu0 %v605
    %628 = vmatprep.subr.bf16.mxu0 0
    %629 = vmatpush1.bf16.msra.mxu0 %v606
    %630 = vmatprep.subr.bf16.mxu0 0
    %631 = vmatpush1.bf16.msra.mxu0 %v607
    %632 = vmatprep.subr.bf16.mxu0 0
    %633 = vmatpush1.bf16.msra.mxu0 0
    %634 = vmatprep.subr.bf16.mxu0 0
    %635 = vmatpush1.bf16.msra.mxu0 0
    %636 = vmatprep.subr.bf16.mxu0 0
    %637 = vmatpush1.bf16.msra.mxu0 0
    %638 = vmatprep.subr.bf16.mxu0 0
    %639 = vmatpush1.bf16.msra.mxu0 0
    %640 = vmatprep.subr.bf16.mxu0 0
    %641 = vmatpush1.bf16.msra.mxu0 0
    %642 = vmatprep.subr.bf16.mxu0 0
    %643 = vmatpush1.bf16.msra.mxu0 0
    %644 = vmatprep.subr.bf16.mxu0 0
    %645 = vmatpush1.bf16.msra.mxu0 0
    %646 = vmatprep.subr.bf16.mxu0 0
    %647 = vmatpush1.bf16.msra.mxu0 0
    %648 = vmatprep.mubr.bf16.mxu0 0
    %649 = vmatmul.mubr.bf16.gmra.mrb[0].mxu0 %v440
    %v650 = vpop.f32.mrb[0].mxu0
    %v651 = vadd.f32 0.0, %v650
    %v652 = vpop.f32.mrb[0].mxu0
    %v653 = vpop.f32.mrb[0].mxu0
    %v654 = vadd.f32 0.0, %v653
    %v655 = vpop.f32.mrb[0].mxu0
    %656 = vmatprep.mubr.bf16.mxu0 0
    %657 = vmatmul.mubr.bf16.gmra.mrb[0].mxu0 %v441
    %v658 = vpop.f32.mrb[0].mxu0
    %v659 = vadd.f32 0.0, %v658
    %v660 = vpop.f32.mrb[0].mxu0
    %v661 = vpop.f32.mrb[0].mxu0
    %v662 = vadd.f32 0.0, %v661
    %v663 = vpop.f32.mrb[0].mxu0
    %664 = vmatprep.mubr.bf16.mxu0 0
    %665 = vmatmul.mubr.bf16.gmra.mrb[0].mxu0 %v442
    %v666 = vpop.f32.mrb[0].mxu0
    %v667 = vadd.f32 0.0, %v666
    %v668 = vpop.f32.mrb[0].mxu0
    %v669 = vpop.f32.mrb[0].mxu0
    %v670 = vadd.f32 0.0, %v669
    %v671 = vpop.f32.mrb[0].mxu0
    %672 = vmatprep.mubr.bf16.mxu0 0
    %673 = vmatmul.mubr.bf16.gmra.mrb[0].mxu0 %v443
    %v674 = vpop.f32.mrb[0].mxu0
    %v675 = vadd.f32 0.0, %v674
    %v676 = vpop.f32.mrb[0].mxu0
    %v677 = vpop.f32.mrb[0].mxu0
    %v678 = vadd.f32 0.0, %v677
    %v679 = vpop.f32.mrb[0].mxu0
    %680 = vmatprep.mubr.bf16.mxu0 0
    %681 = vmatmul.mubr.bf16.gmra.mrb[0].mxu0 %v444
    %v682 = vpop.f32.mrb[0].mxu0
    %v683 = vadd.f32 0.0, %v682
    %v684 = vpop.f32.mrb[0].mxu0
    %v685 = vpop.f32.mrb[0].mxu0
    %v686 = vadd.f32 0.0, %v685
    %v687 = vpop.f32.mrb[0].mxu0
    %688 = vmatprep.mubr.bf16.mxu0 0
    %689 = vmatmul.mubr.bf16.gmra.mrb[0].mxu0 %v445
    %v690 = vpop.f32.mrb[0].mxu0
    %v691 = vadd.f32 0.0, %v690
    %v692 = vpop.f32.mrb[0].mxu0
    %v693 = vpop.f32.mrb[0].mxu0
    %v694 = vadd.f32 0.0, %v693
    %v695 = vpop.f32.mrb[0].mxu0
    %696 = vmatprep.mubr.bf16.mxu0 0
    %697 = vmatmul.mubr.bf16.gmra.mrb[0].mxu0 %v446
    %v698 = vpop.f32.mrb[0].mxu0
    %v699 = vadd.f32 0.0, %v698
    %v700 = vpop.f32.mrb[0].mxu0
    %v701 = vpop.f32.mrb[0].mxu0
    %v702 = vadd.f32 0.0, %v701
    %v703 = vpop.f32.mrb[0].mxu0
    %704 = vmatprep.mubr.bf16.mxu0 0
    %705 = vmatmul.mubr.bf16.gmra.mrb[0].mxu0 %v447
    %v706 = vpop.f32.mrb[0].mxu0
    %v707 = vadd.f32 0.0, %v706
    %v708 = vpop.f32.mrb[0].mxu0
    %v709 = vpop.f32.mrb[0].mxu0
    %v710 = vadd.f32 0.0, %v709
    %v711 = vpop.f32.mrb[0].mxu0
    %712 = vmatprep.mubr.bf16.mxu0 0
    %713 = vmatmul.mubr.bf16.gmra.mrb[0].mxu0 %v448
    %v714 = vpop.f32.mrb[0].mxu0
    %v715 = vadd.f32 0.0, %v714
    %v716 = vpop.f32.mrb[0].mxu0
    %v717 = vpop.f32.mrb[0].mxu0
    %v718 = vadd.f32 0.0, %v717
    %v719 = vpop.f32.mrb[0].mxu0
    %720 = vmatprep.mubr.bf16.mxu0 0
    %721 = vmatmul.mubr.bf16.gmra.mrb[0].mxu0 %v449
    %v722 = vpop.f32.mrb[0].mxu0
    %v723 = vadd.f32 0.0, %v722
    %v724 = vpop.f32.mrb[0].mxu0
    %v725 = vpop.f32.mrb[0].mxu0
    %v726 = vadd.f32 0.0, %v725
    %v727 = vpop.f32.mrb[0].mxu0
    %728 = vmatprep.mubr.bf16.mxu0 0
    %729 = vmatmul.mubr.bf16.gmra.mrb[0].mxu0 %v450
    %v730 = vpop.f32.mrb[0].mxu0
    %v731 = vadd.f32 0.0, %v730
    %v732 = vpop.f32.mrb[0].mxu0
    %v733 = vpop.f32.mrb[0].mxu0
    %v734 = vadd.f32 0.0, %v733
    %v735 = vpop.f32.mrb[0].mxu0
    %736 = vmatprep.mubr.bf16.mxu0 0
    %737 = vmatmul.mubr.bf16.gmra.mrb[0].mxu0 %v451
    %v738 = vpop.f32.mrb[0].mxu0
    %v739 = vadd.f32 0.0, %v738
    %v740 = vpop.f32.mrb[0].mxu0
    %v741 = vpop.f32.mrb[0].mxu0
    %v742 = vadd.f32 0.0, %v741
    %v743 = vpop.f32.mrb[0].mxu0
    %744 = vmatprep.mubr.bf16.mxu0 0
    %745 = vmatmul.mubr.bf16.gmra.mrb[0].mxu0 %v452
    %v746 = vpop.f32.mrb[0].mxu0
    %v747 = vadd.f32 0.0, %v746
    %v748 = vpop.f32.mrb[0].mxu0
    %v749 = vpop.f32.mrb[0].mxu0
    %v750 = vadd.f32 0.0, %v749
    %v751 = vpop.f32.mrb[0].mxu0
    %752 = vmatprep.mubr.bf16.mxu0 0
    %753 = vmatmul.mubr.bf16.gmra.mrb[0].mxu0 %v453
    %v754 = vpop.f32.mrb[0].mxu0
    %v755 = vadd.f32 0.0, %v754
    %v756 = vpop.f32.mrb[0].mxu0
    %v757 = vpop.f32.mrb[0].mxu0
    %v758 = vadd.f32 0.0, %v757
    %v759 = vpop.f32.mrb[0].mxu0
    %760 = vmatprep.mubr.bf16.mxu0 0
    %761 = vmatmul.mubr.bf16.gmra.mrb[0].mxu0 %v454
    %v762 = vpop.f32.mrb[0].mxu0
    %v763 = vadd.f32 0.0, %v762
    %v764 = vpop.f32.mrb[0].mxu0
    %v765 = vpop.f32.mrb[0].mxu0
    %v766 = vadd.f32 0.0, %v765
    %v767 = vpop.f32.mrb[0].mxu0
    %768 = vmatprep.mubr.bf16.mxu0 0
    %769 = vmatmul.mubr.bf16.gmra.mrb[0].mxu0 %v455
    %v770 = vpop.f32.mrb[0].mxu0
    %v771 = vadd.f32 0.0, %v770
    %v772 = vpop.f32.mrb[0].mxu0
    %v773 = vpop.f32.mrb[0].mxu0
    %v774 = vadd.f32 0.0, %v773
    %v775 = vpop.f32.mrb[0].mxu0
    %776 = vmatprep.mubr.bf16.mxu0 0
    %777 = vmatmul.mubr.bf16.gmra.mrb[0].mxu0 %v456
    %v778 = vpop.f32.mrb[0].mxu0
    %v779 = vadd.f32 0.0, %v778
    %v780 = vpop.f32.mrb[0].mxu0
    %v781 = vpop.f32.mrb[0].mxu0
    %v782 = vadd.f32 0.0, %v781
    %v783 = vpop.f32.mrb[0].mxu0
    %784 = vmatprep.mubr.bf16.mxu0 0
    %785 = vmatmul.mubr.bf16.gmra.mrb[0].mxu0 %v457
    %v786 = vpop.f32.mrb[0].mxu0
    %v787 = vadd.f32 0.0, %v786
    %v788 = vpop.f32.mrb[0].mxu0
    %v789 = vpop.f32.mrb[0].mxu0
    %v790 = vadd.f32 0.0, %v789
    %v791 = vpop.f32.mrb[0].mxu0
    %792 = vmatprep.mubr.bf16.mxu0 0
    %793 = vmatmul.mubr.bf16.gmra.mrb[0].mxu0 %v458
    %v794 = vpop.f32.mrb[0].mxu0
    %v795 = vadd.f32 0.0, %v794
    %v796 = vpop.f32.mrb[0].mxu0
    %v797 = vpop.f32.mrb[0].mxu0
    %v798 = vadd.f32 0.0, %v797
    %v799 = vpop.f32.mrb[0].mxu0
    %800 = vmatprep.mubr.bf16.mxu0 0
    %801 = vmatmul.mubr.bf16.gmra.mrb[0].mxu0 %v459
    %v802 = vpop.f32.mrb[0].mxu0
    %v803 = vadd.f32 0.0, %v802
    %v804 = vpop.f32.mrb[0].mxu0
    %v805 = vpop.f32.mrb[0].mxu0
    %v806 = vadd.f32 0.0, %v805
    %v807 = vpop.f32.mrb[0].mxu0
    %808 = vmatprep.mubr.bf16.mxu0 0
    %809 = vmatmul.mubr.bf16.gmra.mrb[0].mxu0 %v460
    %v810 = vpop.f32.mrb[0].mxu0
    %v811 = vadd.f32 0.0, %v810
    %v812 = vpop.f32.mrb[0].mxu0
    %v813 = vpop.f32.mrb[0].mxu0
    %v814 = vadd.f32 0.0, %v813
    %v815 = vpop.f32.mrb[0].mxu0
    %816 = vmatprep.mubr.bf16.mxu0 0
    %817 = vmatmul.mubr.bf16.gmra.mrb[0].mxu0 %v461
    %v818 = vpop.f32.mrb[0].mxu0
    %v819 = vadd.f32 0.0, %v818
    %v820 = vpop.f32.mrb[0].mxu0
    %v821 = vpop.f32.mrb[0].mxu0
    %v822 = vadd.f32 0.0, %v821
    %v823 = vpop.f32.mrb[0].mxu0
    %824 = vmatprep.mubr.bf16.mxu0 0
    %825 = vmatmul.mubr.bf16.gmra.mrb[0].mxu0 %v462
    %v826 = vpop.f32.mrb[0].mxu0
    %v827 = vadd.f32 0.0, %v826
    %v828 = vpop.f32.mrb[0].mxu0
    %v829 = vpop.f32.mrb[0].mxu0
    %v830 = vadd.f32 0.0, %v829
    %v831 = vpop.f32.mrb[0].mxu0
    %832 = vmatprep.mubr.bf16.mxu0 0
    %833 = vmatmul.mubr.bf16.gmra.mrb[0].mxu0 %v463
    %v834 = vpop.f32.mrb[0].mxu0
    %v835 = vadd.f32 0.0, %v834
    %v836 = vpop.f32.mrb[0].mxu0
    %v837 = vpop.f32.mrb[0].mxu0
    %v838 = vadd.f32 0.0, %v837
    %v839 = vpop.f32.mrb[0].mxu0
    %840 = vmatprep.mubr.bf16.mxu0 0
    %841 = vmatmul.mubr.bf16.gmra.mrb[0].mxu0 %v464
    %v842 = vpop.f32.mrb[0].mxu0
    %v843 = vadd.f32 0.0, %v842
    %v844 = vpop.f32.mrb[0].mxu0
    %v845 = vpop.f32.mrb[0].mxu0
    %v846 = vadd.f32 0.0, %v845
    %v847 = vpop.f32.mrb[0].mxu0
    %848 = vmatprep.mubr.bf16.mxu0 0
    %849 = vmatmul.mubr.bf16.gmra.mrb[0].mxu0 %v465
    %v850 = vpop.f32.mrb[0].mxu0
    %v851 = vadd.f32 0.0, %v850
    %v852 = vpop.f32.mrb[0].mxu0
    %v853 = vpop.f32.mrb[0].mxu0
    %v854 = vadd.f32 0.0, %v853
    %v855 = vpop.f32.mrb[0].mxu0
    %856 = vmatprep.mubr.bf16.mxu0 0
    %857 = vmatmul.mubr.bf16.gmra.mrb[0].mxu0 %v466
    %v858 = vpop.f32.mrb[0].mxu0
    %v859 = vadd.f32 0.0, %v858
    %v860 = vpop.f32.mrb[0].mxu0
    %v861 = vpop.f32.mrb[0].mxu0
    %v862 = vadd.f32 0.0, %v861
    %v863 = vpop.f32.mrb[0].mxu0
    %864 = vmatprep.mubr.bf16.mxu0 0
    %865 = vmatmul.mubr.bf16.gmra.mrb[0].mxu0 %v467
    %v866 = vpop.f32.mrb[0].mxu0
    %v867 = vadd.f32 0.0, %v866
    %v868 = vpop.f32.mrb[0].mxu0
    %v869 = vpop.f32.mrb[0].mxu0
    %v870 = vadd.f32 0.0, %v869
    %v871 = vpop.f32.mrb[0].mxu0
    %872 = vmatprep.mubr.bf16.mxu0 0
    %873 = vmatmul.mubr.bf16.gmra.mrb[0].mxu0 %v468
    %v874 = vpop.f32.mrb[0].mxu0
    %v875 = vadd.f32 0.0, %v874
    %v876 = vpop.f32.mrb[0].mxu0
    %v877 = vpop.f32.mrb[0].mxu0
    %v878 = vadd.f32 0.0, %v877
    %v879 = vpop.f32.mrb[0].mxu0
    %880 = vmatprep.mubr.bf16.mxu0 0
    %881 = vmatmul.mubr.bf16.gmra.mrb[0].mxu0 %v469
    %v882 = vpop.f32.mrb[0].mxu0
    %v883 = vadd.f32 0.0, %v882
    %v884 = vpop.f32.mrb[0].mxu0
    %v885 = vpop.f32.mrb[0].mxu0
    %v886 = vadd.f32 0.0, %v885
    %v887 = vpop.f32.mrb[0].mxu0
    %888 = vmatprep.mubr.bf16.mxu0 0
    %889 = vmatmul.mubr.bf16.gmra.mrb[0].mxu0 %v470
    %v890 = vpop.f32.mrb[0].mxu0
    %v891 = vadd.f32 0.0, %v890
    %v892 = vpop.f32.mrb[0].mxu0
    %v893 = vpop.f32.mrb[0].mxu0
    %v894 = vadd.f32 0.0, %v893
    %v895 = vpop.f32.mrb[0].mxu0
    %896 = vmatprep.mubr.bf16.mxu0 0
    %897 = vmatmul.mubr.bf16.gmra.mrb[0].mxu0 %v471
    %v898 = vpop.f32.mrb[0].mxu0
    %v899 = vadd.f32 0.0, %v898
    %v900 = vpop.f32.mrb[0].mxu0
    %v901 = vpop.f32.mrb[0].mxu0
    %v902 = vadd.f32 0.0, %v901
    %v903 = vpop.f32.mrb[0].mxu0
    %904 = vmatprep.mubr.bf16.mxu0 0
    %905 = vmatmul.mubr.bf16.gmra.mrb[0].mxu0 %v472
    %v906 = vpop.f32.mrb[0].mxu0
    %v907 = vadd.f32 0.0, %v906
    %v908 = vpop.f32.mrb[0].mxu0
    %v909 = vpop.f32.mrb[0].mxu0
    %v910 = vadd.f32 0.0, %v909
    %v911 = vpop.f32.mrb[0].mxu0
    %912 = vmatprep.mubr.bf16.mxu0 0
    %913 = vmatmul.mubr.bf16.gmra.mrb[0].mxu0 %v473
    %v914 = vpop.f32.mrb[0].mxu0
    %v915 = vadd.f32 0.0, %v914
    %v916 = vpop.f32.mrb[0].mxu0
    %v917 = vpop.f32.mrb[0].mxu0
    %v918 = vadd.f32 0.0, %v917
    %v919 = vpop.f32.mrb[0].mxu0
    %920 = vmatprep.mubr.bf16.mxu0 0
    %921 = vmatmul.mubr.bf16.gmra.mrb[0].mxu0 %v474
    %v922 = vpop.f32.mrb[0].mxu0
    %v923 = vadd.f32 0.0, %v922
    %v924 = vpop.f32.mrb[0].mxu0
    %v925 = vpop.f32.mrb[0].mxu0
    %v926 = vadd.f32 0.0, %v925
    %v927 = vpop.f32.mrb[0].mxu0
    %928 = vmatprep.mubr.bf16.mxu0 0
    %929 = vmatmul.mubr.bf16.gmra.mrb[0].mxu0 %v475
    %v930 = vpop.f32.mrb[0].mxu0
    %v931 = vadd.f32 0.0, %v930
    %v932 = vpop.f32.mrb[0].mxu0
    %v933 = vpop.f32.mrb[0].mxu0
    %v934 = vadd.f32 0.0, %v933
    %v935 = vpop.f32.mrb[0].mxu0
    %936 = vmatprep.mubr.bf16.mxu0 0
    %937 = vmatmul.mubr.bf16.gmra.mrb[0].mxu0 %v476
    %v938 = vpop.f32.mrb[0].mxu0
    %v939 = vadd.f32 0.0, %v938
    %v940 = vpop.f32.mrb[0].mxu0
    %v941 = vpop.f32.mrb[0].mxu0
    %v942 = vadd.f32 0.0, %v941
    %v943 = vpop.f32.mrb[0].mxu0
    %944 = vmatprep.mubr.bf16.mxu0 0
    %945 = vmatmul.mubr.bf16.gmra.mrb[0].mxu0 %v477
    %v946 = vpop.f32.mrb[0].mxu0
    %v947 = vadd.f32 0.0, %v946
    %v948 = vpop.f32.mrb[0].mxu0
    %v949 = vpop.f32.mrb[0].mxu0
    %v950 = vadd.f32 0.0, %v949
    %v951 = vpop.f32.mrb[0].mxu0
    %952 = vmatprep.mubr.bf16.mxu0 0
    %953 = vmatmul.mubr.bf16.gmra.mrb[0].mxu0 %v478
    %v954 = vpop.f32.mrb[0].mxu0
    %v955 = vadd.f32 0.0, %v954
    %v956 = vpop.f32.mrb[0].mxu0
    %v957 = vpop.f32.mrb[0].mxu0
    %v958 = vadd.f32 0.0, %v957
    %v959 = vpop.f32.mrb[0].mxu0
    %960 = vmatprep.mubr.bf16.mxu0 0
    %961 = vmatmul.mubr.bf16.gmra.mrb[0].mxu0 %v479
    %v962 = vpop.f32.mrb[0].mxu0
    %v963 = vadd.f32 0.0, %v962
    %v964 = vpop.f32.mrb[0].mxu0
    %v965 = vpop.f32.mrb[0].mxu0
    %v966 = vadd.f32 0.0, %v965
    %v967 = vpop.f32.mrb[0].mxu0
    %968 = vmatprep.mubr.bf16.mxu0 0
    %969 = vmatmul.mubr.bf16.gmra.mrb[0].mxu0 %v480
    %v970 = vpop.f32.mrb[0].mxu0
    %v971 = vadd.f32 0.0, %v970
    %v972 = vpop.f32.mrb[0].mxu0
    %v973 = vpop.f32.mrb[0].mxu0
    %v974 = vadd.f32 0.0, %v973
    %v975 = vpop.f32.mrb[0].mxu0
    %976 = vmatprep.mubr.bf16.mxu0 0
    %977 = vmatmul.mubr.bf16.gmra.mrb[0].mxu0 %v481
    %v978 = vpop.f32.mrb[0].mxu0
    %v979 = vadd.f32 0.0, %v978
    %v980 = vpop.f32.mrb[0].mxu0
    %v981 = vpop.f32.mrb[0].mxu0
    %v982 = vadd.f32 0.0, %v981
    %v983 = vpop.f32.mrb[0].mxu0
    %984 = vmatprep.mubr.bf16.mxu0 0
    %985 = vmatmul.mubr.bf16.gmra.mrb[0].mxu0 %v482
    %v986 = vpop.f32.mrb[0].mxu0
    %v987 = vadd.f32 0.0, %v986
    %v988 = vpop.f32.mrb[0].mxu0
    %v989 = vpop.f32.mrb[0].mxu0
    %v990 = vadd.f32 0.0, %v989
    %v991 = vpop.f32.mrb[0].mxu0
    %992 = vmatprep.mubr.bf16.mxu0 0
    %993 = vmatmul.mubr.bf16.gmra.mrb[0].mxu0 %v483
    %v994 = vpop.f32.mrb[0].mxu0
    %v995 = vadd.f32 0.0, %v994
    %v996 = vpop.f32.mrb[0].mxu0
    %v997 = vpop.f32.mrb[0].mxu0
    %v998 = vadd.f32 0.0, %v997
    %v999 = vpop.f32.mrb[0].mxu0
    %1000 = vmatprep.mubr.bf16.mxu0 0
    %1001 = vmatmul.mubr.bf16.gmra.mrb[0].mxu0 %v484
    %v1002 = vpop.f32.mrb[0].mxu0
    %v1003 = vadd.f32 0.0, %v1002
    %v1004 = vpop.f32.mrb[0].mxu0
    %v1005 = vpop.f32.mrb[0].mxu0
    %v1006 = vadd.f32 0.0, %v1005
    %v1007 = vpop.f32.mrb[0].mxu0
    %1008 = vmatprep.mubr.bf16.mxu0 0
    %1009 = vmatmul.mubr.bf16.gmra.mrb[0].mxu0 %v485
    %v1010 = vpop.f32.mrb[0].mxu0
    %v1011 = vadd.f32 0.0, %v1010
    %v1012 = vpop.f32.mrb[0].mxu0
    %v1013 = vpop.f32.mrb[0].mxu0
    %v1014 = vadd.f32 0.0, %v1013
    %v1015 = vpop.f32.mrb[0].mxu0
    %1016 = vmatprep.mubr.bf16.mxu0 0
    %1017 = vmatmul.mubr.bf16.gmra.mrb[0].mxu0 %v486
    %v1018 = vpop.f32.mrb[0].mxu0
    %v1019 = vadd.f32 0.0, %v1018
    %v1020 = vpop.f32.mrb[0].mxu0
    %v1021 = vpop.f32.mrb[0].mxu0
    %v1022 = vadd.f32 0.0, %v1021
    %v1023 = vpop.f32.mrb[0].mxu0
    %1024 = vmatprep.mubr.bf16.mxu0 0
    %1025 = vmatmul.mubr.bf16.gmra.mrb[0].mxu0 %v487
    %v1026 = vpop.f32.mrb[0].mxu0
    %v1027 = vadd.f32 0.0, %v1026
    %v1028 = vpop.f32.mrb[0].mxu0
    %v1029 = vpop.f32.mrb[0].mxu0
    %v1030 = vadd.f32 0.0, %v1029
    %v1031 = vpop.f32.mrb[0].mxu0
    %1032 = vmatprep.mubr.bf16.mxu0 0
    %1033 = vmatmul.mubr.bf16.gmra.mrb[0].mxu0 %v488
    %v1034 = vpop.f32.mrb[0].mxu0
    %v1035 = vadd.f32 0.0, %v1034
    %v1036 = vpop.f32.mrb[0].mxu0
    %v1037 = vpop.f32.mrb[0].mxu0
    %v1038 = vadd.f32 0.0, %v1037
    %v1039 = vpop.f32.mrb[0].mxu0
    %1040 = vmatprep.mubr.bf16.mxu0 0
    %1041 = vmatmul.mubr.bf16.gmra.mrb[0].mxu0 %v489
    %v1042 = vpop.f32.mrb[0].mxu0
    %v1043 = vadd.f32 0.0, %v1042
    %v1044 = vpop.f32.mrb[0].mxu0
    %v1045 = vpop.f32.mrb[0].mxu0
    %v1046 = vadd.f32 0.0, %v1045
    %v1047 = vpop.f32.mrb[0].mxu0
    %1048 = vmatprep.mubr.bf16.mxu0 0
    %1049 = vmatmul.mubr.bf16.gmra.mrb[0].mxu0 %v490
    %v1050 = vpop.f32.mrb[0].mxu0
    %v1051 = vadd.f32 0.0, %v1050
    %v1052 = vpop.f32.mrb[0].mxu0
    %v1053 = vpop.f32.mrb[0].mxu0
    %v1054 = vadd.f32 0.0, %v1053
    %v1055 = vpop.f32.mrb[0].mxu0
    %1056 = vmatprep.mubr.bf16.mxu0 0
    %1057 = vmatmul.mubr.bf16.gmra.mrb[0].mxu0 %v491
    %v1058 = vpop.f32.mrb[0].mxu0
    %v1059 = vadd.f32 0.0, %v1058
    %v1060 = vpop.f32.mrb[0].mxu0
    %v1061 = vpop.f32.mrb[0].mxu0
    %v1062 = vadd.f32 0.0, %v1061
    %v1063 = vpop.f32.mrb[0].mxu0
    %1064 = vmatprep.mubr.bf16.mxu0 0
    %1065 = vmatmul.mubr.bf16.gmra.mrb[0].mxu0 %v492
    %v1066 = vpop.f32.mrb[0].mxu0
    %v1067 = vadd.f32 0.0, %v1066
    %v1068 = vpop.f32.mrb[0].mxu0
    %v1069 = vpop.f32.mrb[0].mxu0
    %v1070 = vadd.f32 0.0, %v1069
    %v1071 = vpop.f32.mrb[0].mxu0
    %1072 = vmatprep.mubr.bf16.mxu0 0
    %1073 = vmatmul.mubr.bf16.gmra.mrb[0].mxu0 %v493
    %v1074 = vpop.f32.mrb[0].mxu0
    %v1075 = vadd.f32 0.0, %v1074
    %v1076 = vpop.f32.mrb[0].mxu0
    %v1077 = vpop.f32.mrb[0].mxu0
    %v1078 = vadd.f32 0.0, %v1077
    %v1079 = vpop.f32.mrb[0].mxu0
    %1080 = vmatprep.mubr.bf16.mxu0 0
    %1081 = vmatmul.mubr.bf16.gmra.mrb[0].mxu0 %v494
    %v1082 = vpop.f32.mrb[0].mxu0
    %v1083 = vadd.f32 0.0, %v1082
    %v1084 = vpop.f32.mrb[0].mxu0
    %v1085 = vpop.f32.mrb[0].mxu0
    %v1086 = vadd.f32 0.0, %v1085
    %v1087 = vpop.f32.mrb[0].mxu0
    %1088 = vmatprep.mubr.bf16.mxu0 0
    %1089 = vmatmul.mubr.bf16.gmra.mrb[0].mxu0 %v495
    %v1090 = vpop.f32.mrb[0].mxu0
    %v1091 = vadd.f32 0.0, %v1090
    %v1092 = vpop.f32.mrb[0].mxu0
    %v1093 = vpop.f32.mrb[0].mxu0
    %v1094 = vadd.f32 0.0, %v1093
    %v1095 = vpop.f32.mrb[0].mxu0
    %1096 = vmatprep.mubr.bf16.mxu0 0
    %1097 = vmatmul.mubr.bf16.gmra.mrb[0].mxu0 %v496
    %v1098 = vpop.f32.mrb[0].mxu0
    %v1099 = vadd.f32 0.0, %v1098
    %v1100 = vpop.f32.mrb[0].mxu0
    %v1101 = vpop.f32.mrb[0].mxu0
    %v1102 = vadd.f32 0.0, %v1101
    %v1103 = vpop.f32.mrb[0].mxu0
    %1104 = vmatprep.mubr.bf16.mxu0 0
    %1105 = vmatmul.mubr.bf16.gmra.mrb[0].mxu0 %v497
    %v1106 = vpop.f32.mrb[0].mxu0
    %v1107 = vadd.f32 0.0, %v1106
    %v1108 = vpop.f32.mrb[0].mxu0
    %v1109 = vpop.f32.mrb[0].mxu0
    %v1110 = vadd.f32 0.0, %v1109
    %v1111 = vpop.f32.mrb[0].mxu0
    %1112 = vmatprep.mubr.bf16.mxu0 0
    %1113 = vmatmul.mubr.bf16.gmra.mrb[0].mxu0 %v498
    %v1114 = vpop.f32.mrb[0].mxu0
    %v1115 = vadd.f32 0.0, %v1114
    %v1116 = vpop.f32.mrb[0].mxu0
    %v1117 = vpop.f32.mrb[0].mxu0
    %v1118 = vadd.f32 0.0, %v1117
    %v1119 = vpop.f32.mrb[0].mxu0
    %1120 = vmatprep.mubr.bf16.mxu0 0
    %1121 = vmatmul.mubr.bf16.gmra.mrb[0].mxu0 %v499
    %v1122 = vpop.f32.mrb[0].mxu0
    %v1123 = vadd.f32 0.0, %v1122
    %v1124 = vpop.f32.mrb[0].mxu0
    %v1125 = vpop.f32.mrb[0].mxu0
    %v1126 = vadd.f32 0.0, %v1125
    %v1127 = vpop.f32.mrb[0].mxu0
    %1128 = vmatprep.mubr.bf16.mxu0 0
    %1129 = vmatmul.mubr.bf16.gmra.mrb[0].mxu0 %v500
    %v1130 = vpop.f32.mrb[0].mxu0
    %v1131 = vadd.f32 0.0, %v1130
    %v1132 = vpop.f32.mrb[0].mxu0
    %v1133 = vpop.f32.mrb[0].mxu0
    %v1134 = vadd.f32 0.0, %v1133
    %v1135 = vpop.f32.mrb[0].mxu0
    %1136 = vmatprep.mubr.bf16.mxu0 0
    %1137 = vmatmul.mubr.bf16.gmra.mrb[0].mxu0 %v501
    %v1138 = vpop.f32.mrb[0].mxu0
    %v1139 = vadd.f32 0.0, %v1138
    %v1140 = vpop.f32.mrb[0].mxu0
    %v1141 = vpop.f32.mrb[0].mxu0
    %v1142 = vadd.f32 0.0, %v1141
    %v1143 = vpop.f32.mrb[0].mxu0
    %1144 = vmatprep.mubr.bf16.mxu0 0
    %1145 = vmatmul.mubr.bf16.gmra.mrb[0].mxu0 %v502
    %v1146 = vpop.f32.mrb[0].mxu0
    %v1147 = vadd.f32 0.0, %v1146
    %v1148 = vpop.f32.mrb[0].mxu0
    %v1149 = vpop.f32.mrb[0].mxu0
    %v1150 = vadd.f32 0.0, %v1149
    %v1151 = vpop.f32.mrb[0].mxu0
    %1152 = vmatprep.mubr.bf16.mxu0 0
    %1153 = vmatmul.mubr.bf16.gmra.mrb[0].mxu0 %v503
    %v1154 = vpop.f32.mrb[0].mxu0
    %v1155 = vadd.f32 0.0, %v1154
    %v1156 = vpop.f32.mrb[0].mxu0
    %v1157 = vpop.f32.mrb[0].mxu0
    %v1158 = vadd.f32 0.0, %v1157
    %v1159 = vpop.f32.mrb[0].mxu0
    %1160 = vdwg.mxu0
    %v1161 = vpack.c.bf16 %v654, %v651
    %v1162 = vpack.c.bf16 %v662, %v659
    %v1163 = vpack.c.bf16 %v670, %v667
    %v1164 = vpack.c.bf16 %v678, %v675
    %v1165 = vpack.c.bf16 %v686, %v683
    %v1166 = vpack.c.bf16 %v694, %v691
    %v1167 = vpack.c.bf16 %v702, %v699
    %v1168 = vpack.c.bf16 %v710, %v707
    %v1169 = vpack.c.bf16 %v718, %v715
    %v1170 = vpack.c.bf16 %v726, %v723
    %v1171 = vpack.c.bf16 %v734, %v731
    %v1172 = vpack.c.bf16 %v742, %v739
    %v1173 = vpack.c.bf16 %v750, %v747
    %v1174 = vpack.c.bf16 %v758, %v755
    %v1175 = vpack.c.bf16 %v766, %v763
    %v1176 = vpack.c.bf16 %v774, %v771
    %v1177 = vpack.c.bf16 %v782, %v779
    %v1178 = vpack.c.bf16 %v790, %v787
    %v1179 = vpack.c.bf16 %v798, %v795
    %v1180 = vpack.c.bf16 %v806, %v803
    %v1181 = vpack.c.bf16 %v814, %v811
    %v1182 = vpack.c.bf16 %v822, %v819
    %v1183 = vpack.c.bf16 %v830, %v827
    %v1184 = vpack.c.bf16 %v838, %v835
    %v1185 = vpack.c.bf16 %v846, %v843
    %v1186 = vpack.c.bf16 %v854, %v851
    %v1187 = vpack.c.bf16 %v862, %v859
    %v1188 = vpack.c.bf16 %v870, %v867
    %v1189 = vpack.c.bf16 %v878, %v875
    %v1190 = vpack.c.bf16 %v886, %v883
    %v1191 = vpack.c.bf16 %v894, %v891
    %v1192 = vpack.c.bf16 %v902, %v899
    %v1193 = vpack.c.bf16 %v910, %v907
    %v1194 = vpack.c.bf16 %v918, %v915
    %v1195 = vpack.c.bf16 %v926, %v923
    %v1196 = vpack.c.bf16 %v934, %v931
    %v1197 = vpack.c.bf16 %v942, %v939
    %v1198 = vpack.c.bf16 %v950, %v947
    %v1199 = vpack.c.bf16 %v958, %v955
    %v1200 = vpack.c.bf16 %v966, %v963
    %v1201 = vpack.c.bf16 %v974, %v971
    %v1202 = vpack.c.bf16 %v982, %v979
    %v1203 = vpack.c.bf16 %v990, %v987
    %v1204 = vpack.c.bf16 %v998, %v995
    %v1205 = vpack.c.bf16 %v1006, %v1003
    %v1206 = vpack.c.bf16 %v1014, %v1011
    %v1207 = vpack.c.bf16 %v1022, %v1019
    %v1208 = vpack.c.bf16 %v1030, %v1027
    %v1209 = vpack.c.bf16 %v1038, %v1035
    %v1210 = vpack.c.bf16 %v1046, %v1043
    %v1211 = vpack.c.bf16 %v1054, %v1051
    %v1212 = vpack.c.bf16 %v1062, %v1059
    %v1213 = vpack.c.bf16 %v1070, %v1067
    %v1214 = vpack.c.bf16 %v1078, %v1075
    %v1215 = vpack.c.bf16 %v1086, %v1083
    %v1216 = vpack.c.bf16 %v1094, %v1091
    %v1217 = vpack.c.bf16 %v1102, %v1099
    %v1218 = vpack.c.bf16 %v1110, %v1107
    %v1219 = vpack.c.bf16 %v1118, %v1115
    %v1220 = vpack.c.bf16 %v1126, %v1123
    %v1221 = vpack.c.bf16 %v1134, %v1131
    %v1222 = vpack.c.bf16 %v1142, %v1139
    %v1223 = vpack.c.bf16 %v1150, %v1147
    %v1224 = vpack.c.bf16 %v1158, %v1155
    %v1289 = vunpack.c.l.b16 %v1161
    %v1290 = vunpack.c.h.b16 %v1161
    %v1291 = vunpack.c.l.b16 %v1162
    %v1292 = vunpack.c.h.b16 %v1162
    %v1293 = vunpack.c.l.b16 %v1163
    %v1294 = vunpack.c.h.b16 %v1163
    %v1295 = vunpack.c.l.b16 %v1164
    %v1296 = vunpack.c.h.b16 %v1164
    %v1297 = vunpack.c.l.b16 %v1165
    %v1298 = vunpack.c.h.b16 %v1165
    %v1299 = vunpack.c.l.b16 %v1166
    %v1300 = vunpack.c.h.b16 %v1166
    %v1301 = vunpack.c.l.b16 %v1167
    %v1302 = vunpack.c.h.b16 %v1167
    %v1303 = vunpack.c.l.b16 %v1168
    %v1304 = vunpack.c.h.b16 %v1168
    %v1305 = vunpack.c.l.b16 %v1169
    %v1306 = vunpack.c.h.b16 %v1169
    %v1307 = vunpack.c.l.b16 %v1170
    %v1308 = vunpack.c.h.b16 %v1170
    %v1309 = vunpack.c.l.b16 %v1171
    %v1310 = vunpack.c.h.b16 %v1171
    %v1311 = vunpack.c.l.b16 %v1172
    %v1312 = vunpack.c.h.b16 %v1172
    %v1313 = vunpack.c.l.b16 %v1173
    %v1314 = vunpack.c.h.b16 %v1173
    %v1315 = vunpack.c.l.b16 %v1174
    %v1316 = vunpack.c.h.b16 %v1174
    %v1317 = vunpack.c.l.b16 %v1175
    %v1318 = vunpack.c.h.b16 %v1175
    %v1319 = vunpack.c.l.b16 %v1176
    %v1320 = vunpack.c.h.b16 %v1176
    %v1321 = vunpack.c.l.b16 %v1177
    %v1322 = vunpack.c.h.b16 %v1177
    %v1323 = vunpack.c.l.b16 %v1178
    %v1324 = vunpack.c.h.b16 %v1178
    %v1325 = vunpack.c.l.b16 %v1179
    %v1326 = vunpack.c.h.b16 %v1179
    %v1327 = vunpack.c.l.b16 %v1180
    %v1328 = vunpack.c.h.b16 %v1180
    %v1329 = vunpack.c.l.b16 %v1181
    %v1330 = vunpack.c.h.b16 %v1181
    %v1331 = vunpack.c.l.b16 %v1182
    %v1332 = vunpack.c.h.b16 %v1182
    %v1333 = vunpack.c.l.b16 %v1183
    %v1334 = vunpack.c.h.b16 %v1183
    %v1335 = vunpack.c.l.b16 %v1184
    %v1336 = vunpack.c.h.b16 %v1184
    %v1337 = vunpack.c.l.b16 %v1185
    %v1338 = vunpack.c.h.b16 %v1185
    %v1339 = vunpack.c.l.b16 %v1186
    %v1340 = vunpack.c.h.b16 %v1186
    %v1341 = vunpack.c.l.b16 %v1187
    %v1342 = vunpack.c.h.b16 %v1187
    %v1343 = vunpack.c.l.b16 %v1188
    %v1344 = vunpack.c.h.b16 %v1188
    %v1345 = vunpack.c.l.b16 %v1189
    %v1346 = vunpack.c.h.b16 %v1189
    %v1347 = vunpack.c.l.b16 %v1190
    %v1348 = vunpack.c.h.b16 %v1190
    %v1349 = vunpack.c.l.b16 %v1191
    %v1350 = vunpack.c.h.b16 %v1191
    %v1351 = vunpack.c.l.b16 %v1192
    %v1352 = vunpack.c.h.b16 %v1192
    %v1353 = vunpack.c.l.b16 %v1193
    %v1354 = vunpack.c.h.b16 %v1193
    %v1355 = vunpack.c.l.b16 %v1194
    %v1356 = vunpack.c.h.b16 %v1194
    %v1357 = vunpack.c.l.b16 %v1195
    %v1358 = vunpack.c.h.b16 %v1195
    %v1359 = vunpack.c.l.b16 %v1196
    %v1360 = vunpack.c.h.b16 %v1196
    %v1361 = vunpack.c.l.b16 %v1197
    %v1362 = vunpack.c.h.b16 %v1197
    %v1363 = vunpack.c.l.b16 %v1198
    %v1364 = vunpack.c.h.b16 %v1198
    %v1365 = vunpack.c.l.b16 %v1199
    %v1366 = vunpack.c.h.b16 %v1199
    %v1367 = vunpack.c.l.b16 %v1200
    %v1368 = vunpack.c.h.b16 %v1200
    %v1369 = vunpack.c.l.b16 %v1201
    %v1370 = vunpack.c.h.b16 %v1201
    %v1371 = vunpack.c.l.b16 %v1202
    %v1372 = vunpack.c.h.b16 %v1202
    %v1373 = vunpack.c.l.b16 %v1203
    %v1374 = vunpack.c.h.b16 %v1203
    %v1375 = vunpack.c.l.b16 %v1204
    %v1376 = vunpack.c.h.b16 %v1204
    %v1377 = vunpack.c.l.b16 %v1205
    %v1378 = vunpack.c.h.b16 %v1205
    %v1379 = vunpack.c.l.b16 %v1206
    %v1380 = vunpack.c.h.b16 %v1206
    %v1381 = vunpack.c.l.b16 %v1207
    %v1382 = vunpack.c.h.b16 %v1207
    %v1383 = vunpack.c.l.b16 %v1208
    %v1384 = vunpack.c.h.b16 %v1208
    %v1385 = vunpack.c.l.b16 %v1209
    %v1386 = vunpack.c.h.b16 %v1209
    %v1387 = vunpack.c.l.b16 %v1210
    %v1388 = vunpack.c.h.b16 %v1210
    %v1389 = vunpack.c.l.b16 %v1211
    %v1390 = vunpack.c.h.b16 %v1211
    %v1391 = vunpack.c.l.b16 %v1212
    %v1392 = vunpack.c.h.b16 %v1212
    %v1393 = vunpack.c.l.b16 %v1213
    %v1394 = vunpack.c.h.b16 %v1213
    %v1395 = vunpack.c.l.b16 %v1214
    %v1396 = vunpack.c.h.b16 %v1214
    %v1397 = vunpack.c.l.b16 %v1215
    %v1398 = vunpack.c.h.b16 %v1215
    %v1399 = vunpack.c.l.b16 %v1216
    %v1400 = vunpack.c.h.b16 %v1216
    %v1401 = vunpack.c.l.b16 %v1217
    %v1402 = vunpack.c.h.b16 %v1217
    %v1403 = vunpack.c.l.b16 %v1218
    %v1404 = vunpack.c.h.b16 %v1218
    %v1405 = vunpack.c.l.b16 %v1219
    %v1406 = vunpack.c.h.b16 %v1219
    %v1407 = vunpack.c.l.b16 %v1220
    %v1408 = vunpack.c.h.b16 %v1220
    %v1409 = vunpack.c.l.b16 %v1221
    %v1410 = vunpack.c.h.b16 %v1221
    %v1411 = vunpack.c.l.b16 %v1222
    %v1412 = vunpack.c.h.b16 %v1222
    %v1413 = vunpack.c.l.b16 %v1223
    %v1414 = vunpack.c.h.b16 %v1223
    %v1415 = vunpack.c.l.b16 %v1224
    %v1416 = vunpack.c.h.b16 %v1224
    %v1417 = vpack.c.b16 %v1289, %v1289
    %v1418 = vpack.c.b16 %v1290, %v1290
    %v1419 = vpack.c.b16 %v1291, %v1291
    %v1420 = vpack.c.b16 %v1292, %v1292
    %v1421 = vpack.c.b16 %v1293, %v1293
    %v1422 = vpack.c.b16 %v1294, %v1294
    %v1423 = vpack.c.b16 %v1295, %v1295
    %v1424 = vpack.c.b16 %v1296, %v1296
    %v1425 = vpack.c.b16 %v1297, %v1297
    %v1426 = vpack.c.b16 %v1298, %v1298
    %v1427 = vpack.c.b16 %v1299, %v1299
    %v1428 = vpack.c.b16 %v1300, %v1300
    %v1429 = vpack.c.b16 %v1301, %v1301
    %v1430 = vpack.c.b16 %v1302, %v1302
    %v1431 = vpack.c.b16 %v1303, %v1303
    %v1432 = vpack.c.b16 %v1304, %v1304
    %v1433 = vpack.c.b16 %v1305, %v1305
    %v1434 = vpack.c.b16 %v1306, %v1306
    %v1435 = vpack.c.b16 %v1307, %v1307
    %v1436 = vpack.c.b16 %v1308, %v1308
    %v1437 = vpack.c.b16 %v1309, %v1309
    %v1438 = vpack.c.b16 %v1310, %v1310
    %v1439 = vpack.c.b16 %v1311, %v1311
    %v1440 = vpack.c.b16 %v1312, %v1312
    %v1441 = vpack.c.b16 %v1313, %v1313
    %v1442 = vpack.c.b16 %v1314, %v1314
    %v1443 = vpack.c.b16 %v1315, %v1315
    %v1444 = vpack.c.b16 %v1316, %v1316
    %v1445 = vpack.c.b16 %v1317, %v1317
    %v1446 = vpack.c.b16 %v1318, %v1318
    %v1447 = vpack.c.b16 %v1319, %v1319
    %v1448 = vpack.c.b16 %v1320, %v1320
    %v1449 = vpack.c.b16 %v1321, %v1321
    %v1450 = vpack.c.b16 %v1322, %v1322
    %v1451 = vpack.c.b16 %v1323, %v1323
    %v1452 = vpack.c.b16 %v1324, %v1324
    %v1453 = vpack.c.b16 %v1325, %v1325
    %v1454 = vpack.c.b16 %v1326, %v1326
    %v1455 = vpack.c.b16 %v1327, %v1327
    %v1456 = vpack.c.b16 %v1328, %v1328
    %v1457 = vpack.c.b16 %v1329, %v1329
    %v1458 = vpack.c.b16 %v1330, %v1330
    %v1459 = vpack.c.b16 %v1331, %v1331
    %v1460 = vpack.c.b16 %v1332, %v1332
    %v1461 = vpack.c.b16 %v1333, %v1333
    %v1462 = vpack.c.b16 %v1334, %v1334
    %v1463 = vpack.c.b16 %v1335, %v1335
    %v1464 = vpack.c.b16 %v1336, %v1336
    %v1465 = vpack.c.b16 %v1337, %v1337
    %v1466 = vpack.c.b16 %v1338, %v1338
    %v1467 = vpack.c.b16 %v1339, %v1339
    %v1468 = vpack.c.b16 %v1340, %v1340
    %v1469 = vpack.c.b16 %v1341, %v1341
    %v1470 = vpack.c.b16 %v1342, %v1342
    %v1471 = vpack.c.b16 %v1343, %v1343
    %v1472 = vpack.c.b16 %v1344, %v1344
    %v1473 = vpack.c.b16 %v1345, %v1345
    %v1474 = vpack.c.b16 %v1346, %v1346
    %v1475 = vpack.c.b16 %v1347, %v1347
    %v1476 = vpack.c.b16 %v1348, %v1348
    %v1477 = vpack.c.b16 %v1349, %v1349
    %v1478 = vpack.c.b16 %v1350, %v1350
    %v1479 = vpack.c.b16 %v1351, %v1351
    %v1480 = vpack.c.b16 %v1352, %v1352
    %v1481 = vpack.c.b16 %v1353, %v1353
    %v1482 = vpack.c.b16 %v1354, %v1354
    %v1483 = vpack.c.b16 %v1355, %v1355
    %v1484 = vpack.c.b16 %v1356, %v1356
    %v1485 = vpack.c.b16 %v1357, %v1357
    %v1486 = vpack.c.b16 %v1358, %v1358
    %v1487 = vpack.c.b16 %v1359, %v1359
    %v1488 = vpack.c.b16 %v1360, %v1360
    %v1489 = vpack.c.b16 %v1361, %v1361
    %v1490 = vpack.c.b16 %v1362, %v1362
    %v1491 = vpack.c.b16 %v1363, %v1363
    %v1492 = vpack.c.b16 %v1364, %v1364
    %v1493 = vpack.c.b16 %v1365, %v1365
    %v1494 = vpack.c.b16 %v1366, %v1366
    %v1495 = vpack.c.b16 %v1367, %v1367
    %v1496 = vpack.c.b16 %v1368, %v1368
    %v1497 = vpack.c.b16 %v1369, %v1369
    %v1498 = vpack.c.b16 %v1370, %v1370
    %v1499 = vpack.c.b16 %v1371, %v1371
    %v1500 = vpack.c.b16 %v1372, %v1372
    %v1501 = vpack.c.b16 %v1373, %v1373
    %v1502 = vpack.c.b16 %v1374, %v1374
    %v1503 = vpack.c.b16 %v1375, %v1375
    %v1504 = vpack.c.b16 %v1376, %v1376
    %v1505 = vpack.c.b16 %v1377, %v1377
    %v1506 = vpack.c.b16 %v1378, %v1378
    %v1507 = vpack.c.b16 %v1379, %v1379
    %v1508 = vpack.c.b16 %v1380, %v1380
    %v1509 = vpack.c.b16 %v1381, %v1381
    %v1510 = vpack.c.b16 %v1382, %v1382
    %v1511 = vpack.c.b16 %v1383, %v1383
    %v1512 = vpack.c.b16 %v1384, %v1384
    %v1513 = vpack.c.b16 %v1385, %v1385
    %v1514 = vpack.c.b16 %v1386, %v1386
    %v1515 = vpack.c.b16 %v1387, %v1387
    %v1516 = vpack.c.b16 %v1388, %v1388
    %v1517 = vpack.c.b16 %v1389, %v1389
    %v1518 = vpack.c.b16 %v1390, %v1390
    %v1519 = vpack.c.b16 %v1391, %v1391
    %v1520 = vpack.c.b16 %v1392, %v1392
    %v1521 = vpack.c.b16 %v1393, %v1393
    %v1522 = vpack.c.b16 %v1394, %v1394
    %v1523 = vpack.c.b16 %v1395, %v1395
    %v1524 = vpack.c.b16 %v1396, %v1396
    %v1525 = vpack.c.b16 %v1397, %v1397
    %v1526 = vpack.c.b16 %v1398, %v1398
    %v1527 = vpack.c.b16 %v1399, %v1399
    %v1528 = vpack.c.b16 %v1400, %v1400
    %v1529 = vpack.c.b16 %v1401, %v1401
    %v1530 = vpack.c.b16 %v1402, %v1402
    %v1531 = vpack.c.b16 %v1403, %v1403
    %v1532 = vpack.c.b16 %v1404, %v1404
    %v1533 = vpack.c.b16 %v1405, %v1405
    %v1534 = vpack.c.b16 %v1406, %v1406
    %v1535 = vpack.c.b16 %v1407, %v1407
    %v1536 = vpack.c.b16 %v1408, %v1408
    %v1537 = vpack.c.b16 %v1409, %v1409
    %v1538 = vpack.c.b16 %v1410, %v1410
    %v1539 = vpack.c.b16 %v1411, %v1411
    %v1540 = vpack.c.b16 %v1412, %v1412
    %v1541 = vpack.c.b16 %v1413, %v1413
    %v1542 = vpack.c.b16 %v1414, %v1414
    %v1543 = vpack.c.b16 %v1415, %v1415
    %v1544 = vpack.c.b16 %v1416, %v1416
    %1673 = vst [vmem:[%s2] sm:$0xf] %v1417
    %1674 = vst [vmem:[%s2 + $0x4] sm:$0xf] %v1418
    %1675 = vst [vmem:[%s2 + $0x8] sm:$0xf] %v1419
    %1676 = vst [vmem:[%s2 + $0xc] sm:$0xf] %v1420
    %1677 = vst [vmem:[%s2 + $0x10] sm:$0xf] %v1421
    %1678 = vst [vmem:[%s2 + $0x14] sm:$0xf] %v1422
    %1679 = vst [vmem:[%s2 + $0x18] sm:$0xf] %v1423
    %1680 = vst [vmem:[%s2 + $0x1c] sm:$0xf] %v1424
    %1681 = vst [vmem:[%s2 + $0x20] sm:$0xf] %v1425
    %1682 = vst [vmem:[%s2 + $0x24] sm:$0xf] %v1426
    %1683 = vst [vmem:[%s2 + $0x28] sm:$0xf] %v1427
    %1684 = vst [vmem:[%s2 + $0x2c] sm:$0xf] %v1428
    %1685 = vst [vmem:[%s2 + $0x30] sm:$0xf] %v1429
    %1686 = vst [vmem:[%s2 + $0x34] sm:$0xf] %v1430
    %1687 = vst [vmem:[%s2 + $0x38] sm:$0xf] %v1431
    %1688 = vst [vmem:[%s2 + $0x3c] sm:$0xf] %v1432
    %1689 = vst [vmem:[%s2 + $0x40] sm:$0xf] %v1433
    %1690 = vst [vmem:[%s2 + $0x44] sm:$0xf] %v1434
    %1691 = vst [vmem:[%s2 + $0x48] sm:$0xf] %v1435
    %1692 = vst [vmem:[%s2 + $0x4c] sm:$0xf] %v1436
    %1693 = vst [vmem:[%s2 + $0x50] sm:$0xf] %v1437
    %1694 = vst [vmem:[%s2 + $0x54] sm:$0xf] %v1438
    %1695 = vst [vmem:[%s2 + $0x58] sm:$0xf] %v1439
    %1696 = vst [vmem:[%s2 + $0x5c] sm:$0xf] %v1440
    %1697 = vst [vmem:[%s2 + $0x60] sm:$0xf] %v1441
    %1698 = vst [vmem:[%s2 + $0x64] sm:$0xf] %v1442
    %1699 = vst [vmem:[%s2 + $0x68] sm:$0xf] %v1443
    %1700 = vst [vmem:[%s2 + $0x6c] sm:$0xf] %v1444
    %1701 = vst [vmem:[%s2 + $0x70] sm:$0xf] %v1445
    %1702 = vst [vmem:[%s2 + $0x74] sm:$0xf] %v1446
    %1703 = vst [vmem:[%s2 + $0x78] sm:$0xf] %v1447
    %1704 = vst [vmem:[%s2 + $0x7c] sm:$0xf] %v1448
    %1705 = vst [vmem:[%s2 + $0x80] sm:$0xf] %v1449
    %1706 = vst [vmem:[%s2 + $0x84] sm:$0xf] %v1450
    %1707 = vst [vmem:[%s2 + $0x88] sm:$0xf] %v1451
    %1708 = vst [vmem:[%s2 + $0x8c] sm:$0xf] %v1452
    %1709 = vst [vmem:[%s2 + $0x90] sm:$0xf] %v1453
    %1710 = vst [vmem:[%s2 + $0x94] sm:$0xf] %v1454
    %1711 = vst [vmem:[%s2 + $0x98] sm:$0xf] %v1455
    %1712 = vst [vmem:[%s2 + $0x9c] sm:$0xf] %v1456
    %1713 = vst [vmem:[%s2 + $0xa0] sm:$0xf] %v1457
    %1714 = vst [vmem:[%s2 + $0xa4] sm:$0xf] %v1458
    %1715 = vst [vmem:[%s2 + $0xa8] sm:$0xf] %v1459
    %1716 = vst [vmem:[%s2 + $0xac] sm:$0xf] %v1460
    %1717 = vst [vmem:[%s2 + $0xb0] sm:$0xf] %v1461
    %1718 = vst [vmem:[%s2 + $0xb4] sm:$0xf] %v1462
    %1719 = vst [vmem:[%s2 + $0xb8] sm:$0xf] %v1463
    %1720 = vst [vmem:[%s2 + $0xbc] sm:$0xf] %v1464
    %1721 = vst [vmem:[%s2 + $0xc0] sm:$0xf] %v1465
    %1722 = vst [vmem:[%s2 + $0xc4] sm:$0xf] %v1466
    %1723 = vst [vmem:[%s2 + $0xc8] sm:$0xf] %v1467
    %1724 = vst [vmem:[%s2 + $0xcc] sm:$0xf] %v1468
    %1725 = vst [vmem:[%s2 + $0xd0] sm:$0xf] %v1469
    %1726 = vst [vmem:[%s2 + $0xd4] sm:$0xf] %v1470
    %1727 = vst [vmem:[%s2 + $0xd8] sm:$0xf] %v1471
    %1728 = vst [vmem:[%s2 + $0xdc] sm:$0xf] %v1472
    %1729 = vst [vmem:[%s2 + $0xe0] sm:$0xf] %v1473
    %1730 = vst [vmem:[%s2 + $0xe4] sm:$0xf] %v1474
    %1731 = vst [vmem:[%s2 + $0xe8] sm:$0xf] %v1475
    %1732 = vst [vmem:[%s2 + $0xec] sm:$0xf] %v1476
    %1733 = vst [vmem:[%s2 + $0xf0] sm:$0xf] %v1477
    %1734 = vst [vmem:[%s2 + $0xf4] sm:$0xf] %v1478
    %1735 = vst [vmem:[%s2 + $0xf8] sm:$0xf] %v1479
    %1736 = vst [vmem:[%s2 + $0xfc] sm:$0xf] %v1480
    %1737 = vst [vmem:[%s2 + $0x100] sm:$0xf] %v1481
    %1738 = vst [vmem:[%s2 + $0x104] sm:$0xf] %v1482
    %1739 = vst [vmem:[%s2 + $0x108] sm:$0xf] %v1483
    %1740 = vst [vmem:[%s2 + $0x10c] sm:$0xf] %v1484
    %1741 = vst [vmem:[%s2 + $0x110] sm:$0xf] %v1485
    %1742 = vst [vmem:[%s2 + $0x114] sm:$0xf] %v1486
    %1743 = vst [vmem:[%s2 + $0x118] sm:$0xf] %v1487
    %1744 = vst [vmem:[%s2 + $0x11c] sm:$0xf] %v1488
    %1745 = vst [vmem:[%s2 + $0x120] sm:$0xf] %v1489
    %1746 = vst [vmem:[%s2 + $0x124] sm:$0xf] %v1490
    %1747 = vst [vmem:[%s2 + $0x128] sm:$0xf] %v1491
    %1748 = vst [vmem:[%s2 + $0x12c] sm:$0xf] %v1492
    %1749 = vst [vmem:[%s2 + $0x130] sm:$0xf] %v1493
    %1750 = vst [vmem:[%s2 + $0x134] sm:$0xf] %v1494
    %1751 = vst [vmem:[%s2 + $0x138] sm:$0xf] %v1495
    %1752 = vst [vmem:[%s2 + $0x13c] sm:$0xf] %v1496
    %1753 = vst [vmem:[%s2 + $0x140] sm:$0xf] %v1497
    %1754 = vst [vmem:[%s2 + $0x144] sm:$0xf] %v1498
    %1755 = vst [vmem:[%s2 + $0x148] sm:$0xf] %v1499
    %1756 = vst [vmem:[%s2 + $0x14c] sm:$0xf] %v1500
    %1757 = vst [vmem:[%s2 + $0x150] sm:$0xf] %v1501
    %1758 = vst [vmem:[%s2 + $0x154] sm:$0xf] %v1502
    %1759 = vst [vmem:[%s2 + $0x158] sm:$0xf] %v1503
    %1760 = vst [vmem:[%s2 + $0x15c] sm:$0xf] %v1504
    %1761 = vst [vmem:[%s2 + $0x160] sm:$0xf] %v1505
    %1762 = vst [vmem:[%s2 + $0x164] sm:$0xf] %v1506
    %1763 = vst [vmem:[%s2 + $0x168] sm:$0xf] %v1507
    %1764 = vst [vmem:[%s2 + $0x16c] sm:$0xf] %v1508
    %1765 = vst [vmem:[%s2 + $0x170] sm:$0xf] %v1509
    %1766 = vst [vmem:[%s2 + $0x174] sm:$0xf] %v1510
    %1767 = vst [vmem:[%s2 + $0x178] sm:$0xf] %v1511
    %1768 = vst [vmem:[%s2 + $0x17c] sm:$0xf] %v1512
    %1769 = vst [vmem:[%s2 + $0x180] sm:$0xf] %v1513
    %1770 = vst [vmem:[%s2 + $0x184] sm:$0xf] %v1514
    %1771 = vst [vmem:[%s2 + $0x188] sm:$0xf] %v1515
    %1772 = vst [vmem:[%s2 + $0x18c] sm:$0xf] %v1516
    %1773 = vst [vmem:[%s2 + $0x190] sm:$0xf] %v1517
    %1774 = vst [vmem:[%s2 + $0x194] sm:$0xf] %v1518
    %1775 = vst [vmem:[%s2 + $0x198] sm:$0xf] %v1519
    %1776 = vst [vmem:[%s2 + $0x19c] sm:$0xf] %v1520
    %1777 = vst [vmem:[%s2 + $0x1a0] sm:$0xf] %v1521
    %1778 = vst [vmem:[%s2 + $0x1a4] sm:$0xf] %v1522
    %1779 = vst [vmem:[%s2 + $0x1a8] sm:$0xf] %v1523
    %1780 = vst [vmem:[%s2 + $0x1ac] sm:$0xf] %v1524
    %1781 = vst [vmem:[%s2 + $0x1b0] sm:$0xf] %v1525
    %1782 = vst [vmem:[%s2 + $0x1b4] sm:$0xf] %v1526
    %1783 = vst [vmem:[%s2 + $0x1b8] sm:$0xf] %v1527
    %1784 = vst [vmem:[%s2 + $0x1bc] sm:$0xf] %v1528
    %1785 = vst [vmem:[%s2 + $0x1c0] sm:$0xf] %v1529
    %1786 = vst [vmem:[%s2 + $0x1c4] sm:$0xf] %v1530
    %1787 = vst [vmem:[%s2 + $0x1c8] sm:$0xf] %v1531
    %1788 = vst [vmem:[%s2 + $0x1cc] sm:$0xf] %v1532
    %1789 = vst [vmem:[%s2 + $0x1d0] sm:$0xf] %v1533
    %1790 = vst [vmem:[%s2 + $0x1d4] sm:$0xf] %v1534
    %1791 = vst [vmem:[%s2 + $0x1d8] sm:$0xf] %v1535
    %1792 = vst [vmem:[%s2 + $0x1dc] sm:$0xf] %v1536
    %1793 = vst [vmem:[%s2 + $0x1e0] sm:$0xf] %v1537
    %1794 = vst [vmem:[%s2 + $0x1e4] sm:$0xf] %v1538
    %1795 = vst [vmem:[%s2 + $0x1e8] sm:$0xf] %v1539
    %1796 = vst [vmem:[%s2 + $0x1ec] sm:$0xf] %v1540
    %1797 = vst [vmem:[%s2 + $0x1f0] sm:$0xf] %v1541
    %1798 = vst [vmem:[%s2 + $0x1f4] sm:$0xf] %v1542
    %1799 = vst [vmem:[%s2 + $0x1f8] sm:$0xf] %v1543
    %1800 = vst [vmem:[%s2 + $0x1fc] sm:$0xf] %v1544
    // Predicated region
    $region18: #{_gcn_forward_padded.3} parent=1 // pred_check
      _
    $region19: #{_gcn_forward_padded.3} parent=1 // pred_check_branch
      %1802 = sbr.rel (0) target = $region21
    $region20: #{_gcn_forward_padded.3} parent=1 // pred_region
      _
    $region21: #{_gcn_forward_padded.3} parent=1 // pred_fallthru
      _
    // Predicated region
    $region22: #{_gcn_forward_padded.3} parent=1 // pred_check
      _
    $region23: #{_gcn_forward_padded.3} parent=1 // pred_check_branch
      %1804 = sbr.rel (0) target = $region25
    $region24: #{_gcn_forward_padded.3} parent=1 // pred_region
      _
    $region25: #{_gcn_forward_padded.3} parent=1 // pred_fallthru
      _
    %1805 = vsyncpa [#allocation3], 1
    %1806 = vsyncpa [#allocation5], 1

// kernel: _gcn_forward_padded.5
$region0: #{_gcn_forward_padded.5}
  #allocation0 [shape = 'u32[]', space=smem, size = 0x4, offset = 0x4, fixed_abs, tag = 'smem constant byte address 0x4 - core index']
  #allocation1 [shape = 'u32[144,128]{1,0:T(1,128)}', space=vmem, size = 0x12000, scoped, tag = 'internal scratch']
  #allocation2 [shape = 'f32[512,128]{1,0:T(8,128)}', space=vmem, size = 0x40000, scoped, tag = 'scratch operand']
  #allocation3 [shape = 's32[1]{0}', space=sflag, size = 0x4, scoped, tag = 'scoped memory for _gcn_forward_padded.5']
  #allocation4 [shape = 'u8[512]{0}', space=smem, size = 0x200, scoped, tag = 'prefetched SMEM operand 0']
  #allocation5 [shape = 'u8[512]{0}', space=smem, size = 0x200, scoped, tag = 'prefetched SMEM operand 1']
  %s0 = inlined_call_operand.vmem [shape: s32[2], index: 0, kind: input, shape index: {}]
  %s1 = inlined_call_operand.vmem [shape: s32[2], index: 1, kind: input, shape index: {}]
  %s2 = inlined_call_operand.vmem [shape: bf16[1024,1024], index: 2, kind: input, shape index: {}]
  %s3 = inlined_call_operand.vmem [shape: bf16[1024,128], index: 3, kind: input, shape index: {}]
  %s4 = inlined_call_operand.vmem [shape: f32[1,128], index: 4, kind: input, shape index: {}]
  %s5 = inlined_call_operand.vmem [shape: f32[1024,128], index: 5, kind: output, shape index: {}]
  %s6 = sld [smem:[#allocation0]]
  $region80: #{_gcn_forward_padded.5} parent=0
    _
  %s8 = ssub.s32 1, %s6
  %s9 = scalar_select 0, %s8, %s6
  %s10 = sshll.u32 %s0, 4
  %s11 = int_to_ptr.vmem [resolvable:$true] %s10
  %13 = dma.vmem_to_smem %s11, 16, [#allocation4], [#allocation3]
  %s14 = sshll.u32 %s1, 4
  %s15 = int_to_ptr.vmem [resolvable:$true] %s14
  %17 = dma.vmem_to_smem %s15, 16, [#allocation5], [#allocation3]
  %18 = dma.done [#allocation3], 32
  %19 = sfence
  $region1: #{_gcn_forward_padded.5} parent=0
    #allocation6 [shape = 'u8[1048576]{0}', space=vmem, size = 0x100000, scoped, tag = 'input window, operand 2']
    loop: start=0, step=1, limit=4
    $region2: #{_gcn_forward_padded.5} parent=1 // loop_pre_header
      _
    $region3: #{_gcn_forward_padded.5} parent=1 // loop_header
      %s21 = sphi 0, %s25
      %p22 = scmp.ge.s32.totalorder %s21, 4
      %s28 = sphi 0, %s40
      %s29 = sphi 0, %s36
      %s30 = sphi 0, %s28
      %s31 = sphi 0, %s29
      %s32 = sphi 0, %s30
      %s33 = sphi 0, %s31
      %s49 = sphi 0, %s51
      %s52 = sphi 0, %s49
      %s53 = sphi 0, %s52
      %s69 = sphi 0, %s53
      %s73 = sphi 0, %s73
      %s75 = sphi 0, %s73
      %s76 = sphi 0, %s75
      %s90 = sphi 0, %s76
      %s94 = sphi 0, %s94
      %s96 = sphi 0, %s94
      %s97 = sphi 0, %s96
      %s111 = sphi 0, %s97
      %s117 = sphi 0, %s119
      %s120 = sphi 0, %s117
      %s121 = sphi 0, %s120
      %s137 = sphi 0, %s121
    $region4: #{_gcn_forward_padded.5} parent=1 // loop_header_branch
      %24 = sbr.rel (%p22) target = $region8
    $region5: #{_gcn_forward_padded.5} parent=1 // loop_body
      %s26 = ssub.s32 %s21, 1
      %s27 = ssub.s32 %s21, 2
      %s34 = sadd.s32 1, %s29
      %p35 = scmp.ge.s32.totalorder %s34, 1
      %s36 = scalar_select %p35, 0, %s34
      %s37 = sadd.s32 1, %s28
      %s38 = scalar_select %p35, %s37, %s28
      %p39 = scmp.ge.s32.totalorder %s38, 2
      %s40 = scalar_select %p39, 0, %s38
      %s41 = sadd.s32 %s28, %s29
      %s42 = sld [smem:[#allocation4 + %s41]]
      %s43 = sadd.s32 %s40, %s36
      %s44 = sld [smem:[#allocation4 + %s43]]
      %s45 = ssub.s32 %s28, %s40
      %s46 = ssub.s32 %s42, %s44
      %s47 = sor.u32 %s45, %s46
      %p48 = scmp.eq.s32.totalorder %s47, 0
      %s50 = sadd.s32 %s49, 1
      %s51 = scalar_select %p48, %s49, %s50
      %p54 = pneg %p48
      %p55 = scmp.eq.s32.totalorder %s21, 1
      %p56 = por %p54, %p55
      %p57 = scmp.ne.s32.totalorder %s49, %s52
      %p58 = scmp.eq.s32.totalorder %s21, 0
      %p59 = por %p57, %p58
      %p60 = scmp.ne.s32.totalorder %s49, %s52
      %p61 = scmp.eq.s32.totalorder %s26, 1
      %p62 = por %p60, %p61
      %p63 = scmp.ne.s32.totalorder %s52, %s53
      %p64 = scmp.eq.s32.totalorder %s26, 0
      %p65 = por %p63, %p64
      %p66 = scmp.ne.s32.totalorder %s52, %s53
      %p67 = scmp.eq.s32.totalorder %s27, 1
      %p68 = por %p66, %p67
      %p70 = scmp.ne.s32.totalorder %s53, %s69
      %p71 = scmp.eq.s32.totalorder %s27, 0
      %p72 = por %p70, %p71
      %s74 = sadd.s32 %s73, 1
      %p77 = scmp.eq.s32.totalorder %s21, 1
      %p78 = scmp.ne.s32.totalorder %s73, %s75
      %p79 = scmp.eq.s32.totalorder %s21, 0
      %p80 = por %p78, %p79
      %p81 = scmp.ne.s32.totalorder %s73, %s75
      %p82 = scmp.eq.s32.totalorder %s26, 1
      %p83 = por %p81, %p82
      %p84 = scmp.ne.s32.totalorder %s75, %s76
      %p85 = scmp.eq.s32.totalorder %s26, 0
      %p86 = por %p84, %p85
      %p87 = scmp.ne.s32.totalorder %s75, %s76
      %p88 = scmp.eq.s32.totalorder %s27, 1
      %p89 = por %p87, %p88
      %p91 = scmp.ne.s32.totalorder %s76, %s90
      %p92 = scmp.eq.s32.totalorder %s27, 0
      %p93 = por %p91, %p92
      %s95 = sadd.s32 %s94, 1
      %p98 = scmp.eq.s32.totalorder %s21, 1
      %p99 = scmp.ne.s32.totalorder %s94, %s96
      %p100 = scmp.eq.s32.totalorder %s21, 0
      %p101 = por %p99, %p100
      %p102 = scmp.ne.s32.totalorder %s94, %s96
      %p103 = scmp.eq.s32.totalorder %s26, 1
      %p104 = por %p102, %p103
      %p105 = scmp.ne.s32.totalorder %s96, %s97
      %p106 = scmp.eq.s32.totalorder %s26, 0
      %p107 = por %p105, %p106
      %p108 = scmp.ne.s32.totalorder %s96, %s97
      %p109 = scmp.eq.s32.totalorder %s27, 1
      %p110 = por %p108, %p109
      %p112 = scmp.ne.s32.totalorder %s97, %s111
      %p113 = scmp.eq.s32.totalorder %s27, 0
      %p114 = por %p112, %p113
      %s115 = ssub.s32 %s28, %s40
      %p116 = scmp.eq.s32.totalorder %s115, 0
      %s118 = sadd.s32 %s117, 1
      %s119 = scalar_select %p116, %s117, %s118
      %p122 = pneg %p116
      %p123 = scmp.eq.s32.totalorder %s21, 1
      %p124 = por %p122, %p123
      %p125 = scmp.ne.s32.totalorder %s117, %s120
      %p126 = scmp.eq.s32.totalorder %s21, 0
      %p127 = por %p125, %p126
      %p128 = scmp.ne.s32.totalorder %s117, %s120
      %p129 = scmp.eq.s32.totalorder %s26, 1
      %p130 = por %p128, %p129
      %p131 = scmp.ne.s32.totalorder %s120, %s121
      %p132 = scmp.eq.s32.totalorder %s26, 0
      %p133 = por %p131, %p132
      %p134 = scmp.ne.s32.totalorder %s120, %s121
      %p135 = scmp.eq.s32.totalorder %s27, 1
      %p136 = por %p134, %p135
      %p138 = scmp.ne.s32.totalorder %s121, %s137
      %p139 = scmp.eq.s32.totalorder %s27, 0
      %p140 = por %p138, %p139
      %p141 = scmp.le.s32.totalorder 1, %s21
      %p142 = scmp.lt.s32.totalorder %s21, 3
      %p143 = pnand %p141, %p142
      %p144 = pneg %p143
      // Predicated region
      $region9: #{_gcn_forward_padded.5} parent=5 // pred_check
        _
      $region10: #{_gcn_forward_padded.5} parent=5 // pred_check_branch
        %146 = sbr.rel (%p143) target = $region12
      $region11: #{_gcn_forward_padded.5} parent=5 // pred_region
        %s147 = ssub.s32 %s21, 1
        // Predicated region
        $region13: #{_gcn_forward_padded.5} parent=11 // pred_check
          %p148 = pneg %p86
        $region14: #{_gcn_forward_padded.5} parent=11 // pred_check_branch
          %150 = sbr.rel (%p148) target = $region16
        $region15: #{_gcn_forward_padded.5} parent=11 // pred_region
          _
        $region16: #{_gcn_forward_padded.5} parent=11 // pred_fallthru
          _
        // Predicated region
        $region17: #{_gcn_forward_padded.5} parent=11 // pred_check
          %p151 = pneg %p107
        $region18: #{_gcn_forward_padded.5} parent=11 // pred_check_branch
          %153 = sbr.rel (%p151) target = $region20
        $region19: #{_gcn_forward_padded.5} parent=11 // pred_region
          _
        $region20: #{_gcn_forward_padded.5} parent=11 // pred_fallthru
          _
      $region12: #{_gcn_forward_padded.5} parent=5 // pred_fallthru
        _
      %p154 = scmp.lt.s32.totalorder %s21, 2
      // Predicated region
      $region21: #{_gcn_forward_padded.5} parent=5 // pred_check
        %p155 = pneg %p154
      $region22: #{_gcn_forward_padded.5} parent=5 // pred_check_branch
        %157 = sbr.rel (%p155) target = $region24
      $region23: #{_gcn_forward_padded.5} parent=5 // pred_region
        // Predicated region
        $region25: #{_gcn_forward_padded.5} parent=23 // pred_check
          %p158 = pneg %p59
        $region26: #{_gcn_forward_padded.5} parent=23 // pred_check_branch
          %160 = sbr.rel (%p158) target = $region28
        $region27: #{_gcn_forward_padded.5} parent=23 // pred_region
          %s161 = sand.u32 %s49, 1
          %s162 = sand.u32 %s49, 1
          %s163 = smul.addr %s162, 1024
          %s164 = scalar_lea.vmem [#allocation6], %s163
          %s165 = sadd.s32 %s28, %s29
          %s166 = sld [smem:[#allocation4 + %s165]]
          %s167 = smul.u32 64, %s28
          %s168 = smul.u32 4, %s166
          %s169 = smul.addr %s167, 8
          %s170 = sadd.s32 %s168, %s169
          %s171 = smul.addr %s170, 4
          %s172 = scalar_lea.vmem %s2, %s171
          // Predicated region
          $region29: #{_gcn_forward_padded.5} parent=27 // pred_check
            _
          $region30: #{_gcn_forward_padded.5} parent=27 // pred_check_branch
            %174 = sbr.rel (0) target = $region32
          $region31: #{_gcn_forward_padded.5} parent=27 // pred_region
            // Predicated region
            $region33: #{_gcn_forward_padded.5} parent=31 // pred_check
              _
            $region34: #{_gcn_forward_padded.5} parent=31 // pred_check_branch
              %176 = sbr.rel (0) target = $region36
            $region35: #{_gcn_forward_padded.5} parent=31 // pred_region
              loop: start=0, step=1, limit=1
              $region37: #{_gcn_forward_padded.5} parent=35 // loop_pre_header
                _
              $region38: #{_gcn_forward_padded.5} parent=35 // loop_header
                %s178 = sphi 0, %s182
                %p179 = scmp.ge.s32.totalorder %s178, 1
                %s183 = sphi %s172, %s172
                %s184 = sphi %s164, %s164
              $region39: #{_gcn_forward_padded.5} parent=35 // loop_header_branch
                %181 = sbr.rel (%p179) target = $region43
              $region40: #{_gcn_forward_padded.5} parent=35 // loop_body
                %v185 = vld [vmem:[%s183] sm:$0xff]
                %186 = vst [vmem:[%s184] sm:$0xff] %v185
                %v187 = vld [vmem:[%s183 + $0x8] sm:$0xff]
                %188 = vst [vmem:[%s184 + $0x8] sm:$0xff] %v187
                %v189 = vld [vmem:[%s183 + $0x20] sm:$0xff]
                %190 = vst [vmem:[%s184 + $0x10] sm:$0xff] %v189
                %v191 = vld [vmem:[%s183 + $0x28] sm:$0xff]
                %192 = vst [vmem:[%s184 + $0x18] sm:$0xff] %v191
                %v193 = vld [vmem:[%s183 + $0x40] sm:$0xff]
                %194 = vst [vmem:[%s184 + $0x20] sm:$0xff] %v193
                %v195 = vld [vmem:[%s183 + $0x48] sm:$0xff]
                %196 = vst [vmem:[%s184 + $0x28] sm:$0xff] %v195
                %v197 = vld [vmem:[%s183 + $0x60] sm:$0xff]
                %198 = vst [vmem:[%s184 + $0x30] sm:$0xff] %v197
                %v199 = vld [vmem:[%s183 + $0x68] sm:$0xff]
                %200 = vst [vmem:[%s184 + $0x38] sm:$0xff] %v199
                %v201 = vld [vmem:[%s183 + $0x80] sm:$0xff]
                %202 = vst [vmem:[%s184 + $0x40] sm:$0xff] %v201
                %v203 = vld [vmem:[%s183 + $0x88] sm:$0xff]
                %204 = vst [vmem:[%s184 + $0x48] sm:$0xff] %v203
                %v205 = vld [vmem:[%s183 + $0xa0] sm:$0xff]
                %206 = vst [vmem:[%s184 + $0x50] sm:$0xff] %v205
                %v207 = vld [vmem:[%s183 + $0xa8] sm:$0xff]
                %208 = vst [vmem:[%s184 + $0x58] sm:$0xff] %v207
                %v209 = vld [vmem:[%s183 + $0xc0] sm:$0xff]
                %210 = vst [vmem:[%s184 + $0x60] sm:$0xff] %v209
                %v211 = vld [vmem:[%s183 + $0xc8] sm:$0xff]
                %212 = vst [vmem:[%s184 + $0x68] sm:$0xff] %v211
                %v213 = vld [vmem:[%s183 + $0xe0] sm:$0xff]
                %214 = vst [vmem:[%s184 + $0x70] sm:$0xff] %v213
                %v215 = vld [vmem:[%s183 + $0xe8] sm:$0xff]
                %216 = vst [vmem:[%s184 + $0x78] sm:$0xff] %v215
                %v217 = vld [vmem:[%s183 + $0x100] sm:$0xff]
                %218 = vst [vmem:[%s184 + $0x80] sm:$0xff] %v217
                %v219 = vld [vmem:[%s183 + $0x108] sm:$0xff]
                %220 = vst [vmem:[%s184 + $0x88] sm:$0xff] %v219
                %v221 = vld [vmem:[%s183 + $0x120] sm:$0xff]
                %222 = vst [vmem:[%s184 + $0x90] sm:$0xff] %v221
                %v223 = vld [vmem:[%s183 + $0x128] sm:$0xff]
                %224 = vst [vmem:[%s184 + $0x98] sm:$0xff] %v223
                %v225 = vld [vmem:[%s183 + $0x140] sm:$0xff]
                %226 = vst [vmem:[%s184 + $0xa0] sm:$0xff] %v225
                %v227 = vld [vmem:[%s183 + $0x148] sm:$0xff]
                %228 = vst [vmem:[%s184 + $0xa8] sm:$0xff] %v227
                %v229 = vld [vmem:[%s183 + $0x160] sm:$0xff]
                %230 = vst [vmem:[%s184 + $0xb0] sm:$0xff] %v229
                %v231 = vld [vmem:[%s183 + $0x168] sm:$0xff]
                %232 = vst [vmem:[%s184 + $0xb8] sm:$0xff] %v231
                %v233 = vld [vmem:[%s183 + $0x180] sm:$0xff]
                %234 = vst [vmem:[%s184 + $0xc0] sm:$0xff] %v233
                %v235 = vld [vmem:[%s183 + $0x188] sm:$0xff]
                %236 = vst [vmem:[%s184 + $0xc8] sm:$0xff] %v235
                %v237 = vld [vmem:[%s183 + $0x1a0] sm:$0xff]
                %238 = vst [vmem:[%s184 + $0xd0] sm:$0xff] %v237
                %v239 = vld [vmem:[%s183 + $0x1a8] sm:$0xff]
                %240 = vst [vmem:[%s184 + $0xd8] sm:$0xff] %v239
                %v241 = vld [vmem:[%s183 + $0x1c0] sm:$0xff]
                %242 = vst [vmem:[%s184 + $0xe0] sm:$0xff] %v241
                %v243 = vld [vmem:[%s183 + $0x1c8] sm:$0xff]
                %244 = vst [vmem:[%s184 + $0xe8] sm:$0xff] %v243
                %v245 = vld [vmem:[%s183 + $0x1e0] sm:$0xff]
                %246 = vst [vmem:[%s184 + $0xf0] sm:$0xff] %v245
                %v247 = vld [vmem:[%s183 + $0x1e8] sm:$0xff]
                %248 = vst [vmem:[%s184 + $0xf8] sm:$0xff] %v247
                %v249 = vld [vmem:[%s183 + $0x200] sm:$0xff]
                %250 = vst [vmem:[%s184 + $0x100] sm:$0xff] %v249
                %v251 = vld [vmem:[%s183 + $0x208] sm:$0xff]
                %252 = vst [vmem:[%s184 + $0x108] sm:$0xff] %v251
                %v253 = vld [vmem:[%s183 + $0x220] sm:$0xff]
                %254 = vst [vmem:[%s184 + $0x110] sm:$0xff] %v253
                %v255 = vld [vmem:[%s183 + $0x228] sm:$0xff]
                %256 = vst [vmem:[%s184 + $0x118] sm:$0xff] %v255
                %v257 = vld [vmem:[%s183 + $0x240] sm:$0xff]
                %258 = vst [vmem:[%s184 + $0x120] sm:$0xff] %v257
                %v259 = vld [vmem:[%s183 + $0x248] sm:$0xff]
                %260 = vst [vmem:[%s184 + $0x128] sm:$0xff] %v259
                %v261 = vld [vmem:[%s183 + $0x260] sm:$0xff]
                %262 = vst [vmem:[%s184 + $0x130] sm:$0xff] %v261
                %v263 = vld [vmem:[%s183 + $0x268] sm:$0xff]
                %264 = vst [vmem:[%s184 + $0x138] sm:$0xff] %v263
                %v265 = vld [vmem:[%s183 + $0x280] sm:$0xff]
                %266 = vst [vmem:[%s184 + $0x140] sm:$0xff] %v265
                %v267 = vld [vmem:[%s183 + $0x288] sm:$0xff]
                %268 = vst [vmem:[%s184 + $0x148] sm:$0xff] %v267
                %v269 = vld [vmem:[%s183 + $0x2a0] sm:$0xff]
                %270 = vst [vmem:[%s184 + $0x150] sm:$0xff] %v269
                %v271 = vld [vmem:[%s183 + $0x2a8] sm:$0xff]
                %272 = vst [vmem:[%s184 + $0x158] sm:$0xff] %v271
                %v273 = vld [vmem:[%s183 + $0x2c0] sm:$0xff]
                %274 = vst [vmem:[%s184 + $0x160] sm:$0xff] %v273
                %v275 = vld [vmem:[%s183 + $0x2c8] sm:$0xff]
                %276 = vst [vmem:[%s184 + $0x168] sm:$0xff] %v275
                %v277 = vld [vmem:[%s183 + $0x2e0] sm:$0xff]
                %278 = vst [vmem:[%s184 + $0x170] sm:$0xff] %v277
                %v279 = vld [vmem:[%s183 + $0x2e8] sm:$0xff]
                %280 = vst [vmem:[%s184 + $0x178] sm:$0xff] %v279
                %v281 = vld [vmem:[%s183 + $0x300] sm:$0xff]
                %282 = vst [vmem:[%s184 + $0x180] sm:$0xff] %v281
                %v283 = vld [vmem:[%s183 + $0x308] sm:$0xff]
                %284 = vst [vmem:[%s184 + $0x188] sm:$0xff] %v283
                %v285 = vld [vmem:[%s183 + $0x320] sm:$0xff]
                %286 = vst [vmem:[%s184 + $0x190] sm:$0xff] %v285
                %v287 = vld [vmem:[%s183 + $0x328] sm:$0xff]
                %288 = vst [vmem:[%s184 + $0x198] sm:$0xff] %v287
                %v289 = vld [vmem:[%s183 + $0x340] sm:$0xff]
                %290 = vst [vmem:[%s184 + $0x1a0] sm:$0xff] %v289
                %v291 = vld [vmem:[%s183 + $0x348] sm:$0xff]
                %292 = vst [vmem:[%s184 + $0x1a8] sm:$0xff] %v291
                %v293 = vld [vmem:[%s183 + $0x360] sm:$0xff]
                %294 = vst [vmem:[%s184 + $0x1b0] sm:$0xff] %v293
                %v295 = vld [vmem:[%s183 + $0x368] sm:$0xff]
                %296 = vst [vmem:[%s184 + $0x1b8] sm:$0xff] %v295
                %v297 = vld [vmem:[%s183 + $0x380] sm:$0xff]
                %298 = vst [vmem:[%s184 + $0x1c0] sm:$0xff] %v297
                %v299 = vld [vmem:[%s183 + $0x388] sm:$0xff]
                %300 = vst [vmem:[%s184 + $0x1c8] sm:$0xff] %v299
                %v301 = vld [vmem:[%s183 + $0x3a0] sm:$0xff]
                %302 = vst [vmem:[%s184 + $0x1d0] sm:$0xff] %v301
                %v303 = vld [vmem:[%s183 + $0x3a8] sm:$0xff]
                %304 = vst [vmem:[%s184 + $0x1d8] sm:$0xff] %v303
                %v305 = vld [vmem:[%s183 + $0x3c0] sm:$0xff]
                %306 = vst [vmem:[%s184 + $0x1e0] sm:$0xff] %v305
                %v307 = vld [vmem:[%s183 + $0x3c8] sm:$0xff]
                %308 = vst [vmem:[%s184 + $0x1e8] sm:$0xff] %v307
                %v309 = vld [vmem:[%s183 + $0x3e0] sm:$0xff]
                %310 = vst [vmem:[%s184 + $0x1f0] sm:$0xff] %v309
                %v311 = vld [vmem:[%s183 + $0x3e8] sm:$0xff]
                %312 = vst [vmem:[%s184 + $0x1f8] sm:$0xff] %v311
                %v313 = vld [vmem:[%s183 + $0x400] sm:$0xff]
                %314 = vst [vmem:[%s184 + $0x200] sm:$0xff] %v313
                %v315 = vld [vmem:[%s183 + $0x408] sm:$0xff]
                %316 = vst [vmem:[%s184 + $0x208] sm:$0xff] %v315
                %v317 = vld [vmem:[%s183 + $0x420] sm:$0xff]
                %318 = vst [vmem:[%s184 + $0x210] sm:$0xff] %v317
                %v319 = vld [vmem:[%s183 + $0x428] sm:$0xff]
                %320 = vst [vmem:[%s184 + $0x218] sm:$0xff] %v319
                %v321 = vld [vmem:[%s183 + $0x440] sm:$0xff]
                %322 = vst [vmem:[%s184 + $0x220] sm:$0xff] %v321
                %v323 = vld [vmem:[%s183 + $0x448] sm:$0xff]
                %324 = vst [vmem:[%s184 + $0x228] sm:$0xff] %v323
                %v325 = vld [vmem:[%s183 + $0x460] sm:$0xff]
                %326 = vst [vmem:[%s184 + $0x230] sm:$0xff] %v325
                %v327 = vld [vmem:[%s183 + $0x468] sm:$0xff]
                %328 = vst [vmem:[%s184 + $0x238] sm:$0xff] %v327
                %v329 = vld [vmem:[%s183 + $0x480] sm:$0xff]
                %330 = vst [vmem:[%s184 + $0x240] sm:$0xff] %v329
                %v331 = vld [vmem:[%s183 + $0x488] sm:$0xff]
                %332 = vst [vmem:[%s184 + $0x248] sm:$0xff] %v331
                %v333 = vld [vmem:[%s183 + $0x4a0] sm:$0xff]
                %334 = vst [vmem:[%s184 + $0x250] sm:$0xff] %v333
                %v335 = vld [vmem:[%s183 + $0x4a8] sm:$0xff]
                %336 = vst [vmem:[%s184 + $0x258] sm:$0xff] %v335
                %v337 = vld [vmem:[%s183 + $0x4c0] sm:$0xff]
                %338 = vst [vmem:[%s184 + $0x260] sm:$0xff] %v337
                %v339 = vld [vmem:[%s183 + $0x4c8] sm:$0xff]
                %340 = vst [vmem:[%s184 + $0x268] sm:$0xff] %v339
                %v341 = vld [vmem:[%s183 + $0x4e0] sm:$0xff]
                %342 = vst [vmem:[%s184 + $0x270] sm:$0xff] %v341
                %v343 = vld [vmem:[%s183 + $0x4e8] sm:$0xff]
                %344 = vst [vmem:[%s184 + $0x278] sm:$0xff] %v343
                %v345 = vld [vmem:[%s183 + $0x500] sm:$0xff]
                %346 = vst [vmem:[%s184 + $0x280] sm:$0xff] %v345
                %v347 = vld [vmem:[%s183 + $0x508] sm:$0xff]
                %348 = vst [vmem:[%s184 + $0x288] sm:$0xff] %v347
                %v349 = vld [vmem:[%s183 + $0x520] sm:$0xff]
                %350 = vst [vmem:[%s184 + $0x290] sm:$0xff] %v349
                %v351 = vld [vmem:[%s183 + $0x528] sm:$0xff]
                %352 = vst [vmem:[%s184 + $0x298] sm:$0xff] %v351
                %v353 = vld [vmem:[%s183 + $0x540] sm:$0xff]
                %354 = vst [vmem:[%s184 + $0x2a0] sm:$0xff] %v353
                %v355 = vld [vmem:[%s183 + $0x548] sm:$0xff]
                %356 = vst [vmem:[%s184 + $0x2a8] sm:$0xff] %v355
                %v357 = vld [vmem:[%s183 + $0x560] sm:$0xff]
                %358 = vst [vmem:[%s184 + $0x2b0] sm:$0xff] %v357
                %v359 = vld [vmem:[%s183 + $0x568] sm:$0xff]
                %360 = vst [vmem:[%s184 + $0x2b8] sm:$0xff] %v359
                %v361 = vld [vmem:[%s183 + $0x580] sm:$0xff]
                %362 = vst [vmem:[%s184 + $0x2c0] sm:$0xff] %v361
                %v363 = vld [vmem:[%s183 + $0x588] sm:$0xff]
                %364 = vst [vmem:[%s184 + $0x2c8] sm:$0xff] %v363
                %v365 = vld [vmem:[%s183 + $0x5a0] sm:$0xff]
                %366 = vst [vmem:[%s184 + $0x2d0] sm:$0xff] %v365
                %v367 = vld [vmem:[%s183 + $0x5a8] sm:$0xff]
                %368 = vst [vmem:[%s184 + $0x2d8] sm:$0xff] %v367
                %v369 = vld [vmem:[%s183 + $0x5c0] sm:$0xff]
                %370 = vst [vmem:[%s184 + $0x2e0] sm:$0xff] %v369
                %v371 = vld [vmem:[%s183 + $0x5c8] sm:$0xff]
                %372 = vst [vmem:[%s184 + $0x2e8] sm:$0xff] %v371
                %v373 = vld [vmem:[%s183 + $0x5e0] sm:$0xff]
                %374 = vst [vmem:[%s184 + $0x2f0] sm:$0xff] %v373
                %v375 = vld [vmem:[%s183 + $0x5e8] sm:$0xff]
                %376 = vst [vmem:[%s184 + $0x2f8] sm:$0xff] %v375
                %v377 = vld [vmem:[%s183 + $0x600] sm:$0xff]
                %378 = vst [vmem:[%s184 + $0x300] sm:$0xff] %v377
                %v379 = vld [vmem:[%s183 + $0x608] sm:$0xff]
                %380 = vst [vmem:[%s184 + $0x308] sm:$0xff] %v379
                %v381 = vld [vmem:[%s183 + $0x620] sm:$0xff]
                %382 = vst [vmem:[%s184 + $0x310] sm:$0xff] %v381
                %v383 = vld [vmem:[%s183 + $0x628] sm:$0xff]
                %384 = vst [vmem:[%s184 + $0x318] sm:$0xff] %v383
                %v385 = vld [vmem:[%s183 + $0x640] sm:$0xff]
                %386 = vst [vmem:[%s184 + $0x320] sm:$0xff] %v385
                %v387 = vld [vmem:[%s183 + $0x648] sm:$0xff]
                %388 = vst [vmem:[%s184 + $0x328] sm:$0xff] %v387
                %v389 = vld [vmem:[%s183 + $0x660] sm:$0xff]
                %390 = vst [vmem:[%s184 + $0x330] sm:$0xff] %v389
                %v391 = vld [vmem:[%s183 + $0x668] sm:$0xff]
                %392 = vst [vmem:[%s184 + $0x338] sm:$0xff] %v391
                %v393 = vld [vmem:[%s183 + $0x680] sm:$0xff]
                %394 = vst [vmem:[%s184 + $0x340] sm:$0xff] %v393
                %v395 = vld [vmem:[%s183 + $0x688] sm:$0xff]
                %396 = vst [vmem:[%s184 + $0x348] sm:$0xff] %v395
                %v397 = vld [vmem:[%s183 + $0x6a0] sm:$0xff]
                %398 = vst [vmem:[%s184 + $0x350] sm:$0xff] %v397
                %v399 = vld [vmem:[%s183 + $0x6a8] sm:$0xff]
                %400 = vst [vmem:[%s184 + $0x358] sm:$0xff] %v399
                %v401 = vld [vmem:[%s183 + $0x6c0] sm:$0xff]
                %402 = vst [vmem:[%s184 + $0x360] sm:$0xff] %v401
                %v403 = vld [vmem:[%s183 + $0x6c8] sm:$0xff]
                %404 = vst [vmem:[%s184 + $0x368] sm:$0xff] %v403
                %v405 = vld [vmem:[%s183 + $0x6e0] sm:$0xff]
                %406 = vst [vmem:[%s184 + $0x370] sm:$0xff] %v405
                %v407 = vld [vmem:[%s183 + $0x6e8] sm:$0xff]
                %408 = vst [vmem:[%s184 + $0x378] sm:$0xff] %v407
                %v409 = vld [vmem:[%s183 + $0x700] sm:$0xff]
                %410 = vst [vmem:[%s184 + $0x380] sm:$0xff] %v409
                %v411 = vld [vmem:[%s183 + $0x708] sm:$0xff]
                %412 = vst [vmem:[%s184 + $0x388] sm:$0xff] %v411
                %v413 = vld [vmem:[%s183 + $0x720] sm:$0xff]
                %414 = vst [vmem:[%s184 + $0x390] sm:$0xff] %v413
                %v415 = vld [vmem:[%s183 + $0x728] sm:$0xff]
                %416 = vst [vmem:[%s184 + $0x398] sm:$0xff] %v415
                %v417 = vld [vmem:[%s183 + $0x740] sm:$0xff]
                %418 = vst [vmem:[%s184 + $0x3a0] sm:$0xff] %v417
                %v419 = vld [vmem:[%s183 + $0x748] sm:$0xff]
                %420 = vst [vmem:[%s184 + $0x3a8] sm:$0xff] %v419
                %v421 = vld [vmem:[%s183 + $0x760] sm:$0xff]
                %422 = vst [vmem:[%s184 + $0x3b0] sm:$0xff] %v421
                %v423 = vld [vmem:[%s183 + $0x768] sm:$0xff]
                %424 = vst [vmem:[%s184 + $0x3b8] sm:$0xff] %v423
                %v425 = vld [vmem:[%s183 + $0x780] sm:$0xff]
                %426 = vst [vmem:[%s184 + $0x3c0] sm:$0xff] %v425
                %v427 = vld [vmem:[%s183 + $0x788] sm:$0xff]
                %428 = vst [vmem:[%s184 + $0x3c8] sm:$0xff] %v427
                %v429 = vld [vmem:[%s183 + $0x7a0] sm:$0xff]
                %430 = vst [vmem:[%s184 + $0x3d0] sm:$0xff] %v429
                %v431 = vld [vmem:[%s183 + $0x7a8] sm:$0xff]
                %432 = vst [vmem:[%s184 + $0x3d8] sm:$0xff] %v431
                %v433 = vld [vmem:[%s183 + $0x7c0] sm:$0xff]
                %434 = vst [vmem:[%s184 + $0x3e0] sm:$0xff] %v433
                %v435 = vld [vmem:[%s183 + $0x7c8] sm:$0xff]
                %436 = vst [vmem:[%s184 + $0x3e8] sm:$0xff] %v435
                %v437 = vld [vmem:[%s183 + $0x7e0] sm:$0xff]
                %438 = vst [vmem:[%s184 + $0x3f0] sm:$0xff] %v437
                %v439 = vld [vmem:[%s183 + $0x7e8] sm:$0xff]
                %440 = vst [vmem:[%s184 + $0x3f8] sm:$0xff] %v439
              $region41: #{_gcn_forward_padded.5} parent=35 // loop_footer
                %s182 = sadd.s32 1, %s178
              $region42: #{_gcn_forward_padded.5} parent=35 // loop_footer_branch
                %177 = sbr.rel target = $region38
              $region43: #{_gcn_forward_padded.5} parent=35 // loop_exit
                _
            $region36: #{_gcn_forward_padded.5} parent=31 // pred_fallthru
              _
            // Predicated region
            $region44: #{_gcn_forward_padded.5} parent=31 // pred_check
              _
            $region45: #{_gcn_forward_padded.5} parent=31 // pred_check_branch
              %442 = sbr.rel target = $region47
            $region46: #{_gcn_forward_padded.5} parent=31 // pred_region
              _
            $region47: #{_gcn_forward_padded.5} parent=31 // pred_fallthru
              _
          $region32: #{_gcn_forward_padded.5} parent=27 // pred_fallthru
            _
          %443 = vnop
        $region28: #{_gcn_forward_padded.5} parent=23 // pred_fallthru
          _
      $region24: #{_gcn_forward_padded.5} parent=5 // pred_fallthru
        _
      %p444 = scmp.le.s32.totalorder 1, %s21
      %p445 = scmp.lt.s32.totalorder %s21, 3
      %p446 = pnand %p444, %p445
      %p447 = pneg %p446
      // Predicated region
      $region48: #{_gcn_forward_padded.5} parent=5 // pred_check
        _
      $region49: #{_gcn_forward_padded.5} parent=5 // pred_check_branch
        %449 = sbr.rel (%p446) target = $region51
      $region50: #{_gcn_forward_padded.5} parent=5 // pred_region
        %s450 = ssub.s32 %s21, 1
        %s451 = sand.u32 %s52, 1
        %s452 = sand.u32 %s52, 1
        %s453 = smul.addr %s452, 1024
        %s454 = scalar_lea.vmem [#allocation6], %s453
        // Predicated region
        $region52: #{_gcn_forward_padded.5} parent=50 // pred_check
          %p455 = pneg %p65
        $region53: #{_gcn_forward_padded.5} parent=50 // pred_check_branch
          %457 = sbr.rel (%p455) target = $region55
        $region54: #{_gcn_forward_padded.5} parent=50 // pred_region
          _
        $region55: #{_gcn_forward_padded.5} parent=50 // pred_fallthru
          _
        %s458 = sand.u32 %s52, 1
        %s459 = sand.u32 %s52, 1
        %s460 = smul.addr %s459, 1024
        %s461 = scalar_lea.vmem [#allocation6], %s460
        %p462 = pneg %p65
        %p463 = pneg %p62
        %p464 = pneg %p86
        %p465 = pneg %p83
        %p466 = pneg %p107
        %p467 = pneg %p104
        %p468 = pneg %p133
        %p469 = pneg %p130
        %s470 = smul.u32 64, %s30
        %p471 = scmp.lt.s32.totalorder %s470, 127
        %s472 = scalar_select %p471, %s470, 127
        %s473 = smul.addr %s472, 8
        %s474 = scalar_lea.vmem %s5, %s473
        %s475 = sadd.s32 %s30, %s31
        %s476 = sld [smem:[#allocation4 + %s475]]
        %s477 = smul.u32 64, %s30
        %s478 = smul.u32 4, %s476
        %s479 = smul.u32 64, %s30
        %p480 = scmp.lt.s32.totalorder %s479, 127
        %s481 = scalar_select %p480, %s479, 127
        %s482 = smul.addr %s481, 8
        %s483 = scalar_lea.vmem %s5, %s482
        %s484 = smul.u32 64, %s30
        %p486 = scmp.eq.s32.totalorder %s31, 0
        // Predicated region
        $region56: #{_gcn_forward_padded.5} parent=50 // pred_check
          %p487 = pneg %p486
        $region57: #{_gcn_forward_padded.5} parent=50 // pred_check_branch
          %489 = sbr.rel (%p487) target = $region59
        $region58: #{_gcn_forward_padded.5} parent=50 // pred_region
          %490 = vst [vmem:[#allocation2] sm:$0xff] 0.0
          %491 = vst [vmem:[#allocation2 + $0x8] sm:$0xff] 0.0
          %492 = vst [vmem:[#allocation2 + $0x10] sm:$0xff] 0.0
          %493 = vst [vmem:[#allocation2 + $0x18] sm:$0xff] 0.0
          %494 = vst [vmem:[#allocation2 + $0x20] sm:$0xff] 0.0
          %495 = vst [vmem:[#allocation2 + $0x28] sm:$0xff] 0.0
          %496 = vst [vmem:[#allocation2 + $0x30] sm:$0xff] 0.0
          %497 = vst [vmem:[#allocation2 + $0x38] sm:$0xff] 0.0
          %498 = vst [vmem:[#allocation2 + $0x40] sm:$0xff] 0.0
          %499 = vst [vmem:[#allocation2 + $0x48] sm:$0xff] 0.0
          %500 = vst [vmem:[#allocation2 + $0x50] sm:$0xff] 0.0
          %501 = vst [vmem:[#allocation2 + $0x58] sm:$0xff] 0.0
          %502 = vst [vmem:[#allocation2 + $0x60] sm:$0xff] 0.0
          %503 = vst [vmem:[#allocation2 + $0x68] sm:$0xff] 0.0
          %504 = vst [vmem:[#allocation2 + $0x70] sm:$0xff] 0.0
          %505 = vst [vmem:[#allocation2 + $0x78] sm:$0xff] 0.0
          %506 = vst [vmem:[#allocation2 + $0x80] sm:$0xff] 0.0
          %507 = vst [vmem:[#allocation2 + $0x88] sm:$0xff] 0.0
          %508 = vst [vmem:[#allocation2 + $0x90] sm:$0xff] 0.0
          %509 = vst [vmem:[#allocation2 + $0x98] sm:$0xff] 0.0
          %510 = vst [vmem:[#allocation2 + $0xa0] sm:$0xff] 0.0
          %511 = vst [vmem:[#allocation2 + $0xa8] sm:$0xff] 0.0
          %512 = vst [vmem:[#allocation2 + $0xb0] sm:$0xff] 0.0
          %513 = vst [vmem:[#allocation2 + $0xb8] sm:$0xff] 0.0
          %514 = vst [vmem:[#allocation2 + $0xc0] sm:$0xff] 0.0
          %515 = vst [vmem:[#allocation2 + $0xc8] sm:$0xff] 0.0
          %516 = vst [vmem:[#allocation2 + $0xd0] sm:$0xff] 0.0
          %517 = vst [vmem:[#allocation2 + $0xd8] sm:$0xff] 0.0
          %518 = vst [vmem:[#allocation2 + $0xe0] sm:$0xff] 0.0
          %519 = vst [vmem:[#allocation2 + $0xe8] sm:$0xff] 0.0
          %520 = vst [vmem:[#allocation2 + $0xf0] sm:$0xff] 0.0
          %521 = vst [vmem:[#allocation2 + $0xf8] sm:$0xff] 0.0
          %522 = vst [vmem:[#allocation2 + $0x100] sm:$0xff] 0.0
          %523 = vst [vmem:[#allocation2 + $0x108] sm:$0xff] 0.0
          %524 = vst [vmem:[#allocation2 + $0x110] sm:$0xff] 0.0
          %525 = vst [vmem:[#allocation2 + $0x118] sm:$0xff] 0.0
          %526 = vst [vmem:[#allocation2 + $0x120] sm:$0xff] 0.0
          %527 = vst [vmem:[#allocation2 + $0x128] sm:$0xff] 0.0
          %528 = vst [vmem:[#allocation2 + $0x130] sm:$0xff] 0.0
          %529 = vst [vmem:[#allocation2 + $0x138] sm:$0xff] 0.0
          %530 = vst [vmem:[#allocation2 + $0x140] sm:$0xff] 0.0
          %531 = vst [vmem:[#allocation2 + $0x148] sm:$0xff] 0.0
          %532 = vst [vmem:[#allocation2 + $0x150] sm:$0xff] 0.0
          %533 = vst [vmem:[#allocation2 + $0x158] sm:$0xff] 0.0
          %534 = vst [vmem:[#allocation2 + $0x160] sm:$0xff] 0.0
          %535 = vst [vmem:[#allocation2 + $0x168] sm:$0xff] 0.0
          %536 = vst [vmem:[#allocation2 + $0x170] sm:$0xff] 0.0
          %537 = vst [vmem:[#allocation2 + $0x178] sm:$0xff] 0.0
          %538 = vst [vmem:[#allocation2 + $0x180] sm:$0xff] 0.0
          %539 = vst [vmem:[#allocation2 + $0x188] sm:$0xff] 0.0
          %540 = vst [vmem:[#allocation2 + $0x190] sm:$0xff] 0.0
          %541 = vst [vmem:[#allocation2 + $0x198] sm:$0xff] 0.0
          %542 = vst [vmem:[#allocation2 + $0x1a0] sm:$0xff] 0.0
          %543 = vst [vmem:[#allocation2 + $0x1a8] sm:$0xff] 0.0
          %544 = vst [vmem:[#allocation2 + $0x1b0] sm:$0xff] 0.0
          %545 = vst [vmem:[#allocation2 + $0x1b8] sm:$0xff] 0.0
          %546 = vst [vmem:[#allocation2 + $0x1c0] sm:$0xff] 0.0
          %547 = vst [vmem:[#allocation2 + $0x1c8] sm:$0xff] 0.0
          %548 = vst [vmem:[#allocation2 + $0x1d0] sm:$0xff] 0.0
          %549 = vst [vmem:[#allocation2 + $0x1d8] sm:$0xff] 0.0
          %550 = vst [vmem:[#allocation2 + $0x1e0] sm:$0xff] 0.0
          %551 = vst [vmem:[#allocation2 + $0x1e8] sm:$0xff] 0.0
          %552 = vst [vmem:[#allocation2 + $0x1f0] sm:$0xff] 0.0
          %553 = vst [vmem:[#allocation2 + $0x1f8] sm:$0xff] 0.0
        $region59: #{_gcn_forward_padded.5} parent=50 // pred_fallthru
          _
        %s554 = sld [smem:[#allocation5 + %s30]]
        %p555 = scmp.lt.s32.totalorder %s31, %s554
        // Predicated region
        $region60: #{_gcn_forward_padded.5} parent=50 // pred_check
          %p556 = pneg %p555
        $region61: #{_gcn_forward_padded.5} parent=50 // pred_check_branch
          %558 = sbr.rel (%p556) target = $region63
        $region62: #{_gcn_forward_padded.5} parent=50 // pred_region
          %s559 = sadd.s32 %s30, %s31
          %s560 = sld [smem:[#allocation4 + %s559]]
          %s561 = smul.u32 %s560, 512
          %s562 = sshra.s32 %s561, 3
          %s563 = sand.u32 %s561, 7
          %s564 = smul.addr %s562, 4
          %s565 = scalar_lea.vmem %s3, %s564
          %v566 = vld [vmem:[%s565] sm:$0xf]
          %v567 = vld [vmem:[%s565 + $0x4] sm:$0xf]
          %v568 = vld [vmem:[%s565 + $0x8] sm:$0xf]
          %v569 = vld [vmem:[%s565 + $0xc] sm:$0xf]
          %v570 = vld [vmem:[%s565 + $0x10] sm:$0xf]
          %v571 = vld [vmem:[%s565 + $0x14] sm:$0xf]
          %v572 = vld [vmem:[%s565 + $0x18] sm:$0xf]
          %v573 = vld [vmem:[%s565 + $0x1c] sm:$0xf]
          %v574 = vld [vmem:[%s565 + $0x20] sm:$0xf]
          %v575 = vld [vmem:[%s565 + $0x24] sm:$0xf]
          %v576 = vld [vmem:[%s565 + $0x28] sm:$0xf]
          %v577 = vld [vmem:[%s565 + $0x2c] sm:$0xf]
          %v578 = vld [vmem:[%s565 + $0x30] sm:$0xf]
          %v579 = vld [vmem:[%s565 + $0x34] sm:$0xf]
          %v580 = vld [vmem:[%s565 + $0x38] sm:$0xf]
          %v581 = vld [vmem:[%s565 + $0x3c] sm:$0xf]
          %v582 = vld [vmem:[%s565 + $0x40] sm:$0xf]
          %v583 = vld [vmem:[%s565 + $0x44] sm:$0xf]
          %v584 = vld [vmem:[%s565 + $0x48] sm:$0xf]
          %v585 = vld [vmem:[%s565 + $0x4c] sm:$0xf]
          %v586 = vld [vmem:[%s565 + $0x50] sm:$0xf]
          %v587 = vld [vmem:[%s565 + $0x54] sm:$0xf]
          %v588 = vld [vmem:[%s565 + $0x58] sm:$0xf]
          %v589 = vld [vmem:[%s565 + $0x5c] sm:$0xf]
          %v590 = vld [vmem:[%s565 + $0x60] sm:$0xf]
          %v591 = vld [vmem:[%s565 + $0x64] sm:$0xf]
          %v592 = vld [vmem:[%s565 + $0x68] sm:$0xf]
          %v593 = vld [vmem:[%s565 + $0x6c] sm:$0xf]
          %v594 = vld [vmem:[%s565 + $0x70] sm:$0xf]
          %v595 = vld [vmem:[%s565 + $0x74] sm:$0xf]
          %v596 = vld [vmem:[%s565 + $0x78] sm:$0xf]
          %v597 = vld [vmem:[%s565 + $0x7c] sm:$0xf]
          %v598 = vld [vmem:[%s565 + $0x80] sm:$0xf]
          %v599 = vld [vmem:[%s565 + $0x84] sm:$0xf]
          %v600 = vld [vmem:[%s565 + $0x88] sm:$0xf]
          %v601 = vld [vmem:[%s565 + $0x8c] sm:$0xf]
          %v602 = vld [vmem:[%s565 + $0x90] sm:$0xf]
          %v603 = vld [vmem:[%s565 + $0x94] sm:$0xf]
          %v604 = vld [vmem:[%s565 + $0x98] sm:$0xf]
          %v605 = vld [vmem:[%s565 + $0x9c] sm:$0xf]
          %v606 = vld [vmem:[%s565 + $0xa0] sm:$0xf]
          %v607 = vld [vmem:[%s565 + $0xa4] sm:$0xf]
          %v608 = vld [vmem:[%s565 + $0xa8] sm:$0xf]
          %v609 = vld [vmem:[%s565 + $0xac] sm:$0xf]
          %v610 = vld [vmem:[%s565 + $0xb0] sm:$0xf]
          %v611 = vld [vmem:[%s565 + $0xb4] sm:$0xf]
          %v612 = vld [vmem:[%s565 + $0xb8] sm:$0xf]
          %v613 = vld [vmem:[%s565 + $0xbc] sm:$0xf]
          %v614 = vld [vmem:[%s565 + $0xc0] sm:$0xf]
          %v615 = vld [vmem:[%s565 + $0xc4] sm:$0xf]
          %v616 = vld [vmem:[%s565 + $0xc8] sm:$0xf]
          %v617 = vld [vmem:[%s565 + $0xcc] sm:$0xf]
          %v618 = vld [vmem:[%s565 + $0xd0] sm:$0xf]
          %v619 = vld [vmem:[%s565 + $0xd4] sm:$0xf]
          %v620 = vld [vmem:[%s565 + $0xd8] sm:$0xf]
          %v621 = vld [vmem:[%s565 + $0xdc] sm:$0xf]
          %v622 = vld [vmem:[%s565 + $0xe0] sm:$0xf]
          %v623 = vld [vmem:[%s565 + $0xe4] sm:$0xf]
          %v624 = vld [vmem:[%s565 + $0xe8] sm:$0xf]
          %v625 = vld [vmem:[%s565 + $0xec] sm:$0xf]
          %v626 = vld [vmem:[%s565 + $0xf0] sm:$0xf]
          %v627 = vld [vmem:[%s565 + $0xf4] sm:$0xf]
          %v628 = vld [vmem:[%s565 + $0xf8] sm:$0xf]
          %v629 = vld [vmem:[%s565 + $0xfc] sm:$0xf]
          %v630 = vld [vmem:[#allocation2] sm:$0xff]
          %v631 = vld [vmem:[#allocation2 + $0x8] sm:$0xff]
          %v632 = vld [vmem:[#allocation2 + $0x10] sm:$0xff]
          %v633 = vld [vmem:[#allocation2 + $0x18] sm:$0xff]
          %v634 = vld [vmem:[#allocation2 + $0x20] sm:$0xff]
          %v635 = vld [vmem:[#allocation2 + $0x28] sm:$0xff]
          %v636 = vld [vmem:[#allocation2 + $0x30] sm:$0xff]
          %v637 = vld [vmem:[#allocation2 + $0x38] sm:$0xff]
          %v638 = vld [vmem:[#allocation2 + $0x40] sm:$0xff]
          %v639 = vld [vmem:[#allocation2 + $0x48] sm:$0xff]
          %v640 = vld [vmem:[#allocation2 + $0x50] sm:$0xff]
          %v641 = vld [vmem:[#allocation2 + $0x58] sm:$0xff]
          %v642 = vld [vmem:[#allocation2 + $0x60] sm:$0xff]
          %v643 = vld [vmem:[#allocation2 + $0x68] sm:$0xff]
          %v644 = vld [vmem:[#allocation2 + $0x70] sm:$0xff]
          %v645 = vld [vmem:[#allocation2 + $0x78] sm:$0xff]
          %v646 = vld [vmem:[#allocation2 + $0x80] sm:$0xff]
          %v647 = vld [vmem:[#allocation2 + $0x88] sm:$0xff]
          %v648 = vld [vmem:[#allocation2 + $0x90] sm:$0xff]
          %v649 = vld [vmem:[#allocation2 + $0x98] sm:$0xff]
          %v650 = vld [vmem:[#allocation2 + $0xa0] sm:$0xff]
          %v651 = vld [vmem:[#allocation2 + $0xa8] sm:$0xff]
          %v652 = vld [vmem:[#allocation2 + $0xb0] sm:$0xff]
          %v653 = vld [vmem:[#allocation2 + $0xb8] sm:$0xff]
          %v654 = vld [vmem:[#allocation2 + $0xc0] sm:$0xff]
          %v655 = vld [vmem:[#allocation2 + $0xc8] sm:$0xff]
          %v656 = vld [vmem:[#allocation2 + $0xd0] sm:$0xff]
          %v657 = vld [vmem:[#allocation2 + $0xd8] sm:$0xff]
          %v658 = vld [vmem:[#allocation2 + $0xe0] sm:$0xff]
          %v659 = vld [vmem:[#allocation2 + $0xe8] sm:$0xff]
          %v660 = vld [vmem:[#allocation2 + $0xf0] sm:$0xff]
          %v661 = vld [vmem:[#allocation2 + $0xf8] sm:$0xff]
          %v662 = vld [vmem:[#allocation2 + $0x100] sm:$0xff]
          %v663 = vld [vmem:[#allocation2 + $0x108] sm:$0xff]
          %v664 = vld [vmem:[#allocation2 + $0x110] sm:$0xff]
          %v665 = vld [vmem:[#allocation2 + $0x118] sm:$0xff]
          %v666 = vld [vmem:[#allocation2 + $0x120] sm:$0xff]
          %v667 = vld [vmem:[#allocation2 + $0x128] sm:$0xff]
          %v668 = vld [vmem:[#allocation2 + $0x130] sm:$0xff]
          %v669 = vld [vmem:[#allocation2 + $0x138] sm:$0xff]
          %v670 = vld [vmem:[#allocation2 + $0x140] sm:$0xff]
          %v671 = vld [vmem:[#allocation2 + $0x148] sm:$0xff]
          %v672 = vld [vmem:[#allocation2 + $0x150] sm:$0xff]
          %v673 = vld [vmem:[#allocation2 + $0x158] sm:$0xff]
          %v674 = vld [vmem:[#allocation2 + $0x160] sm:$0xff]
          %v675 = vld [vmem:[#allocation2 + $0x168] sm:$0xff]
          %v676 = vld [vmem:[#allocation2 + $0x170] sm:$0xff]
          %v677 = vld [vmem:[#allocation2 + $0x178] sm:$0xff]
          %v678 = vld [vmem:[#allocation2 + $0x180] sm:$0xff]
          %v679 = vld [vmem:[#allocation2 + $0x188] sm:$0xff]
          %v680 = vld [vmem:[#allocation2 + $0x190] sm:$0xff]
          %v681 = vld [vmem:[#allocation2 + $0x198] sm:$0xff]
          %v682 = vld [vmem:[#allocation2 + $0x1a0] sm:$0xff]
          %v683 = vld [vmem:[#allocation2 + $0x1a8] sm:$0xff]
          %v684 = vld [vmem:[#allocation2 + $0x1b0] sm:$0xff]
          %v685 = vld [vmem:[#allocation2 + $0x1b8] sm:$0xff]
          %v686 = vld [vmem:[#allocation2 + $0x1c0] sm:$0xff]
          %v687 = vld [vmem:[#allocation2 + $0x1c8] sm:$0xff]
          %v688 = vld [vmem:[#allocation2 + $0x1d0] sm:$0xff]
          %v689 = vld [vmem:[#allocation2 + $0x1d8] sm:$0xff]
          %v690 = vld [vmem:[#allocation2 + $0x1e0] sm:$0xff]
          %v691 = vld [vmem:[#allocation2 + $0x1e8] sm:$0xff]
          %v692 = vld [vmem:[#allocation2 + $0x1f0] sm:$0xff]
          %v693 = vld [vmem:[#allocation2 + $0x1f8] sm:$0xff]
          %v694 = vld [vmem:[%s454] sm:$0xff]
          %v695 = vld [vmem:[%s454 + $0x8] sm:$0xff]
          %v696 = vld [vmem:[%s454 + $0x10] sm:$0xff]
          %v697 = vld [vmem:[%s454 + $0x18] sm:$0xff]
          %v698 = vld [vmem:[%s454 + $0x20] sm:$0xff]
          %v699 = vld [vmem:[%s454 + $0x28] sm:$0xff]
          %v700 = vld [vmem:[%s454 + $0x30] sm:$0xff]
          %v701 = vld [vmem:[%s454 + $0x38] sm:$0xff]
          %v702 = vld [vmem:[%s454 + $0x40] sm:$0xff]
          %v703 = vld [vmem:[%s454 + $0x48] sm:$0xff]
          %v704 = vld [vmem:[%s454 + $0x50] sm:$0xff]
          %v705 = vld [vmem:[%s454 + $0x58] sm:$0xff]
          %v706 = vld [vmem:[%s454 + $0x60] sm:$0xff]
          %v707 = vld [vmem:[%s454 + $0x68] sm:$0xff]
          %v708 = vld [vmem:[%s454 + $0x70] sm:$0xff]
          %v709 = vld [vmem:[%s454 + $0x78] sm:$0xff]
          %v710 = vld [vmem:[%s454 + $0x80] sm:$0xff]
          %v711 = vld [vmem:[%s454 + $0x88] sm:$0xff]
          %v712 = vld [vmem:[%s454 + $0x90] sm:$0xff]
          %v713 = vld [vmem:[%s454 + $0x98] sm:$0xff]
          %v714 = vld [vmem:[%s454 + $0xa0] sm:$0xff]
          %v715 = vld [vmem:[%s454 + $0xa8] sm:$0xff]
          %v716 = vld [vmem:[%s454 + $0xb0] sm:$0xff]
          %v717 = vld [vmem:[%s454 + $0xb8] sm:$0xff]
          %v718 = vld [vmem:[%s454 + $0xc0] sm:$0xff]
          %v719 = vld [vmem:[%s454 + $0xc8] sm:$0xff]
          %v720 = vld [vmem:[%s454 + $0xd0] sm:$0xff]
          %v721 = vld [vmem:[%s454 + $0xd8] sm:$0xff]
          %v722 = vld [vmem:[%s454 + $0xe0] sm:$0xff]
          %v723 = vld [vmem:[%s454 + $0xe8] sm:$0xff]
          %v724 = vld [vmem:[%s454 + $0xf0] sm:$0xff]
          %v725 = vld [vmem:[%s454 + $0xf8] sm:$0xff]
          %v726 = vld [vmem:[%s454 + $0x100] sm:$0xff]
          %v727 = vld [vmem:[%s454 + $0x108] sm:$0xff]
          %v728 = vld [vmem:[%s454 + $0x110] sm:$0xff]
          %v729 = vld [vmem:[%s454 + $0x118] sm:$0xff]
          %v730 = vld [vmem:[%s454 + $0x120] sm:$0xff]
          %v731 = vld [vmem:[%s454 + $0x128] sm:$0xff]
          %v732 = vld [vmem:[%s454 + $0x130] sm:$0xff]
          %v733 = vld [vmem:[%s454 + $0x138] sm:$0xff]
          %v734 = vld [vmem:[%s454 + $0x140] sm:$0xff]
          %v735 = vld [vmem:[%s454 + $0x148] sm:$0xff]
          %v736 = vld [vmem:[%s454 + $0x150] sm:$0xff]
          %v737 = vld [vmem:[%s454 + $0x158] sm:$0xff]
          %v738 = vld [vmem:[%s454 + $0x160] sm:$0xff]
          %v739 = vld [vmem:[%s454 + $0x168] sm:$0xff]
          %v740 = vld [vmem:[%s454 + $0x170] sm:$0xff]
          %v741 = vld [vmem:[%s454 + $0x178] sm:$0xff]
          %v742 = vld [vmem:[%s454 + $0x180] sm:$0xff]
          %v743 = vld [vmem:[%s454 + $0x188] sm:$0xff]
          %v744 = vld [vmem:[%s454 + $0x190] sm:$0xff]
          %v745 = vld [vmem:[%s454 + $0x198] sm:$0xff]
          %v746 = vld [vmem:[%s454 + $0x1a0] sm:$0xff]
          %v747 = vld [vmem:[%s454 + $0x1a8] sm:$0xff]
          %v748 = vld [vmem:[%s454 + $0x1b0] sm:$0xff]
          %v749 = vld [vmem:[%s454 + $0x1b8] sm:$0xff]
          %v750 = vld [vmem:[%s454 + $0x1c0] sm:$0xff]
          %v751 = vld [vmem:[%s454 + $0x1c8] sm:$0xff]
          %v752 = vld [vmem:[%s454 + $0x1d0] sm:$0xff]
          %v753 = vld [vmem:[%s454 + $0x1d8] sm:$0xff]
          %v754 = vld [vmem:[%s454 + $0x1e0] sm:$0xff]
          %v755 = vld [vmem:[%s454 + $0x1e8] sm:$0xff]
          %v756 = vld [vmem:[%s454 + $0x1f0] sm:$0xff]
          %v757 = vld [vmem:[%s454 + $0x1f8] sm:$0xff]
          %v758 = vld [vmem:[%s454 + $0x200] sm:$0xff]
          %v759 = vld [vmem:[%s454 + $0x208] sm:$0xff]
          %v760 = vld [vmem:[%s454 + $0x210] sm:$0xff]
          %v761 = vld [vmem:[%s454 + $0x218] sm:$0xff]
          %v762 = vld [vmem:[%s454 + $0x220] sm:$0xff]
          %v763 = vld [vmem:[%s454 + $0x228] sm:$0xff]
          %v764 = vld [vmem:[%s454 + $0x230] sm:$0xff]
          %v765 = vld [vmem:[%s454 + $0x238] sm:$0xff]
          %v766 = vld [vmem:[%s454 + $0x240] sm:$0xff]
          %v767 = vld [vmem:[%s454 + $0x248] sm:$0xff]
          %v768 = vld [vmem:[%s454 + $0x250] sm:$0xff]
          %v769 = vld [vmem:[%s454 + $0x258] sm:$0xff]
          %v770 = vld [vmem:[%s454 + $0x260] sm:$0xff]
          %v771 = vld [vmem:[%s454 + $0x268] sm:$0xff]
          %v772 = vld [vmem:[%s454 + $0x270] sm:$0xff]
          %v773 = vld [vmem:[%s454 + $0x278] sm:$0xff]
          %v774 = vld [vmem:[%s454 + $0x280] sm:$0xff]
          %v775 = vld [vmem:[%s454 + $0x288] sm:$0xff]
          %v776 = vld [vmem:[%s454 + $0x290] sm:$0xff]
          %v777 = vld [vmem:[%s454 + $0x298] sm:$0xff]
          %v778 = vld [vmem:[%s454 + $0x2a0] sm:$0xff]
          %v779 = vld [vmem:[%s454 + $0x2a8] sm:$0xff]
          %v780 = vld [vmem:[%s454 + $0x2b0] sm:$0xff]
          %v781 = vld [vmem:[%s454 + $0x2b8] sm:$0xff]
          %v782 = vld [vmem:[%s454 + $0x2c0] sm:$0xff]
          %v783 = vld [vmem:[%s454 + $0x2c8] sm:$0xff]
          %v784 = vld [vmem:[%s454 + $0x2d0] sm:$0xff]
          %v785 = vld [vmem:[%s454 + $0x2d8] sm:$0xff]
          %v786 = vld [vmem:[%s454 + $0x2e0] sm:$0xff]
          %v787 = vld [vmem:[%s454 + $0x2e8] sm:$0xff]
          %v788 = vld [vmem:[%s454 + $0x2f0] sm:$0xff]
          %v789 = vld [vmem:[%s454 + $0x2f8] sm:$0xff]
          %v790 = vld [vmem:[%s454 + $0x300] sm:$0xff]
          %v791 = vld [vmem:[%s454 + $0x308] sm:$0xff]
          %v792 = vld [vmem:[%s454 + $0x310] sm:$0xff]
          %v793 = vld [vmem:[%s454 + $0x318] sm:$0xff]
          %v794 = vld [vmem:[%s454 + $0x320] sm:$0xff]
          %v795 = vld [vmem:[%s454 + $0x328] sm:$0xff]
          %v796 = vld [vmem:[%s454 + $0x330] sm:$0xff]
          %v797 = vld [vmem:[%s454 + $0x338] sm:$0xff]
          %v798 = vld [vmem:[%s454 + $0x340] sm:$0xff]
          %v799 = vld [vmem:[%s454 + $0x348] sm:$0xff]
          %v800 = vld [vmem:[%s454 + $0x350] sm:$0xff]
          %v801 = vld [vmem:[%s454 + $0x358] sm:$0xff]
          %v802 = vld [vmem:[%s454 + $0x360] sm:$0xff]
          %v803 = vld [vmem:[%s454 + $0x368] sm:$0xff]
          %v804 = vld [vmem:[%s454 + $0x370] sm:$0xff]
          %v805 = vld [vmem:[%s454 + $0x378] sm:$0xff]
          %v806 = vld [vmem:[%s454 + $0x380] sm:$0xff]
          %v807 = vld [vmem:[%s454 + $0x388] sm:$0xff]
          %v808 = vld [vmem:[%s454 + $0x390] sm:$0xff]
          %v809 = vld [vmem:[%s454 + $0x398] sm:$0xff]
          %v810 = vld [vmem:[%s454 + $0x3a0] sm:$0xff]
          %v811 = vld [vmem:[%s454 + $0x3a8] sm:$0xff]
          %v812 = vld [vmem:[%s454 + $0x3b0] sm:$0xff]
          %v813 = vld [vmem:[%s454 + $0x3b8] sm:$0xff]
          %v814 = vld [vmem:[%s454 + $0x3c0] sm:$0xff]
          %v815 = vld [vmem:[%s454 + $0x3c8] sm:$0xff]
          %v816 = vld [vmem:[%s454 + $0x3d0] sm:$0xff]
          %v817 = vld [vmem:[%s454 + $0x3d8] sm:$0xff]
          %v818 = vld [vmem:[%s454 + $0x3e0] sm:$0xff]
          %v819 = vld [vmem:[%s454 + $0x3e8] sm:$0xff]
          %v820 = vld [vmem:[%s454 + $0x3f0] sm:$0xff]
          %v821 = vld [vmem:[%s454 + $0x3f8] sm:$0xff]
          %v950 = vunpack.c.l.b16 %v694
          %v951 = vunpack.c.h.b16 %v694
          %v952 = vunpack.c.l.b16 %v695
          %v953 = vunpack.c.h.b16 %v695
          %v954 = vunpack.c.l.b16 %v696
          %v955 = vunpack.c.h.b16 %v696
          %v956 = vunpack.c.l.b16 %v697
          %v957 = vunpack.c.h.b16 %v697
          %v958 = vunpack.c.l.b16 %v698
          %v959 = vunpack.c.h.b16 %v698
          %v960 = vunpack.c.l.b16 %v699
          %v961 = vunpack.c.h.b16 %v699
          %v962 = vunpack.c.l.b16 %v700
          %v963 = vunpack.c.h.b16 %v700
          %v964 = vunpack.c.l.b16 %v701
          %v965 = vunpack.c.h.b16 %v701
          %v966 = vunpack.c.l.b16 %v702
          %v967 = vunpack.c.h.b16 %v702
          %v968 = vunpack.c.l.b16 %v703
          %v969 = vunpack.c.h.b16 %v703
          %v970 = vunpack.c.l.b16 %v704
          %v971 = vunpack.c.h.b16 %v704
          %v972 = vunpack.c.l.b16 %v705
          %v973 = vunpack.c.h.b16 %v705
          %v974 = vunpack.c.l.b16 %v706
          %v975 = vunpack.c.h.b16 %v706
          %v976 = vunpack.c.l.b16 %v707
          %v977 = vunpack.c.h.b16 %v707
          %v978 = vunpack.c.l.b16 %v708
          %v979 = vunpack.c.h.b16 %v708
          %v980 = vunpack.c.l.b16 %v709
          %v981 = vunpack.c.h.b16 %v709
          %v982 = vunpack.c.l.b16 %v710
          %v983 = vunpack.c.h.b16 %v710
          %v984 = vunpack.c.l.b16 %v711
          %v985 = vunpack.c.h.b16 %v711
          %v986 = vunpack.c.l.b16 %v712
          %v987 = vunpack.c.h.b16 %v712
          %v988 = vunpack.c.l.b16 %v713
          %v989 = vunpack.c.h.b16 %v713
          %v990 = vunpack.c.l.b16 %v714
          %v991 = vunpack.c.h.b16 %v714
          %v992 = vunpack.c.l.b16 %v715
          %v993 = vunpack.c.h.b16 %v715
          %v994 = vunpack.c.l.b16 %v716
          %v995 = vunpack.c.h.b16 %v716
          %v996 = vunpack.c.l.b16 %v717
          %v997 = vunpack.c.h.b16 %v717
          %v998 = vunpack.c.l.b16 %v718
          %v999 = vunpack.c.h.b16 %v718
          %v1000 = vunpack.c.l.b16 %v719
          %v1001 = vunpack.c.h.b16 %v719
          %v1002 = vunpack.c.l.b16 %v720
          %v1003 = vunpack.c.h.b16 %v720
          %v1004 = vunpack.c.l.b16 %v721
          %v1005 = vunpack.c.h.b16 %v721
          %v1006 = vunpack.c.l.b16 %v722
          %v1007 = vunpack.c.h.b16 %v722
          %v1008 = vunpack.c.l.b16 %v723
          %v1009 = vunpack.c.h.b16 %v723
          %v1010 = vunpack.c.l.b16 %v724
          %v1011 = vunpack.c.h.b16 %v724
          %v1012 = vunpack.c.l.b16 %v725
          %v1013 = vunpack.c.h.b16 %v725
          %v1014 = vunpack.c.l.b16 %v726
          %v1015 = vunpack.c.h.b16 %v726
          %v1016 = vunpack.c.l.b16 %v727
          %v1017 = vunpack.c.h.b16 %v727
          %v1018 = vunpack.c.l.b16 %v728
          %v1019 = vunpack.c.h.b16 %v728
          %v1020 = vunpack.c.l.b16 %v729
          %v1021 = vunpack.c.h.b16 %v729
          %v1022 = vunpack.c.l.b16 %v730
          %v1023 = vunpack.c.h.b16 %v730
          %v1024 = vunpack.c.l.b16 %v731
          %v1025 = vunpack.c.h.b16 %v731
          %v1026 = vunpack.c.l.b16 %v732
          %v1027 = vunpack.c.h.b16 %v732
          %v1028 = vunpack.c.l.b16 %v733
          %v1029 = vunpack.c.h.b16 %v733
          %v1030 = vunpack.c.l.b16 %v734
          %v1031 = vunpack.c.h.b16 %v734
          %v1032 = vunpack.c.l.b16 %v735
          %v1033 = vunpack.c.h.b16 %v735
          %v1034 = vunpack.c.l.b16 %v736
          %v1035 = vunpack.c.h.b16 %v736
          %v1036 = vunpack.c.l.b16 %v737
          %v1037 = vunpack.c.h.b16 %v737
          %v1038 = vunpack.c.l.b16 %v738
          %v1039 = vunpack.c.h.b16 %v738
          %v1040 = vunpack.c.l.b16 %v739
          %v1041 = vunpack.c.h.b16 %v739
          %v1042 = vunpack.c.l.b16 %v740
          %v1043 = vunpack.c.h.b16 %v740
          %v1044 = vunpack.c.l.b16 %v741
          %v1045 = vunpack.c.h.b16 %v741
          %v1046 = vunpack.c.l.b16 %v742
          %v1047 = vunpack.c.h.b16 %v742
          %v1048 = vunpack.c.l.b16 %v743
          %v1049 = vunpack.c.h.b16 %v743
          %v1050 = vunpack.c.l.b16 %v744
          %v1051 = vunpack.c.h.b16 %v744
          %v1052 = vunpack.c.l.b16 %v745
          %v1053 = vunpack.c.h.b16 %v745
          %v1054 = vunpack.c.l.b16 %v746
          %v1055 = vunpack.c.h.b16 %v746
          %v1056 = vunpack.c.l.b16 %v747
          %v1057 = vunpack.c.h.b16 %v747
          %v1058 = vunpack.c.l.b16 %v748
          %v1059 = vunpack.c.h.b16 %v748
          %v1060 = vunpack.c.l.b16 %v749
          %v1061 = vunpack.c.h.b16 %v749
          %v1062 = vunpack.c.l.b16 %v750
          %v1063 = vunpack.c.h.b16 %v750
          %v1064 = vunpack.c.l.b16 %v751
          %v1065 = vunpack.c.h.b16 %v751
          %v1066 = vunpack.c.l.b16 %v752
          %v1067 = vunpack.c.h.b16 %v752
          %v1068 = vunpack.c.l.b16 %v753
          %v1069 = vunpack.c.h.b16 %v753
          %v1070 = vunpack.c.l.b16 %v754
          %v1071 = vunpack.c.h.b16 %v754
          %v1072 = vunpack.c.l.b16 %v755
          %v1073 = vunpack.c.h.b16 %v755
          %v1074 = vunpack.c.l.b16 %v756
          %v1075 = vunpack.c.h.b16 %v756
          %v1076 = vunpack.c.l.b16 %v757
          %v1077 = vunpack.c.h.b16 %v757
          %v1078 = vunpack.c.l.b16 %v758
          %v1079 = vunpack.c.h.b16 %v758
          %v1080 = vunpack.c.l.b16 %v759
          %v1081 = vunpack.c.h.b16 %v759
          %v1082 = vunpack.c.l.b16 %v760
          %v1083 = vunpack.c.h.b16 %v760
          %v1084 = vunpack.c.l.b16 %v761
          %v1085 = vunpack.c.h.b16 %v761
          %v1086 = vunpack.c.l.b16 %v762
          %v1087 = vunpack.c.h.b16 %v762
          %v1088 = vunpack.c.l.b16 %v763
          %v1089 = vunpack.c.h.b16 %v763
          %v1090 = vunpack.c.l.b16 %v764
          %v1091 = vunpack.c.h.b16 %v764
          %v1092 = vunpack.c.l.b16 %v765
          %v1093 = vunpack.c.h.b16 %v765
          %v1094 = vunpack.c.l.b16 %v766
          %v1095 = vunpack.c.h.b16 %v766
          %v1096 = vunpack.c.l.b16 %v767
          %v1097 = vunpack.c.h.b16 %v767
          %v1098 = vunpack.c.l.b16 %v768
          %v1099 = vunpack.c.h.b16 %v768
          %v1100 = vunpack.c.l.b16 %v769
          %v1101 = vunpack.c.h.b16 %v769
          %v1102 = vunpack.c.l.b16 %v770
          %v1103 = vunpack.c.h.b16 %v770
          %v1104 = vunpack.c.l.b16 %v771
          %v1105 = vunpack.c.h.b16 %v771
          %v1106 = vunpack.c.l.b16 %v772
          %v1107 = vunpack.c.h.b16 %v772
          %v1108 = vunpack.c.l.b16 %v773
          %v1109 = vunpack.c.h.b16 %v773
          %v1110 = vunpack.c.l.b16 %v774
          %v1111 = vunpack.c.h.b16 %v774
          %v1112 = vunpack.c.l.b16 %v775
          %v1113 = vunpack.c.h.b16 %v775
          %v1114 = vunpack.c.l.b16 %v776
          %v1115 = vunpack.c.h.b16 %v776
          %v1116 = vunpack.c.l.b16 %v777
          %v1117 = vunpack.c.h.b16 %v777
          %v1118 = vunpack.c.l.b16 %v778
          %v1119 = vunpack.c.h.b16 %v778
          %v1120 = vunpack.c.l.b16 %v779
          %v1121 = vunpack.c.h.b16 %v779
          %v1122 = vunpack.c.l.b16 %v780
          %v1123 = vunpack.c.h.b16 %v780
          %v1124 = vunpack.c.l.b16 %v781
          %v1125 = vunpack.c.h.b16 %v781
          %v1126 = vunpack.c.l.b16 %v782
          %v1127 = vunpack.c.h.b16 %v782
          %v1128 = vunpack.c.l.b16 %v783
          %v1129 = vunpack.c.h.b16 %v783
          %v1130 = vunpack.c.l.b16 %v784
          %v1131 = vunpack.c.h.b16 %v784
          %v1132 = vunpack.c.l.b16 %v785
          %v1133 = vunpack.c.h.b16 %v785
          %v1134 = vunpack.c.l.b16 %v786
          %v1135 = vunpack.c.h.b16 %v786
          %v1136 = vunpack.c.l.b16 %v787
          %v1137 = vunpack.c.h.b16 %v787
          %v1138 = vunpack.c.l.b16 %v788
          %v1139 = vunpack.c.h.b16 %v788
          %v1140 = vunpack.c.l.b16 %v789
          %v1141 = vunpack.c.h.b16 %v789
          %v1142 = vunpack.c.l.b16 %v790
          %v1143 = vunpack.c.h.b16 %v790
          %v1144 = vunpack.c.l.b16 %v791
          %v1145 = vunpack.c.h.b16 %v791
          %v1146 = vunpack.c.l.b16 %v792
          %v1147 = vunpack.c.h.b16 %v792
          %v1148 = vunpack.c.l.b16 %v793
          %v1149 = vunpack.c.h.b16 %v793
          %v1150 = vunpack.c.l.b16 %v794
          %v1151 = vunpack.c.h.b16 %v794
          %v1152 = vunpack.c.l.b16 %v795
          %v1153 = vunpack.c.h.b16 %v795
          %v1154 = vunpack.c.l.b16 %v796
          %v1155 = vunpack.c.h.b16 %v796
          %v1156 = vunpack.c.l.b16 %v797
          %v1157 = vunpack.c.h.b16 %v797
          %v1158 = vunpack.c.l.b16 %v798
          %v1159 = vunpack.c.h.b16 %v798
          %v1160 = vunpack.c.l.b16 %v799
          %v1161 = vunpack.c.h.b16 %v799
          %v1162 = vunpack.c.l.b16 %v800
          %v1163 = vunpack.c.h.b16 %v800
          %v1164 = vunpack.c.l.b16 %v801
          %v1165 = vunpack.c.h.b16 %v801
          %v1166 = vunpack.c.l.b16 %v802
          %v1167 = vunpack.c.h.b16 %v802
          %v1168 = vunpack.c.l.b16 %v803
          %v1169 = vunpack.c.h.b16 %v803
          %v1170 = vunpack.c.l.b16 %v804
          %v1171 = vunpack.c.h.b16 %v804
          %v1172 = vunpack.c.l.b16 %v805
          %v1173 = vunpack.c.h.b16 %v805
          %v1174 = vunpack.c.l.b16 %v806
          %v1175 = vunpack.c.h.b16 %v806
          %v1176 = vunpack.c.l.b16 %v807
          %v1177 = vunpack.c.h.b16 %v807
          %v1178 = vunpack.c.l.b16 %v808
          %v1179 = vunpack.c.h.b16 %v808
          %v1180 = vunpack.c.l.b16 %v809
          %v1181 = vunpack.c.h.b16 %v809
          %v1182 = vunpack.c.l.b16 %v810
          %v1183 = vunpack.c.h.b16 %v810
          %v1184 = vunpack.c.l.b16 %v811
          %v1185 = vunpack.c.h.b16 %v811
          %v1186 = vunpack.c.l.b16 %v812
          %v1187 = vunpack.c.h.b16 %v812
          %v1188 = vunpack.c.l.b16 %v813
          %v1189 = vunpack.c.h.b16 %v813
          %v1190 = vunpack.c.l.b16 %v814
          %v1191 = vunpack.c.h.b16 %v814
          %v1192 = vunpack.c.l.b16 %v815
          %v1193 = vunpack.c.h.b16 %v815
          %v1194 = vunpack.c.l.b16 %v816
          %v1195 = vunpack.c.h.b16 %v816
          %v1196 = vunpack.c.l.b16 %v817
          %v1197 = vunpack.c.h.b16 %v817
          %v1198 = vunpack.c.l.b16 %v818
          %v1199 = vunpack.c.h.b16 %v818
          %v1200 = vunpack.c.l.b16 %v819
          %v1201 = vunpack.c.h.b16 %v819
          %v1202 = vunpack.c.l.b16 %v820
          %v1203 = vunpack.c.h.b16 %v820
          %v1204 = vunpack.c.l.b16 %v821
          %v1205 = vunpack.c.h.b16 %v821
          %v1206 = vpack.c.b16 %v954, %v950
          %v1207 = vpack.c.b16 %v955, %v951
          %v1208 = vpack.c.b16 %v956, %v952
          %v1209 = vpack.c.b16 %v957, %v953
          %v1210 = vpack.c.b16 %v962, %v958
          %v1211 = vpack.c.b16 %v963, %v959
          %v1212 = vpack.c.b16 %v964, %v960
          %v1213 = vpack.c.b16 %v965, %v961
          %v1214 = vpack.c.b16 %v970, %v966
          %v1215 = vpack.c.b16 %v971, %v967
          %v1216 = vpack.c.b16 %v972, %v968
          %v1217 = vpack.c.b16 %v973, %v969
          %v1218 = vpack.c.b16 %v978, %v974
          %v1219 = vpack.c.b16 %v979, %v975
          %v1220 = vpack.c.b16 %v980, %v976
          %v1221 = vpack.c.b16 %v981, %v977
          %v1222 = vpack.c.b16 %v986, %v982
          %v1223 = vpack.c.b16 %v987, %v983
          %v1224 = vpack.c.b16 %v988, %v984
          %v1225 = vpack.c.b16 %v989, %v985
          %v1226 = vpack.c.b16 %v994, %v990
          %v1227 = vpack.c.b16 %v995, %v991
          %v1228 = vpack.c.b16 %v996, %v992
          %v1229 = vpack.c.b16 %v997, %v993
          %v1230 = vpack.c.b16 %v1002, %v998
          %v1231 = vpack.c.b16 %v1003, %v999
          %v1232 = vpack.c.b16 %v1004, %v1000
          %v1233 = vpack.c.b16 %v1005, %v1001
          %v1234 = vpack.c.b16 %v1010, %v1006
          %v1235 = vpack.c.b16 %v1011, %v1007
          %v1236 = vpack.c.b16 %v1012, %v1008
          %v1237 = vpack.c.b16 %v1013, %v1009
          %v1238 = vpack.c.b16 %v1018, %v1014
          %v1239 = vpack.c.b16 %v1019, %v1015
          %v1240 = vpack.c.b16 %v1020, %v1016
          %v1241 = vpack.c.b16 %v1021, %v1017
          %v1242 = vpack.c.b16 %v1026, %v1022
          %v1243 = vpack.c.b16 %v1027, %v1023
          %v1244 = vpack.c.b16 %v1028, %v1024
          %v1245 = vpack.c.b16 %v1029, %v1025
          %v1246 = vpack.c.b16 %v1034, %v1030
          %v1247 = vpack.c.b16 %v1035, %v1031
          %v1248 = vpack.c.b16 %v1036, %v1032
          %v1249 = vpack.c.b16 %v1037, %v1033
          %v1250 = vpack.c.b16 %v1042, %v1038
          %v1251 = vpack.c.b16 %v1043, %v1039
          %v1252 = vpack.c.b16 %v1044, %v1040
          %v1253 = vpack.c.b16 %v1045, %v1041
          %v1254 = vpack.c.b16 %v1050, %v1046
          %v1255 = vpack.c.b16 %v1051, %v1047
          %v1256 = vpack.c.b16 %v1052, %v1048
          %v1257 = vpack.c.b16 %v1053, %v1049
          %v1258 = vpack.c.b16 %v1058, %v1054
          %v1259 = vpack.c.b16 %v1059, %v1055
          %v1260 = vpack.c.b16 %v1060, %v1056
          %v1261 = vpack.c.b16 %v1061, %v1057
          %v1262 = vpack.c.b16 %v1066, %v1062
          %v1263 = vpack.c.b16 %v1067, %v1063
          %v1264 = vpack.c.b16 %v1068, %v1064
          %v1265 = vpack.c.b16 %v1069, %v1065
          %v1266 = vpack.c.b16 %v1074, %v1070
          %v1267 = vpack.c.b16 %v1075, %v1071
          %v1268 = vpack.c.b16 %v1076, %v1072
          %v1269 = vpack.c.b16 %v1077, %v1073
          %v1270 = vpack.c.b16 %v1082, %v1078
          %v1271 = vpack.c.b16 %v1083, %v1079
          %v1272 = vpack.c.b16 %v1084, %v1080
          %v1273 = vpack.c.b16 %v1085, %v1081
          %v1274 = vpack.c.b16 %v1090, %v1086
          %v1275 = vpack.c.b16 %v1091, %v1087
          %v1276 = vpack.c.b16 %v1092, %v1088
          %v1277 = vpack.c.b16 %v1093, %v1089
          %v1278 = vpack.c.b16 %v1098, %v1094
          %v1279 = vpack.c.b16 %v1099, %v1095
          %v1280 = vpack.c.b16 %v1100, %v1096
          %v1281 = vpack.c.b16 %v1101, %v1097
          %v1282 = vpack.c.b16 %v1106, %v1102
          %v1283 = vpack.c.b16 %v1107, %v1103
          %v1284 = vpack.c.b16 %v1108, %v1104
          %v1285 = vpack.c.b16 %v1109, %v1105
          %v1286 = vpack.c.b16 %v1114, %v1110
          %v1287 = vpack.c.b16 %v1115, %v1111
          %v1288 = vpack.c.b16 %v1116, %v1112
          %v1289 = vpack.c.b16 %v1117, %v1113
          %v1290 = vpack.c.b16 %v1122, %v1118
          %v1291 = vpack.c.b16 %v1123, %v1119
          %v1292 = vpack.c.b16 %v1124, %v1120
          %v1293 = vpack.c.b16 %v1125, %v1121
          %v1294 = vpack.c.b16 %v1130, %v1126
          %v1295 = vpack.c.b16 %v1131, %v1127
          %v1296 = vpack.c.b16 %v1132, %v1128
          %v1297 = vpack.c.b16 %v1133, %v1129
          %v1298 = vpack.c.b16 %v1138, %v1134
          %v1299 = vpack.c.b16 %v1139, %v1135
          %v1300 = vpack.c.b16 %v1140, %v1136
          %v1301 = vpack.c.b16 %v1141, %v1137
          %v1302 = vpack.c.b16 %v1146, %v1142
          %v1303 = vpack.c.b16 %v1147, %v1143
          %v1304 = vpack.c.b16 %v1148, %v1144
          %v1305 = vpack.c.b16 %v1149, %v1145
          %v1306 = vpack.c.b16 %v1154, %v1150
          %v1307 = vpack.c.b16 %v1155, %v1151
          %v1308 = vpack.c.b16 %v1156, %v1152
          %v1309 = vpack.c.b16 %v1157, %v1153
          %v1310 = vpack.c.b16 %v1162, %v1158
          %v1311 = vpack.c.b16 %v1163, %v1159
          %v1312 = vpack.c.b16 %v1164, %v1160
          %v1313 = vpack.c.b16 %v1165, %v1161
          %v1314 = vpack.c.b16 %v1170, %v1166
          %v1315 = vpack.c.b16 %v1171, %v1167
          %v1316 = vpack.c.b16 %v1172, %v1168
          %v1317 = vpack.c.b16 %v1173, %v1169
          %v1318 = vpack.c.b16 %v1178, %v1174
          %v1319 = vpack.c.b16 %v1179, %v1175
          %v1320 = vpack.c.b16 %v1180, %v1176
          %v1321 = vpack.c.b16 %v1181, %v1177
          %v1322 = vpack.c.b16 %v1186, %v1182
          %v1323 = vpack.c.b16 %v1187, %v1183
          %v1324 = vpack.c.b16 %v1188, %v1184
          %v1325 = vpack.c.b16 %v1189, %v1185
          %v1326 = vpack.c.b16 %v1194, %v1190
          %v1327 = vpack.c.b16 %v1195, %v1191
          %v1328 = vpack.c.b16 %v1196, %v1192
          %v1329 = vpack.c.b16 %v1197, %v1193
          %v1330 = vpack.c.b16 %v1202, %v1198
          %v1331 = vpack.c.b16 %v1203, %v1199
          %v1332 = vpack.c.b16 %v1204, %v1200
          %v1333 = vpack.c.b16 %v1205, %v1201
          %v1526 = vunpack.c.l.b16 %v566
          %v1527 = vunpack.c.l.b16 %v567
          %v1528 = vunpack.c.l.b16 %v568
          %v1529 = vunpack.c.l.b16 %v569
          %v1530 = vunpack.c.l.b16 %v570
          %v1531 = vunpack.c.l.b16 %v571
          %v1532 = vunpack.c.l.b16 %v572
          %v1533 = vunpack.c.l.b16 %v573
          %v1534 = vunpack.c.l.b16 %v574
          %v1535 = vunpack.c.l.b16 %v575
          %v1536 = vunpack.c.l.b16 %v576
          %v1537 = vunpack.c.l.b16 %v577
          %v1538 = vunpack.c.l.b16 %v578
          %v1539 = vunpack.c.l.b16 %v579
          %v1540 = vunpack.c.l.b16 %v580
          %v1541 = vunpack.c.l.b16 %v581
          %v1542 = vunpack.c.l.b16 %v582
          %v1543 = vunpack.c.l.b16 %v583
          %v1544 = vunpack.c.l.b16 %v584
          %v1545 = vunpack.c.l.b16 %v585
          %v1546 = vunpack.c.l.b16 %v586
          %v1547 = vunpack.c.l.b16 %v587
          %v1548 = vunpack.c.l.b16 %v588
          %v1549 = vunpack.c.l.b16 %v589
          %v1550 = vunpack.c.l.b16 %v590
          %v1551 = vunpack.c.l.b16 %v591
          %v1552 = vunpack.c.l.b16 %v592
          %v1553 = vunpack.c.l.b16 %v593
          %v1554 = vunpack.c.l.b16 %v594
          %v1555 = vunpack.c.l.b16 %v595
          %v1556 = vunpack.c.l.b16 %v596
          %v1557 = vunpack.c.l.b16 %v597
          %v1558 = vunpack.c.l.b16 %v598
          %v1559 = vunpack.c.l.b16 %v599
          %v1560 = vunpack.c.l.b16 %v600
          %v1561 = vunpack.c.l.b16 %v601
          %v1562 = vunpack.c.l.b16 %v602
          %v1563 = vunpack.c.l.b16 %v603
          %v1564 = vunpack.c.l.b16 %v604
          %v1565 = vunpack.c.l.b16 %v605
          %v1566 = vunpack.c.l.b16 %v606
          %v1567 = vunpack.c.l.b16 %v607
          %v1568 = vunpack.c.l.b16 %v608
          %v1569 = vunpack.c.l.b16 %v609
          %v1570 = vunpack.c.l.b16 %v610
          %v1571 = vunpack.c.l.b16 %v611
          %v1572 = vunpack.c.l.b16 %v612
          %v1573 = vunpack.c.l.b16 %v613
          %v1574 = vunpack.c.l.b16 %v614
          %v1575 = vunpack.c.l.b16 %v615
          %v1576 = vunpack.c.l.b16 %v616
          %v1577 = vunpack.c.l.b16 %v617
          %v1578 = vunpack.c.l.b16 %v618
          %v1579 = vunpack.c.l.b16 %v619
          %v1580 = vunpack.c.l.b16 %v620
          %v1581 = vunpack.c.l.b16 %v621
          %v1582 = vunpack.c.l.b16 %v622
          %v1583 = vunpack.c.l.b16 %v623
          %v1584 = vunpack.c.l.b16 %v624
          %v1585 = vunpack.c.l.b16 %v625
          %v1586 = vunpack.c.l.b16 %v626
          %v1587 = vunpack.c.l.b16 %v627
          %v1588 = vunpack.c.l.b16 %v628
          %v1589 = vunpack.c.l.b16 %v629
          %v1590 = vpack.c.b16 %v1527, %v1526
          %v1591 = vpack.c.b16 %v1529, %v1528
          %v1592 = vpack.c.b16 %v1531, %v1530
          %v1593 = vpack.c.b16 %v1533, %v1532
          %v1594 = vpack.c.b16 %v1535, %v1534
          %v1595 = vpack.c.b16 %v1537, %v1536
          %v1596 = vpack.c.b16 %v1539, %v1538
          %v1597 = vpack.c.b16 %v1541, %v1540
          %v1598 = vpack.c.b16 %v1543, %v1542
          %v1599 = vpack.c.b16 %v1545, %v1544
          %v1600 = vpack.c.b16 %v1547, %v1546
          %v1601 = vpack.c.b16 %v1549, %v1548
          %v1602 = vpack.c.b16 %v1551, %v1550
          %v1603 = vpack.c.b16 %v1553, %v1552
          %v1604 = vpack.c.b16 %v1555, %v1554
          %v1605 = vpack.c.b16 %v1557, %v1556
          %v1606 = vpack.c.b16 %v1559, %v1558
          %v1607 = vpack.c.b16 %v1561, %v1560
          %v1608 = vpack.c.b16 %v1563, %v1562
          %v1609 = vpack.c.b16 %v1565, %v1564
          %v1610 = vpack.c.b16 %v1567, %v1566
          %v1611 = vpack.c.b16 %v1569, %v1568
          %v1612 = vpack.c.b16 %v1571, %v1570
          %v1613 = vpack.c.b16 %v1573, %v1572
          %v1614 = vpack.c.b16 %v1575, %v1574
          %v1615 = vpack.c.b16 %v1577, %v1576
          %v1616 = vpack.c.b16 %v1579, %v1578
          %v1617 = vpack.c.b16 %v1581, %v1580
          %v1618 = vpack.c.b16 %v1583, %v1582
          %v1619 = vpack.c.b16 %v1585, %v1584
          %v1620 = vpack.c.b16 %v1587, %v1586
          %v1621 = vpack.c.b16 %v1589, %v1588
          %1654 = vmatprep.subr.bf16.mxu0 0
          %1655 = vmatpush1.bf16.msra.mxu0 %v1590
          %1656 = vmatprep.subr.bf16.mxu0 0
          %1657 = vmatpush1.bf16.msra.mxu0 %v1591
          %1658 = vmatprep.subr.bf16.mxu0 0
          %1659 = vmatpush1.bf16.msra.mxu0 %v1592
          %1660 = vmatprep.subr.bf16.mxu0 0
          %1661 = vmatpush1.bf16.msra.mxu0 %v1593
          %1662 = vmatprep.subr.bf16.mxu0 0
          %1663 = vmatpush1.bf16.msra.mxu0 %v1594
          %1664 = vmatprep.subr.bf16.mxu0 0
          %1665 = vmatpush1.bf16.msra.mxu0 %v1595
          %1666 = vmatprep.subr.bf16.mxu0 0
          %1667 = vmatpush1.bf16.msra.mxu0 %v1596
          %1668 = vmatprep.subr.bf16.mxu0 0
          %1669 = vmatpush1.bf16.msra.mxu0 %v1597
          %1670 = vmatprep.subr.bf16.mxu0 0
          %1671 = vmatpush1.bf16.msra.mxu0 %v1598
          %1672 = vmatprep.subr.bf16.mxu0 0
          %1673 = vmatpush1.bf16.msra.mxu0 %v1599
          %1674 = vmatprep.subr.bf16.mxu0 0
          %1675 = vmatpush1.bf16.msra.mxu0 %v1600
          %1676 = vmatprep.subr.bf16.mxu0 0
          %1677 = vmatpush1.bf16.msra.mxu0 %v1601
          %1678 = vmatprep.subr.bf16.mxu0 0
          %1679 = vmatpush1.bf16.msra.mxu0 %v1602
          %1680 = vmatprep.subr.bf16.mxu0 0
          %1681 = vmatpush1.bf16.msra.mxu0 %v1603
          %1682 = vmatprep.subr.bf16.mxu0 0
          %1683 = vmatpush1.bf16.msra.mxu0 %v1604
          %1684 = vmatprep.subr.bf16.mxu0 0
          %1685 = vmatpush1.bf16.msra.mxu0 %v1605
          %1686 = vmatprep.mubr.bf16.mxu0 %v1207
          %1687 = vmatmul.mubr.bf16.gmra.mrb[0].mxu0 %v1206
          %v1688 = vpop.f32.mrb[0].mxu0
          %v1689 = vadd.f32 0.0, %v1688
          %v1690 = vpop.f32.mrb[0].mxu0
          %v1691 = vpop.f32.mrb[0].mxu0
          %v1692 = vadd.f32 0.0, %v1691
          %v1693 = vpop.f32.mrb[0].mxu0
          %1694 = vmatprep.mubr.bf16.mxu0 %v1211
          %1695 = vmatmul.mubr.bf16.gmra.mrb[0].mxu0 %v1210
          %v1696 = vpop.f32.mrb[0].mxu0
          %v1697 = vadd.f32 0.0, %v1696
          %v1698 = vpop.f32.mrb[0].mxu0
          %v1699 = vpop.f32.mrb[0].mxu0
          %v1700 = vadd.f32 0.0, %v1699
          %v1701 = vpop.f32.mrb[0].mxu0
          %1702 = vmatprep.mubr.bf16.mxu0 %v1215
          %1703 = vmatmul.mubr.bf16.gmra.mrb[0].mxu0 %v1214
          %v1704 = vpop.f32.mrb[0].mxu0
          %v1705 = vadd.f32 0.0, %v1704
          %v1706 = vpop.f32.mrb[0].mxu0
          %v1707 = vpop.f32.mrb[0].mxu0
          %v1708 = vadd.f32 0.0, %v1707
          %v1709 = vpop.f32.mrb[0].mxu0
          %1710 = vmatprep.mubr.bf16.mxu0 %v1219
          %1711 = vmatmul.mubr.bf16.gmra.mrb[0].mxu0 %v1218
          %v1712 = vpop.f32.mrb[0].mxu0
          %v1713 = vadd.f32 0.0, %v1712
          %v1714 = vpop.f32.mrb[0].mxu0
          %v1715 = vpop.f32.mrb[0].mxu0
          %v1716 = vadd.f32 0.0, %v1715
          %v1717 = vpop.f32.mrb[0].mxu0
          %1718 = vmatprep.mubr.bf16.mxu0 %v1223
          %1719 = vmatmul.mubr.bf16.gmra.mrb[0].mxu0 %v1222
          %v1720 = vpop.f32.mrb[0].mxu0
          %v1721 = vadd.f32 0.0, %v1720
          %v1722 = vpop.f32.mrb[0].mxu0
          %v1723 = vpop.f32.mrb[0].mxu0
          %v1724 = vadd.f32 0.0, %v1723
          %v1725 = vpop.f32.mrb[0].mxu0
          %1726 = vmatprep.mubr.bf16.mxu0 %v1227
          %1727 = vmatmul.mubr.bf16.gmra.mrb[0].mxu0 %v1226
          %v1728 = vpop.f32.mrb[0].mxu0
          %v1729 = vadd.f32 0.0, %v1728
          %v1730 = vpop.f32.mrb[0].mxu0
          %v1731 = vpop.f32.mrb[0].mxu0
          %v1732 = vadd.f32 0.0, %v1731
          %v1733 = vpop.f32.mrb[0].mxu0
          %1734 = vmatprep.mubr.bf16.mxu0 %v1231
          %1735 = vmatmul.mubr.bf16.gmra.mrb[0].mxu0 %v1230
          %v1736 = vpop.f32.mrb[0].mxu0
          %v1737 = vadd.f32 0.0, %v1736
          %v1738 = vpop.f32.mrb[0].mxu0
          %v1739 = vpop.f32.mrb[0].mxu0
          %v1740 = vadd.f32 0.0, %v1739
          %v1741 = vpop.f32.mrb[0].mxu0
          %1742 = vmatprep.mubr.bf16.mxu0 %v1235
          %1743 = vmatmul.mubr.bf16.gmra.mrb[0].mxu0 %v1234
          %v1744 = vpop.f32.mrb[0].mxu0
          %v1745 = vadd.f32 0.0, %v1744
          %v1746 = vpop.f32.mrb[0].mxu0
          %v1747 = vpop.f32.mrb[0].mxu0
          %v1748 = vadd.f32 0.0, %v1747
          %v1749 = vpop.f32.mrb[0].mxu0
          %1750 = vmatprep.mubr.bf16.mxu0 %v1239
          %1751 = vmatmul.mubr.bf16.gmra.mrb[0].mxu0 %v1238
          %v1752 = vpop.f32.mrb[0].mxu0
          %v1753 = vadd.f32 0.0, %v1752
          %v1754 = vpop.f32.mrb[0].mxu0
          %v1755 = vpop.f32.mrb[0].mxu0
          %v1756 = vadd.f32 0.0, %v1755
          %v1757 = vpop.f32.mrb[0].mxu0
          %1758 = vmatprep.mubr.bf16.mxu0 %v1243
          %1759 = vmatmul.mubr.bf16.gmra.mrb[0].mxu0 %v1242
          %v1760 = vpop.f32.mrb[0].mxu0
          %v1761 = vadd.f32 0.0, %v1760
          %v1762 = vpop.f32.mrb[0].mxu0
          %v1763 = vpop.f32.mrb[0].mxu0
          %v1764 = vadd.f32 0.0, %v1763
          %v1765 = vpop.f32.mrb[0].mxu0
          %1766 = vmatprep.mubr.bf16.mxu0 %v1247
          %1767 = vmatmul.mubr.bf16.gmra.mrb[0].mxu0 %v1246
          %v1768 = vpop.f32.mrb[0].mxu0
          %v1769 = vadd.f32 0.0, %v1768
          %v1770 = vpop.f32.mrb[0].mxu0
          %v1771 = vpop.f32.mrb[0].mxu0
          %v1772 = vadd.f32 0.0, %v1771
          %v1773 = vpop.f32.mrb[0].mxu0
          %1774 = vmatprep.mubr.bf16.mxu0 %v1251
          %1775 = vmatmul.mubr.bf16.gmra.mrb[0].mxu0 %v1250
          %v1776 = vpop.f32.mrb[0].mxu0
          %v1777 = vadd.f32 0.0, %v1776
          %v1778 = vpop.f32.mrb[0].mxu0
          %v1779 = vpop.f32.mrb[0].mxu0
          %v1780 = vadd.f32 0.0, %v1779
          %v1781 = vpop.f32.mrb[0].mxu0
          %1782 = vmatprep.mubr.bf16.mxu0 %v1255
          %1783 = vmatmul.mubr.bf16.gmra.mrb[0].mxu0 %v1254
          %v1784 = vpop.f32.mrb[0].mxu0
          %v1785 = vadd.f32 0.0, %v1784
          %v1786 = vpop.f32.mrb[0].mxu0
          %v1787 = vpop.f32.mrb[0].mxu0
          %v1788 = vadd.f32 0.0, %v1787
          %v1789 = vpop.f32.mrb[0].mxu0
          %1790 = vmatprep.mubr.bf16.mxu0 %v1259
          %1791 = vmatmul.mubr.bf16.gmra.mrb[0].mxu0 %v1258
          %v1792 = vpop.f32.mrb[0].mxu0
          %v1793 = vadd.f32 0.0, %v1792
          %v1794 = vpop.f32.mrb[0].mxu0
          %v1795 = vpop.f32.mrb[0].mxu0
          %v1796 = vadd.f32 0.0, %v1795
          %v1797 = vpop.f32.mrb[0].mxu0
          %1798 = vmatprep.mubr.bf16.mxu0 %v1263
          %1799 = vmatmul.mubr.bf16.gmra.mrb[0].mxu0 %v1262
          %v1800 = vpop.f32.mrb[0].mxu0
          %v1801 = vadd.f32 0.0, %v1800
          %v1802 = vpop.f32.mrb[0].mxu0
          %v1803 = vpop.f32.mrb[0].mxu0
          %v1804 = vadd.f32 0.0, %v1803
          %v1805 = vpop.f32.mrb[0].mxu0
          %1806 = vmatprep.mubr.bf16.mxu0 %v1267
          %1807 = vmatmul.mubr.bf16.gmra.mrb[0].mxu0 %v1266
          %v1808 = vpop.f32.mrb[0].mxu0
          %v1809 = vadd.f32 0.0, %v1808
          %v1810 = vpop.f32.mrb[0].mxu0
          %v1811 = vpop.f32.mrb[0].mxu0
          %v1812 = vadd.f32 0.0, %v1811
          %v1813 = vpop.f32.mrb[0].mxu0
          %1814 = vmatprep.mubr.bf16.mxu0 %v1271
          %1815 = vmatmul.mubr.bf16.gmra.mrb[0].mxu0 %v1270
          %v1816 = vpop.f32.mrb[0].mxu0
          %v1817 = vadd.f32 0.0, %v1816
          %v1818 = vpop.f32.mrb[0].mxu0
          %v1819 = vpop.f32.mrb[0].mxu0
          %v1820 = vadd.f32 0.0, %v1819
          %v1821 = vpop.f32.mrb[0].mxu0
          %1822 = vmatprep.mubr.bf16.mxu0 %v1275
          %1823 = vmatmul.mubr.bf16.gmra.mrb[0].mxu0 %v1274
          %v1824 = vpop.f32.mrb[0].mxu0
          %v1825 = vadd.f32 0.0, %v1824
          %v1826 = vpop.f32.mrb[0].mxu0
          %v1827 = vpop.f32.mrb[0].mxu0
          %v1828 = vadd.f32 0.0, %v1827
          %v1829 = vpop.f32.mrb[0].mxu0
          %1830 = vmatprep.mubr.bf16.mxu0 %v1279
          %1831 = vmatmul.mubr.bf16.gmra.mrb[0].mxu0 %v1278
          %v1832 = vpop.f32.mrb[0].mxu0
          %v1833 = vadd.f32 0.0, %v1832
          %v1834 = vpop.f32.mrb[0].mxu0
          %v1835 = vpop.f32.mrb[0].mxu0
          %v1836 = vadd.f32 0.0, %v1835
          %v1837 = vpop.f32.mrb[0].mxu0
          %1838 = vmatprep.mubr.bf16.mxu0 %v1283
          %1839 = vmatmul.mubr.bf16.gmra.mrb[0].mxu0 %v1282
          %v1840 = vpop.f32.mrb[0].mxu0
          %v1841 = vadd.f32 0.0, %v1840
          %v1842 = vpop.f32.mrb[0].mxu0
          %v1843 = vpop.f32.mrb[0].mxu0
          %v1844 = vadd.f32 0.0, %v1843
          %v1845 = vpop.f32.mrb[0].mxu0
          %1846 = vmatprep.mubr.bf16.mxu0 %v1287
          %1847 = vmatmul.mubr.bf16.gmra.mrb[0].mxu0 %v1286
          %v1848 = vpop.f32.mrb[0].mxu0
          %v1849 = vadd.f32 0.0, %v1848
          %v1850 = vpop.f32.mrb[0].mxu0
          %v1851 = vpop.f32.mrb[0].mxu0
          %v1852 = vadd.f32 0.0, %v1851
          %v1853 = vpop.f32.mrb[0].mxu0
          %1854 = vmatprep.mubr.bf16.mxu0 %v1291
          %1855 = vmatmul.mubr.bf16.gmra.mrb[0].mxu0 %v1290
          %v1856 = vpop.f32.mrb[0].mxu0
          %v1857 = vadd.f32 0.0, %v1856
          %v1858 = vpop.f32.mrb[0].mxu0
          %v1859 = vpop.f32.mrb[0].mxu0
          %v1860 = vadd.f32 0.0, %v1859
          %v1861 = vpop.f32.mrb[0].mxu0
          %1862 = vmatprep.mubr.bf16.mxu0 %v1295
          %1863 = vmatmul.mubr.bf16.gmra.mrb[0].mxu0 %v1294
          %v1864 = vpop.f32.mrb[0].mxu0
          %v1865 = vadd.f32 0.0, %v1864
          %v1866 = vpop.f32.mrb[0].mxu0
          %v1867 = vpop.f32.mrb[0].mxu0
          %v1868 = vadd.f32 0.0, %v1867
          %v1869 = vpop.f32.mrb[0].mxu0
          %1870 = vmatprep.mubr.bf16.mxu0 %v1299
          %1871 = vmatmul.mubr.bf16.gmra.mrb[0].mxu0 %v1298
          %v1872 = vpop.f32.mrb[0].mxu0
          %v1873 = vadd.f32 0.0, %v1872
          %v1874 = vpop.f32.mrb[0].mxu0
          %v1875 = vpop.f32.mrb[0].mxu0
          %v1876 = vadd.f32 0.0, %v1875
          %v1877 = vpop.f32.mrb[0].mxu0
          %1878 = vmatprep.mubr.bf16.mxu0 %v1303
          %1879 = vmatmul.mubr.bf16.gmra.mrb[0].mxu0 %v1302
          %v1880 = vpop.f32.mrb[0].mxu0
          %v1881 = vadd.f32 0.0, %v1880
          %v1882 = vpop.f32.mrb[0].mxu0
          %v1883 = vpop.f32.mrb[0].mxu0
          %v1884 = vadd.f32 0.0, %v1883
          %v1885 = vpop.f32.mrb[0].mxu0
          %1886 = vmatprep.mubr.bf16.mxu0 %v1307
          %1887 = vmatmul.mubr.bf16.gmra.mrb[0].mxu0 %v1306
          %v1888 = vpop.f32.mrb[0].mxu0
          %v1889 = vadd.f32 0.0, %v1888
          %v1890 = vpop.f32.mrb[0].mxu0
          %v1891 = vpop.f32.mrb[0].mxu0
          %v1892 = vadd.f32 0.0, %v1891
          %v1893 = vpop.f32.mrb[0].mxu0
          %1894 = vmatprep.mubr.bf16.mxu0 %v1311
          %1895 = vmatmul.mubr.bf16.gmra.mrb[0].mxu0 %v1310
          %v1896 = vpop.f32.mrb[0].mxu0
          %v1897 = vadd.f32 0.0, %v1896
          %v1898 = vpop.f32.mrb[0].mxu0
          %v1899 = vpop.f32.mrb[0].mxu0
          %v1900 = vadd.f32 0.0, %v1899
          %v1901 = vpop.f32.mrb[0].mxu0
          %1902 = vmatprep.mubr.bf16.mxu0 %v1315
          %1903 = vmatmul.mubr.bf16.gmra.mrb[0].mxu0 %v1314
          %v1904 = vpop.f32.mrb[0].mxu0
          %v1905 = vadd.f32 0.0, %v1904
          %v1906 = vpop.f32.mrb[0].mxu0
          %v1907 = vpop.f32.mrb[0].mxu0
          %v1908 = vadd.f32 0.0, %v1907
          %v1909 = vpop.f32.mrb[0].mxu0
          %1910 = vmatprep.mubr.bf16.mxu0 %v1319
          %1911 = vmatmul.mubr.bf16.gmra.mrb[0].mxu0 %v1318
          %v1912 = vpop.f32.mrb[0].mxu0
          %v1913 = vadd.f32 0.0, %v1912
          %v1914 = vpop.f32.mrb[0].mxu0
          %v1915 = vpop.f32.mrb[0].mxu0
          %v1916 = vadd.f32 0.0, %v1915
          %v1917 = vpop.f32.mrb[0].mxu0
          %1918 = vmatprep.mubr.bf16.mxu0 %v1323
          %1919 = vmatmul.mubr.bf16.gmra.mrb[0].mxu0 %v1322
          %v1920 = vpop.f32.mrb[0].mxu0
          %v1921 = vadd.f32 0.0, %v1920
          %v1922 = vpop.f32.mrb[0].mxu0
          %v1923 = vpop.f32.mrb[0].mxu0
          %v1924 = vadd.f32 0.0, %v1923
          %v1925 = vpop.f32.mrb[0].mxu0
          %1926 = vmatprep.mubr.bf16.mxu0 %v1327
          %1927 = vmatmul.mubr.bf16.gmra.mrb[0].mxu0 %v1326
          %v1928 = vpop.f32.mrb[0].mxu0
          %v1929 = vadd.f32 0.0, %v1928
          %v1930 = vpop.f32.mrb[0].mxu0
          %v1931 = vpop.f32.mrb[0].mxu0
          %v1932 = vadd.f32 0.0, %v1931
          %v1933 = vpop.f32.mrb[0].mxu0
          %1934 = vmatprep.mubr.bf16.mxu0 %v1331
          %1935 = vmatmul.mubr.bf16.gmra.mrb[0].mxu0 %v1330
          %v1936 = vpop.f32.mrb[0].mxu0
          %v1937 = vadd.f32 0.0, %v1936
          %v1938 = vpop.f32.mrb[0].mxu0
          %v1939 = vpop.f32.mrb[0].mxu0
          %v1940 = vadd.f32 0.0, %v1939
          %v1941 = vpop.f32.mrb[0].mxu0
          %1942 = vdwg.mxu0
          %1943 = vmatprep.subr.bf16.mxu0 0
          %1944 = vmatpush1.bf16.msra.mxu0 %v1606
          %1945 = vmatprep.subr.bf16.mxu0 0
          %1946 = vmatpush1.bf16.msra.mxu0 %v1607
          %1947 = vmatprep.subr.bf16.mxu0 0
          %1948 = vmatpush1.bf16.msra.mxu0 %v1608
          %1949 = vmatprep.subr.bf16.mxu0 0
          %1950 = vmatpush1.bf16.msra.mxu0 %v1609
          %1951 = vmatprep.subr.bf16.mxu0 0
          %1952 = vmatpush1.bf16.msra.mxu0 %v1610
          %1953 = vmatprep.subr.bf16.mxu0 0
          %1954 = vmatpush1.bf16.msra.mxu0 %v1611
          %1955 = vmatprep.subr.bf16.mxu0 0
          %1956 = vmatpush1.bf16.msra.mxu0 %v1612
          %1957 = vmatprep.subr.bf16.mxu0 0
          %1958 = vmatpush1.bf16.msra.mxu0 %v1613
          %1959 = vmatprep.subr.bf16.mxu0 0
          %1960 = vmatpush1.bf16.msra.mxu0 %v1614
          %1961 = vmatprep.subr.bf16.mxu0 0
          %1962 = vmatpush1.bf16.msra.mxu0 %v1615
          %1963 = vmatprep.subr.bf16.mxu0 0
          %1964 = vmatpush1.bf16.msra.mxu0 %v1616
          %1965 = vmatprep.subr.bf16.mxu0 0
          %1966 = vmatpush1.bf16.msra.mxu0 %v1617
          %1967 = vmatprep.subr.bf16.mxu0 0
          %1968 = vmatpush1.bf16.msra.mxu0 %v1618
          %1969 = vmatprep.subr.bf16.mxu0 0
          %1970 = vmatpush1.bf16.msra.mxu0 %v1619
          %1971 = vmatprep.subr.bf16.mxu0 0
          %1972 = vmatpush1.bf16.msra.mxu0 %v1620
          %1973 = vmatprep.subr.bf16.mxu0 0
          %1974 = vmatpush1.bf16.msra.mxu0 %v1621
          %1975 = vmatprep.mubr.bf16.mxu0 %v1209
          %1976 = vmatmul.mubr.bf16.gmra.mrb[0].mxu0 %v1208
          %v1977 = vpop.f32.mrb[0].mxu0
          %v1978 = vadd.f32 %v1689, %v1977
          %v1979 = vpop.f32.mrb[0].mxu0
          %v1980 = vpop.f32.mrb[0].mxu0
          %v1981 = vadd.f32 %v1692, %v1980
          %v1982 = vpop.f32.mrb[0].mxu0
          %1983 = vmatprep.mubr.bf16.mxu0 %v1213
          %1984 = vmatmul.mubr.bf16.gmra.mrb[0].mxu0 %v1212
          %v1985 = vpop.f32.mrb[0].mxu0
          %v1986 = vadd.f32 %v1697, %v1985
          %v1987 = vpop.f32.mrb[0].mxu0
          %v1988 = vpop.f32.mrb[0].mxu0
          %v1989 = vadd.f32 %v1700, %v1988
          %v1990 = vpop.f32.mrb[0].mxu0
          %1991 = vmatprep.mubr.bf16.mxu0 %v1217
          %1992 = vmatmul.mubr.bf16.gmra.mrb[0].mxu0 %v1216
          %v1993 = vpop.f32.mrb[0].mxu0
          %v1994 = vadd.f32 %v1705, %v1993
          %v1995 = vpop.f32.mrb[0].mxu0
          %v1996 = vpop.f32.mrb[0].mxu0
          %v1997 = vadd.f32 %v1708, %v1996
          %v1998 = vpop.f32.mrb[0].mxu0
          %1999 = vmatprep.mubr.bf16.mxu0 %v1221
          %2000 = vmatmul.mubr.bf16.gmra.mrb[0].mxu0 %v1220
          %v2001 = vpop.f32.mrb[0].mxu0
          %v2002 = vadd.f32 %v1713, %v2001
          %v2003 = vpop.f32.mrb[0].mxu0
          %v2004 = vpop.f32.mrb[0].mxu0
          %v2005 = vadd.f32 %v1716, %v2004
          %v2006 = vpop.f32.mrb[0].mxu0
          %2007 = vmatprep.mubr.bf16.mxu0 %v1225
          %2008 = vmatmul.mubr.bf16.gmra.mrb[0].mxu0 %v1224
          %v2009 = vpop.f32.mrb[0].mxu0
          %v2010 = vadd.f32 %v1721, %v2009
          %v2011 = vpop.f32.mrb[0].mxu0
          %v2012 = vpop.f32.mrb[0].mxu0
          %v2013 = vadd.f32 %v1724, %v2012
          %v2014 = vpop.f32.mrb[0].mxu0
          %2015 = vmatprep.mubr.bf16.mxu0 %v1229
          %2016 = vmatmul.mubr.bf16.gmra.mrb[0].mxu0 %v1228
          %v2017 = vpop.f32.mrb[0].mxu0
          %v2018 = vadd.f32 %v1729, %v2017
          %v2019 = vpop.f32.mrb[0].mxu0
          %v2020 = vpop.f32.mrb[0].mxu0
          %v2021 = vadd.f32 %v1732, %v2020
          %v2022 = vpop.f32.mrb[0].mxu0
          %2023 = vmatprep.mubr.bf16.mxu0 %v1233
          %2024 = vmatmul.mubr.bf16.gmra.mrb[0].mxu0 %v1232
          %v2025 = vpop.f32.mrb[0].mxu0
          %v2026 = vadd.f32 %v1737, %v2025
          %v2027 = vpop.f32.mrb[0].mxu0
          %v2028 = vpop.f32.mrb[0].mxu0
          %v2029 = vadd.f32 %v1740, %v2028
          %v2030 = vpop.f32.mrb[0].mxu0
          %2031 = vmatprep.mubr.bf16.mxu0 %v1237
          %2032 = vmatmul.mubr.bf16.gmra.mrb[0].mxu0 %v1236
          %v2033 = vpop.f32.mrb[0].mxu0
          %v2034 = vadd.f32 %v1745, %v2033
          %v2035 = vpop.f32.mrb[0].mxu0
          %v2036 = vpop.f32.mrb[0].mxu0
          %v2037 = vadd.f32 %v1748, %v2036
          %v2038 = vpop.f32.mrb[0].mxu0
          %2039 = vmatprep.mubr.bf16.mxu0 %v1241
          %2040 = vmatmul.mubr.bf16.gmra.mrb[0].mxu0 %v1240
          %v2041 = vpop.f32.mrb[0].mxu0
          %v2042 = vadd.f32 %v1753, %v2041
          %v2043 = vpop.f32.mrb[0].mxu0
          %v2044 = vpop.f32.mrb[0].mxu0
          %v2045 = vadd.f32 %v1756, %v2044
          %v2046 = vpop.f32.mrb[0].mxu0
          %2047 = vmatprep.mubr.bf16.mxu0 %v1245
          %2048 = vmatmul.mubr.bf16.gmra.mrb[0].mxu0 %v1244
          %v2049 = vpop.f32.mrb[0].mxu0
          %v2050 = vadd.f32 %v1761, %v2049
          %v2051 = vpop.f32.mrb[0].mxu0
          %v2052 = vpop.f32.mrb[0].mxu0
          %v2053 = vadd.f32 %v1764, %v2052
          %v2054 = vpop.f32.mrb[0].mxu0
          %2055 = vmatprep.mubr.bf16.mxu0 %v1249
          %2056 = vmatmul.mubr.bf16.gmra.mrb[0].mxu0 %v1248
          %v2057 = vpop.f32.mrb[0].mxu0
          %v2058 = vadd.f32 %v1769, %v2057
          %v2059 = vpop.f32.mrb[0].mxu0
          %v2060 = vpop.f32.mrb[0].mxu0
          %v2061 = vadd.f32 %v1772, %v2060
          %v2062 = vpop.f32.mrb[0].mxu0
          %2063 = vmatprep.mubr.bf16.mxu0 %v1253
          %2064 = vmatmul.mubr.bf16.gmra.mrb[0].mxu0 %v1252
          %v2065 = vpop.f32.mrb[0].mxu0
          %v2066 = vadd.f32 %v1777, %v2065
          %v2067 = vpop.f32.mrb[0].mxu0
          %v2068 = vpop.f32.mrb[0].mxu0
          %v2069 = vadd.f32 %v1780, %v2068
          %v2070 = vpop.f32.mrb[0].mxu0
          %2071 = vmatprep.mubr.bf16.mxu0 %v1257
          %2072 = vmatmul.mubr.bf16.gmra.mrb[0].mxu0 %v1256
          %v2073 = vpop.f32.mrb[0].mxu0
          %v2074 = vadd.f32 %v1785, %v2073
          %v2075 = vpop.f32.mrb[0].mxu0
          %v2076 = vpop.f32.mrb[0].mxu0
          %v2077 = vadd.f32 %v1788, %v2076
          %v2078 = vpop.f32.mrb[0].mxu0
          %2079 = vmatprep.mubr.bf16.mxu0 %v1261
          %2080 = vmatmul.mubr.bf16.gmra.mrb[0].mxu0 %v1260
          %v2081 = vpop.f32.mrb[0].mxu0
          %v2082 = vadd.f32 %v1793, %v2081
          %v2083 = vpop.f32.mrb[0].mxu0
          %v2084 = vpop.f32.mrb[0].mxu0
          %v2085 = vadd.f32 %v1796, %v2084
          %v2086 = vpop.f32.mrb[0].mxu0
          %2087 = vmatprep.mubr.bf16.mxu0 %v1265
          %2088 = vmatmul.mubr.bf16.gmra.mrb[0].mxu0 %v1264
          %v2089 = vpop.f32.mrb[0].mxu0
          %v2090 = vadd.f32 %v1801, %v2089
          %v2091 = vpop.f32.mrb[0].mxu0
          %v2092 = vpop.f32.mrb[0].mxu0
          %v2093 = vadd.f32 %v1804, %v2092
          %v2094 = vpop.f32.mrb[0].mxu0
          %2095 = vmatprep.mubr.bf16.mxu0 %v1269
          %2096 = vmatmul.mubr.bf16.gmra.mrb[0].mxu0 %v1268
          %v2097 = vpop.f32.mrb[0].mxu0
          %v2098 = vadd.f32 %v1809, %v2097
          %v2099 = vpop.f32.mrb[0].mxu0
          %v2100 = vpop.f32.mrb[0].mxu0
          %v2101 = vadd.f32 %v1812, %v2100
          %v2102 = vpop.f32.mrb[0].mxu0
          %2103 = vmatprep.mubr.bf16.mxu0 %v1273
          %2104 = vmatmul.mubr.bf16.gmra.mrb[0].mxu0 %v1272
          %v2105 = vpop.f32.mrb[0].mxu0
          %v2106 = vadd.f32 %v1817, %v2105
          %v2107 = vpop.f32.mrb[0].mxu0
          %v2108 = vpop.f32.mrb[0].mxu0
          %v2109 = vadd.f32 %v1820, %v2108
          %v2110 = vpop.f32.mrb[0].mxu0
          %2111 = vmatprep.mubr.bf16.mxu0 %v1277
          %2112 = vmatmul.mubr.bf16.gmra.mrb[0].mxu0 %v1276
          %v2113 = vpop.f32.mrb[0].mxu0
          %v2114 = vadd.f32 %v1825, %v2113
          %v2115 = vpop.f32.mrb[0].mxu0
          %v2116 = vpop.f32.mrb[0].mxu0
          %v2117 = vadd.f32 %v1828, %v2116
          %v2118 = vpop.f32.mrb[0].mxu0
          %2119 = vmatprep.mubr.bf16.mxu0 %v1281
          %2120 = vmatmul.mubr.bf16.gmra.mrb[0].mxu0 %v1280
          %v2121 = vpop.f32.mrb[0].mxu0
          %v2122 = vadd.f32 %v1833, %v2121
          %v2123 = vpop.f32.mrb[0].mxu0
          %v2124 = vpop.f32.mrb[0].mxu0
          %v2125 = vadd.f32 %v1836, %v2124
          %v2126 = vpop.f32.mrb[0].mxu0
          %2127 = vmatprep.mubr.bf16.mxu0 %v1285
          %2128 = vmatmul.mubr.bf16.gmra.mrb[0].mxu0 %v1284
          %v2129 = vpop.f32.mrb[0].mxu0
          %v2130 = vadd.f32 %v1841, %v2129
          %v2131 = vpop.f32.mrb[0].mxu0
          %v2132 = vpop.f32.mrb[0].mxu0
          %v2133 = vadd.f32 %v1844, %v2132
          %v2134 = vpop.f32.mrb[0].mxu0
          %2135 = vmatprep.mubr.bf16.mxu0 %v1289
          %2136 = vmatmul.mubr.bf16.gmra.mrb[0].mxu0 %v1288
          %v2137 = vpop.f32.mrb[0].mxu0
          %v2138 = vadd.f32 %v1849, %v2137
          %v2139 = vpop.f32.mrb[0].mxu0
          %v2140 = vpop.f32.mrb[0].mxu0
          %v2141 = vadd.f32 %v1852, %v2140
          %v2142 = vpop.f32.mrb[0].mxu0
          %2143 = vmatprep.mubr.bf16.mxu0 %v1293
          %2144 = vmatmul.mubr.bf16.gmra.mrb[0].mxu0 %v1292
          %v2145 = vpop.f32.mrb[0].mxu0
          %v2146 = vadd.f32 %v1857, %v2145
          %v2147 = vpop.f32.mrb[0].mxu0
          %v2148 = vpop.f32.mrb[0].mxu0
          %v2149 = vadd.f32 %v1860, %v2148
          %v2150 = vpop.f32.mrb[0].mxu0
          %2151 = vmatprep.mubr.bf16.mxu0 %v1297
          %2152 = vmatmul.mubr.bf16.gmra.mrb[0].mxu0 %v1296
          %v2153 = vpop.f32.mrb[0].mxu0
          %v2154 = vadd.f32 %v1865, %v2153
          %v2155 = vpop.f32.mrb[0].mxu0
          %v2156 = vpop.f32.mrb[0].mxu0
          %v2157 = vadd.f32 %v1868, %v2156
          %v2158 = vpop.f32.mrb[0].mxu0
          %2159 = vmatprep.mubr.bf16.mxu0 %v1301
          %2160 = vmatmul.mubr.bf16.gmra.mrb[0].mxu0 %v1300
          %v2161 = vpop.f32.mrb[0].mxu0
          %v2162 = vadd.f32 %v1873, %v2161
          %v2163 = vpop.f32.mrb[0].mxu0
          %v2164 = vpop.f32.mrb[0].mxu0
          %v2165 = vadd.f32 %v1876, %v2164
          %v2166 = vpop.f32.mrb[0].mxu0
          %2167 = vmatprep.mubr.bf16.mxu0 %v1305
          %2168 = vmatmul.mubr.bf16.gmra.mrb[0].mxu0 %v1304
          %v2169 = vpop.f32.mrb[0].mxu0
          %v2170 = vadd.f32 %v1881, %v2169
          %v2171 = vpop.f32.mrb[0].mxu0
          %v2172 = vpop.f32.mrb[0].mxu0
          %v2173 = vadd.f32 %v1884, %v2172
          %v2174 = vpop.f32.mrb[0].mxu0
          %2175 = vmatprep.mubr.bf16.mxu0 %v1309
          %2176 = vmatmul.mubr.bf16.gmra.mrb[0].mxu0 %v1308
          %v2177 = vpop.f32.mrb[0].mxu0
          %v2178 = vadd.f32 %v1889, %v2177
          %v2179 = vpop.f32.mrb[0].mxu0
          %v2180 = vpop.f32.mrb[0].mxu0
          %v2181 = vadd.f32 %v1892, %v2180
          %v2182 = vpop.f32.mrb[0].mxu0
          %2183 = vmatprep.mubr.bf16.mxu0 %v1313
          %2184 = vmatmul.mubr.bf16.gmra.mrb[0].mxu0 %v1312
          %v2185 = vpop.f32.mrb[0].mxu0
          %v2186 = vadd.f32 %v1897, %v2185
          %v2187 = vpop.f32.mrb[0].mxu0
          %v2188 = vpop.f32.mrb[0].mxu0
          %v2189 = vadd.f32 %v1900, %v2188
          %v2190 = vpop.f32.mrb[0].mxu0
          %2191 = vmatprep.mubr.bf16.mxu0 %v1317
          %2192 = vmatmul.mubr.bf16.gmra.mrb[0].mxu0 %v1316
          %v2193 = vpop.f32.mrb[0].mxu0
          %v2194 = vadd.f32 %v1905, %v2193
          %v2195 = vpop.f32.mrb[0].mxu0
          %v2196 = vpop.f32.mrb[0].mxu0
          %v2197 = vadd.f32 %v1908, %v2196
          %v2198 = vpop.f32.mrb[0].mxu0
          %2199 = vmatprep.mubr.bf16.mxu0 %v1321
          %2200 = vmatmul.mubr.bf16.gmra.mrb[0].mxu0 %v1320
          %v2201 = vpop.f32.mrb[0].mxu0
          %v2202 = vadd.f32 %v1913, %v2201
          %v2203 = vpop.f32.mrb[0].mxu0
          %v2204 = vpop.f32.mrb[0].mxu0
          %v2205 = vadd.f32 %v1916, %v2204
          %v2206 = vpop.f32.mrb[0].mxu0
          %2207 = vmatprep.mubr.bf16.mxu0 %v1325
          %2208 = vmatmul.mubr.bf16.gmra.mrb[0].mxu0 %v1324
          %v2209 = vpop.f32.mrb[0].mxu0
          %v2210 = vadd.f32 %v1921, %v2209
          %v2211 = vpop.f32.mrb[0].mxu0
          %v2212 = vpop.f32.mrb[0].mxu0
          %v2213 = vadd.f32 %v1924, %v2212
          %v2214 = vpop.f32.mrb[0].mxu0
          %2215 = vmatprep.mubr.bf16.mxu0 %v1329
          %2216 = vmatmul.mubr.bf16.gmra.mrb[0].mxu0 %v1328
          %v2217 = vpop.f32.mrb[0].mxu0
          %v2218 = vadd.f32 %v1929, %v2217
          %v2219 = vpop.f32.mrb[0].mxu0
          %v2220 = vpop.f32.mrb[0].mxu0
          %v2221 = vadd.f32 %v1932, %v2220
          %v2222 = vpop.f32.mrb[0].mxu0
          %2223 = vmatprep.mubr.bf16.mxu0 %v1333
          %2224 = vmatmul.mubr.bf16.gmra.mrb[0].mxu0 %v1332
          %v2225 = vpop.f32.mrb[0].mxu0
          %v2226 = vadd.f32 %v1937, %v2225
          %v2227 = vpop.f32.mrb[0].mxu0
          %v2228 = vpop.f32.mrb[0].mxu0
          %v2229 = vadd.f32 %v1940, %v2228
          %v2230 = vpop.f32.mrb[0].mxu0
          %2231 = vdwg.mxu0
          %v2232 = vadd.f32 %v630, %v1978
          %v2233 = vadd.f32 %v631, %v1981
          %v2234 = vadd.f32 %v632, %v1986
          %v2235 = vadd.f32 %v633, %v1989
          %v2236 = vadd.f32 %v634, %v1994
          %v2237 = vadd.f32 %v635, %v1997
          %v2238 = vadd.f32 %v636, %v2002
          %v2239 = vadd.f32 %v637, %v2005
          %v2240 = vadd.f32 %v638, %v2010
          %v2241 = vadd.f32 %v639, %v2013
          %v2242 = vadd.f32 %v640, %v2018
          %v2243 = vadd.f32 %v641, %v2021
          %v2244 = vadd.f32 %v642, %v2026
          %v2245 = vadd.f32 %v643, %v2029
          %v2246 = vadd.f32 %v644, %v2034
          %v2247 = vadd.f32 %v645, %v2037
          %v2248 = vadd.f32 %v646, %v2042
          %v2249 = vadd.f32 %v647, %v2045
          %v2250 = vadd.f32 %v648, %v2050
          %v2251 = vadd.f32 %v649, %v2053
          %v2252 = vadd.f32 %v650, %v2058
          %v2253 = vadd.f32 %v651, %v2061
          %v2254 = vadd.f32 %v652, %v2066
          %v2255 = vadd.f32 %v653, %v2069
          %v2256 = vadd.f32 %v654, %v2074
          %v2257 = vadd.f32 %v655, %v2077
          %v2258 = vadd.f32 %v656, %v2082
          %v2259 = vadd.f32 %v657, %v2085
          %v2260 = vadd.f32 %v658, %v2090
          %v2261 = vadd.f32 %v659, %v2093
          %v2262 = vadd.f32 %v660, %v2098
          %v2263 = vadd.f32 %v661, %v2101
          %v2264 = vadd.f32 %v662, %v2106
          %v2265 = vadd.f32 %v663, %v2109
          %v2266 = vadd.f32 %v664, %v2114
          %v2267 = vadd.f32 %v665, %v2117
          %v2268 = vadd.f32 %v666, %v2122
          %v2269 = vadd.f32 %v667, %v2125
          %v2270 = vadd.f32 %v668, %v2130
          %v2271 = vadd.f32 %v669, %v2133
          %v2272 = vadd.f32 %v670, %v2138
          %v2273 = vadd.f32 %v671, %v2141
          %v2274 = vadd.f32 %v672, %v2146
          %v2275 = vadd.f32 %v673, %v2149
          %v2276 = vadd.f32 %v674, %v2154
          %v2277 = vadd.f32 %v675, %v2157
          %v2278 = vadd.f32 %v676, %v2162
          %v2279 = vadd.f32 %v677, %v2165
          %v2280 = vadd.f32 %v678, %v2170
          %v2281 = vadd.f32 %v679, %v2173
          %v2282 = vadd.f32 %v680, %v2178
          %v2283 = vadd.f32 %v681, %v2181
          %v2284 = vadd.f32 %v682, %v2186
          %v2285 = vadd.f32 %v683, %v2189
          %v2286 = vadd.f32 %v684, %v2194
          %v2287 = vadd.f32 %v685, %v2197
          %v2288 = vadd.f32 %v686, %v2202
          %v2289 = vadd.f32 %v687, %v2205
          %v2290 = vadd.f32 %v688, %v2210
          %v2291 = vadd.f32 %v689, %v2213
          %v2292 = vadd.f32 %v690, %v2218
          %v2293 = vadd.f32 %v691, %v2221
          %v2294 = vadd.f32 %v692, %v2226
          %v2295 = vadd.f32 %v693, %v2229
          %2296 = vst [vmem:[#allocation2] sm:$0xff] %v2232
          %2297 = vst [vmem:[#allocation2 + $0x8] sm:$0xff] %v2233
          %2298 = vst [vmem:[#allocation2 + $0x10] sm:$0xff] %v2234
          %2299 = vst [vmem:[#allocation2 + $0x18] sm:$0xff] %v2235
          %2300 = vst [vmem:[#allocation2 + $0x20] sm:$0xff] %v2236
          %2301 = vst [vmem:[#allocation2 + $0x28] sm:$0xff] %v2237
          %2302 = vst [vmem:[#allocation2 + $0x30] sm:$0xff] %v2238
          %2303 = vst [vmem:[#allocation2 + $0x38] sm:$0xff] %v2239
          %2304 = vst [vmem:[#allocation2 + $0x40] sm:$0xff] %v2240
          %2305 = vst [vmem:[#allocation2 + $0x48] sm:$0xff] %v2241
          %2306 = vst [vmem:[#allocation2 + $0x50] sm:$0xff] %v2242
          %2307 = vst [vmem:[#allocation2 + $0x58] sm:$0xff] %v2243
          %2308 = vst [vmem:[#allocation2 + $0x60] sm:$0xff] %v2244
          %2309 = vst [vmem:[#allocation2 + $0x68] sm:$0xff] %v2245
          %2310 = vst [vmem:[#allocation2 + $0x70] sm:$0xff] %v2246
          %2311 = vst [vmem:[#allocation2 + $0x78] sm:$0xff] %v2247
          %2312 = vst [vmem:[#allocation2 + $0x80] sm:$0xff] %v2248
          %2313 = vst [vmem:[#allocation2 + $0x88] sm:$0xff] %v2249
          %2314 = vst [vmem:[#allocation2 + $0x90] sm:$0xff] %v2250
          %2315 = vst [vmem:[#allocation2 + $0x98] sm:$0xff] %v2251
          %2316 = vst [vmem:[#allocation2 + $0xa0] sm:$0xff] %v2252
          %2317 = vst [vmem:[#allocation2 + $0xa8] sm:$0xff] %v2253
          %2318 = vst [vmem:[#allocation2 + $0xb0] sm:$0xff] %v2254
          %2319 = vst [vmem:[#allocation2 + $0xb8] sm:$0xff] %v2255
          %2320 = vst [vmem:[#allocation2 + $0xc0] sm:$0xff] %v2256
          %2321 = vst [vmem:[#allocation2 + $0xc8] sm:$0xff] %v2257
          %2322 = vst [vmem:[#allocation2 + $0xd0] sm:$0xff] %v2258
          %2323 = vst [vmem:[#allocation2 + $0xd8] sm:$0xff] %v2259
          %2324 = vst [vmem:[#allocation2 + $0xe0] sm:$0xff] %v2260
          %2325 = vst [vmem:[#allocation2 + $0xe8] sm:$0xff] %v2261
          %2326 = vst [vmem:[#allocation2 + $0xf0] sm:$0xff] %v2262
          %2327 = vst [vmem:[#allocation2 + $0xf8] sm:$0xff] %v2263
          %2328 = vst [vmem:[#allocation2 + $0x100] sm:$0xff] %v2264
          %2329 = vst [vmem:[#allocation2 + $0x108] sm:$0xff] %v2265
          %2330 = vst [vmem:[#allocation2 + $0x110] sm:$0xff] %v2266
          %2331 = vst [vmem:[#allocation2 + $0x118] sm:$0xff] %v2267
          %2332 = vst [vmem:[#allocation2 + $0x120] sm:$0xff] %v2268
          %2333 = vst [vmem:[#allocation2 + $0x128] sm:$0xff] %v2269
          %2334 = vst [vmem:[#allocation2 + $0x130] sm:$0xff] %v2270
          %2335 = vst [vmem:[#allocation2 + $0x138] sm:$0xff] %v2271
          %2336 = vst [vmem:[#allocation2 + $0x140] sm:$0xff] %v2272
          %2337 = vst [vmem:[#allocation2 + $0x148] sm:$0xff] %v2273
          %2338 = vst [vmem:[#allocation2 + $0x150] sm:$0xff] %v2274
          %2339 = vst [vmem:[#allocation2 + $0x158] sm:$0xff] %v2275
          %2340 = vst [vmem:[#allocation2 + $0x160] sm:$0xff] %v2276
          %2341 = vst [vmem:[#allocation2 + $0x168] sm:$0xff] %v2277
          %2342 = vst [vmem:[#allocation2 + $0x170] sm:$0xff] %v2278
          %2343 = vst [vmem:[#allocation2 + $0x178] sm:$0xff] %v2279
          %2344 = vst [vmem:[#allocation2 + $0x180] sm:$0xff] %v2280
          %2345 = vst [vmem:[#allocation2 + $0x188] sm:$0xff] %v2281
          %2346 = vst [vmem:[#allocation2 + $0x190] sm:$0xff] %v2282
          %2347 = vst [vmem:[#allocation2 + $0x198] sm:$0xff] %v2283
          %2348 = vst [vmem:[#allocation2 + $0x1a0] sm:$0xff] %v2284
          %2349 = vst [vmem:[#allocation2 + $0x1a8] sm:$0xff] %v2285
          %2350 = vst [vmem:[#allocation2 + $0x1b0] sm:$0xff] %v2286
          %2351 = vst [vmem:[#allocation2 + $0x1b8] sm:$0xff] %v2287
          %2352 = vst [vmem:[#allocation2 + $0x1c0] sm:$0xff] %v2288
          %2353 = vst [vmem:[#allocation2 + $0x1c8] sm:$0xff] %v2289
          %2354 = vst [vmem:[#allocation2 + $0x1d0] sm:$0xff] %v2290
          %2355 = vst [vmem:[#allocation2 + $0x1d8] sm:$0xff] %v2291
          %2356 = vst [vmem:[#allocation2 + $0x1e0] sm:$0xff] %v2292
          %2357 = vst [vmem:[#allocation2 + $0x1e8] sm:$0xff] %v2293
          %2358 = vst [vmem:[#allocation2 + $0x1f0] sm:$0xff] %v2294
          %2359 = vst [vmem:[#allocation2 + $0x1f8] sm:$0xff] %v2295
        $region63: #{_gcn_forward_padded.5} parent=50 // pred_fallthru
          _
        // Predicated region
        $region64: #{_gcn_forward_padded.5} parent=50 // pred_check
          %p2360 = pneg %p486
        $region65: #{_gcn_forward_padded.5} parent=50 // pred_check_branch
          %2362 = sbr.rel (%p2360) target = $region67
        $region66: #{_gcn_forward_padded.5} parent=50 // pred_region
          %v2363 = vld [vmem:[#allocation2] sm:$0xff]
          %v2364 = vld [vmem:[#allocation2 + $0x8] sm:$0xff]
          %v2365 = vld [vmem:[#allocation2 + $0x10] sm:$0xff]
          %v2366 = vld [vmem:[#allocation2 + $0x18] sm:$0xff]
          %v2367 = vld [vmem:[#allocation2 + $0x20] sm:$0xff]
          %v2368 = vld [vmem:[#allocation2 + $0x28] sm:$0xff]
          %v2369 = vld [vmem:[#allocation2 + $0x30] sm:$0xff]
          %v2370 = vld [vmem:[#allocation2 + $0x38] sm:$0xff]
          %v2371 = vld [vmem:[#allocation2 + $0x40] sm:$0xff]
          %v2372 = vld [vmem:[#allocation2 + $0x48] sm:$0xff]
          %v2373 = vld [vmem:[#allocation2 + $0x50] sm:$0xff]
          %v2374 = vld [vmem:[#allocation2 + $0x58] sm:$0xff]
          %v2375 = vld [vmem:[#allocation2 + $0x60] sm:$0xff]
          %v2376 = vld [vmem:[#allocation2 + $0x68] sm:$0xff]
          %v2377 = vld [vmem:[#allocation2 + $0x70] sm:$0xff]
          %v2378 = vld [vmem:[#allocation2 + $0x78] sm:$0xff]
          %v2379 = vld [vmem:[#allocation2 + $0x80] sm:$0xff]
          %v2380 = vld [vmem:[#allocation2 + $0x88] sm:$0xff]
          %v2381 = vld [vmem:[#allocation2 + $0x90] sm:$0xff]
          %v2382 = vld [vmem:[#allocation2 + $0x98] sm:$0xff]
          %v2383 = vld [vmem:[#allocation2 + $0xa0] sm:$0xff]
          %v2384 = vld [vmem:[#allocation2 + $0xa8] sm:$0xff]
          %v2385 = vld [vmem:[#allocation2 + $0xb0] sm:$0xff]
          %v2386 = vld [vmem:[#allocation2 + $0xb8] sm:$0xff]
          %v2387 = vld [vmem:[#allocation2 + $0xc0] sm:$0xff]
          %v2388 = vld [vmem:[#allocation2 + $0xc8] sm:$0xff]
          %v2389 = vld [vmem:[#allocation2 + $0xd0] sm:$0xff]
          %v2390 = vld [vmem:[#allocation2 + $0xd8] sm:$0xff]
          %v2391 = vld [vmem:[#allocation2 + $0xe0] sm:$0xff]
          %v2392 = vld [vmem:[#allocation2 + $0xe8] sm:$0xff]
          %v2393 = vld [vmem:[#allocation2 + $0xf0] sm:$0xff]
          %v2394 = vld [vmem:[#allocation2 + $0xf8] sm:$0xff]
          %v2395 = vld [vmem:[#allocation2 + $0x100] sm:$0xff]
          %v2396 = vld [vmem:[#allocation2 + $0x108] sm:$0xff]
          %v2397 = vld [vmem:[#allocation2 + $0x110] sm:$0xff]
          %v2398 = vld [vmem:[#allocation2 + $0x118] sm:$0xff]
          %v2399 = vld [vmem:[#allocation2 + $0x120] sm:$0xff]
          %v2400 = vld [vmem:[#allocation2 + $0x128] sm:$0xff]
          %v2401 = vld [vmem:[#allocation2 + $0x130] sm:$0xff]
          %v2402 = vld [vmem:[#allocation2 + $0x138] sm:$0xff]
          %v2403 = vld [vmem:[#allocation2 + $0x140] sm:$0xff]
          %v2404 = vld [vmem:[#allocation2 + $0x148] sm:$0xff]
          %v2405 = vld [vmem:[#allocation2 + $0x150] sm:$0xff]
          %v2406 = vld [vmem:[#allocation2 + $0x158] sm:$0xff]
          %v2407 = vld [vmem:[#allocation2 + $0x160] sm:$0xff]
          %v2408 = vld [vmem:[#allocation2 + $0x168] sm:$0xff]
          %v2409 = vld [vmem:[#allocation2 + $0x170] sm:$0xff]
          %v2410 = vld [vmem:[#allocation2 + $0x178] sm:$0xff]
          %v2411 = vld [vmem:[#allocation2 + $0x180] sm:$0xff]
          %v2412 = vld [vmem:[#allocation2 + $0x188] sm:$0xff]
          %v2413 = vld [vmem:[#allocation2 + $0x190] sm:$0xff]
          %v2414 = vld [vmem:[#allocation2 + $0x198] sm:$0xff]
          %v2415 = vld [vmem:[#allocation2 + $0x1a0] sm:$0xff]
          %v2416 = vld [vmem:[#allocation2 + $0x1a8] sm:$0xff]
          %v2417 = vld [vmem:[#allocation2 + $0x1b0] sm:$0xff]
          %v2418 = vld [vmem:[#allocation2 + $0x1b8] sm:$0xff]
          %v2419 = vld [vmem:[#allocation2 + $0x1c0] sm:$0xff]
          %v2420 = vld [vmem:[#allocation2 + $0x1c8] sm:$0xff]
          %v2421 = vld [vmem:[#allocation2 + $0x1d0] sm:$0xff]
          %v2422 = vld [vmem:[#allocation2 + $0x1d8] sm:$0xff]
          %v2423 = vld [vmem:[#allocation2 + $0x1e0] sm:$0xff]
          %v2424 = vld [vmem:[#allocation2 + $0x1e8] sm:$0xff]
          %v2425 = vld [vmem:[#allocation2 + $0x1f0] sm:$0xff]
          %v2426 = vld [vmem:[#allocation2 + $0x1f8] sm:$0xff]
          %v2427 = vld [vmem:[%s4] sm:$0x1]
          %v2429 = vlaneseq
          %v2430 = vshrl.u32 %v2429, 7
          %v2431 = vsub.s32 0, %v2430
          %v2432 = vrot.slane %v2427, %v2431
          %v2434 = vadd.f32 %v2363, %v2432
          %v2435 = vadd.f32 %v2364, %v2432
          %v2436 = vadd.f32 %v2365, %v2432
          %v2437 = vadd.f32 %v2366, %v2432
          %v2438 = vadd.f32 %v2367, %v2432
          %v2439 = vadd.f32 %v2368, %v2432
          %v2440 = vadd.f32 %v2369, %v2432
          %v2441 = vadd.f32 %v2370, %v2432
          %v2442 = vadd.f32 %v2371, %v2432
          %v2443 = vadd.f32 %v2372, %v2432
          %v2444 = vadd.f32 %v2373, %v2432
          %v2445 = vadd.f32 %v2374, %v2432
          %v2446 = vadd.f32 %v2375, %v2432
          %v2447 = vadd.f32 %v2376, %v2432
          %v2448 = vadd.f32 %v2377, %v2432
          %v2449 = vadd.f32 %v2378, %v2432
          %v2450 = vadd.f32 %v2379, %v2432
          %v2451 = vadd.f32 %v2380, %v2432
          %v2452 = vadd.f32 %v2381, %v2432
          %v2453 = vadd.f32 %v2382, %v2432
          %v2454 = vadd.f32 %v2383, %v2432
          %v2455 = vadd.f32 %v2384, %v2432
          %v2456 = vadd.f32 %v2385, %v2432
          %v2457 = vadd.f32 %v2386, %v2432
          %v2458 = vadd.f32 %v2387, %v2432
          %v2459 = vadd.f32 %v2388, %v2432
          %v2460 = vadd.f32 %v2389, %v2432
          %v2461 = vadd.f32 %v2390, %v2432
          %v2462 = vadd.f32 %v2391, %v2432
          %v2463 = vadd.f32 %v2392, %v2432
          %v2464 = vadd.f32 %v2393, %v2432
          %v2465 = vadd.f32 %v2394, %v2432
          %v2466 = vadd.f32 %v2395, %v2432
          %v2467 = vadd.f32 %v2396, %v2432
          %v2468 = vadd.f32 %v2397, %v2432
          %v2469 = vadd.f32 %v2398, %v2432
          %v2470 = vadd.f32 %v2399, %v2432
          %v2471 = vadd.f32 %v2400, %v2432
          %v2472 = vadd.f32 %v2401, %v2432
          %v2473 = vadd.f32 %v2402, %v2432
          %v2474 = vadd.f32 %v2403, %v2432
          %v2475 = vadd.f32 %v2404, %v2432
          %v2476 = vadd.f32 %v2405, %v2432
          %v2477 = vadd.f32 %v2406, %v2432
          %v2478 = vadd.f32 %v2407, %v2432
          %v2479 = vadd.f32 %v2408, %v2432
          %v2480 = vadd.f32 %v2409, %v2432
          %v2481 = vadd.f32 %v2410, %v2432
          %v2482 = vadd.f32 %v2411, %v2432
          %v2483 = vadd.f32 %v2412, %v2432
          %v2484 = vadd.f32 %v2413, %v2432
          %v2485 = vadd.f32 %v2414, %v2432
          %v2486 = vadd.f32 %v2415, %v2432
          %v2487 = vadd.f32 %v2416, %v2432
          %v2488 = vadd.f32 %v2417, %v2432
          %v2489 = vadd.f32 %v2418, %v2432
          %v2490 = vadd.f32 %v2419, %v2432
          %v2491 = vadd.f32 %v2420, %v2432
          %v2492 = vadd.f32 %v2421, %v2432
          %v2493 = vadd.f32 %v2422, %v2432
          %v2494 = vadd.f32 %v2423, %v2432
          %v2495 = vadd.f32 %v2424, %v2432
          %v2496 = vadd.f32 %v2425, %v2432
          %v2497 = vadd.f32 %v2426, %v2432
          %2498 = vst [vmem:[%s483] sm:$0xff] %v2434
          %2499 = vst [vmem:[%s483 + $0x8] sm:$0xff] %v2435
          %2500 = vst [vmem:[%s483 + $0x10] sm:$0xff] %v2436
          %2501 = vst [vmem:[%s483 + $0x18] sm:$0xff] %v2437
          %2502 = vst [vmem:[%s483 + $0x20] sm:$0xff] %v2438
          %2503 = vst [vmem:[%s483 + $0x28] sm:$0xff] %v2439
          %2504 = vst [vmem:[%s483 + $0x30] sm:$0xff] %v2440
          %2505 = vst [vmem:[%s483 + $0x38] sm:$0xff] %v2441
          %2506 = vst [vmem:[%s483 + $0x40] sm:$0xff] %v2442
          %2507 = vst [vmem:[%s483 + $0x48] sm:$0xff] %v2443
          %2508 = vst [vmem:[%s483 + $0x50] sm:$0xff] %v2444
          %2509 = vst [vmem:[%s483 + $0x58] sm:$0xff] %v2445
          %2510 = vst [vmem:[%s483 + $0x60] sm:$0xff] %v2446
          %2511 = vst [vmem:[%s483 + $0x68] sm:$0xff] %v2447
          %2512 = vst [vmem:[%s483 + $0x70] sm:$0xff] %v2448
          %2513 = vst [vmem:[%s483 + $0x78] sm:$0xff] %v2449
          %2514 = vst [vmem:[%s483 + $0x80] sm:$0xff] %v2450
          %2515 = vst [vmem:[%s483 + $0x88] sm:$0xff] %v2451
          %2516 = vst [vmem:[%s483 + $0x90] sm:$0xff] %v2452
          %2517 = vst [vmem:[%s483 + $0x98] sm:$0xff] %v2453
          %2518 = vst [vmem:[%s483 + $0xa0] sm:$0xff] %v2454
          %2519 = vst [vmem:[%s483 + $0xa8] sm:$0xff] %v2455
          %2520 = vst [vmem:[%s483 + $0xb0] sm:$0xff] %v2456
          %2521 = vst [vmem:[%s483 + $0xb8] sm:$0xff] %v2457
          %2522 = vst [vmem:[%s483 + $0xc0] sm:$0xff] %v2458
          %2523 = vst [vmem:[%s483 + $0xc8] sm:$0xff] %v2459
          %2524 = vst [vmem:[%s483 + $0xd0] sm:$0xff] %v2460
          %2525 = vst [vmem:[%s483 + $0xd8] sm:$0xff] %v2461
          %2526 = vst [vmem:[%s483 + $0xe0] sm:$0xff] %v2462
          %2527 = vst [vmem:[%s483 + $0xe8] sm:$0xff] %v2463
          %2528 = vst [vmem:[%s483 + $0xf0] sm:$0xff] %v2464
          %2529 = vst [vmem:[%s483 + $0xf8] sm:$0xff] %v2465
          %2530 = vst [vmem:[%s483 + $0x100] sm:$0xff] %v2466
          %2531 = vst [vmem:[%s483 + $0x108] sm:$0xff] %v2467
          %2532 = vst [vmem:[%s483 + $0x110] sm:$0xff] %v2468
          %2533 = vst [vmem:[%s483 + $0x118] sm:$0xff] %v2469
          %2534 = vst [vmem:[%s483 + $0x120] sm:$0xff] %v2470
          %2535 = vst [vmem:[%s483 + $0x128] sm:$0xff] %v2471
          %2536 = vst [vmem:[%s483 + $0x130] sm:$0xff] %v2472
          %2537 = vst [vmem:[%s483 + $0x138] sm:$0xff] %v2473
          %2538 = vst [vmem:[%s483 + $0x140] sm:$0xff] %v2474
          %2539 = vst [vmem:[%s483 + $0x148] sm:$0xff] %v2475
          %2540 = vst [vmem:[%s483 + $0x150] sm:$0xff] %v2476
          %2541 = vst [vmem:[%s483 + $0x158] sm:$0xff] %v2477
          %2542 = vst [vmem:[%s483 + $0x160] sm:$0xff] %v2478
          %2543 = vst [vmem:[%s483 + $0x168] sm:$0xff] %v2479
          %2544 = vst [vmem:[%s483 + $0x170] sm:$0xff] %v2480
          %2545 = vst [vmem:[%s483 + $0x178] sm:$0xff] %v2481
          %2546 = vst [vmem:[%s483 + $0x180] sm:$0xff] %v2482
          %2547 = vst [vmem:[%s483 + $0x188] sm:$0xff] %v2483
          %2548 = vst [vmem:[%s483 + $0x190] sm:$0xff] %v2484
          %2549 = vst [vmem:[%s483 + $0x198] sm:$0xff] %v2485
          %2550 = vst [vmem:[%s483 + $0x1a0] sm:$0xff] %v2486
          %2551 = vst [vmem:[%s483 + $0x1a8] sm:$0xff] %v2487
          %2552 = vst [vmem:[%s483 + $0x1b0] sm:$0xff] %v2488
          %2553 = vst [vmem:[%s483 + $0x1b8] sm:$0xff] %v2489
          %2554 = vst [vmem:[%s483 + $0x1c0] sm:$0xff] %v2490
          %2555 = vst [vmem:[%s483 + $0x1c8] sm:$0xff] %v2491
          %2556 = vst [vmem:[%s483 + $0x1d0] sm:$0xff] %v2492
          %2557 = vst [vmem:[%s483 + $0x1d8] sm:$0xff] %v2493
          %2558 = vst [vmem:[%s483 + $0x1e0] sm:$0xff] %v2494
          %2559 = vst [vmem:[%s483 + $0x1e8] sm:$0xff] %v2495
          %2560 = vst [vmem:[%s483 + $0x1f0] sm:$0xff] %v2496
          %2561 = vst [vmem:[%s483 + $0x1f8] sm:$0xff] %v2497
        $region67: #{_gcn_forward_padded.5} parent=50 // pred_fallthru
          _
        %s2562 = smul.u32 64, %s30
        %p2563 = scmp.lt.s32.totalorder %s2562, 127
        %s2564 = scalar_select %p2563, %s2562, 127
        %s2565 = smul.addr %s2564, 8
        %s2566 = scalar_lea.vmem %s5, %s2565
        // Predicated region
        $region68: #{_gcn_forward_padded.5} parent=50 // pred_check
          %p2567 = pneg %p130
        $region69: #{_gcn_forward_padded.5} parent=50 // pred_check_branch
          %2569 = sbr.rel (%p2567) target = $region71
        $region70: #{_gcn_forward_padded.5} parent=50 // pred_region
          %s2570 = smul.u32 64, %s30
        $region71: #{_gcn_forward_padded.5} parent=50 // pred_fallthru
          _
      $region51: #{_gcn_forward_padded.5} parent=5 // pred_fallthru
        _
      %p2571 = scmp.le.s32.totalorder 2, %s21
      // Predicated region
      $region72: #{_gcn_forward_padded.5} parent=5 // pred_check
        %p2572 = pneg %p2571
      $region73: #{_gcn_forward_padded.5} parent=5 // pred_check_branch
        %2574 = sbr.rel (%p2572) target = $region75
      $region74: #{_gcn_forward_padded.5} parent=5 // pred_region
        %s2575 = ssub.s32 %s21, 2
        // Predicated region
        $region76: #{_gcn_forward_padded.5} parent=74 // pred_check
          %p2576 = pneg %p136
        $region77: #{_gcn_forward_padded.5} parent=74 // pred_check_branch
          %2578 = sbr.rel (%p2576) target = $region79
        $region78: #{_gcn_forward_padded.5} parent=74 // pred_region
          %s2579 = smul.u32 64, %s32
          %p2580 = scmp.lt.s32.totalorder %s2579, 127
          %s2581 = scalar_select %p2580, %s2579, 127
          %s2582 = smul.addr %s2581, 8
          %s2583 = scalar_lea.vmem %s5, %s2582
        $region79: #{_gcn_forward_padded.5} parent=74 // pred_fallthru
          _
      $region75: #{_gcn_forward_padded.5} parent=5 // pred_fallthru
        _
    $region6: #{_gcn_forward_padded.5} parent=1 // loop_footer
      %s25 = sadd.s32 1, %s21
    $region7: #{_gcn_forward_padded.5} parent=1 // loop_footer_branch
      %20 = sbr.rel target = $region3
    $region8: #{_gcn_forward_padded.5} parent=1 // loop_exit
      _

// kernel: _gcn_forward_padded.4
$region0: #{_gcn_forward_padded.4}
  #allocation0 [shape = 'u32[]', space=smem, size = 0x4, offset = 0x4, fixed_abs, tag = 'smem constant byte address 0x4 - core index']
  #allocation1 [shape = 'u32[144,128]{1,0:T(1,128)}', space=vmem, size = 0x12000, scoped, tag = 'internal scratch']
  #allocation2 [shape = 'f32[512,128]{1,0:T(8,128)}', space=vmem, size = 0x40000, scoped, tag = 'scratch operand']
  #allocation3 [shape = 's32[1]{0}', space=sflag, size = 0x4, scoped, tag = 'scoped memory for _gcn_forward_padded.4']
  #allocation4 [shape = 'u8[512]{0}', space=smem, size = 0x200, scoped, tag = 'prefetched SMEM operand 0']
  #allocation5 [shape = 'u8[512]{0}', space=smem, size = 0x200, scoped, tag = 'prefetched SMEM operand 1']
  %s0 = inlined_call_operand.hbm [shape: s32[2], index: 0, kind: input, shape index: {}]
  %s1 = inlined_call_operand.hbm [shape: s32[2], index: 1, kind: input, shape index: {}]
  %s2 = inlined_call_operand.hbm [shape: bf16[1024,1024], index: 2, kind: input, shape index: {}]
  %s3 = inlined_call_operand.vmem [shape: bf16[1024,128], index: 3, kind: input, shape index: {}]
  %s4 = inlined_call_operand.hbm [shape: f32[1,128], index: 4, kind: input, shape index: {}]
  %s5 = inlined_call_operand.hbm [shape: bf16[128,128], index: 5, kind: input, shape index: {}]
  %s6 = inlined_call_operand.vmem [shape: bf16[1024,128], index: 6, kind: output, shape index: {}]
  %s7 = sld [smem:[#allocation0]]
  $region73: #{_gcn_forward_padded.4} parent=0
    _
  %s9 = ssub.s32 1, %s7
  %s10 = scalar_select 0, %s9, %s7
  %12 = dma.hbm_to_smem %s0, 16, [#allocation4], [#allocation3]
  %14 = dma.hbm_to_smem %s1, 16, [#allocation5], [#allocation3]
  %15 = dma.done [#allocation3], 32
  %16 = sfence
  $region1: #{_gcn_forward_padded.4} parent=0
    #allocation6 [shape = 'u8[1048576]{0}', space=vmem, size = 0x100000, scoped, tag = 'input window, operand 2']
    #allocation7 [shape = 's32[2]{0}', space=sflag, size = 0x8, scoped, tag = 'scoped memory for _gcn_forward_padded.4']
    #allocation8 [shape = 'u8[512]{0}', space=vmem, size = 0x400, scoped, tag = 'input window, operand 4, single buffered']
    #allocation9 [shape = 's32[1]{0}', space=sflag, size = 0x4, scoped, tag = 'scoped memory for _gcn_forward_padded.4']
    #allocation10 [shape = 'u8[32768]{0}', space=vmem, size = 0x8000, scoped, tag = 'input window, operand 5, single buffered']
    %17 = vsyncpa [#allocation7], 0
    %s18 = scalar_lea.sflag [#allocation7], 1
    %19 = vsyncpa %s18, 0
    %20 = vsyncpa [#allocation9], 0
    loop: start=0, step=1, limit=4
    $region2: #{_gcn_forward_padded.4} parent=1 // loop_pre_header
      _
    $region3: #{_gcn_forward_padded.4} parent=1 // loop_header
      %s22 = sphi 0, %s26
      %p23 = scmp.ge.s32.totalorder %s22, 4
      %s29 = sphi 0, %s41
      %s30 = sphi 0, %s37
      %s31 = sphi 0, %s29
      %s32 = sphi 0, %s30
      %s33 = sphi 0, %s31
      %s34 = sphi 0, %s32
      %s50 = sphi 0, %s52
      %s53 = sphi 0, %s50
      %s54 = sphi 0, %s53
      %s70 = sphi 0, %s54
      %s74 = sphi 0, %s74
      %s76 = sphi 0, %s74
      %s77 = sphi 0, %s76
      %s91 = sphi 0, %s77
      %s95 = sphi 0, %s95
      %s97 = sphi 0, %s95
      %s98 = sphi 0, %s97
      %s112 = sphi 0, %s98
      %s116 = sphi 0, %s116
      %s118 = sphi 0, %s116
      %s119 = sphi 0, %s118
      %s133 = sphi 0, %s119
      %s139 = sphi 0, %s141
      %s142 = sphi 0, %s139
      %s143 = sphi 0, %s142
      %s159 = sphi 0, %s143
    $region4: #{_gcn_forward_padded.4} parent=1 // loop_header_branch
      %25 = sbr.rel (%p23) target = $region8
    $region5: #{_gcn_forward_padded.4} parent=1 // loop_body
      %s27 = ssub.s32 %s22, 1
      %s28 = ssub.s32 %s22, 2
      %s35 = sadd.s32 1, %s30
      %p36 = scmp.ge.s32.totalorder %s35, 1
      %s37 = scalar_select %p36, 0, %s35
      %s38 = sadd.s32 1, %s29
      %s39 = scalar_select %p36, %s38, %s29
      %p40 = scmp.ge.s32.totalorder %s39, 2
      %s41 = scalar_select %p40, 0, %s39
      %s42 = sadd.s32 %s29, %s30
      %s43 = sld [smem:[#allocation4 + %s42]]
      %s44 = sadd.s32 %s41, %s37
      %s45 = sld [smem:[#allocation4 + %s44]]
      %s46 = ssub.s32 %s29, %s41
      %s47 = ssub.s32 %s43, %s45
      %s48 = sor.u32 %s46, %s47
      %p49 = scmp.eq.s32.totalorder %s48, 0
      %s51 = sadd.s32 %s50, 1
      %s52 = scalar_select %p49, %s50, %s51
      %p55 = pneg %p49
      %p56 = scmp.eq.s32.totalorder %s22, 1
      %p57 = por %p55, %p56
      %p58 = scmp.ne.s32.totalorder %s50, %s53
      %p59 = scmp.eq.s32.totalorder %s22, 0
      %p60 = por %p58, %p59
      %p61 = scmp.ne.s32.totalorder %s50, %s53
      %p62 = scmp.eq.s32.totalorder %s27, 1
      %p63 = por %p61, %p62
      %p64 = scmp.ne.s32.totalorder %s53, %s54
      %p65 = scmp.eq.s32.totalorder %s27, 0
      %p66 = por %p64, %p65
      %p67 = scmp.ne.s32.totalorder %s53, %s54
      %p68 = scmp.eq.s32.totalorder %s28, 1
      %p69 = por %p67, %p68
      %p71 = scmp.ne.s32.totalorder %s54, %s70
      %p72 = scmp.eq.s32.totalorder %s28, 0
      %p73 = por %p71, %p72
      %s75 = sadd.s32 %s74, 1
      %p78 = scmp.eq.s32.totalorder %s22, 1
      %p79 = scmp.ne.s32.totalorder %s74, %s76
      %p80 = scmp.eq.s32.totalorder %s22, 0
      %p81 = por %p79, %p80
      %p82 = scmp.ne.s32.totalorder %s74, %s76
      %p83 = scmp.eq.s32.totalorder %s27, 1
      %p84 = por %p82, %p83
      %p85 = scmp.ne.s32.totalorder %s76, %s77
      %p86 = scmp.eq.s32.totalorder %s27, 0
      %p87 = por %p85, %p86
      %p88 = scmp.ne.s32.totalorder %s76, %s77
      %p89 = scmp.eq.s32.totalorder %s28, 1
      %p90 = por %p88, %p89
      %p92 = scmp.ne.s32.totalorder %s77, %s91
      %p93 = scmp.eq.s32.totalorder %s28, 0
      %p94 = por %p92, %p93
      %s96 = sadd.s32 %s95, 1
      %p99 = scmp.eq.s32.totalorder %s22, 1
      %p100 = scmp.ne.s32.totalorder %s95, %s97
      %p101 = scmp.eq.s32.totalorder %s22, 0
      %p102 = por %p100, %p101
      %p103 = scmp.ne.s32.totalorder %s95, %s97
      %p104 = scmp.eq.s32.totalorder %s27, 1
      %p105 = por %p103, %p104
      %p106 = scmp.ne.s32.totalorder %s97, %s98
      %p107 = scmp.eq.s32.totalorder %s27, 0
      %p108 = por %p106, %p107
      %p109 = scmp.ne.s32.totalorder %s97, %s98
      %p110 = scmp.eq.s32.totalorder %s28, 1
      %p111 = por %p109, %p110
      %p113 = scmp.ne.s32.totalorder %s98, %s112
      %p114 = scmp.eq.s32.totalorder %s28, 0
      %p115 = por %p113, %p114
      %s117 = sadd.s32 %s116, 1
      %p120 = scmp.eq.s32.totalorder %s22, 1
      %p121 = scmp.ne.s32.totalorder %s116, %s118
      %p122 = scmp.eq.s32.totalorder %s22, 0
      %p123 = por %p121, %p122
      %p124 = scmp.ne.s32.totalorder %s116, %s118
      %p125 = scmp.eq.s32.totalorder %s27, 1
      %p126 = por %p124, %p125
      %p127 = scmp.ne.s32.totalorder %s118, %s119
      %p128 = scmp.eq.s32.totalorder %s27, 0
      %p129 = por %p127, %p128
      %p130 = scmp.ne.s32.totalorder %s118, %s119
      %p131 = scmp.eq.s32.totalorder %s28, 1
      %p132 = por %p130, %p131
      %p134 = scmp.ne.s32.totalorder %s119, %s133
      %p135 = scmp.eq.s32.totalorder %s28, 0
      %p136 = por %p134, %p135
      %s137 = ssub.s32 %s29, %s41
      %p138 = scmp.eq.s32.totalorder %s137, 0
      %s140 = sadd.s32 %s139, 1
      %s141 = scalar_select %p138, %s139, %s140
      %p144 = pneg %p138
      %p145 = scmp.eq.s32.totalorder %s22, 1
      %p146 = por %p144, %p145
      %p147 = scmp.ne.s32.totalorder %s139, %s142
      %p148 = scmp.eq.s32.totalorder %s22, 0
      %p149 = por %p147, %p148
      %p150 = scmp.ne.s32.totalorder %s139, %s142
      %p151 = scmp.eq.s32.totalorder %s27, 1
      %p152 = por %p150, %p151
      %p153 = scmp.ne.s32.totalorder %s142, %s143
      %p154 = scmp.eq.s32.totalorder %s27, 0
      %p155 = por %p153, %p154
      %p156 = scmp.ne.s32.totalorder %s142, %s143
      %p157 = scmp.eq.s32.totalorder %s28, 1
      %p158 = por %p156, %p157
      %p160 = scmp.ne.s32.totalorder %s143, %s159
      %p161 = scmp.eq.s32.totalorder %s28, 0
      %p162 = por %p160, %p161
      %p163 = scmp.le.s32.totalorder 1, %s22
      %p164 = scmp.lt.s32.totalorder %s22, 3
      %p165 = pnand %p163, %p164
      %p166 = pneg %p165
      // Predicated region
      $region9: #{_gcn_forward_padded.4} parent=5 // pred_check
        _
      $region10: #{_gcn_forward_padded.4} parent=5 // pred_check_branch
        %168 = sbr.rel (%p165) target = $region12
      $region11: #{_gcn_forward_padded.4} parent=5 // pred_region
        %s169 = ssub.s32 %s22, 1
        // Predicated region
        $region13: #{_gcn_forward_padded.4} parent=11 // pred_check
          %p170 = pneg %p87
        $region14: #{_gcn_forward_padded.4} parent=11 // pred_check_branch
          %172 = sbr.rel (%p170) target = $region16
        $region15: #{_gcn_forward_padded.4} parent=11 // pred_region
          _
        $region16: #{_gcn_forward_padded.4} parent=11 // pred_fallthru
          _
        // Predicated region
        $region17: #{_gcn_forward_padded.4} parent=11 // pred_check
          %p173 = pneg %p108
        $region18: #{_gcn_forward_padded.4} parent=11 // pred_check_branch
          %175 = sbr.rel (%p173) target = $region20
        $region19: #{_gcn_forward_padded.4} parent=11 // pred_region
          %s177 = ssub.s32 16, 16
          %178 = vsyncadd [#allocation9], %s177
          %s180 = sshll.u32 [#allocation8], 4
          %s181 = int_to_ptr.vmem [resolvable:$true] %s180
          %183 = dma.hbm_to_vmem [thread:$0]  %s4, 16, %s181, [#allocation9]
        $region20: #{_gcn_forward_padded.4} parent=11 // pred_fallthru
          _
        // Predicated region
        $region21: #{_gcn_forward_padded.4} parent=11 // pred_check
          %p184 = pneg %p129
        $region22: #{_gcn_forward_padded.4} parent=11 // pred_check_branch
          %186 = sbr.rel (%p184) target = $region24
        $region23: #{_gcn_forward_padded.4} parent=11 // pred_region
          %s188 = ssub.s32 1024, 1024
          %189 = vsyncadd [#allocation9], %s188
          %s190 = sshll.u32 [#allocation10], 4
          %s191 = int_to_ptr.vmem [resolvable:$true] %s190
          %196 = dma.hbm_to_vmem [thread:$0]  %s5, 1024, %s191, [#allocation9], 64, 64, 4
        $region24: #{_gcn_forward_padded.4} parent=11 // pred_fallthru
          _
      $region12: #{_gcn_forward_padded.4} parent=5 // pred_fallthru
        _
      %p197 = scmp.lt.s32.totalorder %s22, 2
      // Predicated region
      $region25: #{_gcn_forward_padded.4} parent=5 // pred_check
        %p198 = pneg %p197
      $region26: #{_gcn_forward_padded.4} parent=5 // pred_check_branch
        %200 = sbr.rel (%p198) target = $region28
      $region27: #{_gcn_forward_padded.4} parent=5 // pred_region
        // Predicated region
        $region29: #{_gcn_forward_padded.4} parent=27 // pred_check
          %p201 = pneg %p60
        $region30: #{_gcn_forward_padded.4} parent=27 // pred_check_branch
          %203 = sbr.rel (%p201) target = $region32
        $region31: #{_gcn_forward_padded.4} parent=27 // pred_region
          %s204 = sand.u32 %s50, 1
          %s205 = scalar_lea.sflag [#allocation7], %s204
          %s206 = sand.u32 %s50, 1
          %s207 = smul.addr %s206, 1024
          %s208 = scalar_lea.vmem [#allocation6], %s207
          %s209 = sadd.s32 %s29, %s30
          %s210 = sld [smem:[#allocation4 + %s209]]
          %s211 = smul.u32 64, %s29
          %s212 = smul.u32 4, %s210
          %s214 = ssub.s32 16384, 16384
          %215 = vsyncadd %s205, %s214
          %s216 = smul.addr %s211, 8
          %s217 = sadd.s32 %s212, %s216
          %s218 = smul.addr %s217, 64
          %s219 = scalar_lea.hbm %s2, %s218
          %s220 = sshll.u32 %s208, 4
          %s221 = int_to_ptr.vmem [resolvable:$true] %s220
          %226 = dma.hbm_to_vmem [thread:$0]  %s219, 16384, %s221, %s205, 512, 256, 16
        $region32: #{_gcn_forward_padded.4} parent=27 // pred_fallthru
          _
      $region28: #{_gcn_forward_padded.4} parent=5 // pred_fallthru
        _
      %p227 = scmp.le.s32.totalorder 1, %s22
      %p228 = scmp.lt.s32.totalorder %s22, 3
      %p229 = pnand %p227, %p228
      %p230 = pneg %p229
      // Predicated region
      $region33: #{_gcn_forward_padded.4} parent=5 // pred_check
        _
      $region34: #{_gcn_forward_padded.4} parent=5 // pred_check_branch
        %232 = sbr.rel (%p229) target = $region36
      $region35: #{_gcn_forward_padded.4} parent=5 // pred_region
        %s233 = ssub.s32 %s22, 1
        %s234 = sand.u32 %s53, 1
        %s235 = scalar_lea.sflag [#allocation7], %s234
        %s236 = sand.u32 %s53, 1
        %s237 = smul.addr %s236, 1024
        %s238 = scalar_lea.vmem [#allocation6], %s237
        // Predicated region
        $region37: #{_gcn_forward_padded.4} parent=35 // pred_check
          %p239 = pneg %p66
        $region38: #{_gcn_forward_padded.4} parent=35 // pred_check_branch
          %241 = sbr.rel (%p239) target = $region40
        $region39: #{_gcn_forward_padded.4} parent=35 // pred_region
          %242 = dma.done %s235, 16384
        $region40: #{_gcn_forward_padded.4} parent=35 // pred_fallthru
          _
        // Predicated region
        $region41: #{_gcn_forward_padded.4} parent=35 // pred_check
          %p243 = pneg %p108
        $region42: #{_gcn_forward_padded.4} parent=35 // pred_check_branch
          %245 = sbr.rel (%p243) target = $region44
        $region43: #{_gcn_forward_padded.4} parent=35 // pred_region
          %246 = dma.done [#allocation9], 16
        $region44: #{_gcn_forward_padded.4} parent=35 // pred_fallthru
          _
        // Predicated region
        $region45: #{_gcn_forward_padded.4} parent=35 // pred_check
          %p247 = pneg %p129
        $region46: #{_gcn_forward_padded.4} parent=35 // pred_check_branch
          %249 = sbr.rel (%p247) target = $region48
        $region47: #{_gcn_forward_padded.4} parent=35 // pred_region
          %250 = dma.done [#allocation9], 1024
        $region48: #{_gcn_forward_padded.4} parent=35 // pred_fallthru
          _
        %s251 = sand.u32 %s53, 1
        %s252 = scalar_lea.sflag [#allocation7], %s251
        %s253 = sand.u32 %s53, 1
        %s254 = smul.addr %s253, 1024
        %s255 = scalar_lea.vmem [#allocation6], %s254
        %p256 = pneg %p66
        %p257 = pneg %p63
        %p258 = pneg %p87
        %p259 = pneg %p84
        %p260 = pneg %p108
        %p261 = pneg %p105
        %p262 = pneg %p129
        %p263 = pneg %p126
        %p264 = pneg %p155
        %p265 = pneg %p152
        %s266 = smul.u32 64, %s31
        %p267 = scmp.lt.s32.totalorder %s266, 127
        %s268 = scalar_select %p267, %s266, 127
        %s269 = smul.addr %s268, 4
        %s270 = scalar_lea.vmem %s6, %s269
        %s271 = sadd.s32 %s31, %s32
        %s272 = sld [smem:[#allocation4 + %s271]]
        %s273 = smul.u32 64, %s31
        %s274 = smul.u32 4, %s272
        %s275 = smul.u32 64, %s31
        %p276 = scmp.lt.s32.totalorder %s275, 127
        %s277 = scalar_select %p276, %s275, 127
        %s278 = smul.addr %s277, 4
        %s279 = scalar_lea.vmem %s6, %s278
        %s280 = smul.u32 64, %s31
        %p282 = scmp.eq.s32.totalorder %s32, 0
        // Predicated region
        $region49: #{_gcn_forward_padded.4} parent=35 // pred_check
          %p283 = pneg %p282
        $region50: #{_gcn_forward_padded.4} parent=35 // pred_check_branch
          %285 = sbr.rel (%p283) target = $region52
        $region51: #{_gcn_forward_padded.4} parent=35 // pred_region
          %286 = vst [vmem:[#allocation2] sm:$0xff] 0.0
          %287 = vst [vmem:[#allocation2 + $0x8] sm:$0xff] 0.0
          %288 = vst [vmem:[#allocation2 + $0x10] sm:$0xff] 0.0
          %289 = vst [vmem:[#allocation2 + $0x18] sm:$0xff] 0.0
          %290 = vst [vmem:[#allocation2 + $0x20] sm:$0xff] 0.0
          %291 = vst [vmem:[#allocation2 + $0x28] sm:$0xff] 0.0
          %292 = vst [vmem:[#allocation2 + $0x30] sm:$0xff] 0.0
          %293 = vst [vmem:[#allocation2 + $0x38] sm:$0xff] 0.0
          %294 = vst [vmem:[#allocation2 + $0x40] sm:$0xff] 0.0
          %295 = vst [vmem:[#allocation2 + $0x48] sm:$0xff] 0.0
          %296 = vst [vmem:[#allocation2 + $0x50] sm:$0xff] 0.0
          %297 = vst [vmem:[#allocation2 + $0x58] sm:$0xff] 0.0
          %298 = vst [vmem:[#allocation2 + $0x60] sm:$0xff] 0.0
          %299 = vst [vmem:[#allocation2 + $0x68] sm:$0xff] 0.0
          %300 = vst [vmem:[#allocation2 + $0x70] sm:$0xff] 0.0
          %301 = vst [vmem:[#allocation2 + $0x78] sm:$0xff] 0.0
          %302 = vst [vmem:[#allocation2 + $0x80] sm:$0xff] 0.0
          %303 = vst [vmem:[#allocation2 + $0x88] sm:$0xff] 0.0
          %304 = vst [vmem:[#allocation2 + $0x90] sm:$0xff] 0.0
          %305 = vst [vmem:[#allocation2 + $0x98] sm:$0xff] 0.0
          %306 = vst [vmem:[#allocation2 + $0xa0] sm:$0xff] 0.0
          %307 = vst [vmem:[#allocation2 + $0xa8] sm:$0xff] 0.0
          %308 = vst [vmem:[#allocation2 + $0xb0] sm:$0xff] 0.0
          %309 = vst [vmem:[#allocation2 + $0xb8] sm:$0xff] 0.0
          %310 = vst [vmem:[#allocation2 + $0xc0] sm:$0xff] 0.0
          %311 = vst [vmem:[#allocation2 + $0xc8] sm:$0xff] 0.0
          %312 = vst [vmem:[#allocation2 + $0xd0] sm:$0xff] 0.0
          %313 = vst [vmem:[#allocation2 + $0xd8] sm:$0xff] 0.0
          %314 = vst [vmem:[#allocation2 + $0xe0] sm:$0xff] 0.0
          %315 = vst [vmem:[#allocation2 + $0xe8] sm:$0xff] 0.0
          %316 = vst [vmem:[#allocation2 + $0xf0] sm:$0xff] 0.0
          %317 = vst [vmem:[#allocation2 + $0xf8] sm:$0xff] 0.0
          %318 = vst [vmem:[#allocation2 + $0x100] sm:$0xff] 0.0
          %319 = vst [vmem:[#allocation2 + $0x108] sm:$0xff] 0.0
          %320 = vst [vmem:[#allocation2 + $0x110] sm:$0xff] 0.0
          %321 = vst [vmem:[#allocation2 + $0x118] sm:$0xff] 0.0
          %322 = vst [vmem:[#allocation2 + $0x120] sm:$0xff] 0.0
          %323 = vst [vmem:[#allocation2 + $0x128] sm:$0xff] 0.0
          %324 = vst [vmem:[#allocation2 + $0x130] sm:$0xff] 0.0
          %325 = vst [vmem:[#allocation2 + $0x138] sm:$0xff] 0.0
          %326 = vst [vmem:[#allocation2 + $0x140] sm:$0xff] 0.0
          %327 = vst [vmem:[#allocation2 + $0x148] sm:$0xff] 0.0
          %328 = vst [vmem:[#allocation2 + $0x150] sm:$0xff] 0.0
          %329 = vst [vmem:[#allocation2 + $0x158] sm:$0xff] 0.0
          %330 = vst [vmem:[#allocation2 + $0x160] sm:$0xff] 0.0
          %331 = vst [vmem:[#allocation2 + $0x168] sm:$0xff] 0.0
          %332 = vst [vmem:[#allocation2 + $0x170] sm:$0xff] 0.0
          %333 = vst [vmem:[#allocation2 + $0x178] sm:$0xff] 0.0
          %334 = vst [vmem:[#allocation2 + $0x180] sm:$0xff] 0.0
          %335 = vst [vmem:[#allocation2 + $0x188] sm:$0xff] 0.0
          %336 = vst [vmem:[#allocation2 + $0x190] sm:$0xff] 0.0
          %337 = vst [vmem:[#allocation2 + $0x198] sm:$0xff] 0.0
          %338 = vst [vmem:[#allocation2 + $0x1a0] sm:$0xff] 0.0
          %339 = vst [vmem:[#allocation2 + $0x1a8] sm:$0xff] 0.0
          %340 = vst [vmem:[#allocation2 + $0x1b0] sm:$0xff] 0.0
          %341 = vst [vmem:[#allocation2 + $0x1b8] sm:$0xff] 0.0
          %342 = vst [vmem:[#allocation2 + $0x1c0] sm:$0xff] 0.0
          %343 = vst [vmem:[#allocation2 + $0x1c8] sm:$0xff] 0.0
          %344 = vst [vmem:[#allocation2 + $0x1d0] sm:$0xff] 0.0
          %345 = vst [vmem:[#allocation2 + $0x1d8] sm:$0xff] 0.0
          %346 = vst [vmem:[#allocation2 + $0x1e0] sm:$0xff] 0.0
          %347 = vst [vmem:[#allocation2 + $0x1e8] sm:$0xff] 0.0
          %348 = vst [vmem:[#allocation2 + $0x1f0] sm:$0xff] 0.0
          %349 = vst [vmem:[#allocation2 + $0x1f8] sm:$0xff] 0.0
        $region52: #{_gcn_forward_padded.4} parent=35 // pred_fallthru
          _
        %s350 = sld [smem:[#allocation5 + %s31]]
        %p351 = scmp.lt.s32.totalorder %s32, %s350
        // Predicated region
        $region53: #{_gcn_forward_padded.4} parent=35 // pred_check
          %p352 = pneg %p351
        $region54: #{_gcn_forward_padded.4} parent=35 // pred_check_branch
          %354 = sbr.rel (%p352) target = $region56
        $region55: #{_gcn_forward_padded.4} parent=35 // pred_region
          %s355 = sadd.s32 %s31, %s32
          %s356 = sld [smem:[#allocation4 + %s355]]
          %s357 = smul.u32 %s356, 512
          %s358 = sshra.s32 %s357, 3
          %s359 = sand.u32 %s357, 7
          %s360 = smul.addr %s358, 4
          %s361 = scalar_lea.vmem %s3, %s360
          %v362 = vld [vmem:[%s361] sm:$0xf]
          %v363 = vld [vmem:[%s361 + $0x4] sm:$0xf]
          %v364 = vld [vmem:[%s361 + $0x8] sm:$0xf]
          %v365 = vld [vmem:[%s361 + $0xc] sm:$0xf]
          %v366 = vld [vmem:[%s361 + $0x10] sm:$0xf]
          %v367 = vld [vmem:[%s361 + $0x14] sm:$0xf]
          %v368 = vld [vmem:[%s361 + $0x18] sm:$0xf]
          %v369 = vld [vmem:[%s361 + $0x1c] sm:$0xf]
          %v370 = vld [vmem:[%s361 + $0x20] sm:$0xf]
          %v371 = vld [vmem:[%s361 + $0x24] sm:$0xf]
          %v372 = vld [vmem:[%s361 + $0x28] sm:$0xf]
          %v373 = vld [vmem:[%s361 + $0x2c] sm:$0xf]
          %v374 = vld [vmem:[%s361 + $0x30] sm:$0xf]
          %v375 = vld [vmem:[%s361 + $0x34] sm:$0xf]
          %v376 = vld [vmem:[%s361 + $0x38] sm:$0xf]
          %v377 = vld [vmem:[%s361 + $0x3c] sm:$0xf]
          %v378 = vld [vmem:[%s361 + $0x40] sm:$0xf]
          %v379 = vld [vmem:[%s361 + $0x44] sm:$0xf]
          %v380 = vld [vmem:[%s361 + $0x48] sm:$0xf]
          %v381 = vld [vmem:[%s361 + $0x4c] sm:$0xf]
          %v382 = vld [vmem:[%s361 + $0x50] sm:$0xf]
          %v383 = vld [vmem:[%s361 + $0x54] sm:$0xf]
          %v384 = vld [vmem:[%s361 + $0x58] sm:$0xf]
          %v385 = vld [vmem:[%s361 + $0x5c] sm:$0xf]
          %v386 = vld [vmem:[%s361 + $0x60] sm:$0xf]
          %v387 = vld [vmem:[%s361 + $0x64] sm:$0xf]
          %v388 = vld [vmem:[%s361 + $0x68] sm:$0xf]
          %v389 = vld [vmem:[%s361 + $0x6c] sm:$0xf]
          %v390 = vld [vmem:[%s361 + $0x70] sm:$0xf]
          %v391 = vld [vmem:[%s361 + $0x74] sm:$0xf]
          %v392 = vld [vmem:[%s361 + $0x78] sm:$0xf]
          %v393 = vld [vmem:[%s361 + $0x7c] sm:$0xf]
          %v394 = vld [vmem:[%s361 + $0x80] sm:$0xf]
          %v395 = vld [vmem:[%s361 + $0x84] sm:$0xf]
          %v396 = vld [vmem:[%s361 + $0x88] sm:$0xf]
          %v397 = vld [vmem:[%s361 + $0x8c] sm:$0xf]
          %v398 = vld [vmem:[%s361 + $0x90] sm:$0xf]
          %v399 = vld [vmem:[%s361 + $0x94] sm:$0xf]
          %v400 = vld [vmem:[%s361 + $0x98] sm:$0xf]
          %v401 = vld [vmem:[%s361 + $0x9c] sm:$0xf]
          %v402 = vld [vmem:[%s361 + $0xa0] sm:$0xf]
          %v403 = vld [vmem:[%s361 + $0xa4] sm:$0xf]
          %v404 = vld [vmem:[%s361 + $0xa8] sm:$0xf]
          %v405 = vld [vmem:[%s361 + $0xac] sm:$0xf]
          %v406 = vld [vmem:[%s361 + $0xb0] sm:$0xf]
          %v407 = vld [vmem:[%s361 + $0xb4] sm:$0xf]
          %v408 = vld [vmem:[%s361 + $0xb8] sm:$0xf]
          %v409 = vld [vmem:[%s361 + $0xbc] sm:$0xf]
          %v410 = vld [vmem:[%s361 + $0xc0] sm:$0xf]
          %v411 = vld [vmem:[%s361 + $0xc4] sm:$0xf]
          %v412 = vld [vmem:[%s361 + $0xc8] sm:$0xf]
          %v413 = vld [vmem:[%s361 + $0xcc] sm:$0xf]
          %v414 = vld [vmem:[%s361 + $0xd0] sm:$0xf]
          %v415 = vld [vmem:[%s361 + $0xd4] sm:$0xf]
          %v416 = vld [vmem:[%s361 + $0xd8] sm:$0xf]
          %v417 = vld [vmem:[%s361 + $0xdc] sm:$0xf]
          %v418 = vld [vmem:[%s361 + $0xe0] sm:$0xf]
          %v419 = vld [vmem:[%s361 + $0xe4] sm:$0xf]
          %v420 = vld [vmem:[%s361 + $0xe8] sm:$0xf]
          %v421 = vld [vmem:[%s361 + $0xec] sm:$0xf]
          %v422 = vld [vmem:[%s361 + $0xf0] sm:$0xf]
          %v423 = vld [vmem:[%s361 + $0xf4] sm:$0xf]
          %v424 = vld [vmem:[%s361 + $0xf8] sm:$0xf]
          %v425 = vld [vmem:[%s361 + $0xfc] sm:$0xf]
          %v426 = vld [vmem:[#allocation2] sm:$0xff]
          %v427 = vld [vmem:[#allocation2 + $0x8] sm:$0xff]
          %v428 = vld [vmem:[#allocation2 + $0x10] sm:$0xff]
          %v429 = vld [vmem:[#allocation2 + $0x18] sm:$0xff]
          %v430 = vld [vmem:[#allocation2 + $0x20] sm:$0xff]
          %v431 = vld [vmem:[#allocation2 + $0x28] sm:$0xff]
          %v432 = vld [vmem:[#allocation2 + $0x30] sm:$0xff]
          %v433 = vld [vmem:[#allocation2 + $0x38] sm:$0xff]
          %v434 = vld [vmem:[#allocation2 + $0x40] sm:$0xff]
          %v435 = vld [vmem:[#allocation2 + $0x48] sm:$0xff]
          %v436 = vld [vmem:[#allocation2 + $0x50] sm:$0xff]
          %v437 = vld [vmem:[#allocation2 + $0x58] sm:$0xff]
          %v438 = vld [vmem:[#allocation2 + $0x60] sm:$0xff]
          %v439 = vld [vmem:[#allocation2 + $0x68] sm:$0xff]
          %v440 = vld [vmem:[#allocation2 + $0x70] sm:$0xff]
          %v441 = vld [vmem:[#allocation2 + $0x78] sm:$0xff]
          %v442 = vld [vmem:[#allocation2 + $0x80] sm:$0xff]
          %v443 = vld [vmem:[#allocation2 + $0x88] sm:$0xff]
          %v444 = vld [vmem:[#allocation2 + $0x90] sm:$0xff]
          %v445 = vld [vmem:[#allocation2 + $0x98] sm:$0xff]
          %v446 = vld [vmem:[#allocation2 + $0xa0] sm:$0xff]
          %v447 = vld [vmem:[#allocation2 + $0xa8] sm:$0xff]
          %v448 = vld [vmem:[#allocation2 + $0xb0] sm:$0xff]
          %v449 = vld [vmem:[#allocation2 + $0xb8] sm:$0xff]
          %v450 = vld [vmem:[#allocation2 + $0xc0] sm:$0xff]
          %v451 = vld [vmem:[#allocation2 + $0xc8] sm:$0xff]
          %v452 = vld [vmem:[#allocation2 + $0xd0] sm:$0xff]
          %v453 = vld [vmem:[#allocation2 + $0xd8] sm:$0xff]
          %v454 = vld [vmem:[#allocation2 + $0xe0] sm:$0xff]
          %v455 = vld [vmem:[#allocation2 + $0xe8] sm:$0xff]
          %v456 = vld [vmem:[#allocation2 + $0xf0] sm:$0xff]
          %v457 = vld [vmem:[#allocation2 + $0xf8] sm:$0xff]
          %v458 = vld [vmem:[#allocation2 + $0x100] sm:$0xff]
          %v459 = vld [vmem:[#allocation2 + $0x108] sm:$0xff]
          %v460 = vld [vmem:[#allocation2 + $0x110] sm:$0xff]
          %v461 = vld [vmem:[#allocation2 + $0x118] sm:$0xff]
          %v462 = vld [vmem:[#allocation2 + $0x120] sm:$0xff]
          %v463 = vld [vmem:[#allocation2 + $0x128] sm:$0xff]
          %v464 = vld [vmem:[#allocation2 + $0x130] sm:$0xff]
          %v465 = vld [vmem:[#allocation2 + $0x138] sm:$0xff]
          %v466 = vld [vmem:[#allocation2 + $0x140] sm:$0xff]
          %v467 = vld [vmem:[#allocation2 + $0x148] sm:$0xff]
          %v468 = vld [vmem:[#allocation2 + $0x150] sm:$0xff]
          %v469 = vld [vmem:[#allocation2 + $0x158] sm:$0xff]
          %v470 = vld [vmem:[#allocation2 + $0x160] sm:$0xff]
          %v471 = vld [vmem:[#allocation2 + $0x168] sm:$0xff]
          %v472 = vld [vmem:[#allocation2 + $0x170] sm:$0xff]
          %v473 = vld [vmem:[#allocation2 + $0x178] sm:$0xff]
          %v474 = vld [vmem:[#allocation2 + $0x180] sm:$0xff]
          %v475 = vld [vmem:[#allocation2 + $0x188] sm:$0xff]
          %v476 = vld [vmem:[#allocation2 + $0x190] sm:$0xff]
          %v477 = vld [vmem:[#allocation2 + $0x198] sm:$0xff]
          %v478 = vld [vmem:[#allocation2 + $0x1a0] sm:$0xff]
          %v479 = vld [vmem:[#allocation2 + $0x1a8] sm:$0xff]
          %v480 = vld [vmem:[#allocation2 + $0x1b0] sm:$0xff]
          %v481 = vld [vmem:[#allocation2 + $0x1b8] sm:$0xff]
          %v482 = vld [vmem:[#allocation2 + $0x1c0] sm:$0xff]
          %v483 = vld [vmem:[#allocation2 + $0x1c8] sm:$0xff]
          %v484 = vld [vmem:[#allocation2 + $0x1d0] sm:$0xff]
          %v485 = vld [vmem:[#allocation2 + $0x1d8] sm:$0xff]
          %v486 = vld [vmem:[#allocation2 + $0x1e0] sm:$0xff]
          %v487 = vld [vmem:[#allocation2 + $0x1e8] sm:$0xff]
          %v488 = vld [vmem:[#allocation2 + $0x1f0] sm:$0xff]
          %v489 = vld [vmem:[#allocation2 + $0x1f8] sm:$0xff]
          %v490 = vld [vmem:[%s238] sm:$0xff]
          %v491 = vld [vmem:[%s238 + $0x8] sm:$0xff]
          %v492 = vld [vmem:[%s238 + $0x10] sm:$0xff]
          %v493 = vld [vmem:[%s238 + $0x18] sm:$0xff]
          %v494 = vld [vmem:[%s238 + $0x20] sm:$0xff]
          %v495 = vld [vmem:[%s238 + $0x28] sm:$0xff]
          %v496 = vld [vmem:[%s238 + $0x30] sm:$0xff]
          %v497 = vld [vmem:[%s238 + $0x38] sm:$0xff]
          %v498 = vld [vmem:[%s238 + $0x40] sm:$0xff]
          %v499 = vld [vmem:[%s238 + $0x48] sm:$0xff]
          %v500 = vld [vmem:[%s238 + $0x50] sm:$0xff]
          %v501 = vld [vmem:[%s238 + $0x58] sm:$0xff]
          %v502 = vld [vmem:[%s238 + $0x60] sm:$0xff]
          %v503 = vld [vmem:[%s238 + $0x68] sm:$0xff]
          %v504 = vld [vmem:[%s238 + $0x70] sm:$0xff]
          %v505 = vld [vmem:[%s238 + $0x78] sm:$0xff]
          %v506 = vld [vmem:[%s238 + $0x80] sm:$0xff]
          %v507 = vld [vmem:[%s238 + $0x88] sm:$0xff]
          %v508 = vld [vmem:[%s238 + $0x90] sm:$0xff]
          %v509 = vld [vmem:[%s238 + $0x98] sm:$0xff]
          %v510 = vld [vmem:[%s238 + $0xa0] sm:$0xff]
          %v511 = vld [vmem:[%s238 + $0xa8] sm:$0xff]
          %v512 = vld [vmem:[%s238 + $0xb0] sm:$0xff]
          %v513 = vld [vmem:[%s238 + $0xb8] sm:$0xff]
          %v514 = vld [vmem:[%s238 + $0xc0] sm:$0xff]
          %v515 = vld [vmem:[%s238 + $0xc8] sm:$0xff]
          %v516 = vld [vmem:[%s238 + $0xd0] sm:$0xff]
          %v517 = vld [vmem:[%s238 + $0xd8] sm:$0xff]
          %v518 = vld [vmem:[%s238 + $0xe0] sm:$0xff]
          %v519 = vld [vmem:[%s238 + $0xe8] sm:$0xff]
          %v520 = vld [vmem:[%s238 + $0xf0] sm:$0xff]
          %v521 = vld [vmem:[%s238 + $0xf8] sm:$0xff]
          %v522 = vld [vmem:[%s238 + $0x100] sm:$0xff]
          %v523 = vld [vmem:[%s238 + $0x108] sm:$0xff]
          %v524 = vld [vmem:[%s238 + $0x110] sm:$0xff]
          %v525 = vld [vmem:[%s238 + $0x118] sm:$0xff]
          %v526 = vld [vmem:[%s238 + $0x120] sm:$0xff]
          %v527 = vld [vmem:[%s238 + $0x128] sm:$0xff]
          %v528 = vld [vmem:[%s238 + $0x130] sm:$0xff]
          %v529 = vld [vmem:[%s238 + $0x138] sm:$0xff]
          %v530 = vld [vmem:[%s238 + $0x140] sm:$0xff]
          %v531 = vld [vmem:[%s238 + $0x148] sm:$0xff]
          %v532 = vld [vmem:[%s238 + $0x150] sm:$0xff]
          %v533 = vld [vmem:[%s238 + $0x158] sm:$0xff]
          %v534 = vld [vmem:[%s238 + $0x160] sm:$0xff]
          %v535 = vld [vmem:[%s238 + $0x168] sm:$0xff]
          %v536 = vld [vmem:[%s238 + $0x170] sm:$0xff]
          %v537 = vld [vmem:[%s238 + $0x178] sm:$0xff]
          %v538 = vld [vmem:[%s238 + $0x180] sm:$0xff]
          %v539 = vld [vmem:[%s238 + $0x188] sm:$0xff]
          %v540 = vld [vmem:[%s238 + $0x190] sm:$0xff]
          %v541 = vld [vmem:[%s238 + $0x198] sm:$0xff]
          %v542 = vld [vmem:[%s238 + $0x1a0] sm:$0xff]
          %v543 = vld [vmem:[%s238 + $0x1a8] sm:$0xff]
          %v544 = vld [vmem:[%s238 + $0x1b0] sm:$0xff]
          %v545 = vld [vmem:[%s238 + $0x1b8] sm:$0xff]
          %v546 = vld [vmem:[%s238 + $0x1c0] sm:$0xff]
          %v547 = vld [vmem:[%s238 + $0x1c8] sm:$0xff]
          %v548 = vld [vmem:[%s238 + $0x1d0] sm:$0xff]
          %v549 = vld [vmem:[%s238 + $0x1d8] sm:$0xff]
          %v550 = vld [vmem:[%s238 + $0x1e0] sm:$0xff]
          %v551 = vld [vmem:[%s238 + $0x1e8] sm:$0xff]
          %v552 = vld [vmem:[%s238 + $0x1f0] sm:$0xff]
          %v553 = vld [vmem:[%s238 + $0x1f8] sm:$0xff]
          %v554 = vld [vmem:[%s238 + $0x200] sm:$0xff]
          %v555 = vld [vmem:[%s238 + $0x208] sm:$0xff]
          %v556 = vld [vmem:[%s238 + $0x210] sm:$0xff]
          %v557 = vld [vmem:[%s238 + $0x218] sm:$0xff]
          %v558 = vld [vmem:[%s238 + $0x220] sm:$0xff]
          %v559 = vld [vmem:[%s238 + $0x228] sm:$0xff]
          %v560 = vld [vmem:[%s238 + $0x230] sm:$0xff]
          %v561 = vld [vmem:[%s238 + $0x238] sm:$0xff]
          %v562 = vld [vmem:[%s238 + $0x240] sm:$0xff]
          %v563 = vld [vmem:[%s238 + $0x248] sm:$0xff]
          %v564 = vld [vmem:[%s238 + $0x250] sm:$0xff]
          %v565 = vld [vmem:[%s238 + $0x258] sm:$0xff]
          %v566 = vld [vmem:[%s238 + $0x260] sm:$0xff]
          %v567 = vld [vmem:[%s238 + $0x268] sm:$0xff]
          %v568 = vld [vmem:[%s238 + $0x270] sm:$0xff]
          %v569 = vld [vmem:[%s238 + $0x278] sm:$0xff]
          %v570 = vld [vmem:[%s238 + $0x280] sm:$0xff]
          %v571 = vld [vmem:[%s238 + $0x288] sm:$0xff]
          %v572 = vld [vmem:[%s238 + $0x290] sm:$0xff]
          %v573 = vld [vmem:[%s238 + $0x298] sm:$0xff]
          %v574 = vld [vmem:[%s238 + $0x2a0] sm:$0xff]
          %v575 = vld [vmem:[%s238 + $0x2a8] sm:$0xff]
          %v576 = vld [vmem:[%s238 + $0x2b0] sm:$0xff]
          %v577 = vld [vmem:[%s238 + $0x2b8] sm:$0xff]
          %v578 = vld [vmem:[%s238 + $0x2c0] sm:$0xff]
          %v579 = vld [vmem:[%s238 + $0x2c8] sm:$0xff]
          %v580 = vld [vmem:[%s238 + $0x2d0] sm:$0xff]
          %v581 = vld [vmem:[%s238 + $0x2d8] sm:$0xff]
          %v582 = vld [vmem:[%s238 + $0x2e0] sm:$0xff]
          %v583 = vld [vmem:[%s238 + $0x2e8] sm:$0xff]
          %v584 = vld [vmem:[%s238 + $0x2f0] sm:$0xff]
          %v585 = vld [vmem:[%s238 + $0x2f8] sm:$0xff]
          %v586 = vld [vmem:[%s238 + $0x300] sm:$0xff]
          %v587 = vld [vmem:[%s238 + $0x308] sm:$0xff]
          %v588 = vld [vmem:[%s238 + $0x310] sm:$0xff]
          %v589 = vld [vmem:[%s238 + $0x318] sm:$0xff]
          %v590 = vld [vmem:[%s238 + $0x320] sm:$0xff]
          %v591 = vld [vmem:[%s238 + $0x328] sm:$0xff]
          %v592 = vld [vmem:[%s238 + $0x330] sm:$0xff]
          %v593 = vld [vmem:[%s238 + $0x338] sm:$0xff]
          %v594 = vld [vmem:[%s238 + $0x340] sm:$0xff]
          %v595 = vld [vmem:[%s238 + $0x348] sm:$0xff]
          %v596 = vld [vmem:[%s238 + $0x350] sm:$0xff]
          %v597 = vld [vmem:[%s238 + $0x358] sm:$0xff]
          %v598 = vld [vmem:[%s238 + $0x360] sm:$0xff]
          %v599 = vld [vmem:[%s238 + $0x368] sm:$0xff]
          %v600 = vld [vmem:[%s238 + $0x370] sm:$0xff]
          %v601 = vld [vmem:[%s238 + $0x378] sm:$0xff]
          %v602 = vld [vmem:[%s238 + $0x380] sm:$0xff]
          %v603 = vld [vmem:[%s238 + $0x388] sm:$0xff]
          %v604 = vld [vmem:[%s238 + $0x390] sm:$0xff]
          %v605 = vld [vmem:[%s238 + $0x398] sm:$0xff]
          %v606 = vld [vmem:[%s238 + $0x3a0] sm:$0xff]
          %v607 = vld [vmem:[%s238 + $0x3a8] sm:$0xff]
          %v608 = vld [vmem:[%s238 + $0x3b0] sm:$0xff]
          %v609 = vld [vmem:[%s238 + $0x3b8] sm:$0xff]
          %v610 = vld [vmem:[%s238 + $0x3c0] sm:$0xff]
          %v611 = vld [vmem:[%s238 + $0x3c8] sm:$0xff]
          %v612 = vld [vmem:[%s238 + $0x3d0] sm:$0xff]
          %v613 = vld [vmem:[%s238 + $0x3d8] sm:$0xff]
          %v614 = vld [vmem:[%s238 + $0x3e0] sm:$0xff]
          %v615 = vld [vmem:[%s238 + $0x3e8] sm:$0xff]
          %v616 = vld [vmem:[%s238 + $0x3f0] sm:$0xff]
          %v617 = vld [vmem:[%s238 + $0x3f8] sm:$0xff]
          %v746 = vunpack.c.l.b16 %v490
          %v747 = vunpack.c.h.b16 %v490
          %v748 = vunpack.c.l.b16 %v491
          %v749 = vunpack.c.h.b16 %v491
          %v750 = vunpack.c.l.b16 %v492
          %v751 = vunpack.c.h.b16 %v492
          %v752 = vunpack.c.l.b16 %v493
          %v753 = vunpack.c.h.b16 %v493
          %v754 = vunpack.c.l.b16 %v494
          %v755 = vunpack.c.h.b16 %v494
          %v756 = vunpack.c.l.b16 %v495
          %v757 = vunpack.c.h.b16 %v495
          %v758 = vunpack.c.l.b16 %v496
          %v759 = vunpack.c.h.b16 %v496
          %v760 = vunpack.c.l.b16 %v497
          %v761 = vunpack.c.h.b16 %v497
          %v762 = vunpack.c.l.b16 %v498
          %v763 = vunpack.c.h.b16 %v498
          %v764 = vunpack.c.l.b16 %v499
          %v765 = vunpack.c.h.b16 %v499
          %v766 = vunpack.c.l.b16 %v500
          %v767 = vunpack.c.h.b16 %v500
          %v768 = vunpack.c.l.b16 %v501
          %v769 = vunpack.c.h.b16 %v501
          %v770 = vunpack.c.l.b16 %v502
          %v771 = vunpack.c.h.b16 %v502
          %v772 = vunpack.c.l.b16 %v503
          %v773 = vunpack.c.h.b16 %v503
          %v774 = vunpack.c.l.b16 %v504
          %v775 = vunpack.c.h.b16 %v504
          %v776 = vunpack.c.l.b16 %v505
          %v777 = vunpack.c.h.b16 %v505
          %v778 = vunpack.c.l.b16 %v506
          %v779 = vunpack.c.h.b16 %v506
          %v780 = vunpack.c.l.b16 %v507
          %v781 = vunpack.c.h.b16 %v507
          %v782 = vunpack.c.l.b16 %v508
          %v783 = vunpack.c.h.b16 %v508
          %v784 = vunpack.c.l.b16 %v509
          %v785 = vunpack.c.h.b16 %v509
          %v786 = vunpack.c.l.b16 %v510
          %v787 = vunpack.c.h.b16 %v510
          %v788 = vunpack.c.l.b16 %v511
          %v789 = vunpack.c.h.b16 %v511
          %v790 = vunpack.c.l.b16 %v512
          %v791 = vunpack.c.h.b16 %v512
          %v792 = vunpack.c.l.b16 %v513
          %v793 = vunpack.c.h.b16 %v513
          %v794 = vunpack.c.l.b16 %v514
          %v795 = vunpack.c.h.b16 %v514
          %v796 = vunpack.c.l.b16 %v515
          %v797 = vunpack.c.h.b16 %v515
          %v798 = vunpack.c.l.b16 %v516
          %v799 = vunpack.c.h.b16 %v516
          %v800 = vunpack.c.l.b16 %v517
          %v801 = vunpack.c.h.b16 %v517
          %v802 = vunpack.c.l.b16 %v518
          %v803 = vunpack.c.h.b16 %v518
          %v804 = vunpack.c.l.b16 %v519
          %v805 = vunpack.c.h.b16 %v519
          %v806 = vunpack.c.l.b16 %v520
          %v807 = vunpack.c.h.b16 %v520
          %v808 = vunpack.c.l.b16 %v521
          %v809 = vunpack.c.h.b16 %v521
          %v810 = vunpack.c.l.b16 %v522
          %v811 = vunpack.c.h.b16 %v522
          %v812 = vunpack.c.l.b16 %v523
          %v813 = vunpack.c.h.b16 %v523
          %v814 = vunpack.c.l.b16 %v524
          %v815 = vunpack.c.h.b16 %v524
          %v816 = vunpack.c.l.b16 %v525
          %v817 = vunpack.c.h.b16 %v525
          %v818 = vunpack.c.l.b16 %v526
          %v819 = vunpack.c.h.b16 %v526
          %v820 = vunpack.c.l.b16 %v527
          %v821 = vunpack.c.h.b16 %v527
          %v822 = vunpack.c.l.b16 %v528
          %v823 = vunpack.c.h.b16 %v528
          %v824 = vunpack.c.l.b16 %v529
          %v825 = vunpack.c.h.b16 %v529
          %v826 = vunpack.c.l.b16 %v530
          %v827 = vunpack.c.h.b16 %v530
          %v828 = vunpack.c.l.b16 %v531
          %v829 = vunpack.c.h.b16 %v531
          %v830 = vunpack.c.l.b16 %v532
          %v831 = vunpack.c.h.b16 %v532
          %v832 = vunpack.c.l.b16 %v533
          %v833 = vunpack.c.h.b16 %v533
          %v834 = vunpack.c.l.b16 %v534
          %v835 = vunpack.c.h.b16 %v534
          %v836 = vunpack.c.l.b16 %v535
          %v837 = vunpack.c.h.b16 %v535
          %v838 = vunpack.c.l.b16 %v536
          %v839 = vunpack.c.h.b16 %v536
          %v840 = vunpack.c.l.b16 %v537
          %v841 = vunpack.c.h.b16 %v537
          %v842 = vunpack.c.l.b16 %v538
          %v843 = vunpack.c.h.b16 %v538
          %v844 = vunpack.c.l.b16 %v539
          %v845 = vunpack.c.h.b16 %v539
          %v846 = vunpack.c.l.b16 %v540
          %v847 = vunpack.c.h.b16 %v540
          %v848 = vunpack.c.l.b16 %v541
          %v849 = vunpack.c.h.b16 %v541
          %v850 = vunpack.c.l.b16 %v542
          %v851 = vunpack.c.h.b16 %v542
          %v852 = vunpack.c.l.b16 %v543
          %v853 = vunpack.c.h.b16 %v543
          %v854 = vunpack.c.l.b16 %v544
          %v855 = vunpack.c.h.b16 %v544
          %v856 = vunpack.c.l.b16 %v545
          %v857 = vunpack.c.h.b16 %v545
          %v858 = vunpack.c.l.b16 %v546
          %v859 = vunpack.c.h.b16 %v546
          %v860 = vunpack.c.l.b16 %v547
          %v861 = vunpack.c.h.b16 %v547
          %v862 = vunpack.c.l.b16 %v548
          %v863 = vunpack.c.h.b16 %v548
          %v864 = vunpack.c.l.b16 %v549
          %v865 = vunpack.c.h.b16 %v549
          %v866 = vunpack.c.l.b16 %v550
          %v867 = vunpack.c.h.b16 %v550
          %v868 = vunpack.c.l.b16 %v551
          %v869 = vunpack.c.h.b16 %v551
          %v870 = vunpack.c.l.b16 %v552
          %v871 = vunpack.c.h.b16 %v552
          %v872 = vunpack.c.l.b16 %v553
          %v873 = vunpack.c.h.b16 %v553
          %v874 = vunpack.c.l.b16 %v554
          %v875 = vunpack.c.h.b16 %v554
          %v876 = vunpack.c.l.b16 %v555
          %v877 = vunpack.c.h.b16 %v555
          %v878 = vunpack.c.l.b16 %v556
          %v879 = vunpack.c.h.b16 %v556
          %v880 = vunpack.c.l.b16 %v557
          %v881 = vunpack.c.h.b16 %v557
          %v882 = vunpack.c.l.b16 %v558
          %v883 = vunpack.c.h.b16 %v558
          %v884 = vunpack.c.l.b16 %v559
          %v885 = vunpack.c.h.b16 %v559
          %v886 = vunpack.c.l.b16 %v560
          %v887 = vunpack.c.h.b16 %v560
          %v888 = vunpack.c.l.b16 %v561
          %v889 = vunpack.c.h.b16 %v561
          %v890 = vunpack.c.l.b16 %v562
          %v891 = vunpack.c.h.b16 %v562
          %v892 = vunpack.c.l.b16 %v563
          %v893 = vunpack.c.h.b16 %v563
          %v894 = vunpack.c.l.b16 %v564
          %v895 = vunpack.c.h.b16 %v564
          %v896 = vunpack.c.l.b16 %v565
          %v897 = vunpack.c.h.b16 %v565
          %v898 = vunpack.c.l.b16 %v566
          %v899 = vunpack.c.h.b16 %v566
          %v900 = vunpack.c.l.b16 %v567
          %v901 = vunpack.c.h.b16 %v567
          %v902 = vunpack.c.l.b16 %v568
          %v903 = vunpack.c.h.b16 %v568
          %v904 = vunpack.c.l.b16 %v569
          %v905 = vunpack.c.h.b16 %v569
          %v906 = vunpack.c.l.b16 %v570
          %v907 = vunpack.c.h.b16 %v570
          %v908 = vunpack.c.l.b16 %v571
          %v909 = vunpack.c.h.b16 %v571
          %v910 = vunpack.c.l.b16 %v572
          %v911 = vunpack.c.h.b16 %v572
          %v912 = vunpack.c.l.b16 %v573
          %v913 = vunpack.c.h.b16 %v573
          %v914 = vunpack.c.l.b16 %v574
          %v915 = vunpack.c.h.b16 %v574
          %v916 = vunpack.c.l.b16 %v575
          %v917 = vunpack.c.h.b16 %v575
          %v918 = vunpack.c.l.b16 %v576
          %v919 = vunpack.c.h.b16 %v576
          %v920 = vunpack.c.l.b16 %v577
          %v921 = vunpack.c.h.b16 %v577
          %v922 = vunpack.c.l.b16 %v578
          %v923 = vunpack.c.h.b16 %v578
          %v924 = vunpack.c.l.b16 %v579
          %v925 = vunpack.c.h.b16 %v579
          %v926 = vunpack.c.l.b16 %v580
          %v927 = vunpack.c.h.b16 %v580
          %v928 = vunpack.c.l.b16 %v581
          %v929 = vunpack.c.h.b16 %v581
          %v930 = vunpack.c.l.b16 %v582
          %v931 = vunpack.c.h.b16 %v582
          %v932 = vunpack.c.l.b16 %v583
          %v933 = vunpack.c.h.b16 %v583
          %v934 = vunpack.c.l.b16 %v584
          %v935 = vunpack.c.h.b16 %v584
          %v936 = vunpack.c.l.b16 %v585
          %v937 = vunpack.c.h.b16 %v585
          %v938 = vunpack.c.l.b16 %v586
          %v939 = vunpack.c.h.b16 %v586
          %v940 = vunpack.c.l.b16 %v587
          %v941 = vunpack.c.h.b16 %v587
          %v942 = vunpack.c.l.b16 %v588
          %v943 = vunpack.c.h.b16 %v588
          %v944 = vunpack.c.l.b16 %v589
          %v945 = vunpack.c.h.b16 %v589
          %v946 = vunpack.c.l.b16 %v590
          %v947 = vunpack.c.h.b16 %v590
          %v948 = vunpack.c.l.b16 %v591
          %v949 = vunpack.c.h.b16 %v591
          %v950 = vunpack.c.l.b16 %v592
          %v951 = vunpack.c.h.b16 %v592
          %v952 = vunpack.c.l.b16 %v593
          %v953 = vunpack.c.h.b16 %v593
          %v954 = vunpack.c.l.b16 %v594
          %v955 = vunpack.c.h.b16 %v594
          %v956 = vunpack.c.l.b16 %v595
          %v957 = vunpack.c.h.b16 %v595
          %v958 = vunpack.c.l.b16 %v596
          %v959 = vunpack.c.h.b16 %v596
          %v960 = vunpack.c.l.b16 %v597
          %v961 = vunpack.c.h.b16 %v597
          %v962 = vunpack.c.l.b16 %v598
          %v963 = vunpack.c.h.b16 %v598
          %v964 = vunpack.c.l.b16 %v599
          %v965 = vunpack.c.h.b16 %v599
          %v966 = vunpack.c.l.b16 %v600
          %v967 = vunpack.c.h.b16 %v600
          %v968 = vunpack.c.l.b16 %v601
          %v969 = vunpack.c.h.b16 %v601
          %v970 = vunpack.c.l.b16 %v602
          %v971 = vunpack.c.h.b16 %v602
          %v972 = vunpack.c.l.b16 %v603
          %v973 = vunpack.c.h.b16 %v603
          %v974 = vunpack.c.l.b16 %v604
          %v975 = vunpack.c.h.b16 %v604
          %v976 = vunpack.c.l.b16 %v605
          %v977 = vunpack.c.h.b16 %v605
          %v978 = vunpack.c.l.b16 %v606
          %v979 = vunpack.c.h.b16 %v606
          %v980 = vunpack.c.l.b16 %v607
          %v981 = vunpack.c.h.b16 %v607
          %v982 = vunpack.c.l.b16 %v608
          %v983 = vunpack.c.h.b16 %v608
          %v984 = vunpack.c.l.b16 %v609
          %v985 = vunpack.c.h.b16 %v609
          %v986 = vunpack.c.l.b16 %v610
          %v987 = vunpack.c.h.b16 %v610
          %v988 = vunpack.c.l.b16 %v611
          %v989 = vunpack.c.h.b16 %v611
          %v990 = vunpack.c.l.b16 %v612
          %v991 = vunpack.c.h.b16 %v612
          %v992 = vunpack.c.l.b16 %v613
          %v993 = vunpack.c.h.b16 %v613
          %v994 = vunpack.c.l.b16 %v614
          %v995 = vunpack.c.h.b16 %v614
          %v996 = vunpack.c.l.b16 %v615
          %v997 = vunpack.c.h.b16 %v615
          %v998 = vunpack.c.l.b16 %v616
          %v999 = vunpack.c.h.b16 %v616
          %v1000 = vunpack.c.l.b16 %v617
          %v1001 = vunpack.c.h.b16 %v617
          %v1002 = vpack.c.b16 %v750, %v746
          %v1003 = vpack.c.b16 %v751, %v747
          %v1004 = vpack.c.b16 %v752, %v748
          %v1005 = vpack.c.b16 %v753, %v749
          %v1006 = vpack.c.b16 %v758, %v754
          %v1007 = vpack.c.b16 %v759, %v755
          %v1008 = vpack.c.b16 %v760, %v756
          %v1009 = vpack.c.b16 %v761, %v757
          %v1010 = vpack.c.b16 %v766, %v762
          %v1011 = vpack.c.b16 %v767, %v763
          %v1012 = vpack.c.b16 %v768, %v764
          %v1013 = vpack.c.b16 %v769, %v765
          %v1014 = vpack.c.b16 %v774, %v770
          %v1015 = vpack.c.b16 %v775, %v771
          %v1016 = vpack.c.b16 %v776, %v772
          %v1017 = vpack.c.b16 %v777, %v773
          %v1018 = vpack.c.b16 %v782, %v778
          %v1019 = vpack.c.b16 %v783, %v779
          %v1020 = vpack.c.b16 %v784, %v780
          %v1021 = vpack.c.b16 %v785, %v781
          %v1022 = vpack.c.b16 %v790, %v786
          %v1023 = vpack.c.b16 %v791, %v787
          %v1024 = vpack.c.b16 %v792, %v788
          %v1025 = vpack.c.b16 %v793, %v789
          %v1026 = vpack.c.b16 %v798, %v794
          %v1027 = vpack.c.b16 %v799, %v795
          %v1028 = vpack.c.b16 %v800, %v796
          %v1029 = vpack.c.b16 %v801, %v797
          %v1030 = vpack.c.b16 %v806, %v802
          %v1031 = vpack.c.b16 %v807, %v803
          %v1032 = vpack.c.b16 %v808, %v804
          %v1033 = vpack.c.b16 %v809, %v805
          %v1034 = vpack.c.b16 %v814, %v810
          %v1035 = vpack.c.b16 %v815, %v811
          %v1036 = vpack.c.b16 %v816, %v812
          %v1037 = vpack.c.b16 %v817, %v813
          %v1038 = vpack.c.b16 %v822, %v818
          %v1039 = vpack.c.b16 %v823, %v819
          %v1040 = vpack.c.b16 %v824, %v820
          %v1041 = vpack.c.b16 %v825, %v821
          %v1042 = vpack.c.b16 %v830, %v826
          %v1043 = vpack.c.b16 %v831, %v827
          %v1044 = vpack.c.b16 %v832, %v828
          %v1045 = vpack.c.b16 %v833, %v829
          %v1046 = vpack.c.b16 %v838, %v834
          %v1047 = vpack.c.b16 %v839, %v835
          %v1048 = vpack.c.b16 %v840, %v836
          %v1049 = vpack.c.b16 %v841, %v837
          %v1050 = vpack.c.b16 %v846, %v842
          %v1051 = vpack.c.b16 %v847, %v843
          %v1052 = vpack.c.b16 %v848, %v844
          %v1053 = vpack.c.b16 %v849, %v845
          %v1054 = vpack.c.b16 %v854, %v850
          %v1055 = vpack.c.b16 %v855, %v851
          %v1056 = vpack.c.b16 %v856, %v852
          %v1057 = vpack.c.b16 %v857, %v853
          %v1058 = vpack.c.b16 %v862, %v858
          %v1059 = vpack.c.b16 %v863, %v859
          %v1060 = vpack.c.b16 %v864, %v860
          %v1061 = vpack.c.b16 %v865, %v861
          %v1062 = vpack.c.b16 %v870, %v866
          %v1063 = vpack.c.b16 %v871, %v867
          %v1064 = vpack.c.b16 %v872, %v868
          %v1065 = vpack.c.b16 %v873, %v869
          %v1066 = vpack.c.b16 %v878, %v874
          %v1067 = vpack.c.b16 %v879, %v875
          %v1068 = vpack.c.b16 %v880, %v876
          %v1069 = vpack.c.b16 %v881, %v877
          %v1070 = vpack.c.b16 %v886, %v882
          %v1071 = vpack.c.b16 %v887, %v883
          %v1072 = vpack.c.b16 %v888, %v884
          %v1073 = vpack.c.b16 %v889, %v885
          %v1074 = vpack.c.b16 %v894, %v890
          %v1075 = vpack.c.b16 %v895, %v891
          %v1076 = vpack.c.b16 %v896, %v892
          %v1077 = vpack.c.b16 %v897, %v893
          %v1078 = vpack.c.b16 %v902, %v898
          %v1079 = vpack.c.b16 %v903, %v899
          %v1080 = vpack.c.b16 %v904, %v900
          %v1081 = vpack.c.b16 %v905, %v901
          %v1082 = vpack.c.b16 %v910, %v906
          %v1083 = vpack.c.b16 %v911, %v907
          %v1084 = vpack.c.b16 %v912, %v908
          %v1085 = vpack.c.b16 %v913, %v909
          %v1086 = vpack.c.b16 %v918, %v914
          %v1087 = vpack.c.b16 %v919, %v915
          %v1088 = vpack.c.b16 %v920, %v916
          %v1089 = vpack.c.b16 %v921, %v917
          %v1090 = vpack.c.b16 %v926, %v922
          %v1091 = vpack.c.b16 %v927, %v923
          %v1092 = vpack.c.b16 %v928, %v924
          %v1093 = vpack.c.b16 %v929, %v925
          %v1094 = vpack.c.b16 %v934, %v930
          %v1095 = vpack.c.b16 %v935, %v931
          %v1096 = vpack.c.b16 %v936, %v932
          %v1097 = vpack.c.b16 %v937, %v933
          %v1098 = vpack.c.b16 %v942, %v938
          %v1099 = vpack.c.b16 %v943, %v939
          %v1100 = vpack.c.b16 %v944, %v940
          %v1101 = vpack.c.b16 %v945, %v941
          %v1102 = vpack.c.b16 %v950, %v946
          %v1103 = vpack.c.b16 %v951, %v947
          %v1104 = vpack.c.b16 %v952, %v948
          %v1105 = vpack.c.b16 %v953, %v949
          %v1106 = vpack.c.b16 %v958, %v954
          %v1107 = vpack.c.b16 %v959, %v955
          %v1108 = vpack.c.b16 %v960, %v956
          %v1109 = vpack.c.b16 %v961, %v957
          %v1110 = vpack.c.b16 %v966, %v962
          %v1111 = vpack.c.b16 %v967, %v963
          %v1112 = vpack.c.b16 %v968, %v964
          %v1113 = vpack.c.b16 %v969, %v965
          %v1114 = vpack.c.b16 %v974, %v970
          %v1115 = vpack.c.b16 %v975, %v971
          %v1116 = vpack.c.b16 %v976, %v972
          %v1117 = vpack.c.b16 %v977, %v973
          %v1118 = vpack.c.b16 %v982, %v978
          %v1119 = vpack.c.b16 %v983, %v979
          %v1120 = vpack.c.b16 %v984, %v980
          %v1121 = vpack.c.b16 %v985, %v981
          %v1122 = vpack.c.b16 %v990, %v986
          %v1123 = vpack.c.b16 %v991, %v987
          %v1124 = vpack.c.b16 %v992, %v988
          %v1125 = vpack.c.b16 %v993, %v989
          %v1126 = vpack.c.b16 %v998, %v994
          %v1127 = vpack.c.b16 %v999, %v995
          %v1128 = vpack.c.b16 %v1000, %v996
          %v1129 = vpack.c.b16 %v1001, %v997
          %v1322 = vunpack.c.l.b16 %v362
          %v1323 = vunpack.c.l.b16 %v363
          %v1324 = vunpack.c.l.b16 %v364
          %v1325 = vunpack.c.l.b16 %v365
          %v1326 = vunpack.c.l.b16 %v366
          %v1327 = vunpack.c.l.b16 %v367
          %v1328 = vunpack.c.l.b16 %v368
          %v1329 = vunpack.c.l.b16 %v369
          %v1330 = vunpack.c.l.b16 %v370
          %v1331 = vunpack.c.l.b16 %v371
          %v1332 = vunpack.c.l.b16 %v372
          %v1333 = vunpack.c.l.b16 %v373
          %v1334 = vunpack.c.l.b16 %v374
          %v1335 = vunpack.c.l.b16 %v375
          %v1336 = vunpack.c.l.b16 %v376
          %v1337 = vunpack.c.l.b16 %v377
          %v1338 = vunpack.c.l.b16 %v378
          %v1339 = vunpack.c.l.b16 %v379
          %v1340 = vunpack.c.l.b16 %v380
          %v1341 = vunpack.c.l.b16 %v381
          %v1342 = vunpack.c.l.b16 %v382
          %v1343 = vunpack.c.l.b16 %v383
          %v1344 = vunpack.c.l.b16 %v384
          %v1345 = vunpack.c.l.b16 %v385
          %v1346 = vunpack.c.l.b16 %v386
          %v1347 = vunpack.c.l.b16 %v387
          %v1348 = vunpack.c.l.b16 %v388
          %v1349 = vunpack.c.l.b16 %v389
          %v1350 = vunpack.c.l.b16 %v390
          %v1351 = vunpack.c.l.b16 %v391
          %v1352 = vunpack.c.l.b16 %v392
          %v1353 = vunpack.c.l.b16 %v393
          %v1354 = vunpack.c.l.b16 %v394
          %v1355 = vunpack.c.l.b16 %v395
          %v1356 = vunpack.c.l.b16 %v396
          %v1357 = vunpack.c.l.b16 %v397
          %v1358 = vunpack.c.l.b16 %v398
          %v1359 = vunpack.c.l.b16 %v399
          %v1360 = vunpack.c.l.b16 %v400
          %v1361 = vunpack.c.l.b16 %v401
          %v1362 = vunpack.c.l.b16 %v402
          %v1363 = vunpack.c.l.b16 %v403
          %v1364 = vunpack.c.l.b16 %v404
          %v1365 = vunpack.c.l.b16 %v405
          %v1366 = vunpack.c.l.b16 %v406
          %v1367 = vunpack.c.l.b16 %v407
          %v1368 = vunpack.c.l.b16 %v408
          %v1369 = vunpack.c.l.b16 %v409
          %v1370 = vunpack.c.l.b16 %v410
          %v1371 = vunpack.c.l.b16 %v411
          %v1372 = vunpack.c.l.b16 %v412
          %v1373 = vunpack.c.l.b16 %v413
          %v1374 = vunpack.c.l.b16 %v414
          %v1375 = vunpack.c.l.b16 %v415
          %v1376 = vunpack.c.l.b16 %v416
          %v1377 = vunpack.c.l.b16 %v417
          %v1378 = vunpack.c.l.b16 %v418
          %v1379 = vunpack.c.l.b16 %v419
          %v1380 = vunpack.c.l.b16 %v420
          %v1381 = vunpack.c.l.b16 %v421
          %v1382 = vunpack.c.l.b16 %v422
          %v1383 = vunpack.c.l.b16 %v423
          %v1384 = vunpack.c.l.b16 %v424
          %v1385 = vunpack.c.l.b16 %v425
          %v1386 = vpack.c.b16 %v1323, %v1322
          %v1387 = vpack.c.b16 %v1325, %v1324
          %v1388 = vpack.c.b16 %v1327, %v1326
          %v1389 = vpack.c.b16 %v1329, %v1328
          %v1390 = vpack.c.b16 %v1331, %v1330
          %v1391 = vpack.c.b16 %v1333, %v1332
          %v1392 = vpack.c.b16 %v1335, %v1334
          %v1393 = vpack.c.b16 %v1337, %v1336
          %v1394 = vpack.c.b16 %v1339, %v1338
          %v1395 = vpack.c.b16 %v1341, %v1340
          %v1396 = vpack.c.b16 %v1343, %v1342
          %v1397 = vpack.c.b16 %v1345, %v1344
          %v1398 = vpack.c.b16 %v1347, %v1346
          %v1399 = vpack.c.b16 %v1349, %v1348
          %v1400 = vpack.c.b16 %v1351, %v1350
          %v1401 = vpack.c.b16 %v1353, %v1352
          %v1402 = vpack.c.b16 %v1355, %v1354
          %v1403 = vpack.c.b16 %v1357, %v1356
          %v1404 = vpack.c.b16 %v1359, %v1358
          %v1405 = vpack.c.b16 %v1361, %v1360
          %v1406 = vpack.c.b16 %v1363, %v1362
          %v1407 = vpack.c.b16 %v1365, %v1364
          %v1408 = vpack.c.b16 %v1367, %v1366
          %v1409 = vpack.c.b16 %v1369, %v1368
          %v1410 = vpack.c.b16 %v1371, %v1370
          %v1411 = vpack.c.b16 %v1373, %v1372
          %v1412 = vpack.c.b16 %v1375, %v1374
          %v1413 = vpack.c.b16 %v1377, %v1376
          %v1414 = vpack.c.b16 %v1379, %v1378
          %v1415 = vpack.c.b16 %v1381, %v1380
          %v1416 = vpack.c.b16 %v1383, %v1382
          %v1417 = vpack.c.b16 %v1385, %v1384
          %1450 = vmatprep.subr.bf16.mxu0 0
          %1451 = vmatpush1.bf16.msra.mxu0 %v1386
          %1452 = vmatprep.subr.bf16.mxu0 0
          %1453 = vmatpush1.bf16.msra.mxu0 %v1387
          %1454 = vmatprep.subr.bf16.mxu0 0
          %1455 = vmatpush1.bf16.msra.mxu0 %v1388
          %1456 = vmatprep.subr.bf16.mxu0 0
          %1457 = vmatpush1.bf16.msra.mxu0 %v1389
          %1458 = vmatprep.subr.bf16.mxu0 0
          %1459 = vmatpush1.bf16.msra.mxu0 %v1390
          %1460 = vmatprep.subr.bf16.mxu0 0
          %1461 = vmatpush1.bf16.msra.mxu0 %v1391
          %1462 = vmatprep.subr.bf16.mxu0 0
          %1463 = vmatpush1.bf16.msra.mxu0 %v1392
          %1464 = vmatprep.subr.bf16.mxu0 0
          %1465 = vmatpush1.bf16.msra.mxu0 %v1393
          %1466 = vmatprep.subr.bf16.mxu0 0
          %1467 = vmatpush1.bf16.msra.mxu0 %v1394
          %1468 = vmatprep.subr.bf16.mxu0 0
          %1469 = vmatpush1.bf16.msra.mxu0 %v1395
          %1470 = vmatprep.subr.bf16.mxu0 0
          %1471 = vmatpush1.bf16.msra.mxu0 %v1396
          %1472 = vmatprep.subr.bf16.mxu0 0
          %1473 = vmatpush1.bf16.msra.mxu0 %v1397
          %1474 = vmatprep.subr.bf16.mxu0 0
          %1475 = vmatpush1.bf16.msra.mxu0 %v1398
          %1476 = vmatprep.subr.bf16.mxu0 0
          %1477 = vmatpush1.bf16.msra.mxu0 %v1399
          %1478 = vmatprep.subr.bf16.mxu0 0
          %1479 = vmatpush1.bf16.msra.mxu0 %v1400
          %1480 = vmatprep.subr.bf16.mxu0 0
          %1481 = vmatpush1.bf16.msra.mxu0 %v1401
          %1482 = vmatprep.mubr.bf16.mxu0 %v1003
          %1483 = vmatmul.mubr.bf16.gmra.mrb[0].mxu0 %v1002
          %v1484 = vpop.f32.mrb[0].mxu0
          %v1485 = vadd.f32 0.0, %v1484
          %v1486 = vpop.f32.mrb[0].mxu0
          %v1487 = vpop.f32.mrb[0].mxu0
          %v1488 = vadd.f32 0.0, %v1487
          %v1489 = vpop.f32.mrb[0].mxu0
          %1490 = vmatprep.mubr.bf16.mxu0 %v1007
          %1491 = vmatmul.mubr.bf16.gmra.mrb[0].mxu0 %v1006
          %v1492 = vpop.f32.mrb[0].mxu0
          %v1493 = vadd.f32 0.0, %v1492
          %v1494 = vpop.f32.mrb[0].mxu0
          %v1495 = vpop.f32.mrb[0].mxu0
          %v1496 = vadd.f32 0.0, %v1495
          %v1497 = vpop.f32.mrb[0].mxu0
          %1498 = vmatprep.mubr.bf16.mxu0 %v1011
          %1499 = vmatmul.mubr.bf16.gmra.mrb[0].mxu0 %v1010
          %v1500 = vpop.f32.mrb[0].mxu0
          %v1501 = vadd.f32 0.0, %v1500
          %v1502 = vpop.f32.mrb[0].mxu0
          %v1503 = vpop.f32.mrb[0].mxu0
          %v1504 = vadd.f32 0.0, %v1503
          %v1505 = vpop.f32.mrb[0].mxu0
          %1506 = vmatprep.mubr.bf16.mxu0 %v1015
          %1507 = vmatmul.mubr.bf16.gmra.mrb[0].mxu0 %v1014
          %v1508 = vpop.f32.mrb[0].mxu0
          %v1509 = vadd.f32 0.0, %v1508
          %v1510 = vpop.f32.mrb[0].mxu0
          %v1511 = vpop.f32.mrb[0].mxu0
          %v1512 = vadd.f32 0.0, %v1511
          %v1513 = vpop.f32.mrb[0].mxu0
          %1514 = vmatprep.mubr.bf16.mxu0 %v1019
          %1515 = vmatmul.mubr.bf16.gmra.mrb[0].mxu0 %v1018
          %v1516 = vpop.f32.mrb[0].mxu0
          %v1517 = vadd.f32 0.0, %v1516
          %v1518 = vpop.f32.mrb[0].mxu0
          %v1519 = vpop.f32.mrb[0].mxu0
          %v1520 = vadd.f32 0.0, %v1519
          %v1521 = vpop.f32.mrb[0].mxu0
          %1522 = vmatprep.mubr.bf16.mxu0 %v1023
          %1523 = vmatmul.mubr.bf16.gmra.mrb[0].mxu0 %v1022
          %v1524 = vpop.f32.mrb[0].mxu0
          %v1525 = vadd.f32 0.0, %v1524
          %v1526 = vpop.f32.mrb[0].mxu0
          %v1527 = vpop.f32.mrb[0].mxu0
          %v1528 = vadd.f32 0.0, %v1527
          %v1529 = vpop.f32.mrb[0].mxu0
          %1530 = vmatprep.mubr.bf16.mxu0 %v1027
          %1531 = vmatmul.mubr.bf16.gmra.mrb[0].mxu0 %v1026
          %v1532 = vpop.f32.mrb[0].mxu0
          %v1533 = vadd.f32 0.0, %v1532
          %v1534 = vpop.f32.mrb[0].mxu0
          %v1535 = vpop.f32.mrb[0].mxu0
          %v1536 = vadd.f32 0.0, %v1535
          %v1537 = vpop.f32.mrb[0].mxu0
          %1538 = vmatprep.mubr.bf16.mxu0 %v1031
          %1539 = vmatmul.mubr.bf16.gmra.mrb[0].mxu0 %v1030
          %v1540 = vpop.f32.mrb[0].mxu0
          %v1541 = vadd.f32 0.0, %v1540
          %v1542 = vpop.f32.mrb[0].mxu0
          %v1543 = vpop.f32.mrb[0].mxu0
          %v1544 = vadd.f32 0.0, %v1543
          %v1545 = vpop.f32.mrb[0].mxu0
          %1546 = vmatprep.mubr.bf16.mxu0 %v1035
          %1547 = vmatmul.mubr.bf16.gmra.mrb[0].mxu0 %v1034
          %v1548 = vpop.f32.mrb[0].mxu0
          %v1549 = vadd.f32 0.0, %v1548
          %v1550 = vpop.f32.mrb[0].mxu0
          %v1551 = vpop.f32.mrb[0].mxu0
          %v1552 = vadd.f32 0.0, %v1551
          %v1553 = vpop.f32.mrb[0].mxu0
          %1554 = vmatprep.mubr.bf16.mxu0 %v1039
          %1555 = vmatmul.mubr.bf16.gmra.mrb[0].mxu0 %v1038
          %v1556 = vpop.f32.mrb[0].mxu0
          %v1557 = vadd.f32 0.0, %v1556
          %v1558 = vpop.f32.mrb[0].mxu0
          %v1559 = vpop.f32.mrb[0].mxu0
          %v1560 = vadd.f32 0.0, %v1559
          %v1561 = vpop.f32.mrb[0].mxu0
          %1562 = vmatprep.mubr.bf16.mxu0 %v1043
          %1563 = vmatmul.mubr.bf16.gmra.mrb[0].mxu0 %v1042
          %v1564 = vpop.f32.mrb[0].mxu0
          %v1565 = vadd.f32 0.0, %v1564
          %v1566 = vpop.f32.mrb[0].mxu0
          %v1567 = vpop.f32.mrb[0].mxu0
          %v1568 = vadd.f32 0.0, %v1567
          %v1569 = vpop.f32.mrb[0].mxu0
          %1570 = vmatprep.mubr.bf16.mxu0 %v1047
          %1571 = vmatmul.mubr.bf16.gmra.mrb[0].mxu0 %v1046
          %v1572 = vpop.f32.mrb[0].mxu0
          %v1573 = vadd.f32 0.0, %v1572
          %v1574 = vpop.f32.mrb[0].mxu0
          %v1575 = vpop.f32.mrb[0].mxu0
          %v1576 = vadd.f32 0.0, %v1575
          %v1577 = vpop.f32.mrb[0].mxu0
          %1578 = vmatprep.mubr.bf16.mxu0 %v1051
          %1579 = vmatmul.mubr.bf16.gmra.mrb[0].mxu0 %v1050
          %v1580 = vpop.f32.mrb[0].mxu0
          %v1581 = vadd.f32 0.0, %v1580
          %v1582 = vpop.f32.mrb[0].mxu0
          %v1583 = vpop.f32.mrb[0].mxu0
          %v1584 = vadd.f32 0.0, %v1583
          %v1585 = vpop.f32.mrb[0].mxu0
          %1586 = vmatprep.mubr.bf16.mxu0 %v1055
          %1587 = vmatmul.mubr.bf16.gmra.mrb[0].mxu0 %v1054
          %v1588 = vpop.f32.mrb[0].mxu0
          %v1589 = vadd.f32 0.0, %v1588
          %v1590 = vpop.f32.mrb[0].mxu0
          %v1591 = vpop.f32.mrb[0].mxu0
          %v1592 = vadd.f32 0.0, %v1591
          %v1593 = vpop.f32.mrb[0].mxu0
          %1594 = vmatprep.mubr.bf16.mxu0 %v1059
          %1595 = vmatmul.mubr.bf16.gmra.mrb[0].mxu0 %v1058
          %v1596 = vpop.f32.mrb[0].mxu0
          %v1597 = vadd.f32 0.0, %v1596
          %v1598 = vpop.f32.mrb[0].mxu0
          %v1599 = vpop.f32.mrb[0].mxu0
          %v1600 = vadd.f32 0.0, %v1599
          %v1601 = vpop.f32.mrb[0].mxu0
          %1602 = vmatprep.mubr.bf16.mxu0 %v1063
          %1603 = vmatmul.mubr.bf16.gmra.mrb[0].mxu0 %v1062
          %v1604 = vpop.f32.mrb[0].mxu0
          %v1605 = vadd.f32 0.0, %v1604
          %v1606 = vpop.f32.mrb[0].mxu0
          %v1607 = vpop.f32.mrb[0].mxu0
          %v1608 = vadd.f32 0.0, %v1607
          %v1609 = vpop.f32.mrb[0].mxu0
          %1610 = vmatprep.mubr.bf16.mxu0 %v1067
          %1611 = vmatmul.mubr.bf16.gmra.mrb[0].mxu0 %v1066
          %v1612 = vpop.f32.mrb[0].mxu0
          %v1613 = vadd.f32 0.0, %v1612
          %v1614 = vpop.f32.mrb[0].mxu0
          %v1615 = vpop.f32.mrb[0].mxu0
          %v1616 = vadd.f32 0.0, %v1615
          %v1617 = vpop.f32.mrb[0].mxu0
          %1618 = vmatprep.mubr.bf16.mxu0 %v1071
          %1619 = vmatmul.mubr.bf16.gmra.mrb[0].mxu0 %v1070
          %v1620 = vpop.f32.mrb[0].mxu0
          %v1621 = vadd.f32 0.0, %v1620
          %v1622 = vpop.f32.mrb[0].mxu0
          %v1623 = vpop.f32.mrb[0].mxu0
          %v1624 = vadd.f32 0.0, %v1623
          %v1625 = vpop.f32.mrb[0].mxu0
          %1626 = vmatprep.mubr.bf16.mxu0 %v1075
          %1627 = vmatmul.mubr.bf16.gmra.mrb[0].mxu0 %v1074
          %v1628 = vpop.f32.mrb[0].mxu0
          %v1629 = vadd.f32 0.0, %v1628
          %v1630 = vpop.f32.mrb[0].mxu0
          %v1631 = vpop.f32.mrb[0].mxu0
          %v1632 = vadd.f32 0.0, %v1631
          %v1633 = vpop.f32.mrb[0].mxu0
          %1634 = vmatprep.mubr.bf16.mxu0 %v1079
          %1635 = vmatmul.mubr.bf16.gmra.mrb[0].mxu0 %v1078
          %v1636 = vpop.f32.mrb[0].mxu0
          %v1637 = vadd.f32 0.0, %v1636
          %v1638 = vpop.f32.mrb[0].mxu0
          %v1639 = vpop.f32.mrb[0].mxu0
          %v1640 = vadd.f32 0.0, %v1639
          %v1641 = vpop.f32.mrb[0].mxu0
          %1642 = vmatprep.mubr.bf16.mxu0 %v1083
          %1643 = vmatmul.mubr.bf16.gmra.mrb[0].mxu0 %v1082
          %v1644 = vpop.f32.mrb[0].mxu0
          %v1645 = vadd.f32 0.0, %v1644
          %v1646 = vpop.f32.mrb[0].mxu0
          %v1647 = vpop.f32.mrb[0].mxu0
          %v1648 = vadd.f32 0.0, %v1647
          %v1649 = vpop.f32.mrb[0].mxu0
          %1650 = vmatprep.mubr.bf16.mxu0 %v1087
          %1651 = vmatmul.mubr.bf16.gmra.mrb[0].mxu0 %v1086
          %v1652 = vpop.f32.mrb[0].mxu0
          %v1653 = vadd.f32 0.0, %v1652
          %v1654 = vpop.f32.mrb[0].mxu0
          %v1655 = vpop.f32.mrb[0].mxu0
          %v1656 = vadd.f32 0.0, %v1655
          %v1657 = vpop.f32.mrb[0].mxu0
          %1658 = vmatprep.mubr.bf16.mxu0 %v1091
          %1659 = vmatmul.mubr.bf16.gmra.mrb[0].mxu0 %v1090
          %v1660 = vpop.f32.mrb[0].mxu0
          %v1661 = vadd.f32 0.0, %v1660
          %v1662 = vpop.f32.mrb[0].mxu0
          %v1663 = vpop.f32.mrb[0].mxu0
          %v1664 = vadd.f32 0.0, %v1663
          %v1665 = vpop.f32.mrb[0].mxu0
          %1666 = vmatprep.mubr.bf16.mxu0 %v1095
          %1667 = vmatmul.mubr.bf16.gmra.mrb[0].mxu0 %v1094
          %v1668 = vpop.f32.mrb[0].mxu0
          %v1669 = vadd.f32 0.0, %v1668
          %v1670 = vpop.f32.mrb[0].mxu0
          %v1671 = vpop.f32.mrb[0].mxu0
          %v1672 = vadd.f32 0.0, %v1671
          %v1673 = vpop.f32.mrb[0].mxu0
          %1674 = vmatprep.mubr.bf16.mxu0 %v1099
          %1675 = vmatmul.mubr.bf16.gmra.mrb[0].mxu0 %v1098
          %v1676 = vpop.f32.mrb[0].mxu0
          %v1677 = vadd.f32 0.0, %v1676
          %v1678 = vpop.f32.mrb[0].mxu0
          %v1679 = vpop.f32.mrb[0].mxu0
          %v1680 = vadd.f32 0.0, %v1679
          %v1681 = vpop.f32.mrb[0].mxu0
          %1682 = vmatprep.mubr.bf16.mxu0 %v1103
          %1683 = vmatmul.mubr.bf16.gmra.mrb[0].mxu0 %v1102
          %v1684 = vpop.f32.mrb[0].mxu0
          %v1685 = vadd.f32 0.0, %v1684
          %v1686 = vpop.f32.mrb[0].mxu0
          %v1687 = vpop.f32.mrb[0].mxu0
          %v1688 = vadd.f32 0.0, %v1687
          %v1689 = vpop.f32.mrb[0].mxu0
          %1690 = vmatprep.mubr.bf16.mxu0 %v1107
          %1691 = vmatmul.mubr.bf16.gmra.mrb[0].mxu0 %v1106
          %v1692 = vpop.f32.mrb[0].mxu0
          %v1693 = vadd.f32 0.0, %v1692
          %v1694 = vpop.f32.mrb[0].mxu0
          %v1695 = vpop.f32.mrb[0].mxu0
          %v1696 = vadd.f32 0.0, %v1695
          %v1697 = vpop.f32.mrb[0].mxu0
          %1698 = vmatprep.mubr.bf16.mxu0 %v1111
          %1699 = vmatmul.mubr.bf16.gmra.mrb[0].mxu0 %v1110
          %v1700 = vpop.f32.mrb[0].mxu0
          %v1701 = vadd.f32 0.0, %v1700
          %v1702 = vpop.f32.mrb[0].mxu0
          %v1703 = vpop.f32.mrb[0].mxu0
          %v1704 = vadd.f32 0.0, %v1703
          %v1705 = vpop.f32.mrb[0].mxu0
          %1706 = vmatprep.mubr.bf16.mxu0 %v1115
          %1707 = vmatmul.mubr.bf16.gmra.mrb[0].mxu0 %v1114
          %v1708 = vpop.f32.mrb[0].mxu0
          %v1709 = vadd.f32 0.0, %v1708
          %v1710 = vpop.f32.mrb[0].mxu0
          %v1711 = vpop.f32.mrb[0].mxu0
          %v1712 = vadd.f32 0.0, %v1711
          %v1713 = vpop.f32.mrb[0].mxu0
          %1714 = vmatprep.mubr.bf16.mxu0 %v1119
          %1715 = vmatmul.mubr.bf16.gmra.mrb[0].mxu0 %v1118
          %v1716 = vpop.f32.mrb[0].mxu0
          %v1717 = vadd.f32 0.0, %v1716
          %v1718 = vpop.f32.mrb[0].mxu0
          %v1719 = vpop.f32.mrb[0].mxu0
          %v1720 = vadd.f32 0.0, %v1719
          %v1721 = vpop.f32.mrb[0].mxu0
          %1722 = vmatprep.mubr.bf16.mxu0 %v1123
          %1723 = vmatmul.mubr.bf16.gmra.mrb[0].mxu0 %v1122
          %v1724 = vpop.f32.mrb[0].mxu0
          %v1725 = vadd.f32 0.0, %v1724
          %v1726 = vpop.f32.mrb[0].mxu0
          %v1727 = vpop.f32.mrb[0].mxu0
          %v1728 = vadd.f32 0.0, %v1727
          %v1729 = vpop.f32.mrb[0].mxu0
          %1730 = vmatprep.mubr.bf16.mxu0 %v1127
          %1731 = vmatmul.mubr.bf16.gmra.mrb[0].mxu0 %v1126
          %v1732 = vpop.f32.mrb[0].mxu0
          %v1733 = vadd.f32 0.0, %v1732
          %v1734 = vpop.f32.mrb[0].mxu0
          %v1735 = vpop.f32.mrb[0].mxu0
          %v1736 = vadd.f32 0.0, %v1735
          %v1737 = vpop.f32.mrb[0].mxu0
          %1738 = vdwg.mxu0
          %1739 = vmatprep.subr.bf16.mxu0 0
          %1740 = vmatpush1.bf16.msra.mxu0 %v1402
          %1741 = vmatprep.subr.bf16.mxu0 0
          %1742 = vmatpush1.bf16.msra.mxu0 %v1403
          %1743 = vmatprep.subr.bf16.mxu0 0
          %1744 = vmatpush1.bf16.msra.mxu0 %v1404
          %1745 = vmatprep.subr.bf16.mxu0 0
          %1746 = vmatpush1.bf16.msra.mxu0 %v1405
          %1747 = vmatprep.subr.bf16.mxu0 0
          %1748 = vmatpush1.bf16.msra.mxu0 %v1406
          %1749 = vmatprep.subr.bf16.mxu0 0
          %1750 = vmatpush1.bf16.msra.mxu0 %v1407
          %1751 = vmatprep.subr.bf16.mxu0 0
          %1752 = vmatpush1.bf16.msra.mxu0 %v1408
          %1753 = vmatprep.subr.bf16.mxu0 0
          %1754 = vmatpush1.bf16.msra.mxu0 %v1409
          %1755 = vmatprep.subr.bf16.mxu0 0
          %1756 = vmatpush1.bf16.msra.mxu0 %v1410
          %1757 = vmatprep.subr.bf16.mxu0 0
          %1758 = vmatpush1.bf16.msra.mxu0 %v1411
          %1759 = vmatprep.subr.bf16.mxu0 0
          %1760 = vmatpush1.bf16.msra.mxu0 %v1412
          %1761 = vmatprep.subr.bf16.mxu0 0
          %1762 = vmatpush1.bf16.msra.mxu0 %v1413
          %1763 = vmatprep.subr.bf16.mxu0 0
          %1764 = vmatpush1.bf16.msra.mxu0 %v1414
          %1765 = vmatprep.subr.bf16.mxu0 0
          %1766 = vmatpush1.bf16.msra.mxu0 %v1415
          %1767 = vmatprep.subr.bf16.mxu0 0
          %1768 = vmatpush1.bf16.msra.mxu0 %v1416
          %1769 = vmatprep.subr.bf16.mxu0 0
          %1770 = vmatpush1.bf16.msra.mxu0 %v1417
          %1771 = vmatprep.mubr.bf16.mxu0 %v1005
          %1772 = vmatmul.mubr.bf16.gmra.mrb[0].mxu0 %v1004
          %v1773 = vpop.f32.mrb[0].mxu0
          %v1774 = vadd.f32 %v1485, %v1773
          %v1775 = vpop.f32.mrb[0].mxu0
          %v1776 = vpop.f32.mrb[0].mxu0
          %v1777 = vadd.f32 %v1488, %v1776
          %v1778 = vpop.f32.mrb[0].mxu0
          %1779 = vmatprep.mubr.bf16.mxu0 %v1009
          %1780 = vmatmul.mubr.bf16.gmra.mrb[0].mxu0 %v1008
          %v1781 = vpop.f32.mrb[0].mxu0
          %v1782 = vadd.f32 %v1493, %v1781
          %v1783 = vpop.f32.mrb[0].mxu0
          %v1784 = vpop.f32.mrb[0].mxu0
          %v1785 = vadd.f32 %v1496, %v1784
          %v1786 = vpop.f32.mrb[0].mxu0
          %1787 = vmatprep.mubr.bf16.mxu0 %v1013
          %1788 = vmatmul.mubr.bf16.gmra.mrb[0].mxu0 %v1012
          %v1789 = vpop.f32.mrb[0].mxu0
          %v1790 = vadd.f32 %v1501, %v1789
          %v1791 = vpop.f32.mrb[0].mxu0
          %v1792 = vpop.f32.mrb[0].mxu0
          %v1793 = vadd.f32 %v1504, %v1792
          %v1794 = vpop.f32.mrb[0].mxu0
          %1795 = vmatprep.mubr.bf16.mxu0 %v1017
          %1796 = vmatmul.mubr.bf16.gmra.mrb[0].mxu0 %v1016
          %v1797 = vpop.f32.mrb[0].mxu0
          %v1798 = vadd.f32 %v1509, %v1797
          %v1799 = vpop.f32.mrb[0].mxu0
          %v1800 = vpop.f32.mrb[0].mxu0
          %v1801 = vadd.f32 %v1512, %v1800
          %v1802 = vpop.f32.mrb[0].mxu0
          %1803 = vmatprep.mubr.bf16.mxu0 %v1021
          %1804 = vmatmul.mubr.bf16.gmra.mrb[0].mxu0 %v1020
          %v1805 = vpop.f32.mrb[0].mxu0
          %v1806 = vadd.f32 %v1517, %v1805
          %v1807 = vpop.f32.mrb[0].mxu0
          %v1808 = vpop.f32.mrb[0].mxu0
          %v1809 = vadd.f32 %v1520, %v1808
          %v1810 = vpop.f32.mrb[0].mxu0
          %1811 = vmatprep.mubr.bf16.mxu0 %v1025
          %1812 = vmatmul.mubr.bf16.gmra.mrb[0].mxu0 %v1024
          %v1813 = vpop.f32.mrb[0].mxu0
          %v1814 = vadd.f32 %v1525, %v1813
          %v1815 = vpop.f32.mrb[0].mxu0
          %v1816 = vpop.f32.mrb[0].mxu0
          %v1817 = vadd.f32 %v1528, %v1816
          %v1818 = vpop.f32.mrb[0].mxu0
          %1819 = vmatprep.mubr.bf16.mxu0 %v1029
          %1820 = vmatmul.mubr.bf16.gmra.mrb[0].mxu0 %v1028
          %v1821 = vpop.f32.mrb[0].mxu0
          %v1822 = vadd.f32 %v1533, %v1821
          %v1823 = vpop.f32.mrb[0].mxu0
          %v1824 = vpop.f32.mrb[0].mxu0
          %v1825 = vadd.f32 %v1536, %v1824
          %v1826 = vpop.f32.mrb[0].mxu0
          %1827 = vmatprep.mubr.bf16.mxu0 %v1033
          %1828 = vmatmul.mubr.bf16.gmra.mrb[0].mxu0 %v1032
          %v1829 = vpop.f32.mrb[0].mxu0
          %v1830 = vadd.f32 %v1541, %v1829
          %v1831 = vpop.f32.mrb[0].mxu0
          %v1832 = vpop.f32.mrb[0].mxu0
          %v1833 = vadd.f32 %v1544, %v1832
          %v1834 = vpop.f32.mrb[0].mxu0
          %1835 = vmatprep.mubr.bf16.mxu0 %v1037
          %1836 = vmatmul.mubr.bf16.gmra.mrb[0].mxu0 %v1036
          %v1837 = vpop.f32.mrb[0].mxu0
          %v1838 = vadd.f32 %v1549, %v1837
          %v1839 = vpop.f32.mrb[0].mxu0
          %v1840 = vpop.f32.mrb[0].mxu0
          %v1841 = vadd.f32 %v1552, %v1840
          %v1842 = vpop.f32.mrb[0].mxu0
          %1843 = vmatprep.mubr.bf16.mxu0 %v1041
          %1844 = vmatmul.mubr.bf16.gmra.mrb[0].mxu0 %v1040
          %v1845 = vpop.f32.mrb[0].mxu0
          %v1846 = vadd.f32 %v1557, %v1845
          %v1847 = vpop.f32.mrb[0].mxu0
          %v1848 = vpop.f32.mrb[0].mxu0
          %v1849 = vadd.f32 %v1560, %v1848
          %v1850 = vpop.f32.mrb[0].mxu0
          %1851 = vmatprep.mubr.bf16.mxu0 %v1045
          %1852 = vmatmul.mubr.bf16.gmra.mrb[0].mxu0 %v1044
          %v1853 = vpop.f32.mrb[0].mxu0
          %v1854 = vadd.f32 %v1565, %v1853
          %v1855 = vpop.f32.mrb[0].mxu0
          %v1856 = vpop.f32.mrb[0].mxu0
          %v1857 = vadd.f32 %v1568, %v1856
          %v1858 = vpop.f32.mrb[0].mxu0
          %1859 = vmatprep.mubr.bf16.mxu0 %v1049
          %1860 = vmatmul.mubr.bf16.gmra.mrb[0].mxu0 %v1048
          %v1861 = vpop.f32.mrb[0].mxu0
          %v1862 = vadd.f32 %v1573, %v1861
          %v1863 = vpop.f32.mrb[0].mxu0
          %v1864 = vpop.f32.mrb[0].mxu0
          %v1865 = vadd.f32 %v1576, %v1864
          %v1866 = vpop.f32.mrb[0].mxu0
          %1867 = vmatprep.mubr.bf16.mxu0 %v1053
          %1868 = vmatmul.mubr.bf16.gmra.mrb[0].mxu0 %v1052
          %v1869 = vpop.f32.mrb[0].mxu0
          %v1870 = vadd.f32 %v1581, %v1869
          %v1871 = vpop.f32.mrb[0].mxu0
          %v1872 = vpop.f32.mrb[0].mxu0
          %v1873 = vadd.f32 %v1584, %v1872
          %v1874 = vpop.f32.mrb[0].mxu0
          %1875 = vmatprep.mubr.bf16.mxu0 %v1057
          %1876 = vmatmul.mubr.bf16.gmra.mrb[0].mxu0 %v1056
          %v1877 = vpop.f32.mrb[0].mxu0
          %v1878 = vadd.f32 %v1589, %v1877
          %v1879 = vpop.f32.mrb[0].mxu0
          %v1880 = vpop.f32.mrb[0].mxu0
          %v1881 = vadd.f32 %v1592, %v1880
          %v1882 = vpop.f32.mrb[0].mxu0
          %1883 = vmatprep.mubr.bf16.mxu0 %v1061
          %1884 = vmatmul.mubr.bf16.gmra.mrb[0].mxu0 %v1060
          %v1885 = vpop.f32.mrb[0].mxu0
          %v1886 = vadd.f32 %v1597, %v1885
          %v1887 = vpop.f32.mrb[0].mxu0
          %v1888 = vpop.f32.mrb[0].mxu0
          %v1889 = vadd.f32 %v1600, %v1888
          %v1890 = vpop.f32.mrb[0].mxu0
          %1891 = vmatprep.mubr.bf16.mxu0 %v1065
          %1892 = vmatmul.mubr.bf16.gmra.mrb[0].mxu0 %v1064
          %v1893 = vpop.f32.mrb[0].mxu0
          %v1894 = vadd.f32 %v1605, %v1893
          %v1895 = vpop.f32.mrb[0].mxu0
          %v1896 = vpop.f32.mrb[0].mxu0
          %v1897 = vadd.f32 %v1608, %v1896
          %v1898 = vpop.f32.mrb[0].mxu0
          %1899 = vmatprep.mubr.bf16.mxu0 %v1069
          %1900 = vmatmul.mubr.bf16.gmra.mrb[0].mxu0 %v1068
          %v1901 = vpop.f32.mrb[0].mxu0
          %v1902 = vadd.f32 %v1613, %v1901
          %v1903 = vpop.f32.mrb[0].mxu0
          %v1904 = vpop.f32.mrb[0].mxu0
          %v1905 = vadd.f32 %v1616, %v1904
          %v1906 = vpop.f32.mrb[0].mxu0
          %1907 = vmatprep.mubr.bf16.mxu0 %v1073
          %1908 = vmatmul.mubr.bf16.gmra.mrb[0].mxu0 %v1072
          %v1909 = vpop.f32.mrb[0].mxu0
          %v1910 = vadd.f32 %v1621, %v1909
          %v1911 = vpop.f32.mrb[0].mxu0
          %v1912 = vpop.f32.mrb[0].mxu0
          %v1913 = vadd.f32 %v1624, %v1912
          %v1914 = vpop.f32.mrb[0].mxu0
          %1915 = vmatprep.mubr.bf16.mxu0 %v1077
          %1916 = vmatmul.mubr.bf16.gmra.mrb[0].mxu0 %v1076
          %v1917 = vpop.f32.mrb[0].mxu0
          %v1918 = vadd.f32 %v1629, %v1917
          %v1919 = vpop.f32.mrb[0].mxu0
          %v1920 = vpop.f32.mrb[0].mxu0
          %v1921 = vadd.f32 %v1632, %v1920
          %v1922 = vpop.f32.mrb[0].mxu0
          %1923 = vmatprep.mubr.bf16.mxu0 %v1081
          %1924 = vmatmul.mubr.bf16.gmra.mrb[0].mxu0 %v1080
          %v1925 = vpop.f32.mrb[0].mxu0
          %v1926 = vadd.f32 %v1637, %v1925
          %v1927 = vpop.f32.mrb[0].mxu0
          %v1928 = vpop.f32.mrb[0].mxu0
          %v1929 = vadd.f32 %v1640, %v1928
          %v1930 = vpop.f32.mrb[0].mxu0
          %1931 = vmatprep.mubr.bf16.mxu0 %v1085
          %1932 = vmatmul.mubr.bf16.gmra.mrb[0].mxu0 %v1084
          %v1933 = vpop.f32.mrb[0].mxu0
          %v1934 = vadd.f32 %v1645, %v1933
          %v1935 = vpop.f32.mrb[0].mxu0
          %v1936 = vpop.f32.mrb[0].mxu0
          %v1937 = vadd.f32 %v1648, %v1936
          %v1938 = vpop.f32.mrb[0].mxu0
          %1939 = vmatprep.mubr.bf16.mxu0 %v1089
          %1940 = vmatmul.mubr.bf16.gmra.mrb[0].mxu0 %v1088
          %v1941 = vpop.f32.mrb[0].mxu0
          %v1942 = vadd.f32 %v1653, %v1941
          %v1943 = vpop.f32.mrb[0].mxu0
          %v1944 = vpop.f32.mrb[0].mxu0
          %v1945 = vadd.f32 %v1656, %v1944
          %v1946 = vpop.f32.mrb[0].mxu0
          %1947 = vmatprep.mubr.bf16.mxu0 %v1093
          %1948 = vmatmul.mubr.bf16.gmra.mrb[0].mxu0 %v1092
          %v1949 = vpop.f32.mrb[0].mxu0
          %v1950 = vadd.f32 %v1661, %v1949
          %v1951 = vpop.f32.mrb[0].mxu0
          %v1952 = vpop.f32.mrb[0].mxu0
          %v1953 = vadd.f32 %v1664, %v1952
          %v1954 = vpop.f32.mrb[0].mxu0
          %1955 = vmatprep.mubr.bf16.mxu0 %v1097
          %1956 = vmatmul.mubr.bf16.gmra.mrb[0].mxu0 %v1096
          %v1957 = vpop.f32.mrb[0].mxu0
          %v1958 = vadd.f32 %v1669, %v1957
          %v1959 = vpop.f32.mrb[0].mxu0
          %v1960 = vpop.f32.mrb[0].mxu0
          %v1961 = vadd.f32 %v1672, %v1960
          %v1962 = vpop.f32.mrb[0].mxu0
          %1963 = vmatprep.mubr.bf16.mxu0 %v1101
          %1964 = vmatmul.mubr.bf16.gmra.mrb[0].mxu0 %v1100
          %v1965 = vpop.f32.mrb[0].mxu0
          %v1966 = vadd.f32 %v1677, %v1965
          %v1967 = vpop.f32.mrb[0].mxu0
          %v1968 = vpop.f32.mrb[0].mxu0
          %v1969 = vadd.f32 %v1680, %v1968
          %v1970 = vpop.f32.mrb[0].mxu0
          %1971 = vmatprep.mubr.bf16.mxu0 %v1105
          %1972 = vmatmul.mubr.bf16.gmra.mrb[0].mxu0 %v1104
          %v1973 = vpop.f32.mrb[0].mxu0
          %v1974 = vadd.f32 %v1685, %v1973
          %v1975 = vpop.f32.mrb[0].mxu0
          %v1976 = vpop.f32.mrb[0].mxu0
          %v1977 = vadd.f32 %v1688, %v1976
          %v1978 = vpop.f32.mrb[0].mxu0
          %1979 = vmatprep.mubr.bf16.mxu0 %v1109
          %1980 = vmatmul.mubr.bf16.gmra.mrb[0].mxu0 %v1108
          %v1981 = vpop.f32.mrb[0].mxu0
          %v1982 = vadd.f32 %v1693, %v1981
          %v1983 = vpop.f32.mrb[0].mxu0
          %v1984 = vpop.f32.mrb[0].mxu0
          %v1985 = vadd.f32 %v1696, %v1984
          %v1986 = vpop.f32.mrb[0].mxu0
          %1987 = vmatprep.mubr.bf16.mxu0 %v1113
          %1988 = vmatmul.mubr.bf16.gmra.mrb[0].mxu0 %v1112
          %v1989 = vpop.f32.mrb[0].mxu0
          %v1990 = vadd.f32 %v1701, %v1989
          %v1991 = vpop.f32.mrb[0].mxu0
          %v1992 = vpop.f32.mrb[0].mxu0
          %v1993 = vadd.f32 %v1704, %v1992
          %v1994 = vpop.f32.mrb[0].mxu0
          %1995 = vmatprep.mubr.bf16.mxu0 %v1117
          %1996 = vmatmul.mubr.bf16.gmra.mrb[0].mxu0 %v1116
          %v1997 = vpop.f32.mrb[0].mxu0
          %v1998 = vadd.f32 %v1709, %v1997
          %v1999 = vpop.f32.mrb[0].mxu0
          %v2000 = vpop.f32.mrb[0].mxu0
          %v2001 = vadd.f32 %v1712, %v2000
          %v2002 = vpop.f32.mrb[0].mxu0
          %2003 = vmatprep.mubr.bf16.mxu0 %v1121
          %2004 = vmatmul.mubr.bf16.gmra.mrb[0].mxu0 %v1120
          %v2005 = vpop.f32.mrb[0].mxu0
          %v2006 = vadd.f32 %v1717, %v2005
          %v2007 = vpop.f32.mrb[0].mxu0
          %v2008 = vpop.f32.mrb[0].mxu0
          %v2009 = vadd.f32 %v1720, %v2008
          %v2010 = vpop.f32.mrb[0].mxu0
          %2011 = vmatprep.mubr.bf16.mxu0 %v1125
          %2012 = vmatmul.mubr.bf16.gmra.mrb[0].mxu0 %v1124
          %v2013 = vpop.f32.mrb[0].mxu0
          %v2014 = vadd.f32 %v1725, %v2013
          %v2015 = vpop.f32.mrb[0].mxu0
          %v2016 = vpop.f32.mrb[0].mxu0
          %v2017 = vadd.f32 %v1728, %v2016
          %v2018 = vpop.f32.mrb[0].mxu0
          %2019 = vmatprep.mubr.bf16.mxu0 %v1129
          %2020 = vmatmul.mubr.bf16.gmra.mrb[0].mxu0 %v1128
          %v2021 = vpop.f32.mrb[0].mxu0
          %v2022 = vadd.f32 %v1733, %v2021
          %v2023 = vpop.f32.mrb[0].mxu0
          %v2024 = vpop.f32.mrb[0].mxu0
          %v2025 = vadd.f32 %v1736, %v2024
          %v2026 = vpop.f32.mrb[0].mxu0
          %2027 = vdwg.mxu0
          %v2028 = vadd.f32 %v426, %v1774
          %v2029 = vadd.f32 %v427, %v1777
          %v2030 = vadd.f32 %v428, %v1782
          %v2031 = vadd.f32 %v429, %v1785
          %v2032 = vadd.f32 %v430, %v1790
          %v2033 = vadd.f32 %v431, %v1793
          %v2034 = vadd.f32 %v432, %v1798
          %v2035 = vadd.f32 %v433, %v1801
          %v2036 = vadd.f32 %v434, %v1806
          %v2037 = vadd.f32 %v435, %v1809
          %v2038 = vadd.f32 %v436, %v1814
          %v2039 = vadd.f32 %v437, %v1817
          %v2040 = vadd.f32 %v438, %v1822
          %v2041 = vadd.f32 %v439, %v1825
          %v2042 = vadd.f32 %v440, %v1830
          %v2043 = vadd.f32 %v441, %v1833
          %v2044 = vadd.f32 %v442, %v1838
          %v2045 = vadd.f32 %v443, %v1841
          %v2046 = vadd.f32 %v444, %v1846
          %v2047 = vadd.f32 %v445, %v1849
          %v2048 = vadd.f32 %v446, %v1854
          %v2049 = vadd.f32 %v447, %v1857
          %v2050 = vadd.f32 %v448, %v1862
          %v2051 = vadd.f32 %v449, %v1865
          %v2052 = vadd.f32 %v450, %v1870
          %v2053 = vadd.f32 %v451, %v1873
          %v2054 = vadd.f32 %v452, %v1878
          %v2055 = vadd.f32 %v453, %v1881
          %v2056 = vadd.f32 %v454, %v1886
          %v2057 = vadd.f32 %v455, %v1889
          %v2058 = vadd.f32 %v456, %v1894
          %v2059 = vadd.f32 %v457, %v1897
          %v2060 = vadd.f32 %v458, %v1902
          %v2061 = vadd.f32 %v459, %v1905
          %v2062 = vadd.f32 %v460, %v1910
          %v2063 = vadd.f32 %v461, %v1913
          %v2064 = vadd.f32 %v462, %v1918
          %v2065 = vadd.f32 %v463, %v1921
          %v2066 = vadd.f32 %v464, %v1926
          %v2067 = vadd.f32 %v465, %v1929
          %v2068 = vadd.f32 %v466, %v1934
          %v2069 = vadd.f32 %v467, %v1937
          %v2070 = vadd.f32 %v468, %v1942
          %v2071 = vadd.f32 %v469, %v1945
          %v2072 = vadd.f32 %v470, %v1950
          %v2073 = vadd.f32 %v471, %v1953
          %v2074 = vadd.f32 %v472, %v1958
          %v2075 = vadd.f32 %v473, %v1961
          %v2076 = vadd.f32 %v474, %v1966
          %v2077 = vadd.f32 %v475, %v1969
          %v2078 = vadd.f32 %v476, %v1974
          %v2079 = vadd.f32 %v477, %v1977
          %v2080 = vadd.f32 %v478, %v1982
          %v2081 = vadd.f32 %v479, %v1985
          %v2082 = vadd.f32 %v480, %v1990
          %v2083 = vadd.f32 %v481, %v1993
          %v2084 = vadd.f32 %v482, %v1998
          %v2085 = vadd.f32 %v483, %v2001
          %v2086 = vadd.f32 %v484, %v2006
          %v2087 = vadd.f32 %v485, %v2009
          %v2088 = vadd.f32 %v486, %v2014
          %v2089 = vadd.f32 %v487, %v2017
          %v2090 = vadd.f32 %v488, %v2022
          %v2091 = vadd.f32 %v489, %v2025
          %2092 = vst [vmem:[#allocation2] sm:$0xff] %v2028
          %2093 = vst [vmem:[#allocation2 + $0x8] sm:$0xff] %v2029
          %2094 = vst [vmem:[#allocation2 + $0x10] sm:$0xff] %v2030
          %2095 = vst [vmem:[#allocation2 + $0x18] sm:$0xff] %v2031
          %2096 = vst [vmem:[#allocation2 + $0x20] sm:$0xff] %v2032
          %2097 = vst [vmem:[#allocation2 + $0x28] sm:$0xff] %v2033
          %2098 = vst [vmem:[#allocation2 + $0x30] sm:$0xff] %v2034
          %2099 = vst [vmem:[#allocation2 + $0x38] sm:$0xff] %v2035
          %2100 = vst [vmem:[#allocation2 + $0x40] sm:$0xff] %v2036
          %2101 = vst [vmem:[#allocation2 + $0x48] sm:$0xff] %v2037
          %2102 = vst [vmem:[#allocation2 + $0x50] sm:$0xff] %v2038
          %2103 = vst [vmem:[#allocation2 + $0x58] sm:$0xff] %v2039
          %2104 = vst [vmem:[#allocation2 + $0x60] sm:$0xff] %v2040
          %2105 = vst [vmem:[#allocation2 + $0x68] sm:$0xff] %v2041
          %2106 = vst [vmem:[#allocation2 + $0x70] sm:$0xff] %v2042
          %2107 = vst [vmem:[#allocation2 + $0x78] sm:$0xff] %v2043
          %2108 = vst [vmem:[#allocation2 + $0x80] sm:$0xff] %v2044
          %2109 = vst [vmem:[#allocation2 + $0x88] sm:$0xff] %v2045
          %2110 = vst [vmem:[#allocation2 + $0x90] sm:$0xff] %v2046
          %2111 = vst [vmem:[#allocation2 + $0x98] sm:$0xff] %v2047
          %2112 = vst [vmem:[#allocation2 + $0xa0] sm:$0xff] %v2048
          %2113 = vst [vmem:[#allocation2 + $0xa8] sm:$0xff] %v2049
          %2114 = vst [vmem:[#allocation2 + $0xb0] sm:$0xff] %v2050
          %2115 = vst [vmem:[#allocation2 + $0xb8] sm:$0xff] %v2051
          %2116 = vst [vmem:[#allocation2 + $0xc0] sm:$0xff] %v2052
          %2117 = vst [vmem:[#allocation2 + $0xc8] sm:$0xff] %v2053
          %2118 = vst [vmem:[#allocation2 + $0xd0] sm:$0xff] %v2054
          %2119 = vst [vmem:[#allocation2 + $0xd8] sm:$0xff] %v2055
          %2120 = vst [vmem:[#allocation2 + $0xe0] sm:$0xff] %v2056
          %2121 = vst [vmem:[#allocation2 + $0xe8] sm:$0xff] %v2057
          %2122 = vst [vmem:[#allocation2 + $0xf0] sm:$0xff] %v2058
          %2123 = vst [vmem:[#allocation2 + $0xf8] sm:$0xff] %v2059
          %2124 = vst [vmem:[#allocation2 + $0x100] sm:$0xff] %v2060
          %2125 = vst [vmem:[#allocation2 + $0x108] sm:$0xff] %v2061
          %2126 = vst [vmem:[#allocation2 + $0x110] sm:$0xff] %v2062
          %2127 = vst [vmem:[#allocation2 + $0x118] sm:$0xff] %v2063
          %2128 = vst [vmem:[#allocation2 + $0x120] sm:$0xff] %v2064
          %2129 = vst [vmem:[#allocation2 + $0x128] sm:$0xff] %v2065
          %2130 = vst [vmem:[#allocation2 + $0x130] sm:$0xff] %v2066
          %2131 = vst [vmem:[#allocation2 + $0x138] sm:$0xff] %v2067
          %2132 = vst [vmem:[#allocation2 + $0x140] sm:$0xff] %v2068
          %2133 = vst [vmem:[#allocation2 + $0x148] sm:$0xff] %v2069
          %2134 = vst [vmem:[#allocation2 + $0x150] sm:$0xff] %v2070
          %2135 = vst [vmem:[#allocation2 + $0x158] sm:$0xff] %v2071
          %2136 = vst [vmem:[#allocation2 + $0x160] sm:$0xff] %v2072
          %2137 = vst [vmem:[#allocation2 + $0x168] sm:$0xff] %v2073
          %2138 = vst [vmem:[#allocation2 + $0x170] sm:$0xff] %v2074
          %2139 = vst [vmem:[#allocation2 + $0x178] sm:$0xff] %v2075
          %2140 = vst [vmem:[#allocation2 + $0x180] sm:$0xff] %v2076
          %2141 = vst [vmem:[#allocation2 + $0x188] sm:$0xff] %v2077
          %2142 = vst [vmem:[#allocation2 + $0x190] sm:$0xff] %v2078
          %2143 = vst [vmem:[#allocation2 + $0x198] sm:$0xff] %v2079
          %2144 = vst [vmem:[#allocation2 + $0x1a0] sm:$0xff] %v2080
          %2145 = vst [vmem:[#allocation2 + $0x1a8] sm:$0xff] %v2081
          %2146 = vst [vmem:[#allocation2 + $0x1b0] sm:$0xff] %v2082
          %2147 = vst [vmem:[#allocation2 + $0x1b8] sm:$0xff] %v2083
          %2148 = vst [vmem:[#allocation2 + $0x1c0] sm:$0xff] %v2084
          %2149 = vst [vmem:[#allocation2 + $0x1c8] sm:$0xff] %v2085
          %2150 = vst [vmem:[#allocation2 + $0x1d0] sm:$0xff] %v2086
          %2151 = vst [vmem:[#allocation2 + $0x1d8] sm:$0xff] %v2087
          %2152 = vst [vmem:[#allocation2 + $0x1e0] sm:$0xff] %v2088
          %2153 = vst [vmem:[#allocation2 + $0x1e8] sm:$0xff] %v2089
          %2154 = vst [vmem:[#allocation2 + $0x1f0] sm:$0xff] %v2090
          %2155 = vst [vmem:[#allocation2 + $0x1f8] sm:$0xff] %v2091
        $region56: #{_gcn_forward_padded.4} parent=35 // pred_fallthru
          _
        // Predicated region
        $region57: #{_gcn_forward_padded.4} parent=35 // pred_check
          %p2156 = pneg %p282
        $region58: #{_gcn_forward_padded.4} parent=35 // pred_check_branch
          %2158 = sbr.rel (%p2156) target = $region60
        $region59: #{_gcn_forward_padded.4} parent=35 // pred_region
          %v2159 = vld [vmem:[#allocation2] sm:$0xff]
          %v2160 = vld [vmem:[#allocation2 + $0x8] sm:$0xff]
          %v2161 = vld [vmem:[#allocation2 + $0x10] sm:$0xff]
          %v2162 = vld [vmem:[#allocation2 + $0x18] sm:$0xff]
          %v2163 = vld [vmem:[#allocation2 + $0x20] sm:$0xff]
          %v2164 = vld [vmem:[#allocation2 + $0x28] sm:$0xff]
          %v2165 = vld [vmem:[#allocation2 + $0x30] sm:$0xff]
          %v2166 = vld [vmem:[#allocation2 + $0x38] sm:$0xff]
          %v2167 = vld [vmem:[#allocation2 + $0x40] sm:$0xff]
          %v2168 = vld [vmem:[#allocation2 + $0x48] sm:$0xff]
          %v2169 = vld [vmem:[#allocation2 + $0x50] sm:$0xff]
          %v2170 = vld [vmem:[#allocation2 + $0x58] sm:$0xff]
          %v2171 = vld [vmem:[#allocation2 + $0x60] sm:$0xff]
          %v2172 = vld [vmem:[#allocation2 + $0x68] sm:$0xff]
          %v2173 = vld [vmem:[#allocation2 + $0x70] sm:$0xff]
          %v2174 = vld [vmem:[#allocation2 + $0x78] sm:$0xff]
          %v2175 = vld [vmem:[#allocation2 + $0x80] sm:$0xff]
          %v2176 = vld [vmem:[#allocation2 + $0x88] sm:$0xff]
          %v2177 = vld [vmem:[#allocation2 + $0x90] sm:$0xff]
          %v2178 = vld [vmem:[#allocation2 + $0x98] sm:$0xff]
          %v2179 = vld [vmem:[#allocation2 + $0xa0] sm:$0xff]
          %v2180 = vld [vmem:[#allocation2 + $0xa8] sm:$0xff]
          %v2181 = vld [vmem:[#allocation2 + $0xb0] sm:$0xff]
          %v2182 = vld [vmem:[#allocation2 + $0xb8] sm:$0xff]
          %v2183 = vld [vmem:[#allocation2 + $0xc0] sm:$0xff]
          %v2184 = vld [vmem:[#allocation2 + $0xc8] sm:$0xff]
          %v2185 = vld [vmem:[#allocation2 + $0xd0] sm:$0xff]
          %v2186 = vld [vmem:[#allocation2 + $0xd8] sm:$0xff]
          %v2187 = vld [vmem:[#allocation2 + $0xe0] sm:$0xff]
          %v2188 = vld [vmem:[#allocation2 + $0xe8] sm:$0xff]
          %v2189 = vld [vmem:[#allocation2 + $0xf0] sm:$0xff]
          %v2190 = vld [vmem:[#allocation2 + $0xf8] sm:$0xff]
          %v2191 = vld [vmem:[#allocation2 + $0x100] sm:$0xff]
          %v2192 = vld [vmem:[#allocation2 + $0x108] sm:$0xff]
          %v2193 = vld [vmem:[#allocation2 + $0x110] sm:$0xff]
          %v2194 = vld [vmem:[#allocation2 + $0x118] sm:$0xff]
          %v2195 = vld [vmem:[#allocation2 + $0x120] sm:$0xff]
          %v2196 = vld [vmem:[#allocation2 + $0x128] sm:$0xff]
          %v2197 = vld [vmem:[#allocation2 + $0x130] sm:$0xff]
          %v2198 = vld [vmem:[#allocation2 + $0x138] sm:$0xff]
          %v2199 = vld [vmem:[#allocation2 + $0x140] sm:$0xff]
          %v2200 = vld [vmem:[#allocation2 + $0x148] sm:$0xff]
          %v2201 = vld [vmem:[#allocation2 + $0x150] sm:$0xff]
          %v2202 = vld [vmem:[#allocation2 + $0x158] sm:$0xff]
          %v2203 = vld [vmem:[#allocation2 + $0x160] sm:$0xff]
          %v2204 = vld [vmem:[#allocation2 + $0x168] sm:$0xff]
          %v2205 = vld [vmem:[#allocation2 + $0x170] sm:$0xff]
          %v2206 = vld [vmem:[#allocation2 + $0x178] sm:$0xff]
          %v2207 = vld [vmem:[#allocation2 + $0x180] sm:$0xff]
          %v2208 = vld [vmem:[#allocation2 + $0x188] sm:$0xff]
          %v2209 = vld [vmem:[#allocation2 + $0x190] sm:$0xff]
          %v2210 = vld [vmem:[#allocation2 + $0x198] sm:$0xff]
          %v2211 = vld [vmem:[#allocation2 + $0x1a0] sm:$0xff]
          %v2212 = vld [vmem:[#allocation2 + $0x1a8] sm:$0xff]
          %v2213 = vld [vmem:[#allocation2 + $0x1b0] sm:$0xff]
          %v2214 = vld [vmem:[#allocation2 + $0x1b8] sm:$0xff]
          %v2215 = vld [vmem:[#allocation2 + $0x1c0] sm:$0xff]
          %v2216 = vld [vmem:[#allocation2 + $0x1c8] sm:$0xff]
          %v2217 = vld [vmem:[#allocation2 + $0x1d0] sm:$0xff]
          %v2218 = vld [vmem:[#allocation2 + $0x1d8] sm:$0xff]
          %v2219 = vld [vmem:[#allocation2 + $0x1e0] sm:$0xff]
          %v2220 = vld [vmem:[#allocation2 + $0x1e8] sm:$0xff]
          %v2221 = vld [vmem:[#allocation2 + $0x1f0] sm:$0xff]
          %v2222 = vld [vmem:[#allocation2 + $0x1f8] sm:$0xff]
          %v2223 = vld [vmem:[#allocation8] sm:$0x1]
          %v2225 = vlaneseq
          %v2226 = vshrl.u32 %v2225, 7
          %v2227 = vsub.s32 0, %v2226
          %v2228 = vrot.slane %v2223, %v2227
          %v2230 = vadd.f32 %v2159, %v2228
          %v2231 = vadd.f32 %v2160, %v2228
          %v2232 = vadd.f32 %v2161, %v2228
          %v2233 = vadd.f32 %v2162, %v2228
          %v2234 = vadd.f32 %v2163, %v2228
          %v2235 = vadd.f32 %v2164, %v2228
          %v2236 = vadd.f32 %v2165, %v2228
          %v2237 = vadd.f32 %v2166, %v2228
          %v2238 = vadd.f32 %v2167, %v2228
          %v2239 = vadd.f32 %v2168, %v2228
          %v2240 = vadd.f32 %v2169, %v2228
          %v2241 = vadd.f32 %v2170, %v2228
          %v2242 = vadd.f32 %v2171, %v2228
          %v2243 = vadd.f32 %v2172, %v2228
          %v2244 = vadd.f32 %v2173, %v2228
          %v2245 = vadd.f32 %v2174, %v2228
          %v2246 = vadd.f32 %v2175, %v2228
          %v2247 = vadd.f32 %v2176, %v2228
          %v2248 = vadd.f32 %v2177, %v2228
          %v2249 = vadd.f32 %v2178, %v2228
          %v2250 = vadd.f32 %v2179, %v2228
          %v2251 = vadd.f32 %v2180, %v2228
          %v2252 = vadd.f32 %v2181, %v2228
          %v2253 = vadd.f32 %v2182, %v2228
          %v2254 = vadd.f32 %v2183, %v2228
          %v2255 = vadd.f32 %v2184, %v2228
          %v2256 = vadd.f32 %v2185, %v2228
          %v2257 = vadd.f32 %v2186, %v2228
          %v2258 = vadd.f32 %v2187, %v2228
          %v2259 = vadd.f32 %v2188, %v2228
          %v2260 = vadd.f32 %v2189, %v2228
          %v2261 = vadd.f32 %v2190, %v2228
          %v2262 = vadd.f32 %v2191, %v2228
          %v2263 = vadd.f32 %v2192, %v2228
          %v2264 = vadd.f32 %v2193, %v2228
          %v2265 = vadd.f32 %v2194, %v2228
          %v2266 = vadd.f32 %v2195, %v2228
          %v2267 = vadd.f32 %v2196, %v2228
          %v2268 = vadd.f32 %v2197, %v2228
          %v2269 = vadd.f32 %v2198, %v2228
          %v2270 = vadd.f32 %v2199, %v2228
          %v2271 = vadd.f32 %v2200, %v2228
          %v2272 = vadd.f32 %v2201, %v2228
          %v2273 = vadd.f32 %v2202, %v2228
          %v2274 = vadd.f32 %v2203, %v2228
          %v2275 = vadd.f32 %v2204, %v2228
          %v2276 = vadd.f32 %v2205, %v2228
          %v2277 = vadd.f32 %v2206, %v2228
          %v2278 = vadd.f32 %v2207, %v2228
          %v2279 = vadd.f32 %v2208, %v2228
          %v2280 = vadd.f32 %v2209, %v2228
          %v2281 = vadd.f32 %v2210, %v2228
          %v2282 = vadd.f32 %v2211, %v2228
          %v2283 = vadd.f32 %v2212, %v2228
          %v2284 = vadd.f32 %v2213, %v2228
          %v2285 = vadd.f32 %v2214, %v2228
          %v2286 = vadd.f32 %v2215, %v2228
          %v2287 = vadd.f32 %v2216, %v2228
          %v2288 = vadd.f32 %v2217, %v2228
          %v2289 = vadd.f32 %v2218, %v2228
          %v2290 = vadd.f32 %v2219, %v2228
          %v2291 = vadd.f32 %v2220, %v2228
          %v2292 = vadd.f32 %v2221, %v2228
          %v2293 = vadd.f32 %v2222, %v2228
          %v2294 = vmax.f32 %v2230, 0.0
          %v2295 = vmax.f32 %v2231, 0.0
          %v2296 = vmax.f32 %v2232, 0.0
          %v2297 = vmax.f32 %v2233, 0.0
          %v2298 = vmax.f32 %v2234, 0.0
          %v2299 = vmax.f32 %v2235, 0.0
          %v2300 = vmax.f32 %v2236, 0.0
          %v2301 = vmax.f32 %v2237, 0.0
          %v2302 = vmax.f32 %v2238, 0.0
          %v2303 = vmax.f32 %v2239, 0.0
          %v2304 = vmax.f32 %v2240, 0.0
          %v2305 = vmax.f32 %v2241, 0.0
          %v2306 = vmax.f32 %v2242, 0.0
          %v2307 = vmax.f32 %v2243, 0.0
          %v2308 = vmax.f32 %v2244, 0.0
          %v2309 = vmax.f32 %v2245, 0.0
          %v2310 = vmax.f32 %v2246, 0.0
          %v2311 = vmax.f32 %v2247, 0.0
          %v2312 = vmax.f32 %v2248, 0.0
          %v2313 = vmax.f32 %v2249, 0.0
          %v2314 = vmax.f32 %v2250, 0.0
          %v2315 = vmax.f32 %v2251, 0.0
          %v2316 = vmax.f32 %v2252, 0.0
          %v2317 = vmax.f32 %v2253, 0.0
          %v2318 = vmax.f32 %v2254, 0.0
          %v2319 = vmax.f32 %v2255, 0.0
          %v2320 = vmax.f32 %v2256, 0.0
          %v2321 = vmax.f32 %v2257, 0.0
          %v2322 = vmax.f32 %v2258, 0.0
          %v2323 = vmax.f32 %v2259, 0.0
          %v2324 = vmax.f32 %v2260, 0.0
          %v2325 = vmax.f32 %v2261, 0.0
          %v2326 = vmax.f32 %v2262, 0.0
          %v2327 = vmax.f32 %v2263, 0.0
          %v2328 = vmax.f32 %v2264, 0.0
          %v2329 = vmax.f32 %v2265, 0.0
          %v2330 = vmax.f32 %v2266, 0.0
          %v2331 = vmax.f32 %v2267, 0.0
          %v2332 = vmax.f32 %v2268, 0.0
          %v2333 = vmax.f32 %v2269, 0.0
          %v2334 = vmax.f32 %v2270, 0.0
          %v2335 = vmax.f32 %v2271, 0.0
          %v2336 = vmax.f32 %v2272, 0.0
          %v2337 = vmax.f32 %v2273, 0.0
          %v2338 = vmax.f32 %v2274, 0.0
          %v2339 = vmax.f32 %v2275, 0.0
          %v2340 = vmax.f32 %v2276, 0.0
          %v2341 = vmax.f32 %v2277, 0.0
          %v2342 = vmax.f32 %v2278, 0.0
          %v2343 = vmax.f32 %v2279, 0.0
          %v2344 = vmax.f32 %v2280, 0.0
          %v2345 = vmax.f32 %v2281, 0.0
          %v2346 = vmax.f32 %v2282, 0.0
          %v2347 = vmax.f32 %v2283, 0.0
          %v2348 = vmax.f32 %v2284, 0.0
          %v2349 = vmax.f32 %v2285, 0.0
          %v2350 = vmax.f32 %v2286, 0.0
          %v2351 = vmax.f32 %v2287, 0.0
          %v2352 = vmax.f32 %v2288, 0.0
          %v2353 = vmax.f32 %v2289, 0.0
          %v2354 = vmax.f32 %v2290, 0.0
          %v2355 = vmax.f32 %v2291, 0.0
          %v2356 = vmax.f32 %v2292, 0.0
          %v2357 = vmax.f32 %v2293, 0.0
          %v2358 = vpack.c.bf16 %v2295, %v2294
          %v2359 = vpack.c.bf16 %v2297, %v2296
          %v2360 = vpack.c.bf16 %v2299, %v2298
          %v2361 = vpack.c.bf16 %v2301, %v2300
          %v2362 = vpack.c.bf16 %v2303, %v2302
          %v2363 = vpack.c.bf16 %v2305, %v2304
          %v2364 = vpack.c.bf16 %v2307, %v2306
          %v2365 = vpack.c.bf16 %v2309, %v2308
          %v2366 = vpack.c.bf16 %v2311, %v2310
          %v2367 = vpack.c.bf16 %v2313, %v2312
          %v2368 = vpack.c.bf16 %v2315, %v2314
          %v2369 = vpack.c.bf16 %v2317, %v2316
          %v2370 = vpack.c.bf16 %v2319, %v2318
          %v2371 = vpack.c.bf16 %v2321, %v2320
          %v2372 = vpack.c.bf16 %v2323, %v2322
          %v2373 = vpack.c.bf16 %v2325, %v2324
          %v2374 = vpack.c.bf16 %v2327, %v2326
          %v2375 = vpack.c.bf16 %v2329, %v2328
          %v2376 = vpack.c.bf16 %v2331, %v2330
          %v2377 = vpack.c.bf16 %v2333, %v2332
          %v2378 = vpack.c.bf16 %v2335, %v2334
          %v2379 = vpack.c.bf16 %v2337, %v2336
          %v2380 = vpack.c.bf16 %v2339, %v2338
          %v2381 = vpack.c.bf16 %v2341, %v2340
          %v2382 = vpack.c.bf16 %v2343, %v2342
          %v2383 = vpack.c.bf16 %v2345, %v2344
          %v2384 = vpack.c.bf16 %v2347, %v2346
          %v2385 = vpack.c.bf16 %v2349, %v2348
          %v2386 = vpack.c.bf16 %v2351, %v2350
          %v2387 = vpack.c.bf16 %v2353, %v2352
          %v2388 = vpack.c.bf16 %v2355, %v2354
          %v2389 = vpack.c.bf16 %v2357, %v2356
          %v2390 = vld [vmem:[#allocation10] sm:$0xf]
          %v2391 = vld [vmem:[#allocation10 + $0x4] sm:$0xf]
          %v2392 = vld [vmem:[#allocation10 + $0x8] sm:$0xf]
          %v2393 = vld [vmem:[#allocation10 + $0xc] sm:$0xf]
          %v2394 = vld [vmem:[#allocation10 + $0x10] sm:$0xf]
          %v2395 = vld [vmem:[#allocation10 + $0x14] sm:$0xf]
          %v2396 = vld [vmem:[#allocation10 + $0x18] sm:$0xf]
          %v2397 = vld [vmem:[#allocation10 + $0x1c] sm:$0xf]
          %v2398 = vld [vmem:[#allocation10 + $0x20] sm:$0xf]
          %v2399 = vld [vmem:[#allocation10 + $0x24] sm:$0xf]
          %v2400 = vld [vmem:[#allocation10 + $0x28] sm:$0xf]
          %v2401 = vld [vmem:[#allocation10 + $0x2c] sm:$0xf]
          %v2402 = vld [vmem:[#allocation10 + $0x30] sm:$0xf]
          %v2403 = vld [vmem:[#allocation10 + $0x34] sm:$0xf]
          %v2404 = vld [vmem:[#allocation10 + $0x38] sm:$0xf]
          %v2405 = vld [vmem:[#allocation10 + $0x3c] sm:$0xf]
          %v2422 = vunpack.c.l.b16 %v2390
          %v2423 = vunpack.c.l.b16 %v2391
          %v2424 = vunpack.c.l.b16 %v2392
          %v2425 = vunpack.c.l.b16 %v2393
          %v2426 = vunpack.c.l.b16 %v2394
          %v2427 = vunpack.c.l.b16 %v2395
          %v2428 = vunpack.c.l.b16 %v2396
          %v2429 = vunpack.c.l.b16 %v2397
          %v2430 = vunpack.c.l.b16 %v2398
          %v2431 = vunpack.c.l.b16 %v2399
          %v2432 = vunpack.c.l.b16 %v2400
          %v2433 = vunpack.c.l.b16 %v2401
          %v2434 = vunpack.c.l.b16 %v2402
          %v2435 = vunpack.c.l.b16 %v2403
          %v2436 = vunpack.c.l.b16 %v2404
          %v2437 = vunpack.c.l.b16 %v2405
          %v2438 = vpack.c.b16 %v2423, %v2422
          %v2439 = vpack.c.b16 %v2425, %v2424
          %v2440 = vpack.c.b16 %v2427, %v2426
          %v2441 = vpack.c.b16 %v2429, %v2428
          %v2442 = vpack.c.b16 %v2431, %v2430
          %v2443 = vpack.c.b16 %v2433, %v2432
          %v2444 = vpack.c.b16 %v2435, %v2434
          %v2445 = vpack.c.b16 %v2437, %v2436
          %2454 = vmatprep.subr.bf16.mxu0 0
          %2455 = vmatpush1.bf16.msra.mxu0 %v2438
          %2456 = vmatprep.subr.bf16.mxu0 0
          %2457 = vmatpush1.bf16.msra.mxu0 %v2439
          %2458 = vmatprep.subr.bf16.mxu0 0
          %2459 = vmatpush1.bf16.msra.mxu0 %v2440
          %2460 = vmatprep.subr.bf16.mxu0 0
          %2461 = vmatpush1.bf16.msra.mxu0 %v2441
          %2462 = vmatprep.subr.bf16.mxu0 0
          %2463 = vmatpush1.bf16.msra.mxu0 %v2442
          %2464 = vmatprep.subr.bf16.mxu0 0
          %2465 = vmatpush1.bf16.msra.mxu0 %v2443
          %2466 = vmatprep.subr.bf16.mxu0 0
          %2467 = vmatpush1.bf16.msra.mxu0 %v2444
          %2468 = vmatprep.subr.bf16.mxu0 0
          %2469 = vmatpush1.bf16.msra.mxu0 %v2445
          %2470 = vmatprep.subr.bf16.mxu0 0
          %2471 = vmatpush1.bf16.msra.mxu0 0
          %2472 = vmatprep.subr.bf16.mxu0 0
          %2473 = vmatpush1.bf16.msra.mxu0 0
          %2474 = vmatprep.subr.bf16.mxu0 0
          %2475 = vmatpush1.bf16.msra.mxu0 0
          %2476 = vmatprep.subr.bf16.mxu0 0
          %2477 = vmatpush1.bf16.msra.mxu0 0
          %2478 = vmatprep.subr.bf16.mxu0 0
          %2479 = vmatpush1.bf16.msra.mxu0 0
          %2480 = vmatprep.subr.bf16.mxu0 0
          %2481 = vmatpush1.bf16.msra.mxu0 0
          %2482 = vmatprep.subr.bf16.mxu0 0
          %2483 = vmatpush1.bf16.msra.mxu0 0
          %2484 = vmatprep.subr.bf16.mxu0 0
          %2485 = vmatpush1.bf16.msra.mxu0 0
          %2486 = vmatprep.mubr.bf16.mxu0 0
          %2487 = vmatmul.mubr.bf16.gmra.mrb[0].mxu0 %v2358
          %v2488 = vpop.f32.mrb[0].mxu0
          %v2489 = vadd.f32 0.0, %v2488
          %v2490 = vpop.f32.mrb[0].mxu0
          %v2491 = vpop.f32.mrb[0].mxu0
          %v2492 = vadd.f32 0.0, %v2491
          %v2493 = vpop.f32.mrb[0].mxu0
          %2494 = vmatprep.mubr.bf16.mxu0 0
          %2495 = vmatmul.mubr.bf16.gmra.mrb[0].mxu0 %v2359
          %v2496 = vpop.f32.mrb[0].mxu0
          %v2497 = vadd.f32 0.0, %v2496
          %v2498 = vpop.f32.mrb[0].mxu0
          %v2499 = vpop.f32.mrb[0].mxu0
          %v2500 = vadd.f32 0.0, %v2499
          %v2501 = vpop.f32.mrb[0].mxu0
          %2502 = vmatprep.mubr.bf16.mxu0 0
          %2503 = vmatmul.mubr.bf16.gmra.mrb[0].mxu0 %v2360
          %v2504 = vpop.f32.mrb[0].mxu0
          %v2505 = vadd.f32 0.0, %v2504
          %v2506 = vpop.f32.mrb[0].mxu0
          %v2507 = vpop.f32.mrb[0].mxu0
          %v2508 = vadd.f32 0.0, %v2507
          %v2509 = vpop.f32.mrb[0].mxu0
          %2510 = vmatprep.mubr.bf16.mxu0 0
          %2511 = vmatmul.mubr.bf16.gmra.mrb[0].mxu0 %v2361
          %v2512 = vpop.f32.mrb[0].mxu0
          %v2513 = vadd.f32 0.0, %v2512
          %v2514 = vpop.f32.mrb[0].mxu0
          %v2515 = vpop.f32.mrb[0].mxu0
          %v2516 = vadd.f32 0.0, %v2515
          %v2517 = vpop.f32.mrb[0].mxu0
          %2518 = vmatprep.mubr.bf16.mxu0 0
          %2519 = vmatmul.mubr.bf16.gmra.mrb[0].mxu0 %v2362
          %v2520 = vpop.f32.mrb[0].mxu0
          %v2521 = vadd.f32 0.0, %v2520
          %v2522 = vpop.f32.mrb[0].mxu0
          %v2523 = vpop.f32.mrb[0].mxu0
          %v2524 = vadd.f32 0.0, %v2523
          %v2525 = vpop.f32.mrb[0].mxu0
          %2526 = vmatprep.mubr.bf16.mxu0 0
          %2527 = vmatmul.mubr.bf16.gmra.mrb[0].mxu0 %v2363
          %v2528 = vpop.f32.mrb[0].mxu0
          %v2529 = vadd.f32 0.0, %v2528
          %v2530 = vpop.f32.mrb[0].mxu0
          %v2531 = vpop.f32.mrb[0].mxu0
          %v2532 = vadd.f32 0.0, %v2531
          %v2533 = vpop.f32.mrb[0].mxu0
          %2534 = vmatprep.mubr.bf16.mxu0 0
          %2535 = vmatmul.mubr.bf16.gmra.mrb[0].mxu0 %v2364
          %v2536 = vpop.f32.mrb[0].mxu0
          %v2537 = vadd.f32 0.0, %v2536
          %v2538 = vpop.f32.mrb[0].mxu0
          %v2539 = vpop.f32.mrb[0].mxu0
          %v2540 = vadd.f32 0.0, %v2539
          %v2541 = vpop.f32.mrb[0].mxu0
          %2542 = vmatprep.mubr.bf16.mxu0 0
          %2543 = vmatmul.mubr.bf16.gmra.mrb[0].mxu0 %v2365
          %v2544 = vpop.f32.mrb[0].mxu0
          %v2545 = vadd.f32 0.0, %v2544
          %v2546 = vpop.f32.mrb[0].mxu0
          %v2547 = vpop.f32.mrb[0].mxu0
          %v2548 = vadd.f32 0.0, %v2547
          %v2549 = vpop.f32.mrb[0].mxu0
          %2550 = vmatprep.mubr.bf16.mxu0 0
          %2551 = vmatmul.mubr.bf16.gmra.mrb[0].mxu0 %v2366
          %v2552 = vpop.f32.mrb[0].mxu0
          %v2553 = vadd.f32 0.0, %v2552
          %v2554 = vpop.f32.mrb[0].mxu0
          %v2555 = vpop.f32.mrb[0].mxu0
          %v2556 = vadd.f32 0.0, %v2555
          %v2557 = vpop.f32.mrb[0].mxu0
          %2558 = vmatprep.mubr.bf16.mxu0 0
          %2559 = vmatmul.mubr.bf16.gmra.mrb[0].mxu0 %v2367
          %v2560 = vpop.f32.mrb[0].mxu0
          %v2561 = vadd.f32 0.0, %v2560
          %v2562 = vpop.f32.mrb[0].mxu0
          %v2563 = vpop.f32.mrb[0].mxu0
          %v2564 = vadd.f32 0.0, %v2563
          %v2565 = vpop.f32.mrb[0].mxu0
          %2566 = vmatprep.mubr.bf16.mxu0 0
          %2567 = vmatmul.mubr.bf16.gmra.mrb[0].mxu0 %v2368
          %v2568 = vpop.f32.mrb[0].mxu0
          %v2569 = vadd.f32 0.0, %v2568
          %v2570 = vpop.f32.mrb[0].mxu0
          %v2571 = vpop.f32.mrb[0].mxu0
          %v2572 = vadd.f32 0.0, %v2571
          %v2573 = vpop.f32.mrb[0].mxu0
          %2574 = vmatprep.mubr.bf16.mxu0 0
          %2575 = vmatmul.mubr.bf16.gmra.mrb[0].mxu0 %v2369
          %v2576 = vpop.f32.mrb[0].mxu0
          %v2577 = vadd.f32 0.0, %v2576
          %v2578 = vpop.f32.mrb[0].mxu0
          %v2579 = vpop.f32.mrb[0].mxu0
          %v2580 = vadd.f32 0.0, %v2579
          %v2581 = vpop.f32.mrb[0].mxu0
          %2582 = vmatprep.mubr.bf16.mxu0 0
          %2583 = vmatmul.mubr.bf16.gmra.mrb[0].mxu0 %v2370
          %v2584 = vpop.f32.mrb[0].mxu0
          %v2585 = vadd.f32 0.0, %v2584
          %v2586 = vpop.f32.mrb[0].mxu0
          %v2587 = vpop.f32.mrb[0].mxu0
          %v2588 = vadd.f32 0.0, %v2587
          %v2589 = vpop.f32.mrb[0].mxu0
          %2590 = vmatprep.mubr.bf16.mxu0 0
          %2591 = vmatmul.mubr.bf16.gmra.mrb[0].mxu0 %v2371
          %v2592 = vpop.f32.mrb[0].mxu0
          %v2593 = vadd.f32 0.0, %v2592
          %v2594 = vpop.f32.mrb[0].mxu0
          %v2595 = vpop.f32.mrb[0].mxu0
          %v2596 = vadd.f32 0.0, %v2595
          %v2597 = vpop.f32.mrb[0].mxu0
          %2598 = vmatprep.mubr.bf16.mxu0 0
          %2599 = vmatmul.mubr.bf16.gmra.mrb[0].mxu0 %v2372
          %v2600 = vpop.f32.mrb[0].mxu0
          %v2601 = vadd.f32 0.0, %v2600
          %v2602 = vpop.f32.mrb[0].mxu0
          %v2603 = vpop.f32.mrb[0].mxu0
          %v2604 = vadd.f32 0.0, %v2603
          %v2605 = vpop.f32.mrb[0].mxu0
          %2606 = vmatprep.mubr.bf16.mxu0 0
          %2607 = vmatmul.mubr.bf16.gmra.mrb[0].mxu0 %v2373
          %v2608 = vpop.f32.mrb[0].mxu0
          %v2609 = vadd.f32 0.0, %v2608
          %v2610 = vpop.f32.mrb[0].mxu0
          %v2611 = vpop.f32.mrb[0].mxu0
          %v2612 = vadd.f32 0.0, %v2611
          %v2613 = vpop.f32.mrb[0].mxu0
          %2614 = vmatprep.mubr.bf16.mxu0 0
          %2615 = vmatmul.mubr.bf16.gmra.mrb[0].mxu0 %v2374
          %v2616 = vpop.f32.mrb[0].mxu0
          %v2617 = vadd.f32 0.0, %v2616
          %v2618 = vpop.f32.mrb[0].mxu0
          %v2619 = vpop.f32.mrb[0].mxu0
          %v2620 = vadd.f32 0.0, %v2619
          %v2621 = vpop.f32.mrb[0].mxu0
          %2622 = vmatprep.mubr.bf16.mxu0 0
          %2623 = vmatmul.mubr.bf16.gmra.mrb[0].mxu0 %v2375
          %v2624 = vpop.f32.mrb[0].mxu0
          %v2625 = vadd.f32 0.0, %v2624
          %v2626 = vpop.f32.mrb[0].mxu0
          %v2627 = vpop.f32.mrb[0].mxu0
          %v2628 = vadd.f32 0.0, %v2627
          %v2629 = vpop.f32.mrb[0].mxu0
          %2630 = vmatprep.mubr.bf16.mxu0 0
          %2631 = vmatmul.mubr.bf16.gmra.mrb[0].mxu0 %v2376
          %v2632 = vpop.f32.mrb[0].mxu0
          %v2633 = vadd.f32 0.0, %v2632
          %v2634 = vpop.f32.mrb[0].mxu0
          %v2635 = vpop.f32.mrb[0].mxu0
          %v2636 = vadd.f32 0.0, %v2635
          %v2637 = vpop.f32.mrb[0].mxu0
          %2638 = vmatprep.mubr.bf16.mxu0 0
          %2639 = vmatmul.mubr.bf16.gmra.mrb[0].mxu0 %v2377
          %v2640 = vpop.f32.mrb[0].mxu0
          %v2641 = vadd.f32 0.0, %v2640
          %v2642 = vpop.f32.mrb[0].mxu0
          %v2643 = vpop.f32.mrb[0].mxu0
          %v2644 = vadd.f32 0.0, %v2643
          %v2645 = vpop.f32.mrb[0].mxu0
          %2646 = vmatprep.mubr.bf16.mxu0 0
          %2647 = vmatmul.mubr.bf16.gmra.mrb[0].mxu0 %v2378
          %v2648 = vpop.f32.mrb[0].mxu0
          %v2649 = vadd.f32 0.0, %v2648
          %v2650 = vpop.f32.mrb[0].mxu0
          %v2651 = vpop.f32.mrb[0].mxu0
          %v2652 = vadd.f32 0.0, %v2651
          %v2653 = vpop.f32.mrb[0].mxu0
          %2654 = vmatprep.mubr.bf16.mxu0 0
          %2655 = vmatmul.mubr.bf16.gmra.mrb[0].mxu0 %v2379
          %v2656 = vpop.f32.mrb[0].mxu0
          %v2657 = vadd.f32 0.0, %v2656
          %v2658 = vpop.f32.mrb[0].mxu0
          %v2659 = vpop.f32.mrb[0].mxu0
          %v2660 = vadd.f32 0.0, %v2659
          %v2661 = vpop.f32.mrb[0].mxu0
          %2662 = vmatprep.mubr.bf16.mxu0 0
          %2663 = vmatmul.mubr.bf16.gmra.mrb[0].mxu0 %v2380
          %v2664 = vpop.f32.mrb[0].mxu0
          %v2665 = vadd.f32 0.0, %v2664
          %v2666 = vpop.f32.mrb[0].mxu0
          %v2667 = vpop.f32.mrb[0].mxu0
          %v2668 = vadd.f32 0.0, %v2667
          %v2669 = vpop.f32.mrb[0].mxu0
          %2670 = vmatprep.mubr.bf16.mxu0 0
          %2671 = vmatmul.mubr.bf16.gmra.mrb[0].mxu0 %v2381
          %v2672 = vpop.f32.mrb[0].mxu0
          %v2673 = vadd.f32 0.0, %v2672
          %v2674 = vpop.f32.mrb[0].mxu0
          %v2675 = vpop.f32.mrb[0].mxu0
          %v2676 = vadd.f32 0.0, %v2675
          %v2677 = vpop.f32.mrb[0].mxu0
          %2678 = vmatprep.mubr.bf16.mxu0 0
          %2679 = vmatmul.mubr.bf16.gmra.mrb[0].mxu0 %v2382
          %v2680 = vpop.f32.mrb[0].mxu0
          %v2681 = vadd.f32 0.0, %v2680
          %v2682 = vpop.f32.mrb[0].mxu0
          %v2683 = vpop.f32.mrb[0].mxu0
          %v2684 = vadd.f32 0.0, %v2683
          %v2685 = vpop.f32.mrb[0].mxu0
          %2686 = vmatprep.mubr.bf16.mxu0 0
          %2687 = vmatmul.mubr.bf16.gmra.mrb[0].mxu0 %v2383
          %v2688 = vpop.f32.mrb[0].mxu0
          %v2689 = vadd.f32 0.0, %v2688
          %v2690 = vpop.f32.mrb[0].mxu0
          %v2691 = vpop.f32.mrb[0].mxu0
          %v2692 = vadd.f32 0.0, %v2691
          %v2693 = vpop.f32.mrb[0].mxu0
          %2694 = vmatprep.mubr.bf16.mxu0 0
          %2695 = vmatmul.mubr.bf16.gmra.mrb[0].mxu0 %v2384
          %v2696 = vpop.f32.mrb[0].mxu0
          %v2697 = vadd.f32 0.0, %v2696
          %v2698 = vpop.f32.mrb[0].mxu0
          %v2699 = vpop.f32.mrb[0].mxu0
          %v2700 = vadd.f32 0.0, %v2699
          %v2701 = vpop.f32.mrb[0].mxu0
          %2702 = vmatprep.mubr.bf16.mxu0 0
          %2703 = vmatmul.mubr.bf16.gmra.mrb[0].mxu0 %v2385
          %v2704 = vpop.f32.mrb[0].mxu0
          %v2705 = vadd.f32 0.0, %v2704
          %v2706 = vpop.f32.mrb[0].mxu0
          %v2707 = vpop.f32.mrb[0].mxu0
          %v2708 = vadd.f32 0.0, %v2707
          %v2709 = vpop.f32.mrb[0].mxu0
          %2710 = vmatprep.mubr.bf16.mxu0 0
          %2711 = vmatmul.mubr.bf16.gmra.mrb[0].mxu0 %v2386
          %v2712 = vpop.f32.mrb[0].mxu0
          %v2713 = vadd.f32 0.0, %v2712
          %v2714 = vpop.f32.mrb[0].mxu0
          %v2715 = vpop.f32.mrb[0].mxu0
          %v2716 = vadd.f32 0.0, %v2715
          %v2717 = vpop.f32.mrb[0].mxu0
          %2718 = vmatprep.mubr.bf16.mxu0 0
          %2719 = vmatmul.mubr.bf16.gmra.mrb[0].mxu0 %v2387
          %v2720 = vpop.f32.mrb[0].mxu0
          %v2721 = vadd.f32 0.0, %v2720
          %v2722 = vpop.f32.mrb[0].mxu0
          %v2723 = vpop.f32.mrb[0].mxu0
          %v2724 = vadd.f32 0.0, %v2723
          %v2725 = vpop.f32.mrb[0].mxu0
          %2726 = vmatprep.mubr.bf16.mxu0 0
          %2727 = vmatmul.mubr.bf16.gmra.mrb[0].mxu0 %v2388
          %v2728 = vpop.f32.mrb[0].mxu0
          %v2729 = vadd.f32 0.0, %v2728
          %v2730 = vpop.f32.mrb[0].mxu0
          %v2731 = vpop.f32.mrb[0].mxu0
          %v2732 = vadd.f32 0.0, %v2731
          %v2733 = vpop.f32.mrb[0].mxu0
          %2734 = vmatprep.mubr.bf16.mxu0 0
          %2735 = vmatmul.mubr.bf16.gmra.mrb[0].mxu0 %v2389
          %v2736 = vpop.f32.mrb[0].mxu0
          %v2737 = vadd.f32 0.0, %v2736
          %v2738 = vpop.f32.mrb[0].mxu0
          %v2739 = vpop.f32.mrb[0].mxu0
          %v2740 = vadd.f32 0.0, %v2739
          %v2741 = vpop.f32.mrb[0].mxu0
          %2742 = vdwg.mxu0
          %v2743 = vpack.c.bf16 %v2492, %v2489
          %v2744 = vpack.c.bf16 %v2500, %v2497
          %v2745 = vpack.c.bf16 %v2508, %v2505
          %v2746 = vpack.c.bf16 %v2516, %v2513
          %v2747 = vpack.c.bf16 %v2524, %v2521
          %v2748 = vpack.c.bf16 %v2532, %v2529
          %v2749 = vpack.c.bf16 %v2540, %v2537
          %v2750 = vpack.c.bf16 %v2548, %v2545
          %v2751 = vpack.c.bf16 %v2556, %v2553
          %v2752 = vpack.c.bf16 %v2564, %v2561
          %v2753 = vpack.c.bf16 %v2572, %v2569
          %v2754 = vpack.c.bf16 %v2580, %v2577
          %v2755 = vpack.c.bf16 %v2588, %v2585
          %v2756 = vpack.c.bf16 %v2596, %v2593
          %v2757 = vpack.c.bf16 %v2604, %v2601
          %v2758 = vpack.c.bf16 %v2612, %v2609
          %v2759 = vpack.c.bf16 %v2620, %v2617
          %v2760 = vpack.c.bf16 %v2628, %v2625
          %v2761 = vpack.c.bf16 %v2636, %v2633
          %v2762 = vpack.c.bf16 %v2644, %v2641
          %v2763 = vpack.c.bf16 %v2652, %v2649
          %v2764 = vpack.c.bf16 %v2660, %v2657
          %v2765 = vpack.c.bf16 %v2668, %v2665
          %v2766 = vpack.c.bf16 %v2676, %v2673
          %v2767 = vpack.c.bf16 %v2684, %v2681
          %v2768 = vpack.c.bf16 %v2692, %v2689
          %v2769 = vpack.c.bf16 %v2700, %v2697
          %v2770 = vpack.c.bf16 %v2708, %v2705
          %v2771 = vpack.c.bf16 %v2716, %v2713
          %v2772 = vpack.c.bf16 %v2724, %v2721
          %v2773 = vpack.c.bf16 %v2732, %v2729
          %v2774 = vpack.c.bf16 %v2740, %v2737
          %v2807 = vunpack.c.l.b16 %v2743
          %v2808 = vunpack.c.h.b16 %v2743
          %v2809 = vunpack.c.l.b16 %v2744
          %v2810 = vunpack.c.h.b16 %v2744
          %v2811 = vunpack.c.l.b16 %v2745
          %v2812 = vunpack.c.h.b16 %v2745
          %v2813 = vunpack.c.l.b16 %v2746
          %v2814 = vunpack.c.h.b16 %v2746
          %v2815 = vunpack.c.l.b16 %v2747
          %v2816 = vunpack.c.h.b16 %v2747
          %v2817 = vunpack.c.l.b16 %v2748
          %v2818 = vunpack.c.h.b16 %v2748
          %v2819 = vunpack.c.l.b16 %v2749
          %v2820 = vunpack.c.h.b16 %v2749
          %v2821 = vunpack.c.l.b16 %v2750
          %v2822 = vunpack.c.h.b16 %v2750
          %v2823 = vunpack.c.l.b16 %v2751
          %v2824 = vunpack.c.h.b16 %v2751
          %v2825 = vunpack.c.l.b16 %v2752
          %v2826 = vunpack.c.h.b16 %v2752
          %v2827 = vunpack.c.l.b16 %v2753
          %v2828 = vunpack.c.h.b16 %v2753
          %v2829 = vunpack.c.l.b16 %v2754
          %v2830 = vunpack.c.h.b16 %v2754
          %v2831 = vunpack.c.l.b16 %v2755
          %v2832 = vunpack.c.h.b16 %v2755
          %v2833 = vunpack.c.l.b16 %v2756
          %v2834 = vunpack.c.h.b16 %v2756
          %v2835 = vunpack.c.l.b16 %v2757
          %v2836 = vunpack.c.h.b16 %v2757
          %v2837 = vunpack.c.l.b16 %v2758
          %v2838 = vunpack.c.h.b16 %v2758
          %v2839 = vunpack.c.l.b16 %v2759
          %v2840 = vunpack.c.h.b16 %v2759
          %v2841 = vunpack.c.l.b16 %v2760
          %v2842 = vunpack.c.h.b16 %v2760
          %v2843 = vunpack.c.l.b16 %v2761
          %v2844 = vunpack.c.h.b16 %v2761
          %v2845 = vunpack.c.l.b16 %v2762
          %v2846 = vunpack.c.h.b16 %v2762
          %v2847 = vunpack.c.l.b16 %v2763
          %v2848 = vunpack.c.h.b16 %v2763
          %v2849 = vunpack.c.l.b16 %v2764
          %v2850 = vunpack.c.h.b16 %v2764
          %v2851 = vunpack.c.l.b16 %v2765
          %v2852 = vunpack.c.h.b16 %v2765
          %v2853 = vunpack.c.l.b16 %v2766
          %v2854 = vunpack.c.h.b16 %v2766
          %v2855 = vunpack.c.l.b16 %v2767
          %v2856 = vunpack.c.h.b16 %v2767
          %v2857 = vunpack.c.l.b16 %v2768
          %v2858 = vunpack.c.h.b16 %v2768
          %v2859 = vunpack.c.l.b16 %v2769
          %v2860 = vunpack.c.h.b16 %v2769
          %v2861 = vunpack.c.l.b16 %v2770
          %v2862 = vunpack.c.h.b16 %v2770
          %v2863 = vunpack.c.l.b16 %v2771
          %v2864 = vunpack.c.h.b16 %v2771
          %v2865 = vunpack.c.l.b16 %v2772
          %v2866 = vunpack.c.h.b16 %v2772
          %v2867 = vunpack.c.l.b16 %v2773
          %v2868 = vunpack.c.h.b16 %v2773
          %v2869 = vunpack.c.l.b16 %v2774
          %v2870 = vunpack.c.h.b16 %v2774
          %v2871 = vpack.c.b16 %v2807, %v2807
          %v2872 = vpack.c.b16 %v2808, %v2808
          %v2873 = vpack.c.b16 %v2809, %v2809
          %v2874 = vpack.c.b16 %v2810, %v2810
          %v2875 = vpack.c.b16 %v2811, %v2811
          %v2876 = vpack.c.b16 %v2812, %v2812
          %v2877 = vpack.c.b16 %v2813, %v2813
          %v2878 = vpack.c.b16 %v2814, %v2814
          %v2879 = vpack.c.b16 %v2815, %v2815
          %v2880 = vpack.c.b16 %v2816, %v2816
          %v2881 = vpack.c.b16 %v2817, %v2817
          %v2882 = vpack.c.b16 %v2818, %v2818
          %v2883 = vpack.c.b16 %v2819, %v2819
          %v2884 = vpack.c.b16 %v2820, %v2820
          %v2885 = vpack.c.b16 %v2821, %v2821
          %v2886 = vpack.c.b16 %v2822, %v2822
          %v2887 = vpack.c.b16 %v2823, %v2823
          %v2888 = vpack.c.b16 %v2824, %v2824
          %v2889 = vpack.c.b16 %v2825, %v2825
          %v2890 = vpack.c.b16 %v2826, %v2826
          %v2891 = vpack.c.b16 %v2827, %v2827
          %v2892 = vpack.c.b16 %v2828, %v2828
          %v2893 = vpack.c.b16 %v2829, %v2829
          %v2894 = vpack.c.b16 %v2830, %v2830
          %v2895 = vpack.c.b16 %v2831, %v2831
          %v2896 = vpack.c.b16 %v2832, %v2832
          %v2897 = vpack.c.b16 %v2833, %v2833
          %v2898 = vpack.c.b16 %v2834, %v2834
          %v2899 = vpack.c.b16 %v2835, %v2835
          %v2900 = vpack.c.b16 %v2836, %v2836
          %v2901 = vpack.c.b16 %v2837, %v2837
          %v2902 = vpack.c.b16 %v2838, %v2838
          %v2903 = vpack.c.b16 %v2839, %v2839
          %v2904 = vpack.c.b16 %v2840, %v2840
          %v2905 = vpack.c.b16 %v2841, %v2841
          %v2906 = vpack.c.b16 %v2842, %v2842
          %v2907 = vpack.c.b16 %v2843, %v2843
          %v2908 = vpack.c.b16 %v2844, %v2844
          %v2909 = vpack.c.b16 %v2845, %v2845
          %v2910 = vpack.c.b16 %v2846, %v2846
          %v2911 = vpack.c.b16 %v2847, %v2847
          %v2912 = vpack.c.b16 %v2848, %v2848
          %v2913 = vpack.c.b16 %v2849, %v2849
          %v2914 = vpack.c.b16 %v2850, %v2850
          %v2915 = vpack.c.b16 %v2851, %v2851
          %v2916 = vpack.c.b16 %v2852, %v2852
          %v2917 = vpack.c.b16 %v2853, %v2853
          %v2918 = vpack.c.b16 %v2854, %v2854
          %v2919 = vpack.c.b16 %v2855, %v2855
          %v2920 = vpack.c.b16 %v2856, %v2856
          %v2921 = vpack.c.b16 %v2857, %v2857
          %v2922 = vpack.c.b16 %v2858, %v2858
          %v2923 = vpack.c.b16 %v2859, %v2859
          %v2924 = vpack.c.b16 %v2860, %v2860
          %v2925 = vpack.c.b16 %v2861, %v2861
          %v2926 = vpack.c.b16 %v2862, %v2862
          %v2927 = vpack.c.b16 %v2863, %v2863
          %v2928 = vpack.c.b16 %v2864, %v2864
          %v2929 = vpack.c.b16 %v2865, %v2865
          %v2930 = vpack.c.b16 %v2866, %v2866
          %v2931 = vpack.c.b16 %v2867, %v2867
          %v2932 = vpack.c.b16 %v2868, %v2868
          %v2933 = vpack.c.b16 %v2869, %v2869
          %v2934 = vpack.c.b16 %v2870, %v2870
          %2999 = vst [vmem:[%s279] sm:$0xf] %v2871
          %3000 = vst [vmem:[%s279 + $0x4] sm:$0xf] %v2872
          %3001 = vst [vmem:[%s279 + $0x8] sm:$0xf] %v2873
          %3002 = vst [vmem:[%s279 + $0xc] sm:$0xf] %v2874
          %3003 = vst [vmem:[%s279 + $0x10] sm:$0xf] %v2875
          %3004 = vst [vmem:[%s279 + $0x14] sm:$0xf] %v2876
          %3005 = vst [vmem:[%s279 + $0x18] sm:$0xf] %v2877
          %3006 = vst [vmem:[%s279 + $0x1c] sm:$0xf] %v2878
          %3007 = vst [vmem:[%s279 + $0x20] sm:$0xf] %v2879
          %3008 = vst [vmem:[%s279 + $0x24] sm:$0xf] %v2880
          %3009 = vst [vmem:[%s279 + $0x28] sm:$0xf] %v2881
          %3010 = vst [vmem:[%s279 + $0x2c] sm:$0xf] %v2882
          %3011 = vst [vmem:[%s279 + $0x30] sm:$0xf] %v2883
          %3012 = vst [vmem:[%s279 + $0x34] sm:$0xf] %v2884
          %3013 = vst [vmem:[%s279 + $0x38] sm:$0xf] %v2885
          %3014 = vst [vmem:[%s279 + $0x3c] sm:$0xf] %v2886
          %3015 = vst [vmem:[%s279 + $0x40] sm:$0xf] %v2887
          %3016 = vst [vmem:[%s279 + $0x44] sm:$0xf] %v2888
          %3017 = vst [vmem:[%s279 + $0x48] sm:$0xf] %v2889
          %3018 = vst [vmem:[%s279 + $0x4c] sm:$0xf] %v2890
          %3019 = vst [vmem:[%s279 + $0x50] sm:$0xf] %v2891
          %3020 = vst [vmem:[%s279 + $0x54] sm:$0xf] %v2892
          %3021 = vst [vmem:[%s279 + $0x58] sm:$0xf] %v2893
          %3022 = vst [vmem:[%s279 + $0x5c] sm:$0xf] %v2894
          %3023 = vst [vmem:[%s279 + $0x60] sm:$0xf] %v2895
          %3024 = vst [vmem:[%s279 + $0x64] sm:$0xf] %v2896
          %3025 = vst [vmem:[%s279 + $0x68] sm:$0xf] %v2897
          %3026 = vst [vmem:[%s279 + $0x6c] sm:$0xf] %v2898
          %3027 = vst [vmem:[%s279 + $0x70] sm:$0xf] %v2899
          %3028 = vst [vmem:[%s279 + $0x74] sm:$0xf] %v2900
          %3029 = vst [vmem:[%s279 + $0x78] sm:$0xf] %v2901
          %3030 = vst [vmem:[%s279 + $0x7c] sm:$0xf] %v2902
          %3031 = vst [vmem:[%s279 + $0x80] sm:$0xf] %v2903
          %3032 = vst [vmem:[%s279 + $0x84] sm:$0xf] %v2904
          %3033 = vst [vmem:[%s279 + $0x88] sm:$0xf] %v2905
          %3034 = vst [vmem:[%s279 + $0x8c] sm:$0xf] %v2906
          %3035 = vst [vmem:[%s279 + $0x90] sm:$0xf] %v2907
          %3036 = vst [vmem:[%s279 + $0x94] sm:$0xf] %v2908
          %3037 = vst [vmem:[%s279 + $0x98] sm:$0xf] %v2909
          %3038 = vst [vmem:[%s279 + $0x9c] sm:$0xf] %v2910
          %3039 = vst [vmem:[%s279 + $0xa0] sm:$0xf] %v2911
          %3040 = vst [vmem:[%s279 + $0xa4] sm:$0xf] %v2912
          %3041 = vst [vmem:[%s279 + $0xa8] sm:$0xf] %v2913
          %3042 = vst [vmem:[%s279 + $0xac] sm:$0xf] %v2914
          %3043 = vst [vmem:[%s279 + $0xb0] sm:$0xf] %v2915
          %3044 = vst [vmem:[%s279 + $0xb4] sm:$0xf] %v2916
          %3045 = vst [vmem:[%s279 + $0xb8] sm:$0xf] %v2917
          %3046 = vst [vmem:[%s279 + $0xbc] sm:$0xf] %v2918
          %3047 = vst [vmem:[%s279 + $0xc0] sm:$0xf] %v2919
          %3048 = vst [vmem:[%s279 + $0xc4] sm:$0xf] %v2920
          %3049 = vst [vmem:[%s279 + $0xc8] sm:$0xf] %v2921
          %3050 = vst [vmem:[%s279 + $0xcc] sm:$0xf] %v2922
          %3051 = vst [vmem:[%s279 + $0xd0] sm:$0xf] %v2923
          %3052 = vst [vmem:[%s279 + $0xd4] sm:$0xf] %v2924
          %3053 = vst [vmem:[%s279 + $0xd8] sm:$0xf] %v2925
          %3054 = vst [vmem:[%s279 + $0xdc] sm:$0xf] %v2926
          %3055 = vst [vmem:[%s279 + $0xe0] sm:$0xf] %v2927
          %3056 = vst [vmem:[%s279 + $0xe4] sm:$0xf] %v2928
          %3057 = vst [vmem:[%s279 + $0xe8] sm:$0xf] %v2929
          %3058 = vst [vmem:[%s279 + $0xec] sm:$0xf] %v2930
          %3059 = vst [vmem:[%s279 + $0xf0] sm:$0xf] %v2931
          %3060 = vst [vmem:[%s279 + $0xf4] sm:$0xf] %v2932
          %3061 = vst [vmem:[%s279 + $0xf8] sm:$0xf] %v2933
          %3062 = vst [vmem:[%s279 + $0xfc] sm:$0xf] %v2934
        $region60: #{_gcn_forward_padded.4} parent=35 // pred_fallthru
          _
        %s3063 = smul.u32 64, %s31
        %p3064 = scmp.lt.s32.totalorder %s3063, 127
        %s3065 = scalar_select %p3064, %s3063, 127
        %s3066 = smul.addr %s3065, 4
        %s3067 = scalar_lea.vmem %s6, %s3066
        // Predicated region
        $region61: #{_gcn_forward_padded.4} parent=35 // pred_check
          %p3068 = pneg %p152
        $region62: #{_gcn_forward_padded.4} parent=35 // pred_check_branch
          %3070 = sbr.rel (%p3068) target = $region64
        $region63: #{_gcn_forward_padded.4} parent=35 // pred_region
          %s3071 = smul.u32 64, %s31
        $region64: #{_gcn_forward_padded.4} parent=35 // pred_fallthru
          _
      $region36: #{_gcn_forward_padded.4} parent=5 // pred_fallthru
        _
      %p3072 = scmp.le.s32.totalorder 2, %s22
      // Predicated region
      $region65: #{_gcn_forward_padded.4} parent=5 // pred_check
        %p3073 = pneg %p3072
      $region66: #{_gcn_forward_padded.4} parent=5 // pred_check_branch
        %3075 = sbr.rel (%p3073) target = $region68
      $region67: #{_gcn_forward_padded.4} parent=5 // pred_region
        %s3076 = ssub.s32 %s22, 2
        // Predicated region
        $region69: #{_gcn_forward_padded.4} parent=67 // pred_check
          %p3077 = pneg %p158
        $region70: #{_gcn_forward_padded.4} parent=67 // pred_check_branch
          %3079 = sbr.rel (%p3077) target = $region72
        $region71: #{_gcn_forward_padded.4} parent=67 // pred_region
          %s3080 = smul.u32 64, %s33
          %p3081 = scmp.lt.s32.totalorder %s3080, 127
          %s3082 = scalar_select %p3081, %s3080, 127
          %s3083 = smul.addr %s3082, 4
          %s3084 = scalar_lea.vmem %s6, %s3083
        $region72: #{_gcn_forward_padded.4} parent=67 // pred_fallthru
          _
      $region68: #{_gcn_forward_padded.4} parent=5 // pred_fallthru
        _
    $region6: #{_gcn_forward_padded.4} parent=1 // loop_footer
      %s26 = sadd.s32 1, %s22
    $region7: #{_gcn_forward_padded.4} parent=1 // loop_footer_branch
      %21 = sbr.rel target = $region3
    $region8: #{_gcn_forward_padded.4} parent=1 // loop_exit
      _
    %3085 = vsyncpa [#allocation7], 1
    %s3086 = scalar_lea.sflag [#allocation7], 1
    %3087 = vsyncpa %s3086, 1
    %3088 = vsyncpa [#allocation9], 1

</llo_original>
